<compile_context>
chip_gen: v6e
topology: v6e:2x2x1
jax: 0.10.0
libtpu: 0.0.40
codegen_flags: <defaults>
</compile_context>

<pallas_src>
import math

import jax
import jax.numpy as jnp
import numpy as np
from jax import lax
from jax.experimental import pallas as pl
from jax.experimental.pallas import tpu as pltpu

_BN_EPS = 1e-5
_K = 5         # conv kernel size (both layers)
_C = 32        # output channels of both convs
_KPAD = 32     # conv1 contraction dim, zero-padded 25 -> 32
_PAD_ROWS = 32 # act-scratch pad rows (>= max tap shift 2*W2 + 2, W2 = 12)

# Parity planes (h-parity, w-parity); plane id q = 2*hp + wp.
_PLANES = ((0, 0), (0, 1), (1, 0), (1, 1))


def _plane_taps(a, b):
    """(kh//2, kw//2) offsets of the conv2 taps whose (kh%2, kw%2) == (a, b)."""
    return [(dh, dw) for dh in range(3 - a) for dw in range(3 - b)]


# ------------------------------ Pallas kernel ------------------------------- #
def _make_fused_kernel(B, H2, W2, Ho2, Wo2):
    """conv1 (one matmul) + bn1 + relu -> conv2 (4 wide matmuls) + bn2 + relu."""
    Mq = B * H2 * W2        # rows of one parity plane == rows of output grid
    M1 = 4 * Mq             # conv1 output positions (BN1 population)
    M2 = B * Ho2 * Wo2      # valid conv2 output positions (BN2 population)
    assert _PAD_ROWS >= 2 * W2 + 2, "pad rows must cover the largest tap shift"

    def kernel(p1_ref, w1_ref, w2w_ref, g1_ref, b1_ref, g2_ref, b2_ref,
               o_ref, act_ref, y_ref):
        # -------------- layer 1: single conv1 matmul + BN1 + ReLU ------------
        y1 = jnp.dot(p1_ref[...], w1_ref[...],
                     preferred_element_type=jnp.float32)        # (M1, C) f32
        s1 = jnp.sum(y1, axis=0, keepdims=True)
        ss1 = jnp.sum(y1 * y1, axis=0, keepdims=True)
        mean1 = s1 * (1.0 / M1)
        var1 = ss1 * (1.0 / M1) - mean1 * mean1                 # biased variance
        scale1 = lax.rsqrt(var1 + _BN_EPS) * g1_ref[...]
        shift1 = b1_ref[...] - mean1 * scale1
        act_ref[pl.ds(0, M1), :] = jnp.maximum(
            y1 * scale1 + shift1, 0.0).astype(jnp.bfloat16)
        # Zero the pad rows: conv2's fixed-length reads below must stay finite
        # (VMEM has no OOB/garbage protection and NaN*0 would poison BN2 stats).
        act_ref[pl.ds(M1, _PAD_ROWS), :] = jnp.zeros(
            (_PAD_ROWS, _C), jnp.bfloat16)

        # ------ layer 2: stride-2 conv2 as 4 wide per-parity MXU matmuls -----
        # Plane q=(a,b) holds conv1 outputs at (2*h2+a, 2*w2+b).  For tap
        # (kh, kw) = (2*dh+a, 2*dw+b), the contribution to output row r is
        # act_q[r + dh*W2 + dw] @ W2_tap, so one wide (Mq+32, 32)x(32, 288) dot
        # per plane followed by row-shifted 32-lane slices covers all 25 taps.
        # Rows that wrap past a plane (or into the zero pad rows) only feed
        # output rows that BN2 masks out and the wrapper discards.
        acc = jnp.zeros((Mq, _C), jnp.float32)                  # stays in vregs
        for q, (a, b) in enumerate(_PLANES):
            lhs = act_ref[pl.ds(q * Mq, Mq + _PAD_ROWS), :]     # (Mq+32, C) bf16
            y_ref[...] = jnp.dot(lhs, w2w_ref[pl.ds(q * _C, _C), :],
                                 preferred_element_type=jnp.float32)
            for j, (dh, dw) in enumerate(_plane_taps(a, b)):
                s = dh * W2 + dw                                # static shift
                acc = acc + y_ref[pl.ds(s, Mq), pl.ds(j * _C, _C)]

        # ---------------- BN2 over the valid rows only + ReLU ----------------
        # Row r = n*H2*W2 + h*W2 + w is a real conv2 output iff h<Ho2, w<Wo2.
        # // and % are computed with exact float reciprocals (r < 2^20, +0.5
        # margin) to avoid vector integer division.
        r = lax.broadcasted_iota(jnp.int32, (Mq, _C), 0)
        rf = r.astype(jnp.float32)
        qw = ((rf + 0.5) * (1.0 / W2)).astype(jnp.int32)        # r // W2
        wpos = r - qw * W2                                      # r %  W2
        qh = ((qw.astype(jnp.float32) + 0.5) * (1.0 / H2)).astype(jnp.int32)
        hpos = qw - qh * H2                                     # (r // W2) % H2
        m = ((hpos < Ho2) & (wpos < Wo2)).astype(jnp.float32)
        am = acc * m
        mean2 = jnp.sum(am, axis=0, keepdims=True) * (1.0 / M2)
        var2 = (jnp.sum(am * am, axis=0, keepdims=True) * (1.0 / M2)
                - mean2 * mean2)
        scale2 = lax.rsqrt(var2 + _BN_EPS) * g2_ref[...]
        shift2 = b2_ref[...] - mean2 * scale2
        # Rows with h >= Ho2 or w >= Wo2 are garbage; the wrapper slices them.
        o_ref[...] = jnp.maximum(acc * scale2 + shift2, 0.0)

    return kernel


# -------------------------------- JAX glue ---------------------------------- #
def _conv1_patches_parity(x_nhwc):
    """conv1 im2col with rows pre-split into the four (h%2, w%2) parity planes.

    Returns bf16 patches of shape (4*B*H2*W2, 32) (contraction dim zero-padded
    25 -> 32) with rows ordered (parity q, image n, h//2, w//2).
    """
    B, H, W, Cin = x_nhwc.shape
    H1, W1 = H - _K + 1, W - _K + 1            # conv1 output (stride 1, VALID)
    assert H1 % 2 == 0 and W1 % 2 == 0, "parity split needs even conv1 output"
    H2, W2 = H1 // 2, W1 // 2
    cols = [x_nhwc[:, di:di + H1, dj:dj + W1, :]
            for di in range(_K) for dj in range(_K)]
    p = jnp.stack(cols, axis=3).reshape(B, H1, W1, _K * _K * Cin)
    p = jnp.pad(p, ((0, 0), (0, 0), (0, 0), (0, _KPAD - _K * _K * Cin)))
    p = p.reshape(B, H2, 2, W2, 2, _KPAD)      # (n, h2, hp, w2, wp, k)
    p = jnp.transpose(p, (2, 4, 0, 1, 3, 5))   # (hp, wp, n, h2, w2, k)
    return p.reshape(4 * B * H2 * W2, _KPAD).astype(jnp.bfloat16), (B, H2, W2)


def _pack_w2_wide(w2_oihw):
    """conv2 OIHW weight -> (4*C, 9*C) bf16: row-block = parity, lane-block = tap."""
    w = jnp.transpose(w2_oihw, (2, 3, 1, 0))   # (kh, kw, cin, cout)
    rows = []
    for (a, b) in _PLANES:
        taps = _plane_taps(a, b)
        blocks = [w[2 * dh + a, 2 * dw + b] for (dh, dw) in taps]
        pad = 9 - len(blocks)
        if pad:
            blocks.append(jnp.zeros((_C, pad * _C), w.dtype))
        rows.append(jnp.concatenate(blocks, axis=1))             # (C, 9*C)
    return jnp.concatenate(rows, axis=0).astype(jnp.bfloat16)    # (4*C, 9*C)


def mnist_features(x, params):
    """Forward pass of MnistFeatures. x: NCHW (or (B,H,W), unsqueezed to 1 ch)."""
    if x.ndim == 3:
        x = x[:, None, :, :]                   # mirrors x.unsqueeze_(1)
    x = jnp.transpose(x, (0, 2, 3, 1))         # NCHW -> NHWC
    p1, (B, H2, W2) = _conv1_patches_parity(x)
    Mq = B * H2 * W2
    Ho2, Wo2 = (2 * H2 - _K) // 2 + 1, (2 * W2 - _K) // 2 + 1

    # conv1 weight OIHW -> (kh*kw*cin, cout), zero-padded to KPAD rows, bf16.
    w1 = jnp.transpose(params["w1"], (2, 3, 1, 0)).reshape(-1, _C)
    w1 = jnp.pad(w1, ((0, _KPAD - w1.shape[0]), (0, 0))).astype(jnp.bfloat16)
    # conv2 weight packed per parity plane, taps concatenated along N.
    w2w = _pack_w2_wide(params["w2"])

    kernel = _make_fused_kernel(B, H2, W2, Ho2, Wo2)
    out = pl.pallas_call(
        kernel,
        out_shape=jax.ShapeDtypeStruct((Mq, _C), jnp.float32),
        # Everything fits comfortably in VMEM -> single block, no grid.
        in_specs=[pl.BlockSpec(memory_space=pltpu.MemorySpace.VMEM)] * 7,
        out_specs=pl.BlockSpec(memory_space=pltpu.MemorySpace.VMEM),
        scratch_shapes=[
            pltpu.VMEM((4 * Mq + _PAD_ROWS, _C), jnp.bfloat16),   # conv1 acts
            pltpu.VMEM((Mq + _PAD_ROWS, 9 * _C), jnp.float32),    # wide conv2 out
        ],
    )(p1, w1, w2w,
      params["g1"].reshape(1, _C), params["b1"].reshape(1, _C),
      params["g2"].reshape(1, _C), params["b2"].reshape(1, _C))

    out = out.reshape(B, H2, W2, _C)[:, :Ho2, :Wo2, :]
    return jnp.transpose(out, (0, 3, 1, 2))    # NHWC -> NCHW


# ---------------------------- deterministic init ----------------------------- #
def init_params(key):
    k1, k2 = jax.random.split(key)
    fan1 = 1 * 5 * 5
    fan2 = 32 * 5 * 5
    return dict(
        w1=jax.random.normal(k1, (32, 1, 5, 5), jnp.float32) / math.sqrt(fan1),
        g1=jnp.ones((32,), jnp.float32),   # nn.BatchNorm2d default weight
        b1=jnp.zeros((32,), jnp.float32),  # nn.BatchNorm2d default bias
        w2=jax.random.normal(k2, (32, 32, 5, 5), jnp.float32) / math.sqrt(fan2),
        g2=jnp.ones((32,), jnp.float32),
        b2=jnp.zeros((32,), jnp.float32),
    )


# ----------------------------- pure-JAX reference ---------------------------- #
def _reference(x, params):
    if x.ndim == 3:
        x = x[:, None, :, :]

    def conv(x, w, stride):
        return jax.lax.conv_general_dilated(
            x, w, (stride, stride), "VALID",
            dimension_numbers=("NCHW", "OIHW", "NCHW"),
            precision=jax.lax.Precision.HIGHEST,
        )

    def bn(x, g, b):
        mean = jnp.mean(x, axis=(0, 2, 3), keepdims=True)
        var = jnp.mean((x - mean) ** 2, axis=(0, 2, 3), keepdims=True)
        xn = (x - mean) * jax.lax.rsqrt(var + _BN_EPS)
        return xn * g[None, :, None, None] + b[None, :, None, None]

    x = jax.nn.relu(bn(conv(x, params["w1"], 1), params["g1"], params["b1"]))
    x = jax.nn.relu(bn(conv(x, params["w2"], 2), params["g2"], params["b2"]))
    return x


# ----------------------------------- main ------------------------------------ #
if __name__ == "__main__":
    key = jax.random.PRNGKey(0)
    kx, kp = jax.random.split(key)

    # MNIST-like input: batch=2, 1 channel, 28x28 (NCHW, as PyTorch expects).
    x = jax.random.normal(kx, (2, 1, 28, 28), jnp.float32)
    params = init_params(kp)

    out = jax.jit(mnist_features)(x, params)
    out = jax.block_until_ready(out)

    assert out.shape == (2, 32, 10, 10), out.shape

    ref = jax.block_until_ready(_reference(x, params))
    np.testing.assert_allclose(np.asarray(out), np.asarray(ref), atol=2e-2, rtol=2e-2)

    print("KERNEL_OK")
</pallas_src>

<mosaic_0001>
module attributes {stable_mosaic.version = 11 : i64} {
  func.func @kernel(%arg0: memref<1152x32xbf16, #tpu.memory_space<vmem>>, %arg1: memref<32x32xbf16, #tpu.memory_space<vmem>>, %arg2: memref<128x288xbf16, #tpu.memory_space<vmem>>, %arg3: memref<1x32xf32, #tpu.memory_space<vmem>>, %arg4: memref<1x32xf32, #tpu.memory_space<vmem>>, %arg5: memref<1x32xf32, #tpu.memory_space<vmem>>, %arg6: memref<1x32xf32, #tpu.memory_space<vmem>>, %arg7: memref<288x32xf32, #tpu.memory_space<vmem>>, %arg8: memref<1184x32xbf16, #tpu.memory_space<vmem>>, %arg9: memref<320x288xf32, #tpu.memory_space<vmem>>) attributes {dimension_semantics = [], scalar_prefetch = 0 : i64, scratch_operands = 2 : i64, tpu.core_type = #tpu.core_type<tc>} {
    %c0 = arith.constant 0 : index
    %c0_0 = arith.constant 0 : index
    %0 = vector.load %arg0[%c0, %c0_0] : memref<1152x32xbf16, #tpu.memory_space<vmem>>, vector<1152x32xbf16>
    %c0_1 = arith.constant 0 : index
    %c0_2 = arith.constant 0 : index
    %1 = vector.load %arg1[%c0_1, %c0_2] : memref<32x32xbf16, #tpu.memory_space<vmem>>, vector<32x32xbf16>
    %cst = arith.constant dense<0.000000e+00> : vector<1152x32xf32>
    %2 = tpu.matmul %0, %1, %cst {dimension_numbers = #tpu.dot_dimension_numbers<[1], [0], [0], [1], [0, 0, 1, 1], [], []>} : vector<1152x32xbf16>, vector<32x32xbf16>, vector<1152x32xf32> -> vector<1152x32xf32>
    %cst_3 = arith.constant dense<0.000000e+00> : vector<32xf32>
    %3 = vector.multi_reduction <add>, %2, %cst_3 [0] : vector<1152x32xf32> to vector<32xf32>
    %4 = vector.shape_cast %3 : vector<32xf32> to vector<1x32xf32>
    %5 = arith.mulf %2, %2 : vector<1152x32xf32>
    %cst_4 = arith.constant dense<0.000000e+00> : vector<32xf32>
    %6 = vector.multi_reduction <add>, %5, %cst_4 [0] : vector<1152x32xf32> to vector<32xf32>
    %7 = vector.shape_cast %6 : vector<32xf32> to vector<1x32xf32>
    %cst_5 = arith.constant 8.68055562E-4 : f32
    %8 = vector.broadcast %cst_5 : f32 to vector<1x32xf32>
    %9 = arith.mulf %4, %8 : vector<1x32xf32>
    %cst_6 = arith.constant 8.68055562E-4 : f32
    %10 = vector.broadcast %cst_6 : f32 to vector<1x32xf32>
    %11 = arith.mulf %7, %10 : vector<1x32xf32>
    %12 = arith.mulf %9, %9 : vector<1x32xf32>
    %13 = arith.subf %11, %12 : vector<1x32xf32>
    %cst_7 = arith.constant 9.99999974E-6 : f32
    %14 = vector.broadcast %cst_7 : f32 to vector<1x32xf32>
    %15 = arith.addf %13, %14 : vector<1x32xf32>
    %16 = math.rsqrt %15 : vector<1x32xf32>
    %c0_8 = arith.constant 0 : index
    %c0_9 = arith.constant 0 : index
    %17 = vector.load %arg3[%c0_8, %c0_9] : memref<1x32xf32, #tpu.memory_space<vmem>>, vector<1x32xf32>
    %18 = arith.mulf %16, %17 : vector<1x32xf32>
    %c0_10 = arith.constant 0 : index
    %c0_11 = arith.constant 0 : index
    %19 = vector.load %arg4[%c0_10, %c0_11] : memref<1x32xf32, #tpu.memory_space<vmem>>, vector<1x32xf32>
    %20 = arith.mulf %9, %18 : vector<1x32xf32>
    %21 = arith.subf %19, %20 : vector<1x32xf32>
    %22 = vector.broadcast %18 : vector<1x32xf32> to vector<1152x32xf32>
    %23 = arith.mulf %2, %22 : vector<1152x32xf32>
    %24 = vector.broadcast %21 : vector<1x32xf32> to vector<1152x32xf32>
    %25 = arith.addf %23, %24 : vector<1152x32xf32>
    %cst_12 = arith.constant 0.000000e+00 : f32
    %26 = vector.broadcast %cst_12 : f32 to vector<1152x32xf32>
    %27 = arith.maximumf %25, %26 : vector<1152x32xf32>
    %28 = arith.truncf %27 : vector<1152x32xf32> to vector<1152x32xbf16>
    %c0_13 = arith.constant 0 : index
    %c0_14 = arith.constant 0 : index
    %29 = vector.load %arg8[%c0_13, %c0_14] : memref<1184x32xbf16, #tpu.memory_space<vmem>>, vector<1152x32xbf16>
    tpu.vector_store %arg8[%c0_13, %c0_14], %28 {strides = array<i32>} : memref<1184x32xbf16, #tpu.memory_space<vmem>>, vector<1152x32xbf16>,
    %cst_15 = arith.constant 0.000000e+00 : bf16
    %30 = vector.broadcast %cst_15 : bf16 to vector<32x32xbf16>
    %c1152 = arith.constant 1152 : index
    %c0_16 = arith.constant 0 : index
    %31 = vector.load %arg8[%c1152, %c0_16] : memref<1184x32xbf16, #tpu.memory_space<vmem>>, vector<32x32xbf16>
    tpu.vector_store %arg8[%c1152, %c0_16], %30 {strides = array<i32>} : memref<1184x32xbf16, #tpu.memory_space<vmem>>, vector<32x32xbf16>,
    %cst_17 = arith.constant 0.000000e+00 : f32
    %32 = vector.broadcast %cst_17 : f32 to vector<288x32xf32>
    %c0_18 = arith.constant 0 : index
    %c0_19 = arith.constant 0 : index
    %33 = vector.load %arg8[%c0_18, %c0_19] : memref<1184x32xbf16, #tpu.memory_space<vmem>>, vector<320x32xbf16>
    %c0_20 = arith.constant 0 : index
    %c0_21 = arith.constant 0 : index
    %34 = vector.load %arg2[%c0_20, %c0_21] : memref<128x288xbf16, #tpu.memory_space<vmem>>, vector<32x288xbf16>
    %cst_22 = arith.constant dense<0.000000e+00> : vector<320x288xf32>
    %35 = tpu.matmul %33, %34, %cst_22 {dimension_numbers = #tpu.dot_dimension_numbers<[1], [0], [0], [1], [0, 0, 1, 1], [], []>} : vector<320x32xbf16>, vector<32x288xbf16>, vector<320x288xf32> -> vector<320x288xf32>
    %c0_23 = arith.constant 0 : index
    %c0_24 = arith.constant 0 : index
    %36 = vector.load %arg9[%c0_23, %c0_24] : memref<320x288xf32, #tpu.memory_space<vmem>>, vector<320x288xf32>
    tpu.vector_store %arg9[%c0_23, %c0_24], %35 {strides = array<i32>} : memref<320x288xf32, #tpu.memory_space<vmem>>, vector<320x288xf32>,
    %c0_25 = arith.constant 0 : index
    %c0_26 = arith.constant 0 : index
    %37 = vector.load %arg9[%c0_25, %c0_26] : memref<320x288xf32, #tpu.memory_space<vmem>>, vector<288x32xf32>
    %38 = arith.addf %32, %37 : vector<288x32xf32>
    %c1 = arith.constant 1 : index
    %c32 = arith.constant 32 : index
    %39 = vector.load %arg9[%c1, %c32] : memref<320x288xf32, #tpu.memory_space<vmem>>, vector<288x32xf32>
    %40 = arith.addf %38, %39 : vector<288x32xf32>
    %c2 = arith.constant 2 : index
    %c64 = arith.constant 64 : index
    %41 = vector.load %arg9[%c2, %c64] : memref<320x288xf32, #tpu.memory_space<vmem>>, vector<288x32xf32>
    %42 = arith.addf %40, %41 : vector<288x32xf32>
    %c12 = arith.constant 12 : index
    %c96 = arith.constant 96 : index
    %43 = vector.load %arg9[%c12, %c96] : memref<320x288xf32, #tpu.memory_space<vmem>>, vector<288x32xf32>
    %44 = arith.addf %42, %43 : vector<288x32xf32>
    %c13 = arith.constant 13 : index
    %c128 = arith.constant 128 : index
    %45 = vector.load %arg9[%c13, %c128] : memref<320x288xf32, #tpu.memory_space<vmem>>, vector<288x32xf32>
    %46 = arith.addf %44, %45 : vector<288x32xf32>
    %c14 = arith.constant 14 : index
    %c160 = arith.constant 160 : index
    %47 = vector.load %arg9[%c14, %c160] : memref<320x288xf32, #tpu.memory_space<vmem>>, vector<288x32xf32>
    %48 = arith.addf %46, %47 : vector<288x32xf32>
    %c24 = arith.constant 24 : index
    %c192 = arith.constant 192 : index
    %49 = vector.load %arg9[%c24, %c192] : memref<320x288xf32, #tpu.memory_space<vmem>>, vector<288x32xf32>
    %50 = arith.addf %48, %49 : vector<288x32xf32>
    %c25 = arith.constant 25 : index
    %c224 = arith.constant 224 : index
    %51 = vector.load %arg9[%c25, %c224] : memref<320x288xf32, #tpu.memory_space<vmem>>, vector<288x32xf32>
    %52 = arith.addf %50, %51 : vector<288x32xf32>
    %c26 = arith.constant 26 : index
    %c256 = arith.constant 256 : index
    %53 = vector.load %arg9[%c26, %c256] : memref<320x288xf32, #tpu.memory_space<vmem>>, vector<288x32xf32>
    %54 = arith.addf %52, %53 : vector<288x32xf32>
    %c288 = arith.constant 288 : index
    %c0_27 = arith.constant 0 : index
    %55 = vector.load %arg8[%c288, %c0_27] : memref<1184x32xbf16, #tpu.memory_space<vmem>>, vector<320x32xbf16>
    %c32_28 = arith.constant 32 : index
    %c0_29 = arith.constant 0 : index
    %56 = vector.load %arg2[%c32_28, %c0_29] : memref<128x288xbf16, #tpu.memory_space<vmem>>, vector<32x288xbf16>
    %cst_30 = arith.constant dense<0.000000e+00> : vector<320x288xf32>
    %57 = tpu.matmul %55, %56, %cst_30 {dimension_numbers = #tpu.dot_dimension_numbers<[1], [0], [0], [1], [0, 0, 1, 1], [], []>} : vector<320x32xbf16>, vector<32x288xbf16>, vector<320x288xf32> -> vector<320x288xf32>
    %c0_31 = arith.constant 0 : index
    %c0_32 = arith.constant 0 : index
    %58 = vector.load %arg9[%c0_31, %c0_32] : memref<320x288xf32, #tpu.memory_space<vmem>>, vector<320x288xf32>
    tpu.vector_store %arg9[%c0_31, %c0_32], %57 {strides = array<i32>} : memref<320x288xf32, #tpu.memory_space<vmem>>, vector<320x288xf32>,
    %c0_33 = arith.constant 0 : index
    %c0_34 = arith.constant 0 : index
    %59 = vector.load %arg9[%c0_33, %c0_34] : memref<320x288xf32, #tpu.memory_space<vmem>>, vector<288x32xf32>
    %60 = arith.addf %54, %59 : vector<288x32xf32>
    %c1_35 = arith.constant 1 : index
    %c32_36 = arith.constant 32 : index
    %61 = vector.load %arg9[%c1_35, %c32_36] : memref<320x288xf32, #tpu.memory_space<vmem>>, vector<288x32xf32>
    %62 = arith.addf %60, %61 : vector<288x32xf32>
    %c12_37 = arith.constant 12 : index
    %c64_38 = arith.constant 64 : index
    %63 = vector.load %arg9[%c12_37, %c64_38] : memref<320x288xf32, #tpu.memory_space<vmem>>, vector<288x32xf32>
    %64 = arith.addf %62, %63 : vector<288x32xf32>
    %c13_39 = arith.constant 13 : index
    %c96_40 = arith.constant 96 : index
    %65 = vector.load %arg9[%c13_39, %c96_40] : memref<320x288xf32, #tpu.memory_space<vmem>>, vector<288x32xf32>
    %66 = arith.addf %64, %65 : vector<288x32xf32>
    %c24_41 = arith.constant 24 : index
    %c128_42 = arith.constant 128 : index
    %67 = vector.load %arg9[%c24_41, %c128_42] : memref<320x288xf32, #tpu.memory_space<vmem>>, vector<288x32xf32>
    %68 = arith.addf %66, %67 : vector<288x32xf32>
    %c25_43 = arith.constant 25 : index
    %c160_44 = arith.constant 160 : index
    %69 = vector.load %arg9[%c25_43, %c160_44] : memref<320x288xf32, #tpu.memory_space<vmem>>, vector<288x32xf32>
    %70 = arith.addf %68, %69 : vector<288x32xf32>
    %c576 = arith.constant 576 : index
    %c0_45 = arith.constant 0 : index
    %71 = vector.load %arg8[%c576, %c0_45] : memref<1184x32xbf16, #tpu.memory_space<vmem>>, vector<320x32xbf16>
    %c64_46 = arith.constant 64 : index
    %c0_47 = arith.constant 0 : index
    %72 = vector.load %arg2[%c64_46, %c0_47] : memref<128x288xbf16, #tpu.memory_space<vmem>>, vector<32x288xbf16>
    %cst_48 = arith.constant dense<0.000000e+00> : vector<320x288xf32>
    %73 = tpu.matmul %71, %72, %cst_48 {dimension_numbers = #tpu.dot_dimension_numbers<[1], [0], [0], [1], [0, 0, 1, 1], [], []>} : vector<320x32xbf16>, vector<32x288xbf16>, vector<320x288xf32> -> vector<320x288xf32>
    %c0_49 = arith.constant 0 : index
    %c0_50 = arith.constant 0 : index
    %74 = vector.load %arg9[%c0_49, %c0_50] : memref<320x288xf32, #tpu.memory_space<vmem>>, vector<320x288xf32>
    tpu.vector_store %arg9[%c0_49, %c0_50], %73 {strides = array<i32>} : memref<320x288xf32, #tpu.memory_space<vmem>>, vector<320x288xf32>,
    %c0_51 = arith.constant 0 : index
    %c0_52 = arith.constant 0 : index
    %75 = vector.load %arg9[%c0_51, %c0_52] : memref<320x288xf32, #tpu.memory_space<vmem>>, vector<288x32xf32>
    %76 = arith.addf %70, %75 : vector<288x32xf32>
    %c1_53 = arith.constant 1 : index
    %c32_54 = arith.constant 32 : index
    %77 = vector.load %arg9[%c1_53, %c32_54] : memref<320x288xf32, #tpu.memory_space<vmem>>, vector<288x32xf32>
    %78 = arith.addf %76, %77 : vector<288x32xf32>
    %c2_55 = arith.constant 2 : index
    %c64_56 = arith.constant 64 : index
    %79 = vector.load %arg9[%c2_55, %c64_56] : memref<320x288xf32, #tpu.memory_space<vmem>>, vector<288x32xf32>
    %80 = arith.addf %78, %79 : vector<288x32xf32>
    %c12_57 = arith.constant 12 : index
    %c96_58 = arith.constant 96 : index
    %81 = vector.load %arg9[%c12_57, %c96_58] : memref<320x288xf32, #tpu.memory_space<vmem>>, vector<288x32xf32>
    %82 = arith.addf %80, %81 : vector<288x32xf32>
    %c13_59 = arith.constant 13 : index
    %c128_60 = arith.constant 128 : index
    %83 = vector.load %arg9[%c13_59, %c128_60] : memref<320x288xf32, #tpu.memory_space<vmem>>, vector<288x32xf32>
    %84 = arith.addf %82, %83 : vector<288x32xf32>
    %c14_61 = arith.constant 14 : index
    %c160_62 = arith.constant 160 : index
    %85 = vector.load %arg9[%c14_61, %c160_62] : memref<320x288xf32, #tpu.memory_space<vmem>>, vector<288x32xf32>
    %86 = arith.addf %84, %85 : vector<288x32xf32>
    %c864 = arith.constant 864 : index
    %c0_63 = arith.constant 0 : index
    %87 = vector.load %arg8[%c864, %c0_63] : memref<1184x32xbf16, #tpu.memory_space<vmem>>, vector<320x32xbf16>
    %c96_64 = arith.constant 96 : index
    %c0_65 = arith.constant 0 : index
    %88 = vector.load %arg2[%c96_64, %c0_65] : memref<128x288xbf16, #tpu.memory_space<vmem>>, vector<32x288xbf16>
    %cst_66 = arith.constant dense<0.000000e+00> : vector<320x288xf32>
    %89 = tpu.matmul %87, %88, %cst_66 {dimension_numbers = #tpu.dot_dimension_numbers<[1], [0], [0], [1], [0, 0, 1, 1], [], []>} : vector<320x32xbf16>, vector<32x288xbf16>, vector<320x288xf32> -> vector<320x288xf32>
    %c0_67 = arith.constant 0 : index
    %c0_68 = arith.constant 0 : index
    %90 = vector.load %arg9[%c0_67, %c0_68] : memref<320x288xf32, #tpu.memory_space<vmem>>, vector<320x288xf32>
    tpu.vector_store %arg9[%c0_67, %c0_68], %89 {strides = array<i32>} : memref<320x288xf32, #tpu.memory_space<vmem>>, vector<320x288xf32>,
    %c0_69 = arith.constant 0 : index
    %c0_70 = arith.constant 0 : index
    %91 = vector.load %arg9[%c0_69, %c0_70] : memref<320x288xf32, #tpu.memory_space<vmem>>, vector<288x32xf32>
    %92 = arith.addf %86, %91 : vector<288x32xf32>
    %c1_71 = arith.constant 1 : index
    %c32_72 = arith.constant 32 : index
    %93 = vector.load %arg9[%c1_71, %c32_72] : memref<320x288xf32, #tpu.memory_space<vmem>>, vector<288x32xf32>
    %94 = arith.addf %92, %93 : vector<288x32xf32>
    %c12_73 = arith.constant 12 : index
    %c64_74 = arith.constant 64 : index
    %95 = vector.load %arg9[%c12_73, %c64_74] : memref<320x288xf32, #tpu.memory_space<vmem>>, vector<288x32xf32>
    %96 = arith.addf %94, %95 : vector<288x32xf32>
    %c13_75 = arith.constant 13 : index
    %c96_76 = arith.constant 96 : index
    %97 = vector.load %arg9[%c13_75, %c96_76] : memref<320x288xf32, #tpu.memory_space<vmem>>, vector<288x32xf32>
    %98 = arith.addf %96, %97 : vector<288x32xf32>
    %99 = tpu.iota {dimensions = array<i32: 0>} : vector<288x32xi32>
    %100 = arith.sitofp %99 : vector<288x32xi32> to vector<288x32xf32>
    %cst_77 = arith.constant 5.000000e-01 : f32
    %101 = vector.broadcast %cst_77 : f32 to vector<288x32xf32>
    %102 = arith.addf %100, %101 : vector<288x32xf32>
    %cst_78 = arith.constant 0.0833333358 : f32
    %103 = vector.broadcast %cst_78 : f32 to vector<288x32xf32>
    %104 = arith.mulf %102, %103 : vector<288x32xf32>
    %105 = arith.fptosi %104 : vector<288x32xf32> to vector<288x32xi32>
    %c12_i32 = arith.constant 12 : i32
    %106 = vector.broadcast %c12_i32 : i32 to vector<288x32xi32>
    %107 = arith.muli %105, %106 : vector<288x32xi32>
    %108 = arith.subi %99, %107 : vector<288x32xi32>
    %109 = arith.sitofp %105 : vector<288x32xi32> to vector<288x32xf32>
    %cst_79 = arith.constant 5.000000e-01 : f32
    %110 = vector.broadcast %cst_79 : f32 to vector<288x32xf32>
    %111 = arith.addf %109, %110 : vector<288x32xf32>
    %cst_80 = arith.constant 0.0833333358 : f32
    %112 = vector.broadcast %cst_80 : f32 to vector<288x32xf32>
    %113 = arith.mulf %111, %112 : vector<288x32xf32>
    %114 = arith.fptosi %113 : vector<288x32xf32> to vector<288x32xi32>
    %c12_i32_81 = arith.constant 12 : i32
    %115 = vector.broadcast %c12_i32_81 : i32 to vector<288x32xi32>
    %116 = arith.muli %114, %115 : vector<288x32xi32>
    %117 = arith.subi %105, %116 : vector<288x32xi32>
    %c10_i32 = arith.constant 10 : i32
    %118 = vector.broadcast %c10_i32 : i32 to vector<288x32xi32>
    %119 = arith.cmpi slt, %117, %118 : vector<288x32xi32>
    %c10_i32_82 = arith.constant 10 : i32
    %120 = vector.broadcast %c10_i32_82 : i32 to vector<288x32xi32>
    %121 = arith.cmpi slt, %108, %120 : vector<288x32xi32>
    %122 = arith.andi %119, %121 : vector<288x32xi1>
    %123 = arith.extui %122 : vector<288x32xi1> to vector<288x32xi32>
    %124 = arith.sitofp %123 : vector<288x32xi32> to vector<288x32xf32>
    %125 = arith.mulf %98, %124 : vector<288x32xf32>
    %cst_83 = arith.constant dense<0.000000e+00> : vector<32xf32>
    %126 = vector.multi_reduction <add>, %125, %cst_83 [0] : vector<288x32xf32> to vector<32xf32>
    %127 = vector.shape_cast %126 : vector<32xf32> to vector<1x32xf32>
    %cst_84 = arith.constant 5.000000e-03 : f32
    %128 = vector.broadcast %cst_84 : f32 to vector<1x32xf32>
    %129 = arith.mulf %127, %128 : vector<1x32xf32>
    %130 = arith.mulf %125, %125 : vector<288x32xf32>
    %cst_85 = arith.constant dense<0.000000e+00> : vector<32xf32>
    %131 = vector.multi_reduction <add>, %130, %cst_85 [0] : vector<288x32xf32> to vector<32xf32>
    %132 = vector.shape_cast %131 : vector<32xf32> to vector<1x32xf32>
    %cst_86 = arith.constant 5.000000e-03 : f32
    %133 = vector.broadcast %cst_86 : f32 to vector<1x32xf32>
    %134 = arith.mulf %132, %133 : vector<1x32xf32>
    %135 = arith.mulf %129, %129 : vector<1x32xf32>
    %136 = arith.subf %134, %135 : vector<1x32xf32>
    %cst_87 = arith.constant 9.99999974E-6 : f32
    %137 = vector.broadcast %cst_87 : f32 to vector<1x32xf32>
    %138 = arith.addf %136, %137 : vector<1x32xf32>
    %139 = math.rsqrt %138 : vector<1x32xf32>
    %c0_88 = arith.constant 0 : index
    %c0_89 = arith.constant 0 : index
    %140 = vector.load %arg5[%c0_88, %c0_89] : memref<1x32xf32, #tpu.memory_space<vmem>>, vector<1x32xf32>
    %141 = arith.mulf %139, %140 : vector<1x32xf32>
    %c0_90 = arith.constant 0 : index
    %c0_91 = arith.constant 0 : index
    %142 = vector.load %arg6[%c0_90, %c0_91] : memref<1x32xf32, #tpu.memory_space<vmem>>, vector<1x32xf32>
    %143 = arith.mulf %129, %141 : vector<1x32xf32>
    %144 = arith.subf %142, %143 : vector<1x32xf32>
    %145 = vector.broadcast %141 : vector<1x32xf32> to vector<288x32xf32>
    %146 = arith.mulf %98, %145 : vector<288x32xf32>
    %147 = vector.broadcast %144 : vector<1x32xf32> to vector<288x32xf32>
    %148 = arith.addf %146, %147 : vector<288x32xf32>
    %cst_92 = arith.constant 0.000000e+00 : f32
    %149 = vector.broadcast %cst_92 : f32 to vector<288x32xf32>
    %150 = arith.maximumf %148, %149 : vector<288x32xf32>
    %c0_93 = arith.constant 0 : index
    %c0_94 = arith.constant 0 : index
    %151 = vector.load %arg7[%c0_93, %c0_94] : memref<288x32xf32, #tpu.memory_space<vmem>>, vector<288x32xf32>
    tpu.vector_store %arg7[%c0_93, %c0_94], %150 {strides = array<i32>} : memref<288x32xf32, #tpu.memory_space<vmem>>, vector<288x32xf32>,
    return
  }
}

</mosaic_0001>

<llo_original>
// kernel: mnist_features.1
$region0: #{mnist_features.1}
  #allocation0 [shape = 'u32[]', space=smem, size = 0x4, offset = 0x4, fixed_abs, tag = 'smem constant byte address 0x4 - core index']
  #allocation1 [shape = 'u32[144,128]{1,0:T(1,128)}', space=vmem, size = 0x12000, scoped, tag = 'internal scratch']
  #allocation2 [shape = 'bf16[1184,32]{1,0:T(8,128)(2,1)}', space=vmem, size = 0x4a000, scoped, tag = 'scratch operand']
  #allocation3 [shape = 'f32[320,288]{1,0:T(8,128)}', space=vmem, size = 0x78000, scoped, tag = 'scratch operand']
  %s0 = inlined_call_operand.vmem [shape: bf16[1152,32], index: 0, kind: input, shape index: {}]
  %s1 = inlined_call_operand.vmem [shape: bf16[32,32], index: 1, kind: input, shape index: {}]
  %s2 = inlined_call_operand.vmem [shape: bf16[128,288], index: 2, kind: input, shape index: {}]
  %s3 = inlined_call_operand.vmem [shape: f32[1,32], index: 3, kind: input, shape index: {}]
  %s4 = inlined_call_operand.vmem [shape: f32[1,32], index: 4, kind: input, shape index: {}]
  %s5 = inlined_call_operand.vmem [shape: f32[1,32], index: 5, kind: input, shape index: {}]
  %s6 = inlined_call_operand.vmem [shape: f32[1,32], index: 6, kind: input, shape index: {}]
  %s7 = inlined_call_operand.vmem [shape: f32[288,32], index: 7, kind: output, shape index: {}]
  %s8 = sld [smem:[#allocation0]]
  $region38: #{mnist_features.1} parent=0
    _
  %s10 = ssub.s32 1, %s8
  %s11 = scalar_select 0, %s10, %s8
  // Predicated region
  $region2: #{mnist_features.1} parent=0 // pred_check
    _
  $region3: #{mnist_features.1} parent=0 // pred_check_branch
    %13 = sbr.rel (0) target = $region5
  $region4: #{mnist_features.1} parent=0 // pred_region
    _
  $region5: #{mnist_features.1} parent=0 // pred_fallthru
    _
  // Predicated region
  $region6: #{mnist_features.1} parent=0 // pred_check
    _
  $region7: #{mnist_features.1} parent=0 // pred_check_branch
    %15 = sbr.rel (0) target = $region9
  $region8: #{mnist_features.1} parent=0 // pred_region
    _
  $region9: #{mnist_features.1} parent=0 // pred_fallthru
    _
  // Predicated region
  $region10: #{mnist_features.1} parent=0 // pred_check
    _
  $region11: #{mnist_features.1} parent=0 // pred_check_branch
    %17 = sbr.rel (0) target = $region13
  $region12: #{mnist_features.1} parent=0 // pred_region
    _
  $region13: #{mnist_features.1} parent=0 // pred_fallthru
    _
  // Predicated region
  $region14: #{mnist_features.1} parent=0 // pred_check
    _
  $region15: #{mnist_features.1} parent=0 // pred_check_branch
    %19 = sbr.rel (0) target = $region17
  $region16: #{mnist_features.1} parent=0 // pred_region
    _
  $region17: #{mnist_features.1} parent=0 // pred_fallthru
    _
  // Predicated region
  $region18: #{mnist_features.1} parent=0 // pred_check
    _
  $region19: #{mnist_features.1} parent=0 // pred_check_branch
    %21 = sbr.rel (0) target = $region21
  $region20: #{mnist_features.1} parent=0 // pred_region
    _
  $region21: #{mnist_features.1} parent=0 // pred_fallthru
    _
  // Predicated region
  $region22: #{mnist_features.1} parent=0 // pred_check
    _
  $region23: #{mnist_features.1} parent=0 // pred_check_branch
    %23 = sbr.rel (0) target = $region25
  $region24: #{mnist_features.1} parent=0 // pred_region
    _
  $region25: #{mnist_features.1} parent=0 // pred_fallthru
    _
  // Predicated region
  $region26: #{mnist_features.1} parent=0 // pred_check
    _
  $region27: #{mnist_features.1} parent=0 // pred_check_branch
    %25 = sbr.rel (0) target = $region29
  $region28: #{mnist_features.1} parent=0 // pred_region
    _
  $region29: #{mnist_features.1} parent=0 // pred_fallthru
    _
  %v27 = vld [vmem:[%s0] sm:$0xf]
  %v28 = vld [vmem:[%s0 + $0x4] sm:$0xf]
  %v29 = vld [vmem:[%s0 + $0x8] sm:$0xf]
  %v30 = vld [vmem:[%s0 + $0xc] sm:$0xf]
  %v31 = vld [vmem:[%s0 + $0x10] sm:$0xf]
  %v32 = vld [vmem:[%s0 + $0x14] sm:$0xf]
  %v33 = vld [vmem:[%s0 + $0x18] sm:$0xf]
  %v34 = vld [vmem:[%s0 + $0x1c] sm:$0xf]
  %v35 = vld [vmem:[%s0 + $0x20] sm:$0xf]
  %v36 = vld [vmem:[%s0 + $0x24] sm:$0xf]
  %v37 = vld [vmem:[%s0 + $0x28] sm:$0xf]
  %v38 = vld [vmem:[%s0 + $0x2c] sm:$0xf]
  %v39 = vld [vmem:[%s0 + $0x30] sm:$0xf]
  %v40 = vld [vmem:[%s0 + $0x34] sm:$0xf]
  %v41 = vld [vmem:[%s0 + $0x38] sm:$0xf]
  %v42 = vld [vmem:[%s0 + $0x3c] sm:$0xf]
  %v43 = vld [vmem:[%s0 + $0x40] sm:$0xf]
  %v44 = vld [vmem:[%s0 + $0x44] sm:$0xf]
  %v45 = vld [vmem:[%s0 + $0x48] sm:$0xf]
  %v46 = vld [vmem:[%s0 + $0x4c] sm:$0xf]
  %v47 = vld [vmem:[%s0 + $0x50] sm:$0xf]
  %v48 = vld [vmem:[%s0 + $0x54] sm:$0xf]
  %v49 = vld [vmem:[%s0 + $0x58] sm:$0xf]
  %v50 = vld [vmem:[%s0 + $0x5c] sm:$0xf]
  %v51 = vld [vmem:[%s0 + $0x60] sm:$0xf]
  %v52 = vld [vmem:[%s0 + $0x64] sm:$0xf]
  %v53 = vld [vmem:[%s0 + $0x68] sm:$0xf]
  %v54 = vld [vmem:[%s0 + $0x6c] sm:$0xf]
  %v55 = vld [vmem:[%s0 + $0x70] sm:$0xf]
  %v56 = vld [vmem:[%s0 + $0x74] sm:$0xf]
  %v57 = vld [vmem:[%s0 + $0x78] sm:$0xf]
  %v58 = vld [vmem:[%s0 + $0x7c] sm:$0xf]
  %v59 = vld [vmem:[%s0 + $0x80] sm:$0xf]
  %v60 = vld [vmem:[%s0 + $0x84] sm:$0xf]
  %v61 = vld [vmem:[%s0 + $0x88] sm:$0xf]
  %v62 = vld [vmem:[%s0 + $0x8c] sm:$0xf]
  %v63 = vld [vmem:[%s0 + $0x90] sm:$0xf]
  %v64 = vld [vmem:[%s0 + $0x94] sm:$0xf]
  %v65 = vld [vmem:[%s0 + $0x98] sm:$0xf]
  %v66 = vld [vmem:[%s0 + $0x9c] sm:$0xf]
  %v67 = vld [vmem:[%s0 + $0xa0] sm:$0xf]
  %v68 = vld [vmem:[%s0 + $0xa4] sm:$0xf]
  %v69 = vld [vmem:[%s0 + $0xa8] sm:$0xf]
  %v70 = vld [vmem:[%s0 + $0xac] sm:$0xf]
  %v71 = vld [vmem:[%s0 + $0xb0] sm:$0xf]
  %v72 = vld [vmem:[%s0 + $0xb4] sm:$0xf]
  %v73 = vld [vmem:[%s0 + $0xb8] sm:$0xf]
  %v74 = vld [vmem:[%s0 + $0xbc] sm:$0xf]
  %v75 = vld [vmem:[%s0 + $0xc0] sm:$0xf]
  %v76 = vld [vmem:[%s0 + $0xc4] sm:$0xf]
  %v77 = vld [vmem:[%s0 + $0xc8] sm:$0xf]
  %v78 = vld [vmem:[%s0 + $0xcc] sm:$0xf]
  %v79 = vld [vmem:[%s0 + $0xd0] sm:$0xf]
  %v80 = vld [vmem:[%s0 + $0xd4] sm:$0xf]
  %v81 = vld [vmem:[%s0 + $0xd8] sm:$0xf]
  %v82 = vld [vmem:[%s0 + $0xdc] sm:$0xf]
  %v83 = vld [vmem:[%s0 + $0xe0] sm:$0xf]
  %v84 = vld [vmem:[%s0 + $0xe4] sm:$0xf]
  %v85 = vld [vmem:[%s0 + $0xe8] sm:$0xf]
  %v86 = vld [vmem:[%s0 + $0xec] sm:$0xf]
  %v87 = vld [vmem:[%s0 + $0xf0] sm:$0xf]
  %v88 = vld [vmem:[%s0 + $0xf4] sm:$0xf]
  %v89 = vld [vmem:[%s0 + $0xf8] sm:$0xf]
  %v90 = vld [vmem:[%s0 + $0xfc] sm:$0xf]
  %v91 = vld [vmem:[%s0 + $0x100] sm:$0xf]
  %v92 = vld [vmem:[%s0 + $0x104] sm:$0xf]
  %v93 = vld [vmem:[%s0 + $0x108] sm:$0xf]
  %v94 = vld [vmem:[%s0 + $0x10c] sm:$0xf]
  %v95 = vld [vmem:[%s0 + $0x110] sm:$0xf]
  %v96 = vld [vmem:[%s0 + $0x114] sm:$0xf]
  %v97 = vld [vmem:[%s0 + $0x118] sm:$0xf]
  %v98 = vld [vmem:[%s0 + $0x11c] sm:$0xf]
  %v99 = vld [vmem:[%s0 + $0x120] sm:$0xf]
  %v100 = vld [vmem:[%s0 + $0x124] sm:$0xf]
  %v101 = vld [vmem:[%s0 + $0x128] sm:$0xf]
  %v102 = vld [vmem:[%s0 + $0x12c] sm:$0xf]
  %v103 = vld [vmem:[%s0 + $0x130] sm:$0xf]
  %v104 = vld [vmem:[%s0 + $0x134] sm:$0xf]
  %v105 = vld [vmem:[%s0 + $0x138] sm:$0xf]
  %v106 = vld [vmem:[%s0 + $0x13c] sm:$0xf]
  %v107 = vld [vmem:[%s0 + $0x140] sm:$0xf]
  %v108 = vld [vmem:[%s0 + $0x144] sm:$0xf]
  %v109 = vld [vmem:[%s0 + $0x148] sm:$0xf]
  %v110 = vld [vmem:[%s0 + $0x14c] sm:$0xf]
  %v111 = vld [vmem:[%s0 + $0x150] sm:$0xf]
  %v112 = vld [vmem:[%s0 + $0x154] sm:$0xf]
  %v113 = vld [vmem:[%s0 + $0x158] sm:$0xf]
  %v114 = vld [vmem:[%s0 + $0x15c] sm:$0xf]
  %v115 = vld [vmem:[%s0 + $0x160] sm:$0xf]
  %v116 = vld [vmem:[%s0 + $0x164] sm:$0xf]
  %v117 = vld [vmem:[%s0 + $0x168] sm:$0xf]
  %v118 = vld [vmem:[%s0 + $0x16c] sm:$0xf]
  %v119 = vld [vmem:[%s0 + $0x170] sm:$0xf]
  %v120 = vld [vmem:[%s0 + $0x174] sm:$0xf]
  %v121 = vld [vmem:[%s0 + $0x178] sm:$0xf]
  %v122 = vld [vmem:[%s0 + $0x17c] sm:$0xf]
  %v123 = vld [vmem:[%s0 + $0x180] sm:$0xf]
  %v124 = vld [vmem:[%s0 + $0x184] sm:$0xf]
  %v125 = vld [vmem:[%s0 + $0x188] sm:$0xf]
  %v126 = vld [vmem:[%s0 + $0x18c] sm:$0xf]
  %v127 = vld [vmem:[%s0 + $0x190] sm:$0xf]
  %v128 = vld [vmem:[%s0 + $0x194] sm:$0xf]
  %v129 = vld [vmem:[%s0 + $0x198] sm:$0xf]
  %v130 = vld [vmem:[%s0 + $0x19c] sm:$0xf]
  %v131 = vld [vmem:[%s0 + $0x1a0] sm:$0xf]
  %v132 = vld [vmem:[%s0 + $0x1a4] sm:$0xf]
  %v133 = vld [vmem:[%s0 + $0x1a8] sm:$0xf]
  %v134 = vld [vmem:[%s0 + $0x1ac] sm:$0xf]
  %v135 = vld [vmem:[%s0 + $0x1b0] sm:$0xf]
  %v136 = vld [vmem:[%s0 + $0x1b4] sm:$0xf]
  %v137 = vld [vmem:[%s0 + $0x1b8] sm:$0xf]
  %v138 = vld [vmem:[%s0 + $0x1bc] sm:$0xf]
  %v139 = vld [vmem:[%s0 + $0x1c0] sm:$0xf]
  %v140 = vld [vmem:[%s0 + $0x1c4] sm:$0xf]
  %v141 = vld [vmem:[%s0 + $0x1c8] sm:$0xf]
  %v142 = vld [vmem:[%s0 + $0x1cc] sm:$0xf]
  %v143 = vld [vmem:[%s0 + $0x1d0] sm:$0xf]
  %v144 = vld [vmem:[%s0 + $0x1d4] sm:$0xf]
  %v145 = vld [vmem:[%s0 + $0x1d8] sm:$0xf]
  %v146 = vld [vmem:[%s0 + $0x1dc] sm:$0xf]
  %v147 = vld [vmem:[%s0 + $0x1e0] sm:$0xf]
  %v148 = vld [vmem:[%s0 + $0x1e4] sm:$0xf]
  %v149 = vld [vmem:[%s0 + $0x1e8] sm:$0xf]
  %v150 = vld [vmem:[%s0 + $0x1ec] sm:$0xf]
  %v151 = vld [vmem:[%s0 + $0x1f0] sm:$0xf]
  %v152 = vld [vmem:[%s0 + $0x1f4] sm:$0xf]
  %v153 = vld [vmem:[%s0 + $0x1f8] sm:$0xf]
  %v154 = vld [vmem:[%s0 + $0x1fc] sm:$0xf]
  %v155 = vld [vmem:[%s0 + $0x200] sm:$0xf]
  %v156 = vld [vmem:[%s0 + $0x204] sm:$0xf]
  %v157 = vld [vmem:[%s0 + $0x208] sm:$0xf]
  %v158 = vld [vmem:[%s0 + $0x20c] sm:$0xf]
  %v159 = vld [vmem:[%s0 + $0x210] sm:$0xf]
  %v160 = vld [vmem:[%s0 + $0x214] sm:$0xf]
  %v161 = vld [vmem:[%s0 + $0x218] sm:$0xf]
  %v162 = vld [vmem:[%s0 + $0x21c] sm:$0xf]
  %v163 = vld [vmem:[%s0 + $0x220] sm:$0xf]
  %v164 = vld [vmem:[%s0 + $0x224] sm:$0xf]
  %v165 = vld [vmem:[%s0 + $0x228] sm:$0xf]
  %v166 = vld [vmem:[%s0 + $0x22c] sm:$0xf]
  %v167 = vld [vmem:[%s0 + $0x230] sm:$0xf]
  %v168 = vld [vmem:[%s0 + $0x234] sm:$0xf]
  %v169 = vld [vmem:[%s0 + $0x238] sm:$0xf]
  %v170 = vld [vmem:[%s0 + $0x23c] sm:$0xf]
  %v171 = vld [vmem:[%s1] sm:$0xf]
  %v172 = vld [vmem:[%s1 + $0x4] sm:$0xf]
  %v173 = vld [vmem:[%s1 + $0x8] sm:$0xf]
  %v174 = vld [vmem:[%s1 + $0xc] sm:$0xf]
  %v319 = vunpack.c.l.b16 %v27
  %v320 = vunpack.c.l.b16 %v28
  %v321 = vunpack.c.l.b16 %v29
  %v322 = vunpack.c.l.b16 %v30
  %v323 = vunpack.c.l.b16 %v31
  %v324 = vunpack.c.l.b16 %v32
  %v325 = vunpack.c.l.b16 %v33
  %v326 = vunpack.c.l.b16 %v34
  %v327 = vunpack.c.l.b16 %v35
  %v328 = vunpack.c.l.b16 %v36
  %v329 = vunpack.c.l.b16 %v37
  %v330 = vunpack.c.l.b16 %v38
  %v331 = vunpack.c.l.b16 %v39
  %v332 = vunpack.c.l.b16 %v40
  %v333 = vunpack.c.l.b16 %v41
  %v334 = vunpack.c.l.b16 %v42
  %v335 = vunpack.c.l.b16 %v43
  %v336 = vunpack.c.l.b16 %v44
  %v337 = vunpack.c.l.b16 %v45
  %v338 = vunpack.c.l.b16 %v46
  %v339 = vunpack.c.l.b16 %v47
  %v340 = vunpack.c.l.b16 %v48
  %v341 = vunpack.c.l.b16 %v49
  %v342 = vunpack.c.l.b16 %v50
  %v343 = vunpack.c.l.b16 %v51
  %v344 = vunpack.c.l.b16 %v52
  %v345 = vunpack.c.l.b16 %v53
  %v346 = vunpack.c.l.b16 %v54
  %v347 = vunpack.c.l.b16 %v55
  %v348 = vunpack.c.l.b16 %v56
  %v349 = vunpack.c.l.b16 %v57
  %v350 = vunpack.c.l.b16 %v58
  %v351 = vunpack.c.l.b16 %v59
  %v352 = vunpack.c.l.b16 %v60
  %v353 = vunpack.c.l.b16 %v61
  %v354 = vunpack.c.l.b16 %v62
  %v355 = vunpack.c.l.b16 %v63
  %v356 = vunpack.c.l.b16 %v64
  %v357 = vunpack.c.l.b16 %v65
  %v358 = vunpack.c.l.b16 %v66
  %v359 = vunpack.c.l.b16 %v67
  %v360 = vunpack.c.l.b16 %v68
  %v361 = vunpack.c.l.b16 %v69
  %v362 = vunpack.c.l.b16 %v70
  %v363 = vunpack.c.l.b16 %v71
  %v364 = vunpack.c.l.b16 %v72
  %v365 = vunpack.c.l.b16 %v73
  %v366 = vunpack.c.l.b16 %v74
  %v367 = vunpack.c.l.b16 %v75
  %v368 = vunpack.c.l.b16 %v76
  %v369 = vunpack.c.l.b16 %v77
  %v370 = vunpack.c.l.b16 %v78
  %v371 = vunpack.c.l.b16 %v79
  %v372 = vunpack.c.l.b16 %v80
  %v373 = vunpack.c.l.b16 %v81
  %v374 = vunpack.c.l.b16 %v82
  %v375 = vunpack.c.l.b16 %v83
  %v376 = vunpack.c.l.b16 %v84
  %v377 = vunpack.c.l.b16 %v85
  %v378 = vunpack.c.l.b16 %v86
  %v379 = vunpack.c.l.b16 %v87
  %v380 = vunpack.c.l.b16 %v88
  %v381 = vunpack.c.l.b16 %v89
  %v382 = vunpack.c.l.b16 %v90
  %v383 = vunpack.c.l.b16 %v91
  %v384 = vunpack.c.l.b16 %v92
  %v385 = vunpack.c.l.b16 %v93
  %v386 = vunpack.c.l.b16 %v94
  %v387 = vunpack.c.l.b16 %v95
  %v388 = vunpack.c.l.b16 %v96
  %v389 = vunpack.c.l.b16 %v97
  %v390 = vunpack.c.l.b16 %v98
  %v391 = vunpack.c.l.b16 %v99
  %v392 = vunpack.c.l.b16 %v100
  %v393 = vunpack.c.l.b16 %v101
  %v394 = vunpack.c.l.b16 %v102
  %v395 = vunpack.c.l.b16 %v103
  %v396 = vunpack.c.l.b16 %v104
  %v397 = vunpack.c.l.b16 %v105
  %v398 = vunpack.c.l.b16 %v106
  %v399 = vunpack.c.l.b16 %v107
  %v400 = vunpack.c.l.b16 %v108
  %v401 = vunpack.c.l.b16 %v109
  %v402 = vunpack.c.l.b16 %v110
  %v403 = vunpack.c.l.b16 %v111
  %v404 = vunpack.c.l.b16 %v112
  %v405 = vunpack.c.l.b16 %v113
  %v406 = vunpack.c.l.b16 %v114
  %v407 = vunpack.c.l.b16 %v115
  %v408 = vunpack.c.l.b16 %v116
  %v409 = vunpack.c.l.b16 %v117
  %v410 = vunpack.c.l.b16 %v118
  %v411 = vunpack.c.l.b16 %v119
  %v412 = vunpack.c.l.b16 %v120
  %v413 = vunpack.c.l.b16 %v121
  %v414 = vunpack.c.l.b16 %v122
  %v415 = vunpack.c.l.b16 %v123
  %v416 = vunpack.c.l.b16 %v124
  %v417 = vunpack.c.l.b16 %v125
  %v418 = vunpack.c.l.b16 %v126
  %v419 = vunpack.c.l.b16 %v127
  %v420 = vunpack.c.l.b16 %v128
  %v421 = vunpack.c.l.b16 %v129
  %v422 = vunpack.c.l.b16 %v130
  %v423 = vunpack.c.l.b16 %v131
  %v424 = vunpack.c.l.b16 %v132
  %v425 = vunpack.c.l.b16 %v133
  %v426 = vunpack.c.l.b16 %v134
  %v427 = vunpack.c.l.b16 %v135
  %v428 = vunpack.c.l.b16 %v136
  %v429 = vunpack.c.l.b16 %v137
  %v430 = vunpack.c.l.b16 %v138
  %v431 = vunpack.c.l.b16 %v139
  %v432 = vunpack.c.l.b16 %v140
  %v433 = vunpack.c.l.b16 %v141
  %v434 = vunpack.c.l.b16 %v142
  %v435 = vunpack.c.l.b16 %v143
  %v436 = vunpack.c.l.b16 %v144
  %v437 = vunpack.c.l.b16 %v145
  %v438 = vunpack.c.l.b16 %v146
  %v439 = vunpack.c.l.b16 %v147
  %v440 = vunpack.c.l.b16 %v148
  %v441 = vunpack.c.l.b16 %v149
  %v442 = vunpack.c.l.b16 %v150
  %v443 = vunpack.c.l.b16 %v151
  %v444 = vunpack.c.l.b16 %v152
  %v445 = vunpack.c.l.b16 %v153
  %v446 = vunpack.c.l.b16 %v154
  %v447 = vunpack.c.l.b16 %v155
  %v448 = vunpack.c.l.b16 %v156
  %v449 = vunpack.c.l.b16 %v157
  %v450 = vunpack.c.l.b16 %v158
  %v451 = vunpack.c.l.b16 %v159
  %v452 = vunpack.c.l.b16 %v160
  %v453 = vunpack.c.l.b16 %v161
  %v454 = vunpack.c.l.b16 %v162
  %v455 = vunpack.c.l.b16 %v163
  %v456 = vunpack.c.l.b16 %v164
  %v457 = vunpack.c.l.b16 %v165
  %v458 = vunpack.c.l.b16 %v166
  %v459 = vunpack.c.l.b16 %v167
  %v460 = vunpack.c.l.b16 %v168
  %v461 = vunpack.c.l.b16 %v169
  %v462 = vunpack.c.l.b16 %v170
  %v463 = vpack.c.b16 %v320, %v319
  %v464 = vpack.c.b16 %v322, %v321
  %v465 = vpack.c.b16 %v324, %v323
  %v466 = vpack.c.b16 %v326, %v325
  %v467 = vpack.c.b16 %v328, %v327
  %v468 = vpack.c.b16 %v330, %v329
  %v469 = vpack.c.b16 %v332, %v331
  %v470 = vpack.c.b16 %v334, %v333
  %v471 = vpack.c.b16 %v336, %v335
  %v472 = vpack.c.b16 %v338, %v337
  %v473 = vpack.c.b16 %v340, %v339
  %v474 = vpack.c.b16 %v342, %v341
  %v475 = vpack.c.b16 %v344, %v343
  %v476 = vpack.c.b16 %v346, %v345
  %v477 = vpack.c.b16 %v348, %v347
  %v478 = vpack.c.b16 %v350, %v349
  %v479 = vpack.c.b16 %v352, %v351
  %v480 = vpack.c.b16 %v354, %v353
  %v481 = vpack.c.b16 %v356, %v355
  %v482 = vpack.c.b16 %v358, %v357
  %v483 = vpack.c.b16 %v360, %v359
  %v484 = vpack.c.b16 %v362, %v361
  %v485 = vpack.c.b16 %v364, %v363
  %v486 = vpack.c.b16 %v366, %v365
  %v487 = vpack.c.b16 %v368, %v367
  %v488 = vpack.c.b16 %v370, %v369
  %v489 = vpack.c.b16 %v372, %v371
  %v490 = vpack.c.b16 %v374, %v373
  %v491 = vpack.c.b16 %v376, %v375
  %v492 = vpack.c.b16 %v378, %v377
  %v493 = vpack.c.b16 %v380, %v379
  %v494 = vpack.c.b16 %v382, %v381
  %v495 = vpack.c.b16 %v384, %v383
  %v496 = vpack.c.b16 %v386, %v385
  %v497 = vpack.c.b16 %v388, %v387
  %v498 = vpack.c.b16 %v390, %v389
  %v499 = vpack.c.b16 %v392, %v391
  %v500 = vpack.c.b16 %v394, %v393
  %v501 = vpack.c.b16 %v396, %v395
  %v502 = vpack.c.b16 %v398, %v397
  %v503 = vpack.c.b16 %v400, %v399
  %v504 = vpack.c.b16 %v402, %v401
  %v505 = vpack.c.b16 %v404, %v403
  %v506 = vpack.c.b16 %v406, %v405
  %v507 = vpack.c.b16 %v408, %v407
  %v508 = vpack.c.b16 %v410, %v409
  %v509 = vpack.c.b16 %v412, %v411
  %v510 = vpack.c.b16 %v414, %v413
  %v511 = vpack.c.b16 %v416, %v415
  %v512 = vpack.c.b16 %v418, %v417
  %v513 = vpack.c.b16 %v420, %v419
  %v514 = vpack.c.b16 %v422, %v421
  %v515 = vpack.c.b16 %v424, %v423
  %v516 = vpack.c.b16 %v426, %v425
  %v517 = vpack.c.b16 %v428, %v427
  %v518 = vpack.c.b16 %v430, %v429
  %v519 = vpack.c.b16 %v432, %v431
  %v520 = vpack.c.b16 %v434, %v433
  %v521 = vpack.c.b16 %v436, %v435
  %v522 = vpack.c.b16 %v438, %v437
  %v523 = vpack.c.b16 %v440, %v439
  %v524 = vpack.c.b16 %v442, %v441
  %v525 = vpack.c.b16 %v444, %v443
  %v526 = vpack.c.b16 %v446, %v445
  %v527 = vpack.c.b16 %v448, %v447
  %v528 = vpack.c.b16 %v450, %v449
  %v529 = vpack.c.b16 %v452, %v451
  %v530 = vpack.c.b16 %v454, %v453
  %v531 = vpack.c.b16 %v456, %v455
  %v532 = vpack.c.b16 %v458, %v457
  %v533 = vpack.c.b16 %v460, %v459
  %v534 = vpack.c.b16 %v462, %v461
  %v539 = vunpack.c.l.b16 %v171
  %v540 = vunpack.c.l.b16 %v172
  %v541 = vunpack.c.l.b16 %v173
  %v542 = vunpack.c.l.b16 %v174
  %v543 = vpack.c.b16 %v540, %v539
  %v544 = vpack.c.b16 %v542, %v541
  %vm547 = vcmask 261120
  %v549 = vsel %vm547, %v463, 0
  %v552 = vsel %vm547, %v464, 0
  %v555 = vsel %vm547, %v465, 0
  %v558 = vsel %vm547, %v466, 0
  %v561 = vsel %vm547, %v467, 0
  %v564 = vsel %vm547, %v468, 0
  %v567 = vsel %vm547, %v469, 0
  %v570 = vsel %vm547, %v470, 0
  %v573 = vsel %vm547, %v471, 0
  %v576 = vsel %vm547, %v472, 0
  %v579 = vsel %vm547, %v473, 0
  %v582 = vsel %vm547, %v474, 0
  %v585 = vsel %vm547, %v475, 0
  %v588 = vsel %vm547, %v476, 0
  %v591 = vsel %vm547, %v477, 0
  %v594 = vsel %vm547, %v478, 0
  %v597 = vsel %vm547, %v479, 0
  %v600 = vsel %vm547, %v480, 0
  %v603 = vsel %vm547, %v481, 0
  %v606 = vsel %vm547, %v482, 0
  %v609 = vsel %vm547, %v483, 0
  %v612 = vsel %vm547, %v484, 0
  %v615 = vsel %vm547, %v485, 0
  %v618 = vsel %vm547, %v486, 0
  %v621 = vsel %vm547, %v487, 0
  %v624 = vsel %vm547, %v488, 0
  %v627 = vsel %vm547, %v489, 0
  %v630 = vsel %vm547, %v490, 0
  %v633 = vsel %vm547, %v491, 0
  %v636 = vsel %vm547, %v492, 0
  %v639 = vsel %vm547, %v493, 0
  %v642 = vsel %vm547, %v494, 0
  %v645 = vsel %vm547, %v495, 0
  %v648 = vsel %vm547, %v496, 0
  %v651 = vsel %vm547, %v497, 0
  %v654 = vsel %vm547, %v498, 0
  %v657 = vsel %vm547, %v499, 0
  %v660 = vsel %vm547, %v500, 0
  %v663 = vsel %vm547, %v501, 0
  %v666 = vsel %vm547, %v502, 0
  %v669 = vsel %vm547, %v503, 0
  %v672 = vsel %vm547, %v504, 0
  %v675 = vsel %vm547, %v505, 0
  %v678 = vsel %vm547, %v506, 0
  %v681 = vsel %vm547, %v507, 0
  %v684 = vsel %vm547, %v508, 0
  %v687 = vsel %vm547, %v509, 0
  %v690 = vsel %vm547, %v510, 0
  %v693 = vsel %vm547, %v511, 0
  %v696 = vsel %vm547, %v512, 0
  %v699 = vsel %vm547, %v513, 0
  %v702 = vsel %vm547, %v514, 0
  %v705 = vsel %vm547, %v515, 0
  %v708 = vsel %vm547, %v516, 0
  %v711 = vsel %vm547, %v517, 0
  %v714 = vsel %vm547, %v518, 0
  %v717 = vsel %vm547, %v519, 0
  %v720 = vsel %vm547, %v520, 0
  %v723 = vsel %vm547, %v521, 0
  %v726 = vsel %vm547, %v522, 0
  %v729 = vsel %vm547, %v523, 0
  %v732 = vsel %vm547, %v524, 0
  %v735 = vsel %vm547, %v525, 0
  %v738 = vsel %vm547, %v526, 0
  %v741 = vsel %vm547, %v527, 0
  %v744 = vsel %vm547, %v528, 0
  %v747 = vsel %vm547, %v529, 0
  %v750 = vsel %vm547, %v530, 0
  %v753 = vsel %vm547, %v531, 0
  %v756 = vsel %vm547, %v532, 0
  %v759 = vsel %vm547, %v533, 0
  %v762 = vsel %vm547, %v534, 0
  %764 = vmatprep.subr.bf16.mxu0 0
  %765 = vmatpush1.bf16.msra.mxu0 0
  %766 = vmatprep.subr.bf16.mxu0 0
  %767 = vmatpush1.bf16.msra.mxu0 0
  %768 = vmatprep.subr.bf16.mxu0 0
  %769 = vmatpush1.bf16.msra.mxu0 0
  %770 = vmatprep.subr.bf16.mxu0 0
  %771 = vmatpush1.bf16.msra.mxu0 0
  %772 = vmatprep.subr.bf16.mxu0 0
  %773 = vmatpush1.bf16.msra.mxu0 0
  %774 = vmatprep.subr.bf16.mxu0 0
  %775 = vmatpush1.bf16.msra.mxu0 0
  %776 = vmatprep.subr.bf16.mxu0 0
  %777 = vmatpush1.bf16.msra.mxu0 %v544
  %778 = vmatprep.subr.bf16.mxu0 0
  %779 = vmatpush1.bf16.msra.mxu0 %v543
  %780 = vmatprep.subr.bf16.mxu0 0
  %781 = vmatpush2.bf16.msra.mxu0 0
  %782 = vmatprep.subr.bf16.mxu0 0
  %783 = vmatpush2.bf16.msra.mxu0 0
  %784 = vmatprep.subr.bf16.mxu0 0
  %785 = vmatpush2.bf16.msra.mxu0 0
  %786 = vmatprep.subr.bf16.mxu0 0
  %787 = vmatpush2.bf16.msra.mxu0 0
  %788 = vmatprep.subr.bf16.mxu0 0
  %789 = vmatpush2.bf16.msra.mxu0 0
  %790 = vmatprep.subr.bf16.mxu0 0
  %791 = vmatpush2.bf16.msra.mxu0 0
  %792 = vmatprep.subr.bf16.mxu0 0
  %793 = vmatpush2.bf16.msra.mxu0 0
  %794 = vmatprep.subr.bf16.mxu0 0
  %795 = vmatpush2.bf16.msra.mxu0 0
  %796 = vmatprep.mubr.bf16.mxu0 0
  %797 = vmatmul.mubr.bf16.gmra.mxu0 %v549
  %v798 = vpop.f32.mrf.mxu0
  %v799 = vadd.f32 0.0, %v798
  %v800 = vpop.f32.mrf.mxu0
  %v801 = vpop.f32.mrf.mxu0
  %v802 = vadd.f32 0.0, %v801
  %v803 = vpop.f32.mrf.mxu0
  %804 = vmatprep.mubr.bf16.mxu0 0
  %805 = vmatmul.mubr.bf16.gmra.mxu0 %v552
  %v806 = vpop.f32.mrf.mxu0
  %v807 = vadd.f32 0.0, %v806
  %v808 = vpop.f32.mrf.mxu0
  %v809 = vpop.f32.mrf.mxu0
  %v810 = vadd.f32 0.0, %v809
  %v811 = vpop.f32.mrf.mxu0
  %812 = vmatprep.mubr.bf16.mxu0 0
  %813 = vmatmul.mubr.bf16.gmra.mxu0 %v555
  %v814 = vpop.f32.mrf.mxu0
  %v815 = vadd.f32 0.0, %v814
  %v816 = vpop.f32.mrf.mxu0
  %v817 = vpop.f32.mrf.mxu0
  %v818 = vadd.f32 0.0, %v817
  %v819 = vpop.f32.mrf.mxu0
  %820 = vmatprep.mubr.bf16.mxu0 0
  %821 = vmatmul.mubr.bf16.gmra.mxu0 %v558
  %v822 = vpop.f32.mrf.mxu0
  %v823 = vadd.f32 0.0, %v822
  %v824 = vpop.f32.mrf.mxu0
  %v825 = vpop.f32.mrf.mxu0
  %v826 = vadd.f32 0.0, %v825
  %v827 = vpop.f32.mrf.mxu0
  %828 = vmatprep.mubr.bf16.mxu0 0
  %829 = vmatmul.mubr.bf16.gmra.mxu0 %v561
  %v830 = vpop.f32.mrf.mxu0
  %v831 = vadd.f32 0.0, %v830
  %v832 = vpop.f32.mrf.mxu0
  %v833 = vpop.f32.mrf.mxu0
  %v834 = vadd.f32 0.0, %v833
  %v835 = vpop.f32.mrf.mxu0
  %836 = vmatprep.mubr.bf16.mxu0 0
  %837 = vmatmul.mubr.bf16.gmra.mxu0 %v564
  %v838 = vpop.f32.mrf.mxu0
  %v839 = vadd.f32 0.0, %v838
  %v840 = vpop.f32.mrf.mxu0
  %v841 = vpop.f32.mrf.mxu0
  %v842 = vadd.f32 0.0, %v841
  %v843 = vpop.f32.mrf.mxu0
  %844 = vmatprep.mubr.bf16.mxu0 0
  %845 = vmatmul.mubr.bf16.gmra.mxu0 %v567
  %v846 = vpop.f32.mrf.mxu0
  %v847 = vadd.f32 0.0, %v846
  %v848 = vpop.f32.mrf.mxu0
  %v849 = vpop.f32.mrf.mxu0
  %v850 = vadd.f32 0.0, %v849
  %v851 = vpop.f32.mrf.mxu0
  %852 = vmatprep.mubr.bf16.mxu0 0
  %853 = vmatmul.mubr.bf16.gmra.mxu0 %v570
  %v854 = vpop.f32.mrf.mxu0
  %v855 = vadd.f32 0.0, %v854
  %v856 = vpop.f32.mrf.mxu0
  %v857 = vpop.f32.mrf.mxu0
  %v858 = vadd.f32 0.0, %v857
  %v859 = vpop.f32.mrf.mxu0
  %860 = vmatprep.mubr.bf16.mxu0 0
  %861 = vmatmul.mubr.bf16.gmra.mxu0 %v573
  %v862 = vpop.f32.mrf.mxu0
  %v863 = vadd.f32 0.0, %v862
  %v864 = vpop.f32.mrf.mxu0
  %v865 = vpop.f32.mrf.mxu0
  %v866 = vadd.f32 0.0, %v865
  %v867 = vpop.f32.mrf.mxu0
  %868 = vmatprep.mubr.bf16.mxu0 0
  %869 = vmatmul.mubr.bf16.gmra.mxu0 %v576
  %v870 = vpop.f32.mrf.mxu0
  %v871 = vadd.f32 0.0, %v870
  %v872 = vpop.f32.mrf.mxu0
  %v873 = vpop.f32.mrf.mxu0
  %v874 = vadd.f32 0.0, %v873
  %v875 = vpop.f32.mrf.mxu0
  %876 = vmatprep.mubr.bf16.mxu0 0
  %877 = vmatmul.mubr.bf16.gmra.mxu0 %v579
  %v878 = vpop.f32.mrf.mxu0
  %v879 = vadd.f32 0.0, %v878
  %v880 = vpop.f32.mrf.mxu0
  %v881 = vpop.f32.mrf.mxu0
  %v882 = vadd.f32 0.0, %v881
  %v883 = vpop.f32.mrf.mxu0
  %884 = vmatprep.mubr.bf16.mxu0 0
  %885 = vmatmul.mubr.bf16.gmra.mxu0 %v582
  %v886 = vpop.f32.mrf.mxu0
  %v887 = vadd.f32 0.0, %v886
  %v888 = vpop.f32.mrf.mxu0
  %v889 = vpop.f32.mrf.mxu0
  %v890 = vadd.f32 0.0, %v889
  %v891 = vpop.f32.mrf.mxu0
  %892 = vmatprep.mubr.bf16.mxu0 0
  %893 = vmatmul.mubr.bf16.gmra.mxu0 %v585
  %v894 = vpop.f32.mrf.mxu0
  %v895 = vadd.f32 0.0, %v894
  %v896 = vpop.f32.mrf.mxu0
  %v897 = vpop.f32.mrf.mxu0
  %v898 = vadd.f32 0.0, %v897
  %v899 = vpop.f32.mrf.mxu0
  %900 = vmatprep.mubr.bf16.mxu0 0
  %901 = vmatmul.mubr.bf16.gmra.mxu0 %v588
  %v902 = vpop.f32.mrf.mxu0
  %v903 = vadd.f32 0.0, %v902
  %v904 = vpop.f32.mrf.mxu0
  %v905 = vpop.f32.mrf.mxu0
  %v906 = vadd.f32 0.0, %v905
  %v907 = vpop.f32.mrf.mxu0
  %908 = vmatprep.mubr.bf16.mxu0 0
  %909 = vmatmul.mubr.bf16.gmra.mxu0 %v591
  %v910 = vpop.f32.mrf.mxu0
  %v911 = vadd.f32 0.0, %v910
  %v912 = vpop.f32.mrf.mxu0
  %v913 = vpop.f32.mrf.mxu0
  %v914 = vadd.f32 0.0, %v913
  %v915 = vpop.f32.mrf.mxu0
  %916 = vmatprep.mubr.bf16.mxu0 0
  %917 = vmatmul.mubr.bf16.gmra.mxu0 %v594
  %v918 = vpop.f32.mrf.mxu0
  %v919 = vadd.f32 0.0, %v918
  %v920 = vpop.f32.mrf.mxu0
  %v921 = vpop.f32.mrf.mxu0
  %v922 = vadd.f32 0.0, %v921
  %v923 = vpop.f32.mrf.mxu0
  %924 = vmatprep.mubr.bf16.mxu0 0
  %925 = vmatmul.mubr.bf16.gmra.mxu0 %v597
  %v926 = vpop.f32.mrf.mxu0
  %v927 = vadd.f32 0.0, %v926
  %v928 = vpop.f32.mrf.mxu0
  %v929 = vpop.f32.mrf.mxu0
  %v930 = vadd.f32 0.0, %v929
  %v931 = vpop.f32.mrf.mxu0
  %932 = vmatprep.mubr.bf16.mxu0 0
  %933 = vmatmul.mubr.bf16.gmra.mxu0 %v600
  %v934 = vpop.f32.mrf.mxu0
  %v935 = vadd.f32 0.0, %v934
  %v936 = vpop.f32.mrf.mxu0
  %v937 = vpop.f32.mrf.mxu0
  %v938 = vadd.f32 0.0, %v937
  %v939 = vpop.f32.mrf.mxu0
  %940 = vmatprep.mubr.bf16.mxu0 0
  %941 = vmatmul.mubr.bf16.gmra.mxu0 %v603
  %v942 = vpop.f32.mrf.mxu0
  %v943 = vadd.f32 0.0, %v942
  %v944 = vpop.f32.mrf.mxu0
  %v945 = vpop.f32.mrf.mxu0
  %v946 = vadd.f32 0.0, %v945
  %v947 = vpop.f32.mrf.mxu0
  %948 = vmatprep.mubr.bf16.mxu0 0
  %949 = vmatmul.mubr.bf16.gmra.mxu0 %v606
  %v950 = vpop.f32.mrf.mxu0
  %v951 = vadd.f32 0.0, %v950
  %v952 = vpop.f32.mrf.mxu0
  %v953 = vpop.f32.mrf.mxu0
  %v954 = vadd.f32 0.0, %v953
  %v955 = vpop.f32.mrf.mxu0
  %956 = vmatprep.mubr.bf16.mxu0 0
  %957 = vmatmul.mubr.bf16.gmra.mxu0 %v609
  %v958 = vpop.f32.mrf.mxu0
  %v959 = vadd.f32 0.0, %v958
  %v960 = vpop.f32.mrf.mxu0
  %v961 = vpop.f32.mrf.mxu0
  %v962 = vadd.f32 0.0, %v961
  %v963 = vpop.f32.mrf.mxu0
  %964 = vmatprep.mubr.bf16.mxu0 0
  %965 = vmatmul.mubr.bf16.gmra.mxu0 %v612
  %v966 = vpop.f32.mrf.mxu0
  %v967 = vadd.f32 0.0, %v966
  %v968 = vpop.f32.mrf.mxu0
  %v969 = vpop.f32.mrf.mxu0
  %v970 = vadd.f32 0.0, %v969
  %v971 = vpop.f32.mrf.mxu0
  %972 = vmatprep.mubr.bf16.mxu0 0
  %973 = vmatmul.mubr.bf16.gmra.mxu0 %v615
  %v974 = vpop.f32.mrf.mxu0
  %v975 = vadd.f32 0.0, %v974
  %v976 = vpop.f32.mrf.mxu0
  %v977 = vpop.f32.mrf.mxu0
  %v978 = vadd.f32 0.0, %v977
  %v979 = vpop.f32.mrf.mxu0
  %980 = vmatprep.mubr.bf16.mxu0 0
  %981 = vmatmul.mubr.bf16.gmra.mxu0 %v618
  %v982 = vpop.f32.mrf.mxu0
  %v983 = vadd.f32 0.0, %v982
  %v984 = vpop.f32.mrf.mxu0
  %v985 = vpop.f32.mrf.mxu0
  %v986 = vadd.f32 0.0, %v985
  %v987 = vpop.f32.mrf.mxu0
  %988 = vmatprep.mubr.bf16.mxu0 0
  %989 = vmatmul.mubr.bf16.gmra.mxu0 %v621
  %v990 = vpop.f32.mrf.mxu0
  %v991 = vadd.f32 0.0, %v990
  %v992 = vpop.f32.mrf.mxu0
  %v993 = vpop.f32.mrf.mxu0
  %v994 = vadd.f32 0.0, %v993
  %v995 = vpop.f32.mrf.mxu0
  %996 = vmatprep.mubr.bf16.mxu0 0
  %997 = vmatmul.mubr.bf16.gmra.mxu0 %v624
  %v998 = vpop.f32.mrf.mxu0
  %v999 = vadd.f32 0.0, %v998
  %v1000 = vpop.f32.mrf.mxu0
  %v1001 = vpop.f32.mrf.mxu0
  %v1002 = vadd.f32 0.0, %v1001
  %v1003 = vpop.f32.mrf.mxu0
  %1004 = vmatprep.mubr.bf16.mxu0 0
  %1005 = vmatmul.mubr.bf16.gmra.mxu0 %v627
  %v1006 = vpop.f32.mrf.mxu0
  %v1007 = vadd.f32 0.0, %v1006
  %v1008 = vpop.f32.mrf.mxu0
  %v1009 = vpop.f32.mrf.mxu0
  %v1010 = vadd.f32 0.0, %v1009
  %v1011 = vpop.f32.mrf.mxu0
  %1012 = vmatprep.mubr.bf16.mxu0 0
  %1013 = vmatmul.mubr.bf16.gmra.mxu0 %v630
  %v1014 = vpop.f32.mrf.mxu0
  %v1015 = vadd.f32 0.0, %v1014
  %v1016 = vpop.f32.mrf.mxu0
  %v1017 = vpop.f32.mrf.mxu0
  %v1018 = vadd.f32 0.0, %v1017
  %v1019 = vpop.f32.mrf.mxu0
  %1020 = vmatprep.mubr.bf16.mxu0 0
  %1021 = vmatmul.mubr.bf16.gmra.mxu0 %v633
  %v1022 = vpop.f32.mrf.mxu0
  %v1023 = vadd.f32 0.0, %v1022
  %v1024 = vpop.f32.mrf.mxu0
  %v1025 = vpop.f32.mrf.mxu0
  %v1026 = vadd.f32 0.0, %v1025
  %v1027 = vpop.f32.mrf.mxu0
  %1028 = vmatprep.mubr.bf16.mxu0 0
  %1029 = vmatmul.mubr.bf16.gmra.mxu0 %v636
  %v1030 = vpop.f32.mrf.mxu0
  %v1031 = vadd.f32 0.0, %v1030
  %v1032 = vpop.f32.mrf.mxu0
  %v1033 = vpop.f32.mrf.mxu0
  %v1034 = vadd.f32 0.0, %v1033
  %v1035 = vpop.f32.mrf.mxu0
  %1036 = vmatprep.mubr.bf16.mxu0 0
  %1037 = vmatmul.mubr.bf16.gmra.mxu0 %v639
  %v1038 = vpop.f32.mrf.mxu0
  %v1039 = vadd.f32 0.0, %v1038
  %v1040 = vpop.f32.mrf.mxu0
  %v1041 = vpop.f32.mrf.mxu0
  %v1042 = vadd.f32 0.0, %v1041
  %v1043 = vpop.f32.mrf.mxu0
  %1044 = vmatprep.mubr.bf16.mxu0 0
  %1045 = vmatmul.mubr.bf16.gmra.mxu0 %v642
  %v1046 = vpop.f32.mrf.mxu0
  %v1047 = vadd.f32 0.0, %v1046
  %v1048 = vpop.f32.mrf.mxu0
  %v1049 = vpop.f32.mrf.mxu0
  %v1050 = vadd.f32 0.0, %v1049
  %v1051 = vpop.f32.mrf.mxu0
  %1052 = vmatprep.mubr.bf16.mxu0 0
  %1053 = vmatmul.mubr.bf16.gmra.mxu0 %v645
  %v1054 = vpop.f32.mrf.mxu0
  %v1055 = vadd.f32 0.0, %v1054
  %v1056 = vpop.f32.mrf.mxu0
  %v1057 = vpop.f32.mrf.mxu0
  %v1058 = vadd.f32 0.0, %v1057
  %v1059 = vpop.f32.mrf.mxu0
  %1060 = vmatprep.mubr.bf16.mxu0 0
  %1061 = vmatmul.mubr.bf16.gmra.mxu0 %v648
  %v1062 = vpop.f32.mrf.mxu0
  %v1063 = vadd.f32 0.0, %v1062
  %v1064 = vpop.f32.mrf.mxu0
  %v1065 = vpop.f32.mrf.mxu0
  %v1066 = vadd.f32 0.0, %v1065
  %v1067 = vpop.f32.mrf.mxu0
  %1068 = vmatprep.mubr.bf16.mxu0 0
  %1069 = vmatmul.mubr.bf16.gmra.mxu0 %v651
  %v1070 = vpop.f32.mrf.mxu0
  %v1071 = vadd.f32 0.0, %v1070
  %v1072 = vpop.f32.mrf.mxu0
  %v1073 = vpop.f32.mrf.mxu0
  %v1074 = vadd.f32 0.0, %v1073
  %v1075 = vpop.f32.mrf.mxu0
  %1076 = vmatprep.mubr.bf16.mxu0 0
  %1077 = vmatmul.mubr.bf16.gmra.mxu0 %v654
  %v1078 = vpop.f32.mrf.mxu0
  %v1079 = vadd.f32 0.0, %v1078
  %v1080 = vpop.f32.mrf.mxu0
  %v1081 = vpop.f32.mrf.mxu0
  %v1082 = vadd.f32 0.0, %v1081
  %v1083 = vpop.f32.mrf.mxu0
  %1084 = vmatprep.mubr.bf16.mxu0 0
  %1085 = vmatmul.mubr.bf16.gmra.mxu0 %v657
  %v1086 = vpop.f32.mrf.mxu0
  %v1087 = vadd.f32 0.0, %v1086
  %v1088 = vpop.f32.mrf.mxu0
  %v1089 = vpop.f32.mrf.mxu0
  %v1090 = vadd.f32 0.0, %v1089
  %v1091 = vpop.f32.mrf.mxu0
  %1092 = vmatprep.mubr.bf16.mxu0 0
  %1093 = vmatmul.mubr.bf16.gmra.mxu0 %v660
  %v1094 = vpop.f32.mrf.mxu0
  %v1095 = vadd.f32 0.0, %v1094
  %v1096 = vpop.f32.mrf.mxu0
  %v1097 = vpop.f32.mrf.mxu0
  %v1098 = vadd.f32 0.0, %v1097
  %v1099 = vpop.f32.mrf.mxu0
  %1100 = vmatprep.mubr.bf16.mxu0 0
  %1101 = vmatmul.mubr.bf16.gmra.mxu0 %v663
  %v1102 = vpop.f32.mrf.mxu0
  %v1103 = vadd.f32 0.0, %v1102
  %v1104 = vpop.f32.mrf.mxu0
  %v1105 = vpop.f32.mrf.mxu0
  %v1106 = vadd.f32 0.0, %v1105
  %v1107 = vpop.f32.mrf.mxu0
  %1108 = vmatprep.mubr.bf16.mxu0 0
  %1109 = vmatmul.mubr.bf16.gmra.mxu0 %v666
  %v1110 = vpop.f32.mrf.mxu0
  %v1111 = vadd.f32 0.0, %v1110
  %v1112 = vpop.f32.mrf.mxu0
  %v1113 = vpop.f32.mrf.mxu0
  %v1114 = vadd.f32 0.0, %v1113
  %v1115 = vpop.f32.mrf.mxu0
  %1116 = vmatprep.mubr.bf16.mxu0 0
  %1117 = vmatmul.mubr.bf16.gmra.mxu0 %v669
  %v1118 = vpop.f32.mrf.mxu0
  %v1119 = vadd.f32 0.0, %v1118
  %v1120 = vpop.f32.mrf.mxu0
  %v1121 = vpop.f32.mrf.mxu0
  %v1122 = vadd.f32 0.0, %v1121
  %v1123 = vpop.f32.mrf.mxu0
  %1124 = vmatprep.mubr.bf16.mxu0 0
  %1125 = vmatmul.mubr.bf16.gmra.mxu0 %v672
  %v1126 = vpop.f32.mrf.mxu0
  %v1127 = vadd.f32 0.0, %v1126
  %v1128 = vpop.f32.mrf.mxu0
  %v1129 = vpop.f32.mrf.mxu0
  %v1130 = vadd.f32 0.0, %v1129
  %v1131 = vpop.f32.mrf.mxu0
  %1132 = vmatprep.mubr.bf16.mxu0 0
  %1133 = vmatmul.mubr.bf16.gmra.mxu0 %v675
  %v1134 = vpop.f32.mrf.mxu0
  %v1135 = vadd.f32 0.0, %v1134
  %v1136 = vpop.f32.mrf.mxu0
  %v1137 = vpop.f32.mrf.mxu0
  %v1138 = vadd.f32 0.0, %v1137
  %v1139 = vpop.f32.mrf.mxu0
  %1140 = vmatprep.mubr.bf16.mxu0 0
  %1141 = vmatmul.mubr.bf16.gmra.mxu0 %v678
  %v1142 = vpop.f32.mrf.mxu0
  %v1143 = vadd.f32 0.0, %v1142
  %v1144 = vpop.f32.mrf.mxu0
  %v1145 = vpop.f32.mrf.mxu0
  %v1146 = vadd.f32 0.0, %v1145
  %v1147 = vpop.f32.mrf.mxu0
  %1148 = vmatprep.mubr.bf16.mxu0 0
  %1149 = vmatmul.mubr.bf16.gmra.mxu0 %v681
  %v1150 = vpop.f32.mrf.mxu0
  %v1151 = vadd.f32 0.0, %v1150
  %v1152 = vpop.f32.mrf.mxu0
  %v1153 = vpop.f32.mrf.mxu0
  %v1154 = vadd.f32 0.0, %v1153
  %v1155 = vpop.f32.mrf.mxu0
  %1156 = vmatprep.mubr.bf16.mxu0 0
  %1157 = vmatmul.mubr.bf16.gmra.mxu0 %v684
  %v1158 = vpop.f32.mrf.mxu0
  %v1159 = vadd.f32 0.0, %v1158
  %v1160 = vpop.f32.mrf.mxu0
  %v1161 = vpop.f32.mrf.mxu0
  %v1162 = vadd.f32 0.0, %v1161
  %v1163 = vpop.f32.mrf.mxu0
  %1164 = vmatprep.mubr.bf16.mxu0 0
  %1165 = vmatmul.mubr.bf16.gmra.mxu0 %v687
  %v1166 = vpop.f32.mrf.mxu0
  %v1167 = vadd.f32 0.0, %v1166
  %v1168 = vpop.f32.mrf.mxu0
  %v1169 = vpop.f32.mrf.mxu0
  %v1170 = vadd.f32 0.0, %v1169
  %v1171 = vpop.f32.mrf.mxu0
  %1172 = vmatprep.mubr.bf16.mxu0 0
  %1173 = vmatmul.mubr.bf16.gmra.mxu0 %v690
  %v1174 = vpop.f32.mrf.mxu0
  %v1175 = vadd.f32 0.0, %v1174
  %v1176 = vpop.f32.mrf.mxu0
  %v1177 = vpop.f32.mrf.mxu0
  %v1178 = vadd.f32 0.0, %v1177
  %v1179 = vpop.f32.mrf.mxu0
  %1180 = vmatprep.mubr.bf16.mxu0 0
  %1181 = vmatmul.mubr.bf16.gmra.mxu0 %v693
  %v1182 = vpop.f32.mrf.mxu0
  %v1183 = vadd.f32 0.0, %v1182
  %v1184 = vpop.f32.mrf.mxu0
  %v1185 = vpop.f32.mrf.mxu0
  %v1186 = vadd.f32 0.0, %v1185
  %v1187 = vpop.f32.mrf.mxu0
  %1188 = vmatprep.mubr.bf16.mxu0 0
  %1189 = vmatmul.mubr.bf16.gmra.mxu0 %v696
  %v1190 = vpop.f32.mrf.mxu0
  %v1191 = vadd.f32 0.0, %v1190
  %v1192 = vpop.f32.mrf.mxu0
  %v1193 = vpop.f32.mrf.mxu0
  %v1194 = vadd.f32 0.0, %v1193
  %v1195 = vpop.f32.mrf.mxu0
  %1196 = vmatprep.mubr.bf16.mxu0 0
  %1197 = vmatmul.mubr.bf16.gmra.mxu0 %v699
  %v1198 = vpop.f32.mrf.mxu0
  %v1199 = vadd.f32 0.0, %v1198
  %v1200 = vpop.f32.mrf.mxu0
  %v1201 = vpop.f32.mrf.mxu0
  %v1202 = vadd.f32 0.0, %v1201
  %v1203 = vpop.f32.mrf.mxu0
  %1204 = vmatprep.mubr.bf16.mxu0 0
  %1205 = vmatmul.mubr.bf16.gmra.mxu0 %v702
  %v1206 = vpop.f32.mrf.mxu0
  %v1207 = vadd.f32 0.0, %v1206
  %v1208 = vpop.f32.mrf.mxu0
  %v1209 = vpop.f32.mrf.mxu0
  %v1210 = vadd.f32 0.0, %v1209
  %v1211 = vpop.f32.mrf.mxu0
  %1212 = vmatprep.mubr.bf16.mxu0 0
  %1213 = vmatmul.mubr.bf16.gmra.mxu0 %v705
  %v1214 = vpop.f32.mrf.mxu0
  %v1215 = vadd.f32 0.0, %v1214
  %v1216 = vpop.f32.mrf.mxu0
  %v1217 = vpop.f32.mrf.mxu0
  %v1218 = vadd.f32 0.0, %v1217
  %v1219 = vpop.f32.mrf.mxu0
  %1220 = vmatprep.mubr.bf16.mxu0 0
  %1221 = vmatmul.mubr.bf16.gmra.mxu0 %v708
  %v1222 = vpop.f32.mrf.mxu0
  %v1223 = vadd.f32 0.0, %v1222
  %v1224 = vpop.f32.mrf.mxu0
  %v1225 = vpop.f32.mrf.mxu0
  %v1226 = vadd.f32 0.0, %v1225
  %v1227 = vpop.f32.mrf.mxu0
  %1228 = vmatprep.mubr.bf16.mxu0 0
  %1229 = vmatmul.mubr.bf16.gmra.mxu0 %v711
  %v1230 = vpop.f32.mrf.mxu0
  %v1231 = vadd.f32 0.0, %v1230
  %v1232 = vpop.f32.mrf.mxu0
  %v1233 = vpop.f32.mrf.mxu0
  %v1234 = vadd.f32 0.0, %v1233
  %v1235 = vpop.f32.mrf.mxu0
  %1236 = vmatprep.mubr.bf16.mxu0 0
  %1237 = vmatmul.mubr.bf16.gmra.mxu0 %v714
  %v1238 = vpop.f32.mrf.mxu0
  %v1239 = vadd.f32 0.0, %v1238
  %v1240 = vpop.f32.mrf.mxu0
  %v1241 = vpop.f32.mrf.mxu0
  %v1242 = vadd.f32 0.0, %v1241
  %v1243 = vpop.f32.mrf.mxu0
  %1244 = vmatprep.mubr.bf16.mxu0 0
  %1245 = vmatmul.mubr.bf16.gmra.mxu0 %v717
  %v1246 = vpop.f32.mrf.mxu0
  %v1247 = vadd.f32 0.0, %v1246
  %v1248 = vpop.f32.mrf.mxu0
  %v1249 = vpop.f32.mrf.mxu0
  %v1250 = vadd.f32 0.0, %v1249
  %v1251 = vpop.f32.mrf.mxu0
  %1252 = vmatprep.mubr.bf16.mxu0 0
  %1253 = vmatmul.mubr.bf16.gmra.mxu0 %v720
  %v1254 = vpop.f32.mrf.mxu0
  %v1255 = vadd.f32 0.0, %v1254
  %v1256 = vpop.f32.mrf.mxu0
  %v1257 = vpop.f32.mrf.mxu0
  %v1258 = vadd.f32 0.0, %v1257
  %v1259 = vpop.f32.mrf.mxu0
  %1260 = vmatprep.mubr.bf16.mxu0 0
  %1261 = vmatmul.mubr.bf16.gmra.mxu0 %v723
  %v1262 = vpop.f32.mrf.mxu0
  %v1263 = vadd.f32 0.0, %v1262
  %v1264 = vpop.f32.mrf.mxu0
  %v1265 = vpop.f32.mrf.mxu0
  %v1266 = vadd.f32 0.0, %v1265
  %v1267 = vpop.f32.mrf.mxu0
  %1268 = vmatprep.mubr.bf16.mxu0 0
  %1269 = vmatmul.mubr.bf16.gmra.mxu0 %v726
  %v1270 = vpop.f32.mrf.mxu0
  %v1271 = vadd.f32 0.0, %v1270
  %v1272 = vpop.f32.mrf.mxu0
  %v1273 = vpop.f32.mrf.mxu0
  %v1274 = vadd.f32 0.0, %v1273
  %v1275 = vpop.f32.mrf.mxu0
  %1276 = vmatprep.mubr.bf16.mxu0 0
  %1277 = vmatmul.mubr.bf16.gmra.mxu0 %v729
  %v1278 = vpop.f32.mrf.mxu0
  %v1279 = vadd.f32 0.0, %v1278
  %v1280 = vpop.f32.mrf.mxu0
  %v1281 = vpop.f32.mrf.mxu0
  %v1282 = vadd.f32 0.0, %v1281
  %v1283 = vpop.f32.mrf.mxu0
  %1284 = vmatprep.mubr.bf16.mxu0 0
  %1285 = vmatmul.mubr.bf16.gmra.mxu0 %v732
  %v1286 = vpop.f32.mrf.mxu0
  %v1287 = vadd.f32 0.0, %v1286
  %v1288 = vpop.f32.mrf.mxu0
  %v1289 = vpop.f32.mrf.mxu0
  %v1290 = vadd.f32 0.0, %v1289
  %v1291 = vpop.f32.mrf.mxu0
  %1292 = vmatprep.mubr.bf16.mxu0 0
  %1293 = vmatmul.mubr.bf16.gmra.mxu0 %v735
  %v1294 = vpop.f32.mrf.mxu0
  %v1295 = vadd.f32 0.0, %v1294
  %v1296 = vpop.f32.mrf.mxu0
  %v1297 = vpop.f32.mrf.mxu0
  %v1298 = vadd.f32 0.0, %v1297
  %v1299 = vpop.f32.mrf.mxu0
  %1300 = vmatprep.mubr.bf16.mxu0 0
  %1301 = vmatmul.mubr.bf16.gmra.mxu0 %v738
  %v1302 = vpop.f32.mrf.mxu0
  %v1303 = vadd.f32 0.0, %v1302
  %v1304 = vpop.f32.mrf.mxu0
  %v1305 = vpop.f32.mrf.mxu0
  %v1306 = vadd.f32 0.0, %v1305
  %v1307 = vpop.f32.mrf.mxu0
  %1308 = vmatprep.mubr.bf16.mxu0 0
  %1309 = vmatmul.mubr.bf16.gmra.mxu0 %v741
  %v1310 = vpop.f32.mrf.mxu0
  %v1311 = vadd.f32 0.0, %v1310
  %v1312 = vpop.f32.mrf.mxu0
  %v1313 = vpop.f32.mrf.mxu0
  %v1314 = vadd.f32 0.0, %v1313
  %v1315 = vpop.f32.mrf.mxu0
  %1316 = vmatprep.mubr.bf16.mxu0 0
  %1317 = vmatmul.mubr.bf16.gmra.mxu0 %v744
  %v1318 = vpop.f32.mrf.mxu0
  %v1319 = vadd.f32 0.0, %v1318
  %v1320 = vpop.f32.mrf.mxu0
  %v1321 = vpop.f32.mrf.mxu0
  %v1322 = vadd.f32 0.0, %v1321
  %v1323 = vpop.f32.mrf.mxu0
  %1324 = vmatprep.mubr.bf16.mxu0 0
  %1325 = vmatmul.mubr.bf16.gmra.mxu0 %v747
  %v1326 = vpop.f32.mrf.mxu0
  %v1327 = vadd.f32 0.0, %v1326
  %v1328 = vpop.f32.mrf.mxu0
  %v1329 = vpop.f32.mrf.mxu0
  %v1330 = vadd.f32 0.0, %v1329
  %v1331 = vpop.f32.mrf.mxu0
  %1332 = vmatprep.mubr.bf16.mxu0 0
  %1333 = vmatmul.mubr.bf16.gmra.mxu0 %v750
  %v1334 = vpop.f32.mrf.mxu0
  %v1335 = vadd.f32 0.0, %v1334
  %v1336 = vpop.f32.mrf.mxu0
  %v1337 = vpop.f32.mrf.mxu0
  %v1338 = vadd.f32 0.0, %v1337
  %v1339 = vpop.f32.mrf.mxu0
  %1340 = vmatprep.mubr.bf16.mxu0 0
  %1341 = vmatmul.mubr.bf16.gmra.mxu0 %v753
  %v1342 = vpop.f32.mrf.mxu0
  %v1343 = vadd.f32 0.0, %v1342
  %v1344 = vpop.f32.mrf.mxu0
  %v1345 = vpop.f32.mrf.mxu0
  %v1346 = vadd.f32 0.0, %v1345
  %v1347 = vpop.f32.mrf.mxu0
  %1348 = vmatprep.mubr.bf16.mxu0 0
  %1349 = vmatmul.mubr.bf16.gmra.mxu0 %v756
  %v1350 = vpop.f32.mrf.mxu0
  %v1351 = vadd.f32 0.0, %v1350
  %v1352 = vpop.f32.mrf.mxu0
  %v1353 = vpop.f32.mrf.mxu0
  %v1354 = vadd.f32 0.0, %v1353
  %v1355 = vpop.f32.mrf.mxu0
  %1356 = vmatprep.mubr.bf16.mxu0 0
  %1357 = vmatmul.mubr.bf16.gmra.mxu0 %v759
  %v1358 = vpop.f32.mrf.mxu0
  %v1359 = vadd.f32 0.0, %v1358
  %v1360 = vpop.f32.mrf.mxu0
  %v1361 = vpop.f32.mrf.mxu0
  %v1362 = vadd.f32 0.0, %v1361
  %v1363 = vpop.f32.mrf.mxu0
  %1364 = vmatprep.mubr.bf16.mxu0 0
  %1365 = vmatmul.mubr.bf16.gmra.mxu0 %v762
  %v1366 = vpop.f32.mrf.mxu0
  %v1367 = vadd.f32 0.0, %v1366
  %v1368 = vpop.f32.mrf.mxu0
  %v1369 = vpop.f32.mrf.mxu0
  %v1370 = vadd.f32 0.0, %v1369
  %v1371 = vpop.f32.mrf.mxu0
  %1372 = vdwg.mxu0
  %v1373 = vsel %vm547, %v799, 0.0
  %v1374 = vsel %vm547, %v802, 0.0
  %v1375 = vadd.f32 %v1373, %v1374
  %v1376 = vsel %vm547, %v807, 0.0
  %v1377 = vadd.f32 %v1375, %v1376
  %v1378 = vsel %vm547, %v810, 0.0
  %v1379 = vadd.f32 %v1377, %v1378
  %v1380 = vsel %vm547, %v815, 0.0
  %v1381 = vadd.f32 %v1379, %v1380
  %v1382 = vsel %vm547, %v818, 0.0
  %v1383 = vadd.f32 %v1381, %v1382
  %v1384 = vsel %vm547, %v823, 0.0
  %v1385 = vadd.f32 %v1383, %v1384
  %v1386 = vsel %vm547, %v826, 0.0
  %v1387 = vadd.f32 %v1385, %v1386
  %v1388 = vsel %vm547, %v831, 0.0
  %v1389 = vadd.f32 %v1387, %v1388
  %v1390 = vsel %vm547, %v834, 0.0
  %v1391 = vadd.f32 %v1389, %v1390
  %v1392 = vsel %vm547, %v839, 0.0
  %v1393 = vadd.f32 %v1391, %v1392
  %v1394 = vsel %vm547, %v842, 0.0
  %v1395 = vadd.f32 %v1393, %v1394
  %v1396 = vsel %vm547, %v847, 0.0
  %v1397 = vadd.f32 %v1395, %v1396
  %v1398 = vsel %vm547, %v850, 0.0
  %v1399 = vadd.f32 %v1397, %v1398
  %v1400 = vsel %vm547, %v855, 0.0
  %v1401 = vadd.f32 %v1399, %v1400
  %v1402 = vsel %vm547, %v858, 0.0
  %v1403 = vadd.f32 %v1401, %v1402
  %v1404 = vsel %vm547, %v863, 0.0
  %v1405 = vadd.f32 %v1403, %v1404
  %v1406 = vsel %vm547, %v866, 0.0
  %v1407 = vadd.f32 %v1405, %v1406
  %v1408 = vsel %vm547, %v871, 0.0
  %v1409 = vadd.f32 %v1407, %v1408
  %v1410 = vsel %vm547, %v874, 0.0
  %v1411 = vadd.f32 %v1409, %v1410
  %v1412 = vsel %vm547, %v879, 0.0
  %v1413 = vadd.f32 %v1411, %v1412
  %v1414 = vsel %vm547, %v882, 0.0
  %v1415 = vadd.f32 %v1413, %v1414
  %v1416 = vsel %vm547, %v887, 0.0
  %v1417 = vadd.f32 %v1415, %v1416
  %v1418 = vsel %vm547, %v890, 0.0
  %v1419 = vadd.f32 %v1417, %v1418
  %v1420 = vsel %vm547, %v895, 0.0
  %v1421 = vadd.f32 %v1419, %v1420
  %v1422 = vsel %vm547, %v898, 0.0
  %v1423 = vadd.f32 %v1421, %v1422
  %v1424 = vsel %vm547, %v903, 0.0
  %v1425 = vadd.f32 %v1423, %v1424
  %v1426 = vsel %vm547, %v906, 0.0
  %v1427 = vadd.f32 %v1425, %v1426
  %v1428 = vsel %vm547, %v911, 0.0
  %v1429 = vadd.f32 %v1427, %v1428
  %v1430 = vsel %vm547, %v914, 0.0
  %v1431 = vadd.f32 %v1429, %v1430
  %v1432 = vsel %vm547, %v919, 0.0
  %v1433 = vadd.f32 %v1431, %v1432
  %v1434 = vsel %vm547, %v922, 0.0
  %v1435 = vadd.f32 %v1433, %v1434
  %v1436 = vsel %vm547, %v927, 0.0
  %v1437 = vadd.f32 %v1435, %v1436
  %v1438 = vsel %vm547, %v930, 0.0
  %v1439 = vadd.f32 %v1437, %v1438
  %v1440 = vsel %vm547, %v935, 0.0
  %v1441 = vadd.f32 %v1439, %v1440
  %v1442 = vsel %vm547, %v938, 0.0
  %v1443 = vadd.f32 %v1441, %v1442
  %v1444 = vsel %vm547, %v943, 0.0
  %v1445 = vadd.f32 %v1443, %v1444
  %v1446 = vsel %vm547, %v946, 0.0
  %v1447 = vadd.f32 %v1445, %v1446
  %v1448 = vsel %vm547, %v951, 0.0
  %v1449 = vadd.f32 %v1447, %v1448
  %v1450 = vsel %vm547, %v954, 0.0
  %v1451 = vadd.f32 %v1449, %v1450
  %v1452 = vsel %vm547, %v959, 0.0
  %v1453 = vadd.f32 %v1451, %v1452
  %v1454 = vsel %vm547, %v962, 0.0
  %v1455 = vadd.f32 %v1453, %v1454
  %v1456 = vsel %vm547, %v967, 0.0
  %v1457 = vadd.f32 %v1455, %v1456
  %v1458 = vsel %vm547, %v970, 0.0
  %v1459 = vadd.f32 %v1457, %v1458
  %v1460 = vsel %vm547, %v975, 0.0
  %v1461 = vadd.f32 %v1459, %v1460
  %v1462 = vsel %vm547, %v978, 0.0
  %v1463 = vadd.f32 %v1461, %v1462
  %v1464 = vsel %vm547, %v983, 0.0
  %v1465 = vadd.f32 %v1463, %v1464
  %v1466 = vsel %vm547, %v986, 0.0
  %v1467 = vadd.f32 %v1465, %v1466
  %v1468 = vsel %vm547, %v991, 0.0
  %v1469 = vadd.f32 %v1467, %v1468
  %v1470 = vsel %vm547, %v994, 0.0
  %v1471 = vadd.f32 %v1469, %v1470
  %v1472 = vsel %vm547, %v999, 0.0
  %v1473 = vadd.f32 %v1471, %v1472
  %v1474 = vsel %vm547, %v1002, 0.0
  %v1475 = vadd.f32 %v1473, %v1474
  %v1476 = vsel %vm547, %v1007, 0.0
  %v1477 = vadd.f32 %v1475, %v1476
  %v1478 = vsel %vm547, %v1010, 0.0
  %v1479 = vadd.f32 %v1477, %v1478
  %v1480 = vsel %vm547, %v1015, 0.0
  %v1481 = vadd.f32 %v1479, %v1480
  %v1482 = vsel %vm547, %v1018, 0.0
  %v1483 = vadd.f32 %v1481, %v1482
  %v1484 = vsel %vm547, %v1023, 0.0
  %v1485 = vadd.f32 %v1483, %v1484
  %v1486 = vsel %vm547, %v1026, 0.0
  %v1487 = vadd.f32 %v1485, %v1486
  %v1488 = vsel %vm547, %v1031, 0.0
  %v1489 = vadd.f32 %v1487, %v1488
  %v1490 = vsel %vm547, %v1034, 0.0
  %v1491 = vadd.f32 %v1489, %v1490
  %v1492 = vsel %vm547, %v1039, 0.0
  %v1493 = vadd.f32 %v1491, %v1492
  %v1494 = vsel %vm547, %v1042, 0.0
  %v1495 = vadd.f32 %v1493, %v1494
  %v1496 = vsel %vm547, %v1047, 0.0
  %v1497 = vadd.f32 %v1495, %v1496
  %v1498 = vsel %vm547, %v1050, 0.0
  %v1499 = vadd.f32 %v1497, %v1498
  %v1500 = vsel %vm547, %v1055, 0.0
  %v1501 = vadd.f32 %v1499, %v1500
  %v1502 = vsel %vm547, %v1058, 0.0
  %v1503 = vadd.f32 %v1501, %v1502
  %v1504 = vsel %vm547, %v1063, 0.0
  %v1505 = vadd.f32 %v1503, %v1504
  %v1506 = vsel %vm547, %v1066, 0.0
  %v1507 = vadd.f32 %v1505, %v1506
  %v1508 = vsel %vm547, %v1071, 0.0
  %v1509 = vadd.f32 %v1507, %v1508
  %v1510 = vsel %vm547, %v1074, 0.0
  %v1511 = vadd.f32 %v1509, %v1510
  %v1512 = vsel %vm547, %v1079, 0.0
  %v1513 = vadd.f32 %v1511, %v1512
  %v1514 = vsel %vm547, %v1082, 0.0
  %v1515 = vadd.f32 %v1513, %v1514
  %v1516 = vsel %vm547, %v1087, 0.0
  %v1517 = vadd.f32 %v1515, %v1516
  %v1518 = vsel %vm547, %v1090, 0.0
  %v1519 = vadd.f32 %v1517, %v1518
  %v1520 = vsel %vm547, %v1095, 0.0
  %v1521 = vadd.f32 %v1519, %v1520
  %v1522 = vsel %vm547, %v1098, 0.0
  %v1523 = vadd.f32 %v1521, %v1522
  %v1524 = vsel %vm547, %v1103, 0.0
  %v1525 = vadd.f32 %v1523, %v1524
  %v1526 = vsel %vm547, %v1106, 0.0
  %v1527 = vadd.f32 %v1525, %v1526
  %v1528 = vsel %vm547, %v1111, 0.0
  %v1529 = vadd.f32 %v1527, %v1528
  %v1530 = vsel %vm547, %v1114, 0.0
  %v1531 = vadd.f32 %v1529, %v1530
  %v1532 = vsel %vm547, %v1119, 0.0
  %v1533 = vadd.f32 %v1531, %v1532
  %v1534 = vsel %vm547, %v1122, 0.0
  %v1535 = vadd.f32 %v1533, %v1534
  %v1536 = vsel %vm547, %v1127, 0.0
  %v1537 = vadd.f32 %v1535, %v1536
  %v1538 = vsel %vm547, %v1130, 0.0
  %v1539 = vadd.f32 %v1537, %v1538
  %v1540 = vsel %vm547, %v1135, 0.0
  %v1541 = vadd.f32 %v1539, %v1540
  %v1542 = vsel %vm547, %v1138, 0.0
  %v1543 = vadd.f32 %v1541, %v1542
  %v1544 = vsel %vm547, %v1143, 0.0
  %v1545 = vadd.f32 %v1543, %v1544
  %v1546 = vsel %vm547, %v1146, 0.0
  %v1547 = vadd.f32 %v1545, %v1546
  %v1548 = vsel %vm547, %v1151, 0.0
  %v1549 = vadd.f32 %v1547, %v1548
  %v1550 = vsel %vm547, %v1154, 0.0
  %v1551 = vadd.f32 %v1549, %v1550
  %v1552 = vsel %vm547, %v1159, 0.0
  %v1553 = vadd.f32 %v1551, %v1552
  %v1554 = vsel %vm547, %v1162, 0.0
  %v1555 = vadd.f32 %v1553, %v1554
  %v1556 = vsel %vm547, %v1167, 0.0
  %v1557 = vadd.f32 %v1555, %v1556
  %v1558 = vsel %vm547, %v1170, 0.0
  %v1559 = vadd.f32 %v1557, %v1558
  %v1560 = vsel %vm547, %v1175, 0.0
  %v1561 = vadd.f32 %v1559, %v1560
  %v1562 = vsel %vm547, %v1178, 0.0
  %v1563 = vadd.f32 %v1561, %v1562
  %v1564 = vsel %vm547, %v1183, 0.0
  %v1565 = vadd.f32 %v1563, %v1564
  %v1566 = vsel %vm547, %v1186, 0.0
  %v1567 = vadd.f32 %v1565, %v1566
  %v1568 = vsel %vm547, %v1191, 0.0
  %v1569 = vadd.f32 %v1567, %v1568
  %v1570 = vsel %vm547, %v1194, 0.0
  %v1571 = vadd.f32 %v1569, %v1570
  %v1572 = vsel %vm547, %v1199, 0.0
  %v1573 = vadd.f32 %v1571, %v1572
  %v1574 = vsel %vm547, %v1202, 0.0
  %v1575 = vadd.f32 %v1573, %v1574
  %v1576 = vsel %vm547, %v1207, 0.0
  %v1577 = vadd.f32 %v1575, %v1576
  %v1578 = vsel %vm547, %v1210, 0.0
  %v1579 = vadd.f32 %v1577, %v1578
  %v1580 = vsel %vm547, %v1215, 0.0
  %v1581 = vadd.f32 %v1579, %v1580
  %v1582 = vsel %vm547, %v1218, 0.0
  %v1583 = vadd.f32 %v1581, %v1582
  %v1584 = vsel %vm547, %v1223, 0.0
  %v1585 = vadd.f32 %v1583, %v1584
  %v1586 = vsel %vm547, %v1226, 0.0
  %v1587 = vadd.f32 %v1585, %v1586
  %v1588 = vsel %vm547, %v1231, 0.0
  %v1589 = vadd.f32 %v1587, %v1588
  %v1590 = vsel %vm547, %v1234, 0.0
  %v1591 = vadd.f32 %v1589, %v1590
  %v1592 = vsel %vm547, %v1239, 0.0
  %v1593 = vadd.f32 %v1591, %v1592
  %v1594 = vsel %vm547, %v1242, 0.0
  %v1595 = vadd.f32 %v1593, %v1594
  %v1596 = vsel %vm547, %v1247, 0.0
  %v1597 = vadd.f32 %v1595, %v1596
  %v1598 = vsel %vm547, %v1250, 0.0
  %v1599 = vadd.f32 %v1597, %v1598
  %v1600 = vsel %vm547, %v1255, 0.0
  %v1601 = vadd.f32 %v1599, %v1600
  %v1602 = vsel %vm547, %v1258, 0.0
  %v1603 = vadd.f32 %v1601, %v1602
  %v1604 = vsel %vm547, %v1263, 0.0
  %v1605 = vadd.f32 %v1603, %v1604
  %v1606 = vsel %vm547, %v1266, 0.0
  %v1607 = vadd.f32 %v1605, %v1606
  %v1608 = vsel %vm547, %v1271, 0.0
  %v1609 = vadd.f32 %v1607, %v1608
  %v1610 = vsel %vm547, %v1274, 0.0
  %v1611 = vadd.f32 %v1609, %v1610
  %v1612 = vsel %vm547, %v1279, 0.0
  %v1613 = vadd.f32 %v1611, %v1612
  %v1614 = vsel %vm547, %v1282, 0.0
  %v1615 = vadd.f32 %v1613, %v1614
  %v1616 = vsel %vm547, %v1287, 0.0
  %v1617 = vadd.f32 %v1615, %v1616
  %v1618 = vsel %vm547, %v1290, 0.0
  %v1619 = vadd.f32 %v1617, %v1618
  %v1620 = vsel %vm547, %v1295, 0.0
  %v1621 = vadd.f32 %v1619, %v1620
  %v1622 = vsel %vm547, %v1298, 0.0
  %v1623 = vadd.f32 %v1621, %v1622
  %v1624 = vsel %vm547, %v1303, 0.0
  %v1625 = vadd.f32 %v1623, %v1624
  %v1626 = vsel %vm547, %v1306, 0.0
  %v1627 = vadd.f32 %v1625, %v1626
  %v1628 = vsel %vm547, %v1311, 0.0
  %v1629 = vadd.f32 %v1627, %v1628
  %v1630 = vsel %vm547, %v1314, 0.0
  %v1631 = vadd.f32 %v1629, %v1630
  %v1632 = vsel %vm547, %v1319, 0.0
  %v1633 = vadd.f32 %v1631, %v1632
  %v1634 = vsel %vm547, %v1322, 0.0
  %v1635 = vadd.f32 %v1633, %v1634
  %v1636 = vsel %vm547, %v1327, 0.0
  %v1637 = vadd.f32 %v1635, %v1636
  %v1638 = vsel %vm547, %v1330, 0.0
  %v1639 = vadd.f32 %v1637, %v1638
  %v1640 = vsel %vm547, %v1335, 0.0
  %v1641 = vadd.f32 %v1639, %v1640
  %v1642 = vsel %vm547, %v1338, 0.0
  %v1643 = vadd.f32 %v1641, %v1642
  %v1644 = vsel %vm547, %v1343, 0.0
  %v1645 = vadd.f32 %v1643, %v1644
  %v1646 = vsel %vm547, %v1346, 0.0
  %v1647 = vadd.f32 %v1645, %v1646
  %v1648 = vsel %vm547, %v1351, 0.0
  %v1649 = vadd.f32 %v1647, %v1648
  %v1650 = vsel %vm547, %v1354, 0.0
  %v1651 = vadd.f32 %v1649, %v1650
  %v1652 = vsel %vm547, %v1359, 0.0
  %v1653 = vadd.f32 %v1651, %v1652
  %v1654 = vsel %vm547, %v1362, 0.0
  %v1655 = vadd.f32 %v1653, %v1654
  %v1656 = vsel %vm547, %v1367, 0.0
  %v1657 = vadd.f32 %v1655, %v1656
  %v1658 = vsel %vm547, %v1370, 0.0
  %v1659 = vadd.f32 %v1657, %v1658
  %v1660 = vrot.slane %v1659, 4
  %v1661 = vadd.f32 %v1659, %v1660
  %v1662 = vrot.slane %v1661, 2
  %v1663 = vadd.f32 %v1661, %v1662
  %v1664 = vrot.slane %v1663, 1
  %v1665 = vadd.f32 %v1663, %v1664
  %v1666 = vmul.f32 %v799, %v799
  %v1667 = vmul.f32 %v802, %v802
  %v1668 = vmul.f32 %v807, %v807
  %v1669 = vmul.f32 %v810, %v810
  %v1670 = vmul.f32 %v815, %v815
  %v1671 = vmul.f32 %v818, %v818
  %v1672 = vmul.f32 %v823, %v823
  %v1673 = vmul.f32 %v826, %v826
  %v1674 = vmul.f32 %v831, %v831
  %v1675 = vmul.f32 %v834, %v834
  %v1676 = vmul.f32 %v839, %v839
  %v1677 = vmul.f32 %v842, %v842
  %v1678 = vmul.f32 %v847, %v847
  %v1679 = vmul.f32 %v850, %v850
  %v1680 = vmul.f32 %v855, %v855
  %v1681 = vmul.f32 %v858, %v858
  %v1682 = vmul.f32 %v863, %v863
  %v1683 = vmul.f32 %v866, %v866
  %v1684 = vmul.f32 %v871, %v871
  %v1685 = vmul.f32 %v874, %v874
  %v1686 = vmul.f32 %v879, %v879
  %v1687 = vmul.f32 %v882, %v882
  %v1688 = vmul.f32 %v887, %v887
  %v1689 = vmul.f32 %v890, %v890
  %v1690 = vmul.f32 %v895, %v895
  %v1691 = vmul.f32 %v898, %v898
  %v1692 = vmul.f32 %v903, %v903
  %v1693 = vmul.f32 %v906, %v906
  %v1694 = vmul.f32 %v911, %v911
  %v1695 = vmul.f32 %v914, %v914
  %v1696 = vmul.f32 %v919, %v919
  %v1697 = vmul.f32 %v922, %v922
  %v1698 = vmul.f32 %v927, %v927
  %v1699 = vmul.f32 %v930, %v930
  %v1700 = vmul.f32 %v935, %v935
  %v1701 = vmul.f32 %v938, %v938
  %v1702 = vmul.f32 %v943, %v943
  %v1703 = vmul.f32 %v946, %v946
  %v1704 = vmul.f32 %v951, %v951
  %v1705 = vmul.f32 %v954, %v954
  %v1706 = vmul.f32 %v959, %v959
  %v1707 = vmul.f32 %v962, %v962
  %v1708 = vmul.f32 %v967, %v967
  %v1709 = vmul.f32 %v970, %v970
  %v1710 = vmul.f32 %v975, %v975
  %v1711 = vmul.f32 %v978, %v978
  %v1712 = vmul.f32 %v983, %v983
  %v1713 = vmul.f32 %v986, %v986
  %v1714 = vmul.f32 %v991, %v991
  %v1715 = vmul.f32 %v994, %v994
  %v1716 = vmul.f32 %v999, %v999
  %v1717 = vmul.f32 %v1002, %v1002
  %v1718 = vmul.f32 %v1007, %v1007
  %v1719 = vmul.f32 %v1010, %v1010
  %v1720 = vmul.f32 %v1015, %v1015
  %v1721 = vmul.f32 %v1018, %v1018
  %v1722 = vmul.f32 %v1023, %v1023
  %v1723 = vmul.f32 %v1026, %v1026
  %v1724 = vmul.f32 %v1031, %v1031
  %v1725 = vmul.f32 %v1034, %v1034
  %v1726 = vmul.f32 %v1039, %v1039
  %v1727 = vmul.f32 %v1042, %v1042
  %v1728 = vmul.f32 %v1047, %v1047
  %v1729 = vmul.f32 %v1050, %v1050
  %v1730 = vmul.f32 %v1055, %v1055
  %v1731 = vmul.f32 %v1058, %v1058
  %v1732 = vmul.f32 %v1063, %v1063
  %v1733 = vmul.f32 %v1066, %v1066
  %v1734 = vmul.f32 %v1071, %v1071
  %v1735 = vmul.f32 %v1074, %v1074
  %v1736 = vmul.f32 %v1079, %v1079
  %v1737 = vmul.f32 %v1082, %v1082
  %v1738 = vmul.f32 %v1087, %v1087
  %v1739 = vmul.f32 %v1090, %v1090
  %v1740 = vmul.f32 %v1095, %v1095
  %v1741 = vmul.f32 %v1098, %v1098
  %v1742 = vmul.f32 %v1103, %v1103
  %v1743 = vmul.f32 %v1106, %v1106
  %v1744 = vmul.f32 %v1111, %v1111
  %v1745 = vmul.f32 %v1114, %v1114
  %v1746 = vmul.f32 %v1119, %v1119
  %v1747 = vmul.f32 %v1122, %v1122
  %v1748 = vmul.f32 %v1127, %v1127
  %v1749 = vmul.f32 %v1130, %v1130
  %v1750 = vmul.f32 %v1135, %v1135
  %v1751 = vmul.f32 %v1138, %v1138
  %v1752 = vmul.f32 %v1143, %v1143
  %v1753 = vmul.f32 %v1146, %v1146
  %v1754 = vmul.f32 %v1151, %v1151
  %v1755 = vmul.f32 %v1154, %v1154
  %v1756 = vmul.f32 %v1159, %v1159
  %v1757 = vmul.f32 %v1162, %v1162
  %v1758 = vmul.f32 %v1167, %v1167
  %v1759 = vmul.f32 %v1170, %v1170
  %v1760 = vmul.f32 %v1175, %v1175
  %v1761 = vmul.f32 %v1178, %v1178
  %v1762 = vmul.f32 %v1183, %v1183
  %v1763 = vmul.f32 %v1186, %v1186
  %v1764 = vmul.f32 %v1191, %v1191
  %v1765 = vmul.f32 %v1194, %v1194
  %v1766 = vmul.f32 %v1199, %v1199
  %v1767 = vmul.f32 %v1202, %v1202
  %v1768 = vmul.f32 %v1207, %v1207
  %v1769 = vmul.f32 %v1210, %v1210
  %v1770 = vmul.f32 %v1215, %v1215
  %v1771 = vmul.f32 %v1218, %v1218
  %v1772 = vmul.f32 %v1223, %v1223
  %v1773 = vmul.f32 %v1226, %v1226
  %v1774 = vmul.f32 %v1231, %v1231
  %v1775 = vmul.f32 %v1234, %v1234
  %v1776 = vmul.f32 %v1239, %v1239
  %v1777 = vmul.f32 %v1242, %v1242
  %v1778 = vmul.f32 %v1247, %v1247
  %v1779 = vmul.f32 %v1250, %v1250
  %v1780 = vmul.f32 %v1255, %v1255
  %v1781 = vmul.f32 %v1258, %v1258
  %v1782 = vmul.f32 %v1263, %v1263
  %v1783 = vmul.f32 %v1266, %v1266
  %v1784 = vmul.f32 %v1271, %v1271
  %v1785 = vmul.f32 %v1274, %v1274
  %v1786 = vmul.f32 %v1279, %v1279
  %v1787 = vmul.f32 %v1282, %v1282
  %v1788 = vmul.f32 %v1287, %v1287
  %v1789 = vmul.f32 %v1290, %v1290
  %v1790 = vmul.f32 %v1295, %v1295
  %v1791 = vmul.f32 %v1298, %v1298
  %v1792 = vmul.f32 %v1303, %v1303
  %v1793 = vmul.f32 %v1306, %v1306
  %v1794 = vmul.f32 %v1311, %v1311
  %v1795 = vmul.f32 %v1314, %v1314
  %v1796 = vmul.f32 %v1319, %v1319
  %v1797 = vmul.f32 %v1322, %v1322
  %v1798 = vmul.f32 %v1327, %v1327
  %v1799 = vmul.f32 %v1330, %v1330
  %v1800 = vmul.f32 %v1335, %v1335
  %v1801 = vmul.f32 %v1338, %v1338
  %v1802 = vmul.f32 %v1343, %v1343
  %v1803 = vmul.f32 %v1346, %v1346
  %v1804 = vmul.f32 %v1351, %v1351
  %v1805 = vmul.f32 %v1354, %v1354
  %v1806 = vmul.f32 %v1359, %v1359
  %v1807 = vmul.f32 %v1362, %v1362
  %v1808 = vmul.f32 %v1367, %v1367
  %v1809 = vmul.f32 %v1370, %v1370
  %v1810 = vsel %vm547, %v1666, 0.0
  %v1811 = vsel %vm547, %v1667, 0.0
  %v1812 = vadd.f32 %v1810, %v1811
  %v1813 = vsel %vm547, %v1668, 0.0
  %v1814 = vadd.f32 %v1812, %v1813
  %v1815 = vsel %vm547, %v1669, 0.0
  %v1816 = vadd.f32 %v1814, %v1815
  %v1817 = vsel %vm547, %v1670, 0.0
  %v1818 = vadd.f32 %v1816, %v1817
  %v1819 = vsel %vm547, %v1671, 0.0
  %v1820 = vadd.f32 %v1818, %v1819
  %v1821 = vsel %vm547, %v1672, 0.0
  %v1822 = vadd.f32 %v1820, %v1821
  %v1823 = vsel %vm547, %v1673, 0.0
  %v1824 = vadd.f32 %v1822, %v1823
  %v1825 = vsel %vm547, %v1674, 0.0
  %v1826 = vadd.f32 %v1824, %v1825
  %v1827 = vsel %vm547, %v1675, 0.0
  %v1828 = vadd.f32 %v1826, %v1827
  %v1829 = vsel %vm547, %v1676, 0.0
  %v1830 = vadd.f32 %v1828, %v1829
  %v1831 = vsel %vm547, %v1677, 0.0
  %v1832 = vadd.f32 %v1830, %v1831
  %v1833 = vsel %vm547, %v1678, 0.0
  %v1834 = vadd.f32 %v1832, %v1833
  %v1835 = vsel %vm547, %v1679, 0.0
  %v1836 = vadd.f32 %v1834, %v1835
  %v1837 = vsel %vm547, %v1680, 0.0
  %v1838 = vadd.f32 %v1836, %v1837
  %v1839 = vsel %vm547, %v1681, 0.0
  %v1840 = vadd.f32 %v1838, %v1839
  %v1841 = vsel %vm547, %v1682, 0.0
  %v1842 = vadd.f32 %v1840, %v1841
  %v1843 = vsel %vm547, %v1683, 0.0
  %v1844 = vadd.f32 %v1842, %v1843
  %v1845 = vsel %vm547, %v1684, 0.0
  %v1846 = vadd.f32 %v1844, %v1845
  %v1847 = vsel %vm547, %v1685, 0.0
  %v1848 = vadd.f32 %v1846, %v1847
  %v1849 = vsel %vm547, %v1686, 0.0
  %v1850 = vadd.f32 %v1848, %v1849
  %v1851 = vsel %vm547, %v1687, 0.0
  %v1852 = vadd.f32 %v1850, %v1851
  %v1853 = vsel %vm547, %v1688, 0.0
  %v1854 = vadd.f32 %v1852, %v1853
  %v1855 = vsel %vm547, %v1689, 0.0
  %v1856 = vadd.f32 %v1854, %v1855
  %v1857 = vsel %vm547, %v1690, 0.0
  %v1858 = vadd.f32 %v1856, %v1857
  %v1859 = vsel %vm547, %v1691, 0.0
  %v1860 = vadd.f32 %v1858, %v1859
  %v1861 = vsel %vm547, %v1692, 0.0
  %v1862 = vadd.f32 %v1860, %v1861
  %v1863 = vsel %vm547, %v1693, 0.0
  %v1864 = vadd.f32 %v1862, %v1863
  %v1865 = vsel %vm547, %v1694, 0.0
  %v1866 = vadd.f32 %v1864, %v1865
  %v1867 = vsel %vm547, %v1695, 0.0
  %v1868 = vadd.f32 %v1866, %v1867
  %v1869 = vsel %vm547, %v1696, 0.0
  %v1870 = vadd.f32 %v1868, %v1869
  %v1871 = vsel %vm547, %v1697, 0.0
  %v1872 = vadd.f32 %v1870, %v1871
  %v1873 = vsel %vm547, %v1698, 0.0
  %v1874 = vadd.f32 %v1872, %v1873
  %v1875 = vsel %vm547, %v1699, 0.0
  %v1876 = vadd.f32 %v1874, %v1875
  %v1877 = vsel %vm547, %v1700, 0.0
  %v1878 = vadd.f32 %v1876, %v1877
  %v1879 = vsel %vm547, %v1701, 0.0
  %v1880 = vadd.f32 %v1878, %v1879
  %v1881 = vsel %vm547, %v1702, 0.0
  %v1882 = vadd.f32 %v1880, %v1881
  %v1883 = vsel %vm547, %v1703, 0.0
  %v1884 = vadd.f32 %v1882, %v1883
  %v1885 = vsel %vm547, %v1704, 0.0
  %v1886 = vadd.f32 %v1884, %v1885
  %v1887 = vsel %vm547, %v1705, 0.0
  %v1888 = vadd.f32 %v1886, %v1887
  %v1889 = vsel %vm547, %v1706, 0.0
  %v1890 = vadd.f32 %v1888, %v1889
  %v1891 = vsel %vm547, %v1707, 0.0
  %v1892 = vadd.f32 %v1890, %v1891
  %v1893 = vsel %vm547, %v1708, 0.0
  %v1894 = vadd.f32 %v1892, %v1893
  %v1895 = vsel %vm547, %v1709, 0.0
  %v1896 = vadd.f32 %v1894, %v1895
  %v1897 = vsel %vm547, %v1710, 0.0
  %v1898 = vadd.f32 %v1896, %v1897
  %v1899 = vsel %vm547, %v1711, 0.0
  %v1900 = vadd.f32 %v1898, %v1899
  %v1901 = vsel %vm547, %v1712, 0.0
  %v1902 = vadd.f32 %v1900, %v1901
  %v1903 = vsel %vm547, %v1713, 0.0
  %v1904 = vadd.f32 %v1902, %v1903
  %v1905 = vsel %vm547, %v1714, 0.0
  %v1906 = vadd.f32 %v1904, %v1905
  %v1907 = vsel %vm547, %v1715, 0.0
  %v1908 = vadd.f32 %v1906, %v1907
  %v1909 = vsel %vm547, %v1716, 0.0
  %v1910 = vadd.f32 %v1908, %v1909
  %v1911 = vsel %vm547, %v1717, 0.0
  %v1912 = vadd.f32 %v1910, %v1911
  %v1913 = vsel %vm547, %v1718, 0.0
  %v1914 = vadd.f32 %v1912, %v1913
  %v1915 = vsel %vm547, %v1719, 0.0
  %v1916 = vadd.f32 %v1914, %v1915
  %v1917 = vsel %vm547, %v1720, 0.0
  %v1918 = vadd.f32 %v1916, %v1917
  %v1919 = vsel %vm547, %v1721, 0.0
  %v1920 = vadd.f32 %v1918, %v1919
  %v1921 = vsel %vm547, %v1722, 0.0
  %v1922 = vadd.f32 %v1920, %v1921
  %v1923 = vsel %vm547, %v1723, 0.0
  %v1924 = vadd.f32 %v1922, %v1923
  %v1925 = vsel %vm547, %v1724, 0.0
  %v1926 = vadd.f32 %v1924, %v1925
  %v1927 = vsel %vm547, %v1725, 0.0
  %v1928 = vadd.f32 %v1926, %v1927
  %v1929 = vsel %vm547, %v1726, 0.0
  %v1930 = vadd.f32 %v1928, %v1929
  %v1931 = vsel %vm547, %v1727, 0.0
  %v1932 = vadd.f32 %v1930, %v1931
  %v1933 = vsel %vm547, %v1728, 0.0
  %v1934 = vadd.f32 %v1932, %v1933
  %v1935 = vsel %vm547, %v1729, 0.0
  %v1936 = vadd.f32 %v1934, %v1935
  %v1937 = vsel %vm547, %v1730, 0.0
  %v1938 = vadd.f32 %v1936, %v1937
  %v1939 = vsel %vm547, %v1731, 0.0
  %v1940 = vadd.f32 %v1938, %v1939
  %v1941 = vsel %vm547, %v1732, 0.0
  %v1942 = vadd.f32 %v1940, %v1941
  %v1943 = vsel %vm547, %v1733, 0.0
  %v1944 = vadd.f32 %v1942, %v1943
  %v1945 = vsel %vm547, %v1734, 0.0
  %v1946 = vadd.f32 %v1944, %v1945
  %v1947 = vsel %vm547, %v1735, 0.0
  %v1948 = vadd.f32 %v1946, %v1947
  %v1949 = vsel %vm547, %v1736, 0.0
  %v1950 = vadd.f32 %v1948, %v1949
  %v1951 = vsel %vm547, %v1737, 0.0
  %v1952 = vadd.f32 %v1950, %v1951
  %v1953 = vsel %vm547, %v1738, 0.0
  %v1954 = vadd.f32 %v1952, %v1953
  %v1955 = vsel %vm547, %v1739, 0.0
  %v1956 = vadd.f32 %v1954, %v1955
  %v1957 = vsel %vm547, %v1740, 0.0
  %v1958 = vadd.f32 %v1956, %v1957
  %v1959 = vsel %vm547, %v1741, 0.0
  %v1960 = vadd.f32 %v1958, %v1959
  %v1961 = vsel %vm547, %v1742, 0.0
  %v1962 = vadd.f32 %v1960, %v1961
  %v1963 = vsel %vm547, %v1743, 0.0
  %v1964 = vadd.f32 %v1962, %v1963
  %v1965 = vsel %vm547, %v1744, 0.0
  %v1966 = vadd.f32 %v1964, %v1965
  %v1967 = vsel %vm547, %v1745, 0.0
  %v1968 = vadd.f32 %v1966, %v1967
  %v1969 = vsel %vm547, %v1746, 0.0
  %v1970 = vadd.f32 %v1968, %v1969
  %v1971 = vsel %vm547, %v1747, 0.0
  %v1972 = vadd.f32 %v1970, %v1971
  %v1973 = vsel %vm547, %v1748, 0.0
  %v1974 = vadd.f32 %v1972, %v1973
  %v1975 = vsel %vm547, %v1749, 0.0
  %v1976 = vadd.f32 %v1974, %v1975
  %v1977 = vsel %vm547, %v1750, 0.0
  %v1978 = vadd.f32 %v1976, %v1977
  %v1979 = vsel %vm547, %v1751, 0.0
  %v1980 = vadd.f32 %v1978, %v1979
  %v1981 = vsel %vm547, %v1752, 0.0
  %v1982 = vadd.f32 %v1980, %v1981
  %v1983 = vsel %vm547, %v1753, 0.0
  %v1984 = vadd.f32 %v1982, %v1983
  %v1985 = vsel %vm547, %v1754, 0.0
  %v1986 = vadd.f32 %v1984, %v1985
  %v1987 = vsel %vm547, %v1755, 0.0
  %v1988 = vadd.f32 %v1986, %v1987
  %v1989 = vsel %vm547, %v1756, 0.0
  %v1990 = vadd.f32 %v1988, %v1989
  %v1991 = vsel %vm547, %v1757, 0.0
  %v1992 = vadd.f32 %v1990, %v1991
  %v1993 = vsel %vm547, %v1758, 0.0
  %v1994 = vadd.f32 %v1992, %v1993
  %v1995 = vsel %vm547, %v1759, 0.0
  %v1996 = vadd.f32 %v1994, %v1995
  %v1997 = vsel %vm547, %v1760, 0.0
  %v1998 = vadd.f32 %v1996, %v1997
  %v1999 = vsel %vm547, %v1761, 0.0
  %v2000 = vadd.f32 %v1998, %v1999
  %v2001 = vsel %vm547, %v1762, 0.0
  %v2002 = vadd.f32 %v2000, %v2001
  %v2003 = vsel %vm547, %v1763, 0.0
  %v2004 = vadd.f32 %v2002, %v2003
  %v2005 = vsel %vm547, %v1764, 0.0
  %v2006 = vadd.f32 %v2004, %v2005
  %v2007 = vsel %vm547, %v1765, 0.0
  %v2008 = vadd.f32 %v2006, %v2007
  %v2009 = vsel %vm547, %v1766, 0.0
  %v2010 = vadd.f32 %v2008, %v2009
  %v2011 = vsel %vm547, %v1767, 0.0
  %v2012 = vadd.f32 %v2010, %v2011
  %v2013 = vsel %vm547, %v1768, 0.0
  %v2014 = vadd.f32 %v2012, %v2013
  %v2015 = vsel %vm547, %v1769, 0.0
  %v2016 = vadd.f32 %v2014, %v2015
  %v2017 = vsel %vm547, %v1770, 0.0
  %v2018 = vadd.f32 %v2016, %v2017
  %v2019 = vsel %vm547, %v1771, 0.0
  %v2020 = vadd.f32 %v2018, %v2019
  %v2021 = vsel %vm547, %v1772, 0.0
  %v2022 = vadd.f32 %v2020, %v2021
  %v2023 = vsel %vm547, %v1773, 0.0
  %v2024 = vadd.f32 %v2022, %v2023
  %v2025 = vsel %vm547, %v1774, 0.0
  %v2026 = vadd.f32 %v2024, %v2025
  %v2027 = vsel %vm547, %v1775, 0.0
  %v2028 = vadd.f32 %v2026, %v2027
  %v2029 = vsel %vm547, %v1776, 0.0
  %v2030 = vadd.f32 %v2028, %v2029
  %v2031 = vsel %vm547, %v1777, 0.0
  %v2032 = vadd.f32 %v2030, %v2031
  %v2033 = vsel %vm547, %v1778, 0.0
  %v2034 = vadd.f32 %v2032, %v2033
  %v2035 = vsel %vm547, %v1779, 0.0
  %v2036 = vadd.f32 %v2034, %v2035
  %v2037 = vsel %vm547, %v1780, 0.0
  %v2038 = vadd.f32 %v2036, %v2037
  %v2039 = vsel %vm547, %v1781, 0.0
  %v2040 = vadd.f32 %v2038, %v2039
  %v2041 = vsel %vm547, %v1782, 0.0
  %v2042 = vadd.f32 %v2040, %v2041
  %v2043 = vsel %vm547, %v1783, 0.0
  %v2044 = vadd.f32 %v2042, %v2043
  %v2045 = vsel %vm547, %v1784, 0.0
  %v2046 = vadd.f32 %v2044, %v2045
  %v2047 = vsel %vm547, %v1785, 0.0
  %v2048 = vadd.f32 %v2046, %v2047
  %v2049 = vsel %vm547, %v1786, 0.0
  %v2050 = vadd.f32 %v2048, %v2049
  %v2051 = vsel %vm547, %v1787, 0.0
  %v2052 = vadd.f32 %v2050, %v2051
  %v2053 = vsel %vm547, %v1788, 0.0
  %v2054 = vadd.f32 %v2052, %v2053
  %v2055 = vsel %vm547, %v1789, 0.0
  %v2056 = vadd.f32 %v2054, %v2055
  %v2057 = vsel %vm547, %v1790, 0.0
  %v2058 = vadd.f32 %v2056, %v2057
  %v2059 = vsel %vm547, %v1791, 0.0
  %v2060 = vadd.f32 %v2058, %v2059
  %v2061 = vsel %vm547, %v1792, 0.0
  %v2062 = vadd.f32 %v2060, %v2061
  %v2063 = vsel %vm547, %v1793, 0.0
  %v2064 = vadd.f32 %v2062, %v2063
  %v2065 = vsel %vm547, %v1794, 0.0
  %v2066 = vadd.f32 %v2064, %v2065
  %v2067 = vsel %vm547, %v1795, 0.0
  %v2068 = vadd.f32 %v2066, %v2067
  %v2069 = vsel %vm547, %v1796, 0.0
  %v2070 = vadd.f32 %v2068, %v2069
  %v2071 = vsel %vm547, %v1797, 0.0
  %v2072 = vadd.f32 %v2070, %v2071
  %v2073 = vsel %vm547, %v1798, 0.0
  %v2074 = vadd.f32 %v2072, %v2073
  %v2075 = vsel %vm547, %v1799, 0.0
  %v2076 = vadd.f32 %v2074, %v2075
  %v2077 = vsel %vm547, %v1800, 0.0
  %v2078 = vadd.f32 %v2076, %v2077
  %v2079 = vsel %vm547, %v1801, 0.0
  %v2080 = vadd.f32 %v2078, %v2079
  %v2081 = vsel %vm547, %v1802, 0.0
  %v2082 = vadd.f32 %v2080, %v2081
  %v2083 = vsel %vm547, %v1803, 0.0
  %v2084 = vadd.f32 %v2082, %v2083
  %v2085 = vsel %vm547, %v1804, 0.0
  %v2086 = vadd.f32 %v2084, %v2085
  %v2087 = vsel %vm547, %v1805, 0.0
  %v2088 = vadd.f32 %v2086, %v2087
  %v2089 = vsel %vm547, %v1806, 0.0
  %v2090 = vadd.f32 %v2088, %v2089
  %v2091 = vsel %vm547, %v1807, 0.0
  %v2092 = vadd.f32 %v2090, %v2091
  %v2093 = vsel %vm547, %v1808, 0.0
  %v2094 = vadd.f32 %v2092, %v2093
  %v2095 = vsel %vm547, %v1809, 0.0
  %v2096 = vadd.f32 %v2094, %v2095
  %v2097 = vrot.slane %v2096, 4
  %v2098 = vadd.f32 %v2096, %v2097
  %v2099 = vrot.slane %v2098, 2
  %v2100 = vadd.f32 %v2098, %v2099
  %v2101 = vrot.slane %v2100, 1
  %v2102 = vadd.f32 %v2100, %v2101
  %v2103 = vmul.f32 %v1665, 0.00086805556
  %v2104 = vmul.f32 %v2102, 0.00086805556
  %v2105 = vmul.f32 %v2103, %v2103
  %v2106 = vsub.f32 %v2104, %v2105
  %v2107 = vadd.f32 %v2106, 1e-05
  %v2108 = vrsqrt.pop %v2107
  %v2109 = vld [vmem:[%s3] sm:$0x1]
  %v2110 = vmul.f32 %v2108, %v2109
  %v2111 = vld [vmem:[%s4] sm:$0x1]
  %v2112 = vmul.f32 %v2103, %v2110
  %v2113 = vsub.f32 %v2111, %v2112
  %v2114 = vlaneseq
  %v2115 = vshrl.u32 %v2114, 7
  %v2116 = vsub.s32 0, %v2115
  %v2117 = vrot.slane %v2110, %v2116
  %v2118 = vmul.f32 %v799, %v2117
  %v2119 = vmul.f32 %v802, %v2117
  %v2120 = vmul.f32 %v807, %v2117
  %v2121 = vmul.f32 %v810, %v2117
  %v2122 = vmul.f32 %v815, %v2117
  %v2123 = vmul.f32 %v818, %v2117
  %v2124 = vmul.f32 %v823, %v2117
  %v2125 = vmul.f32 %v826, %v2117
  %v2126 = vmul.f32 %v831, %v2117
  %v2127 = vmul.f32 %v834, %v2117
  %v2128 = vmul.f32 %v839, %v2117
  %v2129 = vmul.f32 %v842, %v2117
  %v2130 = vmul.f32 %v847, %v2117
  %v2131 = vmul.f32 %v850, %v2117
  %v2132 = vmul.f32 %v855, %v2117
  %v2133 = vmul.f32 %v858, %v2117
  %v2134 = vmul.f32 %v863, %v2117
  %v2135 = vmul.f32 %v866, %v2117
  %v2136 = vmul.f32 %v871, %v2117
  %v2137 = vmul.f32 %v874, %v2117
  %v2138 = vmul.f32 %v879, %v2117
  %v2139 = vmul.f32 %v882, %v2117
  %v2140 = vmul.f32 %v887, %v2117
  %v2141 = vmul.f32 %v890, %v2117
  %v2142 = vmul.f32 %v895, %v2117
  %v2143 = vmul.f32 %v898, %v2117
  %v2144 = vmul.f32 %v903, %v2117
  %v2145 = vmul.f32 %v906, %v2117
  %v2146 = vmul.f32 %v911, %v2117
  %v2147 = vmul.f32 %v914, %v2117
  %v2148 = vmul.f32 %v919, %v2117
  %v2149 = vmul.f32 %v922, %v2117
  %v2150 = vmul.f32 %v927, %v2117
  %v2151 = vmul.f32 %v930, %v2117
  %v2152 = vmul.f32 %v935, %v2117
  %v2153 = vmul.f32 %v938, %v2117
  %v2154 = vmul.f32 %v943, %v2117
  %v2155 = vmul.f32 %v946, %v2117
  %v2156 = vmul.f32 %v951, %v2117
  %v2157 = vmul.f32 %v954, %v2117
  %v2158 = vmul.f32 %v959, %v2117
  %v2159 = vmul.f32 %v962, %v2117
  %v2160 = vmul.f32 %v967, %v2117
  %v2161 = vmul.f32 %v970, %v2117
  %v2162 = vmul.f32 %v975, %v2117
  %v2163 = vmul.f32 %v978, %v2117
  %v2164 = vmul.f32 %v983, %v2117
  %v2165 = vmul.f32 %v986, %v2117
  %v2166 = vmul.f32 %v991, %v2117
  %v2167 = vmul.f32 %v994, %v2117
  %v2168 = vmul.f32 %v999, %v2117
  %v2169 = vmul.f32 %v1002, %v2117
  %v2170 = vmul.f32 %v1007, %v2117
  %v2171 = vmul.f32 %v1010, %v2117
  %v2172 = vmul.f32 %v1015, %v2117
  %v2173 = vmul.f32 %v1018, %v2117
  %v2174 = vmul.f32 %v1023, %v2117
  %v2175 = vmul.f32 %v1026, %v2117
  %v2176 = vmul.f32 %v1031, %v2117
  %v2177 = vmul.f32 %v1034, %v2117
  %v2178 = vmul.f32 %v1039, %v2117
  %v2179 = vmul.f32 %v1042, %v2117
  %v2180 = vmul.f32 %v1047, %v2117
  %v2181 = vmul.f32 %v1050, %v2117
  %v2182 = vmul.f32 %v1055, %v2117
  %v2183 = vmul.f32 %v1058, %v2117
  %v2184 = vmul.f32 %v1063, %v2117
  %v2185 = vmul.f32 %v1066, %v2117
  %v2186 = vmul.f32 %v1071, %v2117
  %v2187 = vmul.f32 %v1074, %v2117
  %v2188 = vmul.f32 %v1079, %v2117
  %v2189 = vmul.f32 %v1082, %v2117
  %v2190 = vmul.f32 %v1087, %v2117
  %v2191 = vmul.f32 %v1090, %v2117
  %v2192 = vmul.f32 %v1095, %v2117
  %v2193 = vmul.f32 %v1098, %v2117
  %v2194 = vmul.f32 %v1103, %v2117
  %v2195 = vmul.f32 %v1106, %v2117
  %v2196 = vmul.f32 %v1111, %v2117
  %v2197 = vmul.f32 %v1114, %v2117
  %v2198 = vmul.f32 %v1119, %v2117
  %v2199 = vmul.f32 %v1122, %v2117
  %v2200 = vmul.f32 %v1127, %v2117
  %v2201 = vmul.f32 %v1130, %v2117
  %v2202 = vmul.f32 %v1135, %v2117
  %v2203 = vmul.f32 %v1138, %v2117
  %v2204 = vmul.f32 %v1143, %v2117
  %v2205 = vmul.f32 %v1146, %v2117
  %v2206 = vmul.f32 %v1151, %v2117
  %v2207 = vmul.f32 %v1154, %v2117
  %v2208 = vmul.f32 %v1159, %v2117
  %v2209 = vmul.f32 %v1162, %v2117
  %v2210 = vmul.f32 %v1167, %v2117
  %v2211 = vmul.f32 %v1170, %v2117
  %v2212 = vmul.f32 %v1175, %v2117
  %v2213 = vmul.f32 %v1178, %v2117
  %v2214 = vmul.f32 %v1183, %v2117
  %v2215 = vmul.f32 %v1186, %v2117
  %v2216 = vmul.f32 %v1191, %v2117
  %v2217 = vmul.f32 %v1194, %v2117
  %v2218 = vmul.f32 %v1199, %v2117
  %v2219 = vmul.f32 %v1202, %v2117
  %v2220 = vmul.f32 %v1207, %v2117
  %v2221 = vmul.f32 %v1210, %v2117
  %v2222 = vmul.f32 %v1215, %v2117
  %v2223 = vmul.f32 %v1218, %v2117
  %v2224 = vmul.f32 %v1223, %v2117
  %v2225 = vmul.f32 %v1226, %v2117
  %v2226 = vmul.f32 %v1231, %v2117
  %v2227 = vmul.f32 %v1234, %v2117
  %v2228 = vmul.f32 %v1239, %v2117
  %v2229 = vmul.f32 %v1242, %v2117
  %v2230 = vmul.f32 %v1247, %v2117
  %v2231 = vmul.f32 %v1250, %v2117
  %v2232 = vmul.f32 %v1255, %v2117
  %v2233 = vmul.f32 %v1258, %v2117
  %v2234 = vmul.f32 %v1263, %v2117
  %v2235 = vmul.f32 %v1266, %v2117
  %v2236 = vmul.f32 %v1271, %v2117
  %v2237 = vmul.f32 %v1274, %v2117
  %v2238 = vmul.f32 %v1279, %v2117
  %v2239 = vmul.f32 %v1282, %v2117
  %v2240 = vmul.f32 %v1287, %v2117
  %v2241 = vmul.f32 %v1290, %v2117
  %v2242 = vmul.f32 %v1295, %v2117
  %v2243 = vmul.f32 %v1298, %v2117
  %v2244 = vmul.f32 %v1303, %v2117
  %v2245 = vmul.f32 %v1306, %v2117
  %v2246 = vmul.f32 %v1311, %v2117
  %v2247 = vmul.f32 %v1314, %v2117
  %v2248 = vmul.f32 %v1319, %v2117
  %v2249 = vmul.f32 %v1322, %v2117
  %v2250 = vmul.f32 %v1327, %v2117
  %v2251 = vmul.f32 %v1330, %v2117
  %v2252 = vmul.f32 %v1335, %v2117
  %v2253 = vmul.f32 %v1338, %v2117
  %v2254 = vmul.f32 %v1343, %v2117
  %v2255 = vmul.f32 %v1346, %v2117
  %v2256 = vmul.f32 %v1351, %v2117
  %v2257 = vmul.f32 %v1354, %v2117
  %v2258 = vmul.f32 %v1359, %v2117
  %v2259 = vmul.f32 %v1362, %v2117
  %v2260 = vmul.f32 %v1367, %v2117
  %v2261 = vmul.f32 %v1370, %v2117
  %v2263 = vlaneseq
  %v2264 = vshrl.u32 %v2263, 7
  %v2265 = vsub.s32 0, %v2264
  %v2266 = vrot.slane %v2113, %v2265
  %v2268 = vadd.f32 %v2118, %v2266
  %v2269 = vadd.f32 %v2119, %v2266
  %v2270 = vadd.f32 %v2120, %v2266
  %v2271 = vadd.f32 %v2121, %v2266
  %v2272 = vadd.f32 %v2122, %v2266
  %v2273 = vadd.f32 %v2123, %v2266
  %v2274 = vadd.f32 %v2124, %v2266
  %v2275 = vadd.f32 %v2125, %v2266
  %v2276 = vadd.f32 %v2126, %v2266
  %v2277 = vadd.f32 %v2127, %v2266
  %v2278 = vadd.f32 %v2128, %v2266
  %v2279 = vadd.f32 %v2129, %v2266
  %v2280 = vadd.f32 %v2130, %v2266
  %v2281 = vadd.f32 %v2131, %v2266
  %v2282 = vadd.f32 %v2132, %v2266
  %v2283 = vadd.f32 %v2133, %v2266
  %v2284 = vadd.f32 %v2134, %v2266
  %v2285 = vadd.f32 %v2135, %v2266
  %v2286 = vadd.f32 %v2136, %v2266
  %v2287 = vadd.f32 %v2137, %v2266
  %v2288 = vadd.f32 %v2138, %v2266
  %v2289 = vadd.f32 %v2139, %v2266
  %v2290 = vadd.f32 %v2140, %v2266
  %v2291 = vadd.f32 %v2141, %v2266
  %v2292 = vadd.f32 %v2142, %v2266
  %v2293 = vadd.f32 %v2143, %v2266
  %v2294 = vadd.f32 %v2144, %v2266
  %v2295 = vadd.f32 %v2145, %v2266
  %v2296 = vadd.f32 %v2146, %v2266
  %v2297 = vadd.f32 %v2147, %v2266
  %v2298 = vadd.f32 %v2148, %v2266
  %v2299 = vadd.f32 %v2149, %v2266
  %v2300 = vadd.f32 %v2150, %v2266
  %v2301 = vadd.f32 %v2151, %v2266
  %v2302 = vadd.f32 %v2152, %v2266
  %v2303 = vadd.f32 %v2153, %v2266
  %v2304 = vadd.f32 %v2154, %v2266
  %v2305 = vadd.f32 %v2155, %v2266
  %v2306 = vadd.f32 %v2156, %v2266
  %v2307 = vadd.f32 %v2157, %v2266
  %v2308 = vadd.f32 %v2158, %v2266
  %v2309 = vadd.f32 %v2159, %v2266
  %v2310 = vadd.f32 %v2160, %v2266
  %v2311 = vadd.f32 %v2161, %v2266
  %v2312 = vadd.f32 %v2162, %v2266
  %v2313 = vadd.f32 %v2163, %v2266
  %v2314 = vadd.f32 %v2164, %v2266
  %v2315 = vadd.f32 %v2165, %v2266
  %v2316 = vadd.f32 %v2166, %v2266
  %v2317 = vadd.f32 %v2167, %v2266
  %v2318 = vadd.f32 %v2168, %v2266
  %v2319 = vadd.f32 %v2169, %v2266
  %v2320 = vadd.f32 %v2170, %v2266
  %v2321 = vadd.f32 %v2171, %v2266
  %v2322 = vadd.f32 %v2172, %v2266
  %v2323 = vadd.f32 %v2173, %v2266
  %v2324 = vadd.f32 %v2174, %v2266
  %v2325 = vadd.f32 %v2175, %v2266
  %v2326 = vadd.f32 %v2176, %v2266
  %v2327 = vadd.f32 %v2177, %v2266
  %v2328 = vadd.f32 %v2178, %v2266
  %v2329 = vadd.f32 %v2179, %v2266
  %v2330 = vadd.f32 %v2180, %v2266
  %v2331 = vadd.f32 %v2181, %v2266
  %v2332 = vadd.f32 %v2182, %v2266
  %v2333 = vadd.f32 %v2183, %v2266
  %v2334 = vadd.f32 %v2184, %v2266
  %v2335 = vadd.f32 %v2185, %v2266
  %v2336 = vadd.f32 %v2186, %v2266
  %v2337 = vadd.f32 %v2187, %v2266
  %v2338 = vadd.f32 %v2188, %v2266
  %v2339 = vadd.f32 %v2189, %v2266
  %v2340 = vadd.f32 %v2190, %v2266
  %v2341 = vadd.f32 %v2191, %v2266
  %v2342 = vadd.f32 %v2192, %v2266
  %v2343 = vadd.f32 %v2193, %v2266
  %v2344 = vadd.f32 %v2194, %v2266
  %v2345 = vadd.f32 %v2195, %v2266
  %v2346 = vadd.f32 %v2196, %v2266
  %v2347 = vadd.f32 %v2197, %v2266
  %v2348 = vadd.f32 %v2198, %v2266
  %v2349 = vadd.f32 %v2199, %v2266
  %v2350 = vadd.f32 %v2200, %v2266
  %v2351 = vadd.f32 %v2201, %v2266
  %v2352 = vadd.f32 %v2202, %v2266
  %v2353 = vadd.f32 %v2203, %v2266
  %v2354 = vadd.f32 %v2204, %v2266
  %v2355 = vadd.f32 %v2205, %v2266
  %v2356 = vadd.f32 %v2206, %v2266
  %v2357 = vadd.f32 %v2207, %v2266
  %v2358 = vadd.f32 %v2208, %v2266
  %v2359 = vadd.f32 %v2209, %v2266
  %v2360 = vadd.f32 %v2210, %v2266
  %v2361 = vadd.f32 %v2211, %v2266
  %v2362 = vadd.f32 %v2212, %v2266
  %v2363 = vadd.f32 %v2213, %v2266
  %v2364 = vadd.f32 %v2214, %v2266
  %v2365 = vadd.f32 %v2215, %v2266
  %v2366 = vadd.f32 %v2216, %v2266
  %v2367 = vadd.f32 %v2217, %v2266
  %v2368 = vadd.f32 %v2218, %v2266
  %v2369 = vadd.f32 %v2219, %v2266
  %v2370 = vadd.f32 %v2220, %v2266
  %v2371 = vadd.f32 %v2221, %v2266
  %v2372 = vadd.f32 %v2222, %v2266
  %v2373 = vadd.f32 %v2223, %v2266
  %v2374 = vadd.f32 %v2224, %v2266
  %v2375 = vadd.f32 %v2225, %v2266
  %v2376 = vadd.f32 %v2226, %v2266
  %v2377 = vadd.f32 %v2227, %v2266
  %v2378 = vadd.f32 %v2228, %v2266
  %v2379 = vadd.f32 %v2229, %v2266
  %v2380 = vadd.f32 %v2230, %v2266
  %v2381 = vadd.f32 %v2231, %v2266
  %v2382 = vadd.f32 %v2232, %v2266
  %v2383 = vadd.f32 %v2233, %v2266
  %v2384 = vadd.f32 %v2234, %v2266
  %v2385 = vadd.f32 %v2235, %v2266
  %v2386 = vadd.f32 %v2236, %v2266
  %v2387 = vadd.f32 %v2237, %v2266
  %v2388 = vadd.f32 %v2238, %v2266
  %v2389 = vadd.f32 %v2239, %v2266
  %v2390 = vadd.f32 %v2240, %v2266
  %v2391 = vadd.f32 %v2241, %v2266
  %v2392 = vadd.f32 %v2242, %v2266
  %v2393 = vadd.f32 %v2243, %v2266
  %v2394 = vadd.f32 %v2244, %v2266
  %v2395 = vadd.f32 %v2245, %v2266
  %v2396 = vadd.f32 %v2246, %v2266
  %v2397 = vadd.f32 %v2247, %v2266
  %v2398 = vadd.f32 %v2248, %v2266
  %v2399 = vadd.f32 %v2249, %v2266
  %v2400 = vadd.f32 %v2250, %v2266
  %v2401 = vadd.f32 %v2251, %v2266
  %v2402 = vadd.f32 %v2252, %v2266
  %v2403 = vadd.f32 %v2253, %v2266
  %v2404 = vadd.f32 %v2254, %v2266
  %v2405 = vadd.f32 %v2255, %v2266
  %v2406 = vadd.f32 %v2256, %v2266
  %v2407 = vadd.f32 %v2257, %v2266
  %v2408 = vadd.f32 %v2258, %v2266
  %v2409 = vadd.f32 %v2259, %v2266
  %v2410 = vadd.f32 %v2260, %v2266
  %v2411 = vadd.f32 %v2261, %v2266
  %v2412 = vmax.f32 %v2268, 0.0
  %v2413 = vmax.f32 %v2269, 0.0
  %v2414 = vmax.f32 %v2270, 0.0
  %v2415 = vmax.f32 %v2271, 0.0
  %v2416 = vmax.f32 %v2272, 0.0
  %v2417 = vmax.f32 %v2273, 0.0
  %v2418 = vmax.f32 %v2274, 0.0
  %v2419 = vmax.f32 %v2275, 0.0
  %v2420 = vmax.f32 %v2276, 0.0
  %v2421 = vmax.f32 %v2277, 0.0
  %v2422 = vmax.f32 %v2278, 0.0
  %v2423 = vmax.f32 %v2279, 0.0
  %v2424 = vmax.f32 %v2280, 0.0
  %v2425 = vmax.f32 %v2281, 0.0
  %v2426 = vmax.f32 %v2282, 0.0
  %v2427 = vmax.f32 %v2283, 0.0
  %v2428 = vmax.f32 %v2284, 0.0
  %v2429 = vmax.f32 %v2285, 0.0
  %v2430 = vmax.f32 %v2286, 0.0
  %v2431 = vmax.f32 %v2287, 0.0
  %v2432 = vmax.f32 %v2288, 0.0
  %v2433 = vmax.f32 %v2289, 0.0
  %v2434 = vmax.f32 %v2290, 0.0
  %v2435 = vmax.f32 %v2291, 0.0
  %v2436 = vmax.f32 %v2292, 0.0
  %v2437 = vmax.f32 %v2293, 0.0
  %v2438 = vmax.f32 %v2294, 0.0
  %v2439 = vmax.f32 %v2295, 0.0
  %v2440 = vmax.f32 %v2296, 0.0
  %v2441 = vmax.f32 %v2297, 0.0
  %v2442 = vmax.f32 %v2298, 0.0
  %v2443 = vmax.f32 %v2299, 0.0
  %v2444 = vmax.f32 %v2300, 0.0
  %v2445 = vmax.f32 %v2301, 0.0
  %v2446 = vmax.f32 %v2302, 0.0
  %v2447 = vmax.f32 %v2303, 0.0
  %v2448 = vmax.f32 %v2304, 0.0
  %v2449 = vmax.f32 %v2305, 0.0
  %v2450 = vmax.f32 %v2306, 0.0
  %v2451 = vmax.f32 %v2307, 0.0
  %v2452 = vmax.f32 %v2308, 0.0
  %v2453 = vmax.f32 %v2309, 0.0
  %v2454 = vmax.f32 %v2310, 0.0
  %v2455 = vmax.f32 %v2311, 0.0
  %v2456 = vmax.f32 %v2312, 0.0
  %v2457 = vmax.f32 %v2313, 0.0
  %v2458 = vmax.f32 %v2314, 0.0
  %v2459 = vmax.f32 %v2315, 0.0
  %v2460 = vmax.f32 %v2316, 0.0
  %v2461 = vmax.f32 %v2317, 0.0
  %v2462 = vmax.f32 %v2318, 0.0
  %v2463 = vmax.f32 %v2319, 0.0
  %v2464 = vmax.f32 %v2320, 0.0
  %v2465 = vmax.f32 %v2321, 0.0
  %v2466 = vmax.f32 %v2322, 0.0
  %v2467 = vmax.f32 %v2323, 0.0
  %v2468 = vmax.f32 %v2324, 0.0
  %v2469 = vmax.f32 %v2325, 0.0
  %v2470 = vmax.f32 %v2326, 0.0
  %v2471 = vmax.f32 %v2327, 0.0
  %v2472 = vmax.f32 %v2328, 0.0
  %v2473 = vmax.f32 %v2329, 0.0
  %v2474 = vmax.f32 %v2330, 0.0
  %v2475 = vmax.f32 %v2331, 0.0
  %v2476 = vmax.f32 %v2332, 0.0
  %v2477 = vmax.f32 %v2333, 0.0
  %v2478 = vmax.f32 %v2334, 0.0
  %v2479 = vmax.f32 %v2335, 0.0
  %v2480 = vmax.f32 %v2336, 0.0
  %v2481 = vmax.f32 %v2337, 0.0
  %v2482 = vmax.f32 %v2338, 0.0
  %v2483 = vmax.f32 %v2339, 0.0
  %v2484 = vmax.f32 %v2340, 0.0
  %v2485 = vmax.f32 %v2341, 0.0
  %v2486 = vmax.f32 %v2342, 0.0
  %v2487 = vmax.f32 %v2343, 0.0
  %v2488 = vmax.f32 %v2344, 0.0
  %v2489 = vmax.f32 %v2345, 0.0
  %v2490 = vmax.f32 %v2346, 0.0
  %v2491 = vmax.f32 %v2347, 0.0
  %v2492 = vmax.f32 %v2348, 0.0
  %v2493 = vmax.f32 %v2349, 0.0
  %v2494 = vmax.f32 %v2350, 0.0
  %v2495 = vmax.f32 %v2351, 0.0
  %v2496 = vmax.f32 %v2352, 0.0
  %v2497 = vmax.f32 %v2353, 0.0
  %v2498 = vmax.f32 %v2354, 0.0
  %v2499 = vmax.f32 %v2355, 0.0
  %v2500 = vmax.f32 %v2356, 0.0
  %v2501 = vmax.f32 %v2357, 0.0
  %v2502 = vmax.f32 %v2358, 0.0
  %v2503 = vmax.f32 %v2359, 0.0
  %v2504 = vmax.f32 %v2360, 0.0
  %v2505 = vmax.f32 %v2361, 0.0
  %v2506 = vmax.f32 %v2362, 0.0
  %v2507 = vmax.f32 %v2363, 0.0
  %v2508 = vmax.f32 %v2364, 0.0
  %v2509 = vmax.f32 %v2365, 0.0
  %v2510 = vmax.f32 %v2366, 0.0
  %v2511 = vmax.f32 %v2367, 0.0
  %v2512 = vmax.f32 %v2368, 0.0
  %v2513 = vmax.f32 %v2369, 0.0
  %v2514 = vmax.f32 %v2370, 0.0
  %v2515 = vmax.f32 %v2371, 0.0
  %v2516 = vmax.f32 %v2372, 0.0
  %v2517 = vmax.f32 %v2373, 0.0
  %v2518 = vmax.f32 %v2374, 0.0
  %v2519 = vmax.f32 %v2375, 0.0
  %v2520 = vmax.f32 %v2376, 0.0
  %v2521 = vmax.f32 %v2377, 0.0
  %v2522 = vmax.f32 %v2378, 0.0
  %v2523 = vmax.f32 %v2379, 0.0
  %v2524 = vmax.f32 %v2380, 0.0
  %v2525 = vmax.f32 %v2381, 0.0
  %v2526 = vmax.f32 %v2382, 0.0
  %v2527 = vmax.f32 %v2383, 0.0
  %v2528 = vmax.f32 %v2384, 0.0
  %v2529 = vmax.f32 %v2385, 0.0
  %v2530 = vmax.f32 %v2386, 0.0
  %v2531 = vmax.f32 %v2387, 0.0
  %v2532 = vmax.f32 %v2388, 0.0
  %v2533 = vmax.f32 %v2389, 0.0
  %v2534 = vmax.f32 %v2390, 0.0
  %v2535 = vmax.f32 %v2391, 0.0
  %v2536 = vmax.f32 %v2392, 0.0
  %v2537 = vmax.f32 %v2393, 0.0
  %v2538 = vmax.f32 %v2394, 0.0
  %v2539 = vmax.f32 %v2395, 0.0
  %v2540 = vmax.f32 %v2396, 0.0
  %v2541 = vmax.f32 %v2397, 0.0
  %v2542 = vmax.f32 %v2398, 0.0
  %v2543 = vmax.f32 %v2399, 0.0
  %v2544 = vmax.f32 %v2400, 0.0
  %v2545 = vmax.f32 %v2401, 0.0
  %v2546 = vmax.f32 %v2402, 0.0
  %v2547 = vmax.f32 %v2403, 0.0
  %v2548 = vmax.f32 %v2404, 0.0
  %v2549 = vmax.f32 %v2405, 0.0
  %v2550 = vmax.f32 %v2406, 0.0
  %v2551 = vmax.f32 %v2407, 0.0
  %v2552 = vmax.f32 %v2408, 0.0
  %v2553 = vmax.f32 %v2409, 0.0
  %v2554 = vmax.f32 %v2410, 0.0
  %v2555 = vmax.f32 %v2411, 0.0
  %v2556 = vpack.c.bf16 %v2413, %v2412
  %v2557 = vpack.c.bf16 %v2415, %v2414
  %v2558 = vpack.c.bf16 %v2417, %v2416
  %v2559 = vpack.c.bf16 %v2419, %v2418
  %v2560 = vpack.c.bf16 %v2421, %v2420
  %v2561 = vpack.c.bf16 %v2423, %v2422
  %v2562 = vpack.c.bf16 %v2425, %v2424
  %v2563 = vpack.c.bf16 %v2427, %v2426
  %v2564 = vpack.c.bf16 %v2429, %v2428
  %v2565 = vpack.c.bf16 %v2431, %v2430
  %v2566 = vpack.c.bf16 %v2433, %v2432
  %v2567 = vpack.c.bf16 %v2435, %v2434
  %v2568 = vpack.c.bf16 %v2437, %v2436
  %v2569 = vpack.c.bf16 %v2439, %v2438
  %v2570 = vpack.c.bf16 %v2441, %v2440
  %v2571 = vpack.c.bf16 %v2443, %v2442
  %v2572 = vpack.c.bf16 %v2445, %v2444
  %v2573 = vpack.c.bf16 %v2447, %v2446
  %v2574 = vpack.c.bf16 %v2449, %v2448
  %v2575 = vpack.c.bf16 %v2451, %v2450
  %v2576 = vpack.c.bf16 %v2453, %v2452
  %v2577 = vpack.c.bf16 %v2455, %v2454
  %v2578 = vpack.c.bf16 %v2457, %v2456
  %v2579 = vpack.c.bf16 %v2459, %v2458
  %v2580 = vpack.c.bf16 %v2461, %v2460
  %v2581 = vpack.c.bf16 %v2463, %v2462
  %v2582 = vpack.c.bf16 %v2465, %v2464
  %v2583 = vpack.c.bf16 %v2467, %v2466
  %v2584 = vpack.c.bf16 %v2469, %v2468
  %v2585 = vpack.c.bf16 %v2471, %v2470
  %v2586 = vpack.c.bf16 %v2473, %v2472
  %v2587 = vpack.c.bf16 %v2475, %v2474
  %v2588 = vpack.c.bf16 %v2477, %v2476
  %v2589 = vpack.c.bf16 %v2479, %v2478
  %v2590 = vpack.c.bf16 %v2481, %v2480
  %v2591 = vpack.c.bf16 %v2483, %v2482
  %v2592 = vpack.c.bf16 %v2485, %v2484
  %v2593 = vpack.c.bf16 %v2487, %v2486
  %v2594 = vpack.c.bf16 %v2489, %v2488
  %v2595 = vpack.c.bf16 %v2491, %v2490
  %v2596 = vpack.c.bf16 %v2493, %v2492
  %v2597 = vpack.c.bf16 %v2495, %v2494
  %v2598 = vpack.c.bf16 %v2497, %v2496
  %v2599 = vpack.c.bf16 %v2499, %v2498
  %v2600 = vpack.c.bf16 %v2501, %v2500
  %v2601 = vpack.c.bf16 %v2503, %v2502
  %v2602 = vpack.c.bf16 %v2505, %v2504
  %v2603 = vpack.c.bf16 %v2507, %v2506
  %v2604 = vpack.c.bf16 %v2509, %v2508
  %v2605 = vpack.c.bf16 %v2511, %v2510
  %v2606 = vpack.c.bf16 %v2513, %v2512
  %v2607 = vpack.c.bf16 %v2515, %v2514
  %v2608 = vpack.c.bf16 %v2517, %v2516
  %v2609 = vpack.c.bf16 %v2519, %v2518
  %v2610 = vpack.c.bf16 %v2521, %v2520
  %v2611 = vpack.c.bf16 %v2523, %v2522
  %v2612 = vpack.c.bf16 %v2525, %v2524
  %v2613 = vpack.c.bf16 %v2527, %v2526
  %v2614 = vpack.c.bf16 %v2529, %v2528
  %v2615 = vpack.c.bf16 %v2531, %v2530
  %v2616 = vpack.c.bf16 %v2533, %v2532
  %v2617 = vpack.c.bf16 %v2535, %v2534
  %v2618 = vpack.c.bf16 %v2537, %v2536
  %v2619 = vpack.c.bf16 %v2539, %v2538
  %v2620 = vpack.c.bf16 %v2541, %v2540
  %v2621 = vpack.c.bf16 %v2543, %v2542
  %v2622 = vpack.c.bf16 %v2545, %v2544
  %v2623 = vpack.c.bf16 %v2547, %v2546
  %v2624 = vpack.c.bf16 %v2549, %v2548
  %v2625 = vpack.c.bf16 %v2551, %v2550
  %v2626 = vpack.c.bf16 %v2553, %v2552
  %v2627 = vpack.c.bf16 %v2555, %v2554
  %v2700 = vunpack.c.l.b16 %v2556
  %v2701 = vunpack.c.h.b16 %v2556
  %v2702 = vunpack.c.l.b16 %v2557
  %v2703 = vunpack.c.h.b16 %v2557
  %v2704 = vunpack.c.l.b16 %v2558
  %v2705 = vunpack.c.h.b16 %v2558
  %v2706 = vunpack.c.l.b16 %v2559
  %v2707 = vunpack.c.h.b16 %v2559
  %v2708 = vunpack.c.l.b16 %v2560
  %v2709 = vunpack.c.h.b16 %v2560
  %v2710 = vunpack.c.l.b16 %v2561
  %v2711 = vunpack.c.h.b16 %v2561
  %v2712 = vunpack.c.l.b16 %v2562
  %v2713 = vunpack.c.h.b16 %v2562
  %v2714 = vunpack.c.l.b16 %v2563
  %v2715 = vunpack.c.h.b16 %v2563
  %v2716 = vunpack.c.l.b16 %v2564
  %v2717 = vunpack.c.h.b16 %v2564
  %v2718 = vunpack.c.l.b16 %v2565
  %v2719 = vunpack.c.h.b16 %v2565
  %v2720 = vunpack.c.l.b16 %v2566
  %v2721 = vunpack.c.h.b16 %v2566
  %v2722 = vunpack.c.l.b16 %v2567
  %v2723 = vunpack.c.h.b16 %v2567
  %v2724 = vunpack.c.l.b16 %v2568
  %v2725 = vunpack.c.h.b16 %v2568
  %v2726 = vunpack.c.l.b16 %v2569
  %v2727 = vunpack.c.h.b16 %v2569
  %v2728 = vunpack.c.l.b16 %v2570
  %v2729 = vunpack.c.h.b16 %v2570
  %v2730 = vunpack.c.l.b16 %v2571
  %v2731 = vunpack.c.h.b16 %v2571
  %v2732 = vunpack.c.l.b16 %v2572
  %v2733 = vunpack.c.h.b16 %v2572
  %v2734 = vunpack.c.l.b16 %v2573
  %v2735 = vunpack.c.h.b16 %v2573
  %v2736 = vunpack.c.l.b16 %v2574
  %v2737 = vunpack.c.h.b16 %v2574
  %v2738 = vunpack.c.l.b16 %v2575
  %v2739 = vunpack.c.h.b16 %v2575
  %v2740 = vunpack.c.l.b16 %v2576
  %v2741 = vunpack.c.h.b16 %v2576
  %v2742 = vunpack.c.l.b16 %v2577
  %v2743 = vunpack.c.h.b16 %v2577
  %v2744 = vunpack.c.l.b16 %v2578
  %v2745 = vunpack.c.h.b16 %v2578
  %v2746 = vunpack.c.l.b16 %v2579
  %v2747 = vunpack.c.h.b16 %v2579
  %v2748 = vunpack.c.l.b16 %v2580
  %v2749 = vunpack.c.h.b16 %v2580
  %v2750 = vunpack.c.l.b16 %v2581
  %v2751 = vunpack.c.h.b16 %v2581
  %v2752 = vunpack.c.l.b16 %v2582
  %v2753 = vunpack.c.h.b16 %v2582
  %v2754 = vunpack.c.l.b16 %v2583
  %v2755 = vunpack.c.h.b16 %v2583
  %v2756 = vunpack.c.l.b16 %v2584
  %v2757 = vunpack.c.h.b16 %v2584
  %v2758 = vunpack.c.l.b16 %v2585
  %v2759 = vunpack.c.h.b16 %v2585
  %v2760 = vunpack.c.l.b16 %v2586
  %v2761 = vunpack.c.h.b16 %v2586
  %v2762 = vunpack.c.l.b16 %v2587
  %v2763 = vunpack.c.h.b16 %v2587
  %v2764 = vunpack.c.l.b16 %v2588
  %v2765 = vunpack.c.h.b16 %v2588
  %v2766 = vunpack.c.l.b16 %v2589
  %v2767 = vunpack.c.h.b16 %v2589
  %v2768 = vunpack.c.l.b16 %v2590
  %v2769 = vunpack.c.h.b16 %v2590
  %v2770 = vunpack.c.l.b16 %v2591
  %v2771 = vunpack.c.h.b16 %v2591
  %v2772 = vunpack.c.l.b16 %v2592
  %v2773 = vunpack.c.h.b16 %v2592
  %v2774 = vunpack.c.l.b16 %v2593
  %v2775 = vunpack.c.h.b16 %v2593
  %v2776 = vunpack.c.l.b16 %v2594
  %v2777 = vunpack.c.h.b16 %v2594
  %v2778 = vunpack.c.l.b16 %v2595
  %v2779 = vunpack.c.h.b16 %v2595
  %v2780 = vunpack.c.l.b16 %v2596
  %v2781 = vunpack.c.h.b16 %v2596
  %v2782 = vunpack.c.l.b16 %v2597
  %v2783 = vunpack.c.h.b16 %v2597
  %v2784 = vunpack.c.l.b16 %v2598
  %v2785 = vunpack.c.h.b16 %v2598
  %v2786 = vunpack.c.l.b16 %v2599
  %v2787 = vunpack.c.h.b16 %v2599
  %v2788 = vunpack.c.l.b16 %v2600
  %v2789 = vunpack.c.h.b16 %v2600
  %v2790 = vunpack.c.l.b16 %v2601
  %v2791 = vunpack.c.h.b16 %v2601
  %v2792 = vunpack.c.l.b16 %v2602
  %v2793 = vunpack.c.h.b16 %v2602
  %v2794 = vunpack.c.l.b16 %v2603
  %v2795 = vunpack.c.h.b16 %v2603
  %v2796 = vunpack.c.l.b16 %v2604
  %v2797 = vunpack.c.h.b16 %v2604
  %v2798 = vunpack.c.l.b16 %v2605
  %v2799 = vunpack.c.h.b16 %v2605
  %v2800 = vunpack.c.l.b16 %v2606
  %v2801 = vunpack.c.h.b16 %v2606
  %v2802 = vunpack.c.l.b16 %v2607
  %v2803 = vunpack.c.h.b16 %v2607
  %v2804 = vunpack.c.l.b16 %v2608
  %v2805 = vunpack.c.h.b16 %v2608
  %v2806 = vunpack.c.l.b16 %v2609
  %v2807 = vunpack.c.h.b16 %v2609
  %v2808 = vunpack.c.l.b16 %v2610
  %v2809 = vunpack.c.h.b16 %v2610
  %v2810 = vunpack.c.l.b16 %v2611
  %v2811 = vunpack.c.h.b16 %v2611
  %v2812 = vunpack.c.l.b16 %v2612
  %v2813 = vunpack.c.h.b16 %v2612
  %v2814 = vunpack.c.l.b16 %v2613
  %v2815 = vunpack.c.h.b16 %v2613
  %v2816 = vunpack.c.l.b16 %v2614
  %v2817 = vunpack.c.h.b16 %v2614
  %v2818 = vunpack.c.l.b16 %v2615
  %v2819 = vunpack.c.h.b16 %v2615
  %v2820 = vunpack.c.l.b16 %v2616
  %v2821 = vunpack.c.h.b16 %v2616
  %v2822 = vunpack.c.l.b16 %v2617
  %v2823 = vunpack.c.h.b16 %v2617
  %v2824 = vunpack.c.l.b16 %v2618
  %v2825 = vunpack.c.h.b16 %v2618
  %v2826 = vunpack.c.l.b16 %v2619
  %v2827 = vunpack.c.h.b16 %v2619
  %v2828 = vunpack.c.l.b16 %v2620
  %v2829 = vunpack.c.h.b16 %v2620
  %v2830 = vunpack.c.l.b16 %v2621
  %v2831 = vunpack.c.h.b16 %v2621
  %v2832 = vunpack.c.l.b16 %v2622
  %v2833 = vunpack.c.h.b16 %v2622
  %v2834 = vunpack.c.l.b16 %v2623
  %v2835 = vunpack.c.h.b16 %v2623
  %v2836 = vunpack.c.l.b16 %v2624
  %v2837 = vunpack.c.h.b16 %v2624
  %v2838 = vunpack.c.l.b16 %v2625
  %v2839 = vunpack.c.h.b16 %v2625
  %v2840 = vunpack.c.l.b16 %v2626
  %v2841 = vunpack.c.h.b16 %v2626
  %v2842 = vunpack.c.l.b16 %v2627
  %v2843 = vunpack.c.h.b16 %v2627
  %v2844 = vpack.c.b16 %v2700, %v2700
  %v2845 = vpack.c.b16 %v2701, %v2701
  %v2846 = vpack.c.b16 %v2702, %v2702
  %v2847 = vpack.c.b16 %v2703, %v2703
  %v2848 = vpack.c.b16 %v2704, %v2704
  %v2849 = vpack.c.b16 %v2705, %v2705
  %v2850 = vpack.c.b16 %v2706, %v2706
  %v2851 = vpack.c.b16 %v2707, %v2707
  %v2852 = vpack.c.b16 %v2708, %v2708
  %v2853 = vpack.c.b16 %v2709, %v2709
  %v2854 = vpack.c.b16 %v2710, %v2710
  %v2855 = vpack.c.b16 %v2711, %v2711
  %v2856 = vpack.c.b16 %v2712, %v2712
  %v2857 = vpack.c.b16 %v2713, %v2713
  %v2858 = vpack.c.b16 %v2714, %v2714
  %v2859 = vpack.c.b16 %v2715, %v2715
  %v2860 = vpack.c.b16 %v2716, %v2716
  %v2861 = vpack.c.b16 %v2717, %v2717
  %v2862 = vpack.c.b16 %v2718, %v2718
  %v2863 = vpack.c.b16 %v2719, %v2719
  %v2864 = vpack.c.b16 %v2720, %v2720
  %v2865 = vpack.c.b16 %v2721, %v2721
  %v2866 = vpack.c.b16 %v2722, %v2722
  %v2867 = vpack.c.b16 %v2723, %v2723
  %v2868 = vpack.c.b16 %v2724, %v2724
  %v2869 = vpack.c.b16 %v2725, %v2725
  %v2870 = vpack.c.b16 %v2726, %v2726
  %v2871 = vpack.c.b16 %v2727, %v2727
  %v2872 = vpack.c.b16 %v2728, %v2728
  %v2873 = vpack.c.b16 %v2729, %v2729
  %v2874 = vpack.c.b16 %v2730, %v2730
  %v2875 = vpack.c.b16 %v2731, %v2731
  %v2876 = vpack.c.b16 %v2732, %v2732
  %v2877 = vpack.c.b16 %v2733, %v2733
  %v2878 = vpack.c.b16 %v2734, %v2734
  %v2879 = vpack.c.b16 %v2735, %v2735
  %v2880 = vpack.c.b16 %v2736, %v2736
  %v2881 = vpack.c.b16 %v2737, %v2737
  %v2882 = vpack.c.b16 %v2738, %v2738
  %v2883 = vpack.c.b16 %v2739, %v2739
  %v2884 = vpack.c.b16 %v2740, %v2740
  %v2885 = vpack.c.b16 %v2741, %v2741
  %v2886 = vpack.c.b16 %v2742, %v2742
  %v2887 = vpack.c.b16 %v2743, %v2743
  %v2888 = vpack.c.b16 %v2744, %v2744
  %v2889 = vpack.c.b16 %v2745, %v2745
  %v2890 = vpack.c.b16 %v2746, %v2746
  %v2891 = vpack.c.b16 %v2747, %v2747
  %v2892 = vpack.c.b16 %v2748, %v2748
  %v2893 = vpack.c.b16 %v2749, %v2749
  %v2894 = vpack.c.b16 %v2750, %v2750
  %v2895 = vpack.c.b16 %v2751, %v2751
  %v2896 = vpack.c.b16 %v2752, %v2752
  %v2897 = vpack.c.b16 %v2753, %v2753
  %v2898 = vpack.c.b16 %v2754, %v2754
  %v2899 = vpack.c.b16 %v2755, %v2755
  %v2900 = vpack.c.b16 %v2756, %v2756
  %v2901 = vpack.c.b16 %v2757, %v2757
  %v2902 = vpack.c.b16 %v2758, %v2758
  %v2903 = vpack.c.b16 %v2759, %v2759
  %v2904 = vpack.c.b16 %v2760, %v2760
  %v2905 = vpack.c.b16 %v2761, %v2761
  %v2906 = vpack.c.b16 %v2762, %v2762
  %v2907 = vpack.c.b16 %v2763, %v2763
  %v2908 = vpack.c.b16 %v2764, %v2764
  %v2909 = vpack.c.b16 %v2765, %v2765
  %v2910 = vpack.c.b16 %v2766, %v2766
  %v2911 = vpack.c.b16 %v2767, %v2767
  %v2912 = vpack.c.b16 %v2768, %v2768
  %v2913 = vpack.c.b16 %v2769, %v2769
  %v2914 = vpack.c.b16 %v2770, %v2770
  %v2915 = vpack.c.b16 %v2771, %v2771
  %v2916 = vpack.c.b16 %v2772, %v2772
  %v2917 = vpack.c.b16 %v2773, %v2773
  %v2918 = vpack.c.b16 %v2774, %v2774
  %v2919 = vpack.c.b16 %v2775, %v2775
  %v2920 = vpack.c.b16 %v2776, %v2776
  %v2921 = vpack.c.b16 %v2777, %v2777
  %v2922 = vpack.c.b16 %v2778, %v2778
  %v2923 = vpack.c.b16 %v2779, %v2779
  %v2924 = vpack.c.b16 %v2780, %v2780
  %v2925 = vpack.c.b16 %v2781, %v2781
  %v2926 = vpack.c.b16 %v2782, %v2782
  %v2927 = vpack.c.b16 %v2783, %v2783
  %v2928 = vpack.c.b16 %v2784, %v2784
  %v2929 = vpack.c.b16 %v2785, %v2785
  %v2930 = vpack.c.b16 %v2786, %v2786
  %v2931 = vpack.c.b16 %v2787, %v2787
  %v2932 = vpack.c.b16 %v2788, %v2788
  %v2933 = vpack.c.b16 %v2789, %v2789
  %v2934 = vpack.c.b16 %v2790, %v2790
  %v2935 = vpack.c.b16 %v2791, %v2791
  %v2936 = vpack.c.b16 %v2792, %v2792
  %v2937 = vpack.c.b16 %v2793, %v2793
  %v2938 = vpack.c.b16 %v2794, %v2794
  %v2939 = vpack.c.b16 %v2795, %v2795
  %v2940 = vpack.c.b16 %v2796, %v2796
  %v2941 = vpack.c.b16 %v2797, %v2797
  %v2942 = vpack.c.b16 %v2798, %v2798
  %v2943 = vpack.c.b16 %v2799, %v2799
  %v2944 = vpack.c.b16 %v2800, %v2800
  %v2945 = vpack.c.b16 %v2801, %v2801
  %v2946 = vpack.c.b16 %v2802, %v2802
  %v2947 = vpack.c.b16 %v2803, %v2803
  %v2948 = vpack.c.b16 %v2804, %v2804
  %v2949 = vpack.c.b16 %v2805, %v2805
  %v2950 = vpack.c.b16 %v2806, %v2806
  %v2951 = vpack.c.b16 %v2807, %v2807
  %v2952 = vpack.c.b16 %v2808, %v2808
  %v2953 = vpack.c.b16 %v2809, %v2809
  %v2954 = vpack.c.b16 %v2810, %v2810
  %v2955 = vpack.c.b16 %v2811, %v2811
  %v2956 = vpack.c.b16 %v2812, %v2812
  %v2957 = vpack.c.b16 %v2813, %v2813
  %v2958 = vpack.c.b16 %v2814, %v2814
  %v2959 = vpack.c.b16 %v2815, %v2815
  %v2960 = vpack.c.b16 %v2816, %v2816
  %v2961 = vpack.c.b16 %v2817, %v2817
  %v2962 = vpack.c.b16 %v2818, %v2818
  %v2963 = vpack.c.b16 %v2819, %v2819
  %v2964 = vpack.c.b16 %v2820, %v2820
  %v2965 = vpack.c.b16 %v2821, %v2821
  %v2966 = vpack.c.b16 %v2822, %v2822
  %v2967 = vpack.c.b16 %v2823, %v2823
  %v2968 = vpack.c.b16 %v2824, %v2824
  %v2969 = vpack.c.b16 %v2825, %v2825
  %v2970 = vpack.c.b16 %v2826, %v2826
  %v2971 = vpack.c.b16 %v2827, %v2827
  %v2972 = vpack.c.b16 %v2828, %v2828
  %v2973 = vpack.c.b16 %v2829, %v2829
  %v2974 = vpack.c.b16 %v2830, %v2830
  %v2975 = vpack.c.b16 %v2831, %v2831
  %v2976 = vpack.c.b16 %v2832, %v2832
  %v2977 = vpack.c.b16 %v2833, %v2833
  %v2978 = vpack.c.b16 %v2834, %v2834
  %v2979 = vpack.c.b16 %v2835, %v2835
  %v2980 = vpack.c.b16 %v2836, %v2836
  %v2981 = vpack.c.b16 %v2837, %v2837
  %v2982 = vpack.c.b16 %v2838, %v2838
  %v2983 = vpack.c.b16 %v2839, %v2839
  %v2984 = vpack.c.b16 %v2840, %v2840
  %v2985 = vpack.c.b16 %v2841, %v2841
  %v2986 = vpack.c.b16 %v2842, %v2842
  %v2987 = vpack.c.b16 %v2843, %v2843
  %vm3132 = vcmask 257024
  %3133 = vst.msk [vmem:[#allocation2] sm:$0xf] %vm3132, %v2844
  %3134 = vst.msk [vmem:[#allocation2 + $0x4] sm:$0xf] %vm3132, %v2845
  %3135 = vst.msk [vmem:[#allocation2 + $0x8] sm:$0xf] %vm3132, %v2846
  %3136 = vst.msk [vmem:[#allocation2 + $0xc] sm:$0xf] %vm3132, %v2847
  %3137 = vst.msk [vmem:[#allocation2 + $0x10] sm:$0xf] %vm3132, %v2848
  %3138 = vst.msk [vmem:[#allocation2 + $0x14] sm:$0xf] %vm3132, %v2849
  %3139 = vst.msk [vmem:[#allocation2 + $0x18] sm:$0xf] %vm3132, %v2850
  %3140 = vst.msk [vmem:[#allocation2 + $0x1c] sm:$0xf] %vm3132, %v2851
  %3141 = vst.msk [vmem:[#allocation2 + $0x20] sm:$0xf] %vm3132, %v2852
  %3142 = vst.msk [vmem:[#allocation2 + $0x24] sm:$0xf] %vm3132, %v2853
  %3143 = vst.msk [vmem:[#allocation2 + $0x28] sm:$0xf] %vm3132, %v2854
  %3144 = vst.msk [vmem:[#allocation2 + $0x2c] sm:$0xf] %vm3132, %v2855
  %3145 = vst.msk [vmem:[#allocation2 + $0x30] sm:$0xf] %vm3132, %v2856
  %3146 = vst.msk [vmem:[#allocation2 + $0x34] sm:$0xf] %vm3132, %v2857
  %3147 = vst.msk [vmem:[#allocation2 + $0x38] sm:$0xf] %vm3132, %v2858
  %3148 = vst.msk [vmem:[#allocation2 + $0x3c] sm:$0xf] %vm3132, %v2859
  %3149 = vst.msk [vmem:[#allocation2 + $0x40] sm:$0xf] %vm3132, %v2860
  %3150 = vst.msk [vmem:[#allocation2 + $0x44] sm:$0xf] %vm3132, %v2861
  %3151 = vst.msk [vmem:[#allocation2 + $0x48] sm:$0xf] %vm3132, %v2862
  %3152 = vst.msk [vmem:[#allocation2 + $0x4c] sm:$0xf] %vm3132, %v2863
  %3153 = vst.msk [vmem:[#allocation2 + $0x50] sm:$0xf] %vm3132, %v2864
  %3154 = vst.msk [vmem:[#allocation2 + $0x54] sm:$0xf] %vm3132, %v2865
  %3155 = vst.msk [vmem:[#allocation2 + $0x58] sm:$0xf] %vm3132, %v2866
  %3156 = vst.msk [vmem:[#allocation2 + $0x5c] sm:$0xf] %vm3132, %v2867
  %3157 = vst.msk [vmem:[#allocation2 + $0x60] sm:$0xf] %vm3132, %v2868
  %3158 = vst.msk [vmem:[#allocation2 + $0x64] sm:$0xf] %vm3132, %v2869
  %3159 = vst.msk [vmem:[#allocation2 + $0x68] sm:$0xf] %vm3132, %v2870
  %3160 = vst.msk [vmem:[#allocation2 + $0x6c] sm:$0xf] %vm3132, %v2871
  %3161 = vst.msk [vmem:[#allocation2 + $0x70] sm:$0xf] %vm3132, %v2872
  %3162 = vst.msk [vmem:[#allocation2 + $0x74] sm:$0xf] %vm3132, %v2873
  %3163 = vst.msk [vmem:[#allocation2 + $0x78] sm:$0xf] %vm3132, %v2874
  %3164 = vst.msk [vmem:[#allocation2 + $0x7c] sm:$0xf] %vm3132, %v2875
  %3165 = vst.msk [vmem:[#allocation2 + $0x80] sm:$0xf] %vm3132, %v2876
  %3166 = vst.msk [vmem:[#allocation2 + $0x84] sm:$0xf] %vm3132, %v2877
  %3167 = vst.msk [vmem:[#allocation2 + $0x88] sm:$0xf] %vm3132, %v2878
  %3168 = vst.msk [vmem:[#allocation2 + $0x8c] sm:$0xf] %vm3132, %v2879
  %3169 = vst.msk [vmem:[#allocation2 + $0x90] sm:$0xf] %vm3132, %v2880
  %3170 = vst.msk [vmem:[#allocation2 + $0x94] sm:$0xf] %vm3132, %v2881
  %3171 = vst.msk [vmem:[#allocation2 + $0x98] sm:$0xf] %vm3132, %v2882
  %3172 = vst.msk [vmem:[#allocation2 + $0x9c] sm:$0xf] %vm3132, %v2883
  %3173 = vst.msk [vmem:[#allocation2 + $0xa0] sm:$0xf] %vm3132, %v2884
  %3174 = vst.msk [vmem:[#allocation2 + $0xa4] sm:$0xf] %vm3132, %v2885
  %3175 = vst.msk [vmem:[#allocation2 + $0xa8] sm:$0xf] %vm3132, %v2886
  %3176 = vst.msk [vmem:[#allocation2 + $0xac] sm:$0xf] %vm3132, %v2887
  %3177 = vst.msk [vmem:[#allocation2 + $0xb0] sm:$0xf] %vm3132, %v2888
  %3178 = vst.msk [vmem:[#allocation2 + $0xb4] sm:$0xf] %vm3132, %v2889
  %3179 = vst.msk [vmem:[#allocation2 + $0xb8] sm:$0xf] %vm3132, %v2890
  %3180 = vst.msk [vmem:[#allocation2 + $0xbc] sm:$0xf] %vm3132, %v2891
  %3181 = vst.msk [vmem:[#allocation2 + $0xc0] sm:$0xf] %vm3132, %v2892
  %3182 = vst.msk [vmem:[#allocation2 + $0xc4] sm:$0xf] %vm3132, %v2893
  %3183 = vst.msk [vmem:[#allocation2 + $0xc8] sm:$0xf] %vm3132, %v2894
  %3184 = vst.msk [vmem:[#allocation2 + $0xcc] sm:$0xf] %vm3132, %v2895
  %3185 = vst.msk [vmem:[#allocation2 + $0xd0] sm:$0xf] %vm3132, %v2896
  %3186 = vst.msk [vmem:[#allocation2 + $0xd4] sm:$0xf] %vm3132, %v2897
  %3187 = vst.msk [vmem:[#allocation2 + $0xd8] sm:$0xf] %vm3132, %v2898
  %3188 = vst.msk [vmem:[#allocation2 + $0xdc] sm:$0xf] %vm3132, %v2899
  %3189 = vst.msk [vmem:[#allocation2 + $0xe0] sm:$0xf] %vm3132, %v2900
  %3190 = vst.msk [vmem:[#allocation2 + $0xe4] sm:$0xf] %vm3132, %v2901
  %3191 = vst.msk [vmem:[#allocation2 + $0xe8] sm:$0xf] %vm3132, %v2902
  %3192 = vst.msk [vmem:[#allocation2 + $0xec] sm:$0xf] %vm3132, %v2903
  %3193 = vst.msk [vmem:[#allocation2 + $0xf0] sm:$0xf] %vm3132, %v2904
  %3194 = vst.msk [vmem:[#allocation2 + $0xf4] sm:$0xf] %vm3132, %v2905
  %3195 = vst.msk [vmem:[#allocation2 + $0xf8] sm:$0xf] %vm3132, %v2906
  %3196 = vst.msk [vmem:[#allocation2 + $0xfc] sm:$0xf] %vm3132, %v2907
  %3197 = vst.msk [vmem:[#allocation2 + $0x100] sm:$0xf] %vm3132, %v2908
  %3198 = vst.msk [vmem:[#allocation2 + $0x104] sm:$0xf] %vm3132, %v2909
  %3199 = vst.msk [vmem:[#allocation2 + $0x108] sm:$0xf] %vm3132, %v2910
  %3200 = vst.msk [vmem:[#allocation2 + $0x10c] sm:$0xf] %vm3132, %v2911
  %3201 = vst.msk [vmem:[#allocation2 + $0x110] sm:$0xf] %vm3132, %v2912
  %3202 = vst.msk [vmem:[#allocation2 + $0x114] sm:$0xf] %vm3132, %v2913
  %3203 = vst.msk [vmem:[#allocation2 + $0x118] sm:$0xf] %vm3132, %v2914
  %3204 = vst.msk [vmem:[#allocation2 + $0x11c] sm:$0xf] %vm3132, %v2915
  %3205 = vst.msk [vmem:[#allocation2 + $0x120] sm:$0xf] %vm3132, %v2916
  %3206 = vst.msk [vmem:[#allocation2 + $0x124] sm:$0xf] %vm3132, %v2917
  %3207 = vst.msk [vmem:[#allocation2 + $0x128] sm:$0xf] %vm3132, %v2918
  %3208 = vst.msk [vmem:[#allocation2 + $0x12c] sm:$0xf] %vm3132, %v2919
  %3209 = vst.msk [vmem:[#allocation2 + $0x130] sm:$0xf] %vm3132, %v2920
  %3210 = vst.msk [vmem:[#allocation2 + $0x134] sm:$0xf] %vm3132, %v2921
  %3211 = vst.msk [vmem:[#allocation2 + $0x138] sm:$0xf] %vm3132, %v2922
  %3212 = vst.msk [vmem:[#allocation2 + $0x13c] sm:$0xf] %vm3132, %v2923
  %3213 = vst.msk [vmem:[#allocation2 + $0x140] sm:$0xf] %vm3132, %v2924
  %3214 = vst.msk [vmem:[#allocation2 + $0x144] sm:$0xf] %vm3132, %v2925
  %3215 = vst.msk [vmem:[#allocation2 + $0x148] sm:$0xf] %vm3132, %v2926
  %3216 = vst.msk [vmem:[#allocation2 + $0x14c] sm:$0xf] %vm3132, %v2927
  %3217 = vst.msk [vmem:[#allocation2 + $0x150] sm:$0xf] %vm3132, %v2928
  %3218 = vst.msk [vmem:[#allocation2 + $0x154] sm:$0xf] %vm3132, %v2929
  %3219 = vst.msk [vmem:[#allocation2 + $0x158] sm:$0xf] %vm3132, %v2930
  %3220 = vst.msk [vmem:[#allocation2 + $0x15c] sm:$0xf] %vm3132, %v2931
  %3221 = vst.msk [vmem:[#allocation2 + $0x160] sm:$0xf] %vm3132, %v2932
  %3222 = vst.msk [vmem:[#allocation2 + $0x164] sm:$0xf] %vm3132, %v2933
  %3223 = vst.msk [vmem:[#allocation2 + $0x168] sm:$0xf] %vm3132, %v2934
  %3224 = vst.msk [vmem:[#allocation2 + $0x16c] sm:$0xf] %vm3132, %v2935
  %3225 = vst.msk [vmem:[#allocation2 + $0x170] sm:$0xf] %vm3132, %v2936
  %3226 = vst.msk [vmem:[#allocation2 + $0x174] sm:$0xf] %vm3132, %v2937
  %3227 = vst.msk [vmem:[#allocation2 + $0x178] sm:$0xf] %vm3132, %v2938
  %3228 = vst.msk [vmem:[#allocation2 + $0x17c] sm:$0xf] %vm3132, %v2939
  %3229 = vst.msk [vmem:[#allocation2 + $0x180] sm:$0xf] %vm3132, %v2940
  %3230 = vst.msk [vmem:[#allocation2 + $0x184] sm:$0xf] %vm3132, %v2941
  %3231 = vst.msk [vmem:[#allocation2 + $0x188] sm:$0xf] %vm3132, %v2942
  %3232 = vst.msk [vmem:[#allocation2 + $0x18c] sm:$0xf] %vm3132, %v2943
  %3233 = vst.msk [vmem:[#allocation2 + $0x190] sm:$0xf] %vm3132, %v2944
  %3234 = vst.msk [vmem:[#allocation2 + $0x194] sm:$0xf] %vm3132, %v2945
  %3235 = vst.msk [vmem:[#allocation2 + $0x198] sm:$0xf] %vm3132, %v2946
  %3236 = vst.msk [vmem:[#allocation2 + $0x19c] sm:$0xf] %vm3132, %v2947
  %3237 = vst.msk [vmem:[#allocation2 + $0x1a0] sm:$0xf] %vm3132, %v2948
  %3238 = vst.msk [vmem:[#allocation2 + $0x1a4] sm:$0xf] %vm3132, %v2949
  %3239 = vst.msk [vmem:[#allocation2 + $0x1a8] sm:$0xf] %vm3132, %v2950
  %3240 = vst.msk [vmem:[#allocation2 + $0x1ac] sm:$0xf] %vm3132, %v2951
  %3241 = vst.msk [vmem:[#allocation2 + $0x1b0] sm:$0xf] %vm3132, %v2952
  %3242 = vst.msk [vmem:[#allocation2 + $0x1b4] sm:$0xf] %vm3132, %v2953
  %3243 = vst.msk [vmem:[#allocation2 + $0x1b8] sm:$0xf] %vm3132, %v2954
  %3244 = vst.msk [vmem:[#allocation2 + $0x1bc] sm:$0xf] %vm3132, %v2955
  %3245 = vst.msk [vmem:[#allocation2 + $0x1c0] sm:$0xf] %vm3132, %v2956
  %3246 = vst.msk [vmem:[#allocation2 + $0x1c4] sm:$0xf] %vm3132, %v2957
  %3247 = vst.msk [vmem:[#allocation2 + $0x1c8] sm:$0xf] %vm3132, %v2958
  %3248 = vst.msk [vmem:[#allocation2 + $0x1cc] sm:$0xf] %vm3132, %v2959
  %3249 = vst.msk [vmem:[#allocation2 + $0x1d0] sm:$0xf] %vm3132, %v2960
  %3250 = vst.msk [vmem:[#allocation2 + $0x1d4] sm:$0xf] %vm3132, %v2961
  %3251 = vst.msk [vmem:[#allocation2 + $0x1d8] sm:$0xf] %vm3132, %v2962
  %3252 = vst.msk [vmem:[#allocation2 + $0x1dc] sm:$0xf] %vm3132, %v2963
  %3253 = vst.msk [vmem:[#allocation2 + $0x1e0] sm:$0xf] %vm3132, %v2964
  %3254 = vst.msk [vmem:[#allocation2 + $0x1e4] sm:$0xf] %vm3132, %v2965
  %3255 = vst.msk [vmem:[#allocation2 + $0x1e8] sm:$0xf] %vm3132, %v2966
  %3256 = vst.msk [vmem:[#allocation2 + $0x1ec] sm:$0xf] %vm3132, %v2967
  %3257 = vst.msk [vmem:[#allocation2 + $0x1f0] sm:$0xf] %vm3132, %v2968
  %3258 = vst.msk [vmem:[#allocation2 + $0x1f4] sm:$0xf] %vm3132, %v2969
  %3259 = vst.msk [vmem:[#allocation2 + $0x1f8] sm:$0xf] %vm3132, %v2970
  %3260 = vst.msk [vmem:[#allocation2 + $0x1fc] sm:$0xf] %vm3132, %v2971
  %3261 = vst.msk [vmem:[#allocation2 + $0x200] sm:$0xf] %vm3132, %v2972
  %3262 = vst.msk [vmem:[#allocation2 + $0x204] sm:$0xf] %vm3132, %v2973
  %3263 = vst.msk [vmem:[#allocation2 + $0x208] sm:$0xf] %vm3132, %v2974
  %3264 = vst.msk [vmem:[#allocation2 + $0x20c] sm:$0xf] %vm3132, %v2975
  %3265 = vst.msk [vmem:[#allocation2 + $0x210] sm:$0xf] %vm3132, %v2976
  %3266 = vst.msk [vmem:[#allocation2 + $0x214] sm:$0xf] %vm3132, %v2977
  %3267 = vst.msk [vmem:[#allocation2 + $0x218] sm:$0xf] %vm3132, %v2978
  %3268 = vst.msk [vmem:[#allocation2 + $0x21c] sm:$0xf] %vm3132, %v2979
  %3269 = vst.msk [vmem:[#allocation2 + $0x220] sm:$0xf] %vm3132, %v2980
  %3270 = vst.msk [vmem:[#allocation2 + $0x224] sm:$0xf] %vm3132, %v2981
  %3271 = vst.msk [vmem:[#allocation2 + $0x228] sm:$0xf] %vm3132, %v2982
  %3272 = vst.msk [vmem:[#allocation2 + $0x22c] sm:$0xf] %vm3132, %v2983
  %3273 = vst.msk [vmem:[#allocation2 + $0x230] sm:$0xf] %vm3132, %v2984
  %3274 = vst.msk [vmem:[#allocation2 + $0x234] sm:$0xf] %vm3132, %v2985
  %3275 = vst.msk [vmem:[#allocation2 + $0x238] sm:$0xf] %vm3132, %v2986
  %3276 = vst.msk [vmem:[#allocation2 + $0x23c] sm:$0xf] %vm3132, %v2987
  %3277 = vst.msk [vmem:[#allocation2 + $0x240] sm:$0xf] %vm3132, 0
  %3278 = vst.msk [vmem:[#allocation2 + $0x244] sm:$0xf] %vm3132, 0
  %3279 = vst.msk [vmem:[#allocation2 + $0x248] sm:$0xf] %vm3132, 0
  %3280 = vst.msk [vmem:[#allocation2 + $0x24c] sm:$0xf] %vm3132, 0
  %v3281 = vld [vmem:[#allocation2] sm:$0xf]
  %v3282 = vld [vmem:[#allocation2 + $0x4] sm:$0xf]
  %v3283 = vld [vmem:[#allocation2 + $0x8] sm:$0xf]
  %v3284 = vld [vmem:[#allocation2 + $0xc] sm:$0xf]
  %v3285 = vld [vmem:[#allocation2 + $0x10] sm:$0xf]
  %v3286 = vld [vmem:[#allocation2 + $0x14] sm:$0xf]
  %v3287 = vld [vmem:[#allocation2 + $0x18] sm:$0xf]
  %v3288 = vld [vmem:[#allocation2 + $0x1c] sm:$0xf]
  %v3289 = vld [vmem:[#allocation2 + $0x20] sm:$0xf]
  %v3290 = vld [vmem:[#allocation2 + $0x24] sm:$0xf]
  %v3291 = vld [vmem:[#allocation2 + $0x28] sm:$0xf]
  %v3292 = vld [vmem:[#allocation2 + $0x2c] sm:$0xf]
  %v3293 = vld [vmem:[#allocation2 + $0x30] sm:$0xf]
  %v3294 = vld [vmem:[#allocation2 + $0x34] sm:$0xf]
  %v3295 = vld [vmem:[#allocation2 + $0x38] sm:$0xf]
  %v3296 = vld [vmem:[#allocation2 + $0x3c] sm:$0xf]
  %v3297 = vld [vmem:[#allocation2 + $0x40] sm:$0xf]
  %v3298 = vld [vmem:[#allocation2 + $0x44] sm:$0xf]
  %v3299 = vld [vmem:[#allocation2 + $0x48] sm:$0xf]
  %v3300 = vld [vmem:[#allocation2 + $0x4c] sm:$0xf]
  %v3301 = vld [vmem:[#allocation2 + $0x50] sm:$0xf]
  %v3302 = vld [vmem:[#allocation2 + $0x54] sm:$0xf]
  %v3303 = vld [vmem:[#allocation2 + $0x58] sm:$0xf]
  %v3304 = vld [vmem:[#allocation2 + $0x5c] sm:$0xf]
  %v3305 = vld [vmem:[#allocation2 + $0x60] sm:$0xf]
  %v3306 = vld [vmem:[#allocation2 + $0x64] sm:$0xf]
  %v3307 = vld [vmem:[#allocation2 + $0x68] sm:$0xf]
  %v3308 = vld [vmem:[#allocation2 + $0x6c] sm:$0xf]
  %v3309 = vld [vmem:[#allocation2 + $0x70] sm:$0xf]
  %v3310 = vld [vmem:[#allocation2 + $0x74] sm:$0xf]
  %v3311 = vld [vmem:[#allocation2 + $0x78] sm:$0xf]
  %v3312 = vld [vmem:[#allocation2 + $0x7c] sm:$0xf]
  %v3313 = vld [vmem:[#allocation2 + $0x80] sm:$0xf]
  %v3314 = vld [vmem:[#allocation2 + $0x84] sm:$0xf]
  %v3315 = vld [vmem:[#allocation2 + $0x88] sm:$0xf]
  %v3316 = vld [vmem:[#allocation2 + $0x8c] sm:$0xf]
  %v3317 = vld [vmem:[#allocation2 + $0x90] sm:$0xf]
  %v3318 = vld [vmem:[#allocation2 + $0x94] sm:$0xf]
  %v3319 = vld [vmem:[#allocation2 + $0x98] sm:$0xf]
  %v3320 = vld [vmem:[#allocation2 + $0x9c] sm:$0xf]
  %v3321 = vld [vmem:[%s2] sm:$0xff]
  %v3322 = vld [vmem:[%s2 + $0x8] sm:$0xf]
  %v3323 = vld [vmem:[%s2 + $0xc] sm:$0xff]
  %v3324 = vld [vmem:[%s2 + $0x14] sm:$0xf]
  %v3325 = vld [vmem:[%s2 + $0x18] sm:$0xff]
  %v3326 = vld [vmem:[%s2 + $0x20] sm:$0xf]
  %v3327 = vld [vmem:[%s2 + $0x24] sm:$0xff]
  %v3328 = vld [vmem:[%s2 + $0x2c] sm:$0xf]
  %v3369 = vunpack.c.l.b16 %v3281
  %v3370 = vunpack.c.l.b16 %v3282
  %v3371 = vunpack.c.l.b16 %v3283
  %v3372 = vunpack.c.l.b16 %v3284
  %v3373 = vunpack.c.l.b16 %v3285
  %v3374 = vunpack.c.l.b16 %v3286
  %v3375 = vunpack.c.l.b16 %v3287
  %v3376 = vunpack.c.l.b16 %v3288
  %v3377 = vunpack.c.l.b16 %v3289
  %v3378 = vunpack.c.l.b16 %v3290
  %v3379 = vunpack.c.l.b16 %v3291
  %v3380 = vunpack.c.l.b16 %v3292
  %v3381 = vunpack.c.l.b16 %v3293
  %v3382 = vunpack.c.l.b16 %v3294
  %v3383 = vunpack.c.l.b16 %v3295
  %v3384 = vunpack.c.l.b16 %v3296
  %v3385 = vunpack.c.l.b16 %v3297
  %v3386 = vunpack.c.l.b16 %v3298
  %v3387 = vunpack.c.l.b16 %v3299
  %v3388 = vunpack.c.l.b16 %v3300
  %v3389 = vunpack.c.l.b16 %v3301
  %v3390 = vunpack.c.l.b16 %v3302
  %v3391 = vunpack.c.l.b16 %v3303
  %v3392 = vunpack.c.l.b16 %v3304
  %v3393 = vunpack.c.l.b16 %v3305
  %v3394 = vunpack.c.l.b16 %v3306
  %v3395 = vunpack.c.l.b16 %v3307
  %v3396 = vunpack.c.l.b16 %v3308
  %v3397 = vunpack.c.l.b16 %v3309
  %v3398 = vunpack.c.l.b16 %v3310
  %v3399 = vunpack.c.l.b16 %v3311
  %v3400 = vunpack.c.l.b16 %v3312
  %v3401 = vunpack.c.l.b16 %v3313
  %v3402 = vunpack.c.l.b16 %v3314
  %v3403 = vunpack.c.l.b16 %v3315
  %v3404 = vunpack.c.l.b16 %v3316
  %v3405 = vunpack.c.l.b16 %v3317
  %v3406 = vunpack.c.l.b16 %v3318
  %v3407 = vunpack.c.l.b16 %v3319
  %v3408 = vunpack.c.l.b16 %v3320
  %v3409 = vpack.c.b16 %v3370, %v3369
  %v3410 = vpack.c.b16 %v3372, %v3371
  %v3411 = vpack.c.b16 %v3374, %v3373
  %v3412 = vpack.c.b16 %v3376, %v3375
  %v3413 = vpack.c.b16 %v3378, %v3377
  %v3414 = vpack.c.b16 %v3380, %v3379
  %v3415 = vpack.c.b16 %v3382, %v3381
  %v3416 = vpack.c.b16 %v3384, %v3383
  %v3417 = vpack.c.b16 %v3386, %v3385
  %v3418 = vpack.c.b16 %v3388, %v3387
  %v3419 = vpack.c.b16 %v3390, %v3389
  %v3420 = vpack.c.b16 %v3392, %v3391
  %v3421 = vpack.c.b16 %v3394, %v3393
  %v3422 = vpack.c.b16 %v3396, %v3395
  %v3423 = vpack.c.b16 %v3398, %v3397
  %v3424 = vpack.c.b16 %v3400, %v3399
  %v3425 = vpack.c.b16 %v3402, %v3401
  %v3426 = vpack.c.b16 %v3404, %v3403
  %v3427 = vpack.c.b16 %v3406, %v3405
  %v3428 = vpack.c.b16 %v3408, %v3407
  %v3437 = vunpack.c.l.b16 %v3321
  %v3438 = vunpack.c.h.b16 %v3321
  %v3439 = vunpack.c.l.b16 %v3322
  %v3440 = vunpack.c.l.b16 %v3323
  %v3441 = vunpack.c.h.b16 %v3323
  %v3442 = vunpack.c.l.b16 %v3324
  %v3443 = vunpack.c.l.b16 %v3325
  %v3444 = vunpack.c.h.b16 %v3325
  %v3445 = vunpack.c.l.b16 %v3326
  %v3446 = vunpack.c.l.b16 %v3327
  %v3447 = vunpack.c.h.b16 %v3327
  %v3448 = vunpack.c.l.b16 %v3328
  %v3449 = vpack.c.b16 %v3440, %v3437
  %v3450 = vpack.c.b16 %v3441, %v3438
  %v3451 = vpack.c.b16 %v3442, %v3439
  %v3452 = vpack.c.b16 %v3446, %v3443
  %v3453 = vpack.c.b16 %v3447, %v3444
  %v3454 = vpack.c.b16 %v3448, %v3445
  %v3462 = vsel %vm547, %v3409, 0
  %v3465 = vsel %vm547, %v3410, 0
  %v3468 = vsel %vm547, %v3411, 0
  %v3471 = vsel %vm547, %v3412, 0
  %v3474 = vsel %vm547, %v3413, 0
  %v3477 = vsel %vm547, %v3414, 0
  %v3480 = vsel %vm547, %v3415, 0
  %v3483 = vsel %vm547, %v3416, 0
  %v3486 = vsel %vm547, %v3417, 0
  %v3489 = vsel %vm547, %v3418, 0
  %v3492 = vsel %vm547, %v3419, 0
  %v3495 = vsel %vm547, %v3420, 0
  %v3498 = vsel %vm547, %v3421, 0
  %v3501 = vsel %vm547, %v3422, 0
  %v3504 = vsel %vm547, %v3423, 0
  %v3507 = vsel %vm547, %v3424, 0
  %v3510 = vsel %vm547, %v3425, 0
  %v3513 = vsel %vm547, %v3426, 0
  %v3516 = vsel %vm547, %v3427, 0
  %v3519 = vsel %vm547, %v3428, 0
  %3521 = vmatprep.subr.bf16.mxu0 0
  %3522 = vmatpush1.bf16.msra.mxu0 0
  %3523 = vmatprep.subr.bf16.mxu0 0
  %3524 = vmatpush1.bf16.msra.mxu0 0
  %3525 = vmatprep.subr.bf16.mxu0 0
  %3526 = vmatpush1.bf16.msra.mxu0 0
  %3527 = vmatprep.subr.bf16.mxu0 0
  %3528 = vmatpush1.bf16.msra.mxu0 0
  %3529 = vmatprep.subr.bf16.mxu0 0
  %3530 = vmatpush1.bf16.msra.mxu0 0
  %3531 = vmatprep.subr.bf16.mxu0 0
  %3532 = vmatpush1.bf16.msra.mxu0 0
  %3533 = vmatprep.subr.bf16.mxu0 %v3453
  %3534 = vmatpush1.bf16.msra.mxu0 %v3452
  %3535 = vmatprep.subr.bf16.mxu0 %v3450
  %3536 = vmatpush1.bf16.msra.mxu0 %v3449
  %3537 = vmatprep.subr.bf16.mxu0 0
  %3538 = vmatpush2.bf16.msra.mxu0 0
  %3539 = vmatprep.subr.bf16.mxu0 0
  %3540 = vmatpush2.bf16.msra.mxu0 0
  %3541 = vmatprep.subr.bf16.mxu0 0
  %3542 = vmatpush2.bf16.msra.mxu0 0
  %3543 = vmatprep.subr.bf16.mxu0 0
  %3544 = vmatpush2.bf16.msra.mxu0 0
  %3545 = vmatprep.subr.bf16.mxu0 0
  %3546 = vmatpush2.bf16.msra.mxu0 0
  %3547 = vmatprep.subr.bf16.mxu0 0
  %3548 = vmatpush2.bf16.msra.mxu0 0
  %3549 = vmatprep.subr.bf16.mxu0 0
  %3550 = vmatpush2.bf16.msra.mxu0 0
  %3551 = vmatprep.subr.bf16.mxu0 0
  %3552 = vmatpush2.bf16.msra.mxu0 0
  %3553 = vmatprep.mubr.bf16.mxu0 0
  %3554 = vmatmul.mubr.bf16.gmra.mxu0 %v3462
  %v3555 = vpop.f32.mrf.mxu0
  %v3556 = vadd.f32 0.0, %v3555
  %v3557 = vpop.f32.mrf.mxu0
  %v3558 = vadd.f32 0.0, %v3557
  %v3559 = vpop.f32.mrf.mxu0
  %v3560 = vadd.f32 0.0, %v3559
  %v3561 = vpop.f32.mrf.mxu0
  %v3562 = vadd.f32 0.0, %v3561
  %3563 = vmatprep.mubr.bf16.mxu0 0
  %3564 = vmatmul.mubr.bf16.gmra.mxu0 %v3465
  %v3565 = vpop.f32.mrf.mxu0
  %v3566 = vadd.f32 0.0, %v3565
  %v3567 = vpop.f32.mrf.mxu0
  %v3568 = vadd.f32 0.0, %v3567
  %v3569 = vpop.f32.mrf.mxu0
  %v3570 = vadd.f32 0.0, %v3569
  %v3571 = vpop.f32.mrf.mxu0
  %v3572 = vadd.f32 0.0, %v3571
  %3573 = vmatprep.mubr.bf16.mxu0 0
  %3574 = vmatmul.mubr.bf16.gmra.mxu0 %v3468
  %v3575 = vpop.f32.mrf.mxu0
  %v3576 = vadd.f32 0.0, %v3575
  %v3577 = vpop.f32.mrf.mxu0
  %v3578 = vadd.f32 0.0, %v3577
  %v3579 = vpop.f32.mrf.mxu0
  %v3580 = vadd.f32 0.0, %v3579
  %v3581 = vpop.f32.mrf.mxu0
  %v3582 = vadd.f32 0.0, %v3581
  %3583 = vmatprep.mubr.bf16.mxu0 0
  %3584 = vmatmul.mubr.bf16.gmra.mxu0 %v3471
  %v3585 = vpop.f32.mrf.mxu0
  %v3586 = vadd.f32 0.0, %v3585
  %v3587 = vpop.f32.mrf.mxu0
  %v3588 = vadd.f32 0.0, %v3587
  %v3589 = vpop.f32.mrf.mxu0
  %v3590 = vadd.f32 0.0, %v3589
  %v3591 = vpop.f32.mrf.mxu0
  %v3592 = vadd.f32 0.0, %v3591
  %3593 = vmatprep.mubr.bf16.mxu0 0
  %3594 = vmatmul.mubr.bf16.gmra.mxu0 %v3474
  %v3595 = vpop.f32.mrf.mxu0
  %v3596 = vadd.f32 0.0, %v3595
  %v3597 = vpop.f32.mrf.mxu0
  %v3598 = vadd.f32 0.0, %v3597
  %v3599 = vpop.f32.mrf.mxu0
  %v3600 = vadd.f32 0.0, %v3599
  %v3601 = vpop.f32.mrf.mxu0
  %v3602 = vadd.f32 0.0, %v3601
  %3603 = vmatprep.mubr.bf16.mxu0 0
  %3604 = vmatmul.mubr.bf16.gmra.mxu0 %v3477
  %v3605 = vpop.f32.mrf.mxu0
  %v3606 = vadd.f32 0.0, %v3605
  %v3607 = vpop.f32.mrf.mxu0
  %v3608 = vadd.f32 0.0, %v3607
  %v3609 = vpop.f32.mrf.mxu0
  %v3610 = vadd.f32 0.0, %v3609
  %v3611 = vpop.f32.mrf.mxu0
  %v3612 = vadd.f32 0.0, %v3611
  %3613 = vmatprep.mubr.bf16.mxu0 0
  %3614 = vmatmul.mubr.bf16.gmra.mxu0 %v3480
  %v3615 = vpop.f32.mrf.mxu0
  %v3616 = vadd.f32 0.0, %v3615
  %v3617 = vpop.f32.mrf.mxu0
  %v3618 = vadd.f32 0.0, %v3617
  %v3619 = vpop.f32.mrf.mxu0
  %v3620 = vadd.f32 0.0, %v3619
  %v3621 = vpop.f32.mrf.mxu0
  %v3622 = vadd.f32 0.0, %v3621
  %3623 = vmatprep.mubr.bf16.mxu0 0
  %3624 = vmatmul.mubr.bf16.gmra.mxu0 %v3483
  %v3625 = vpop.f32.mrf.mxu0
  %v3626 = vadd.f32 0.0, %v3625
  %v3627 = vpop.f32.mrf.mxu0
  %v3628 = vadd.f32 0.0, %v3627
  %v3629 = vpop.f32.mrf.mxu0
  %v3630 = vadd.f32 0.0, %v3629
  %v3631 = vpop.f32.mrf.mxu0
  %v3632 = vadd.f32 0.0, %v3631
  %3633 = vmatprep.mubr.bf16.mxu0 0
  %3634 = vmatmul.mubr.bf16.gmra.mxu0 %v3486
  %v3635 = vpop.f32.mrf.mxu0
  %v3636 = vadd.f32 0.0, %v3635
  %v3637 = vpop.f32.mrf.mxu0
  %v3638 = vadd.f32 0.0, %v3637
  %v3639 = vpop.f32.mrf.mxu0
  %v3640 = vadd.f32 0.0, %v3639
  %v3641 = vpop.f32.mrf.mxu0
  %v3642 = vadd.f32 0.0, %v3641
  %3643 = vmatprep.mubr.bf16.mxu0 0
  %3644 = vmatmul.mubr.bf16.gmra.mxu0 %v3489
  %v3645 = vpop.f32.mrf.mxu0
  %v3646 = vadd.f32 0.0, %v3645
  %v3647 = vpop.f32.mrf.mxu0
  %v3648 = vadd.f32 0.0, %v3647
  %v3649 = vpop.f32.mrf.mxu0
  %v3650 = vadd.f32 0.0, %v3649
  %v3651 = vpop.f32.mrf.mxu0
  %v3652 = vadd.f32 0.0, %v3651
  %3653 = vmatprep.mubr.bf16.mxu0 0
  %3654 = vmatmul.mubr.bf16.gmra.mxu0 %v3492
  %v3655 = vpop.f32.mrf.mxu0
  %v3656 = vadd.f32 0.0, %v3655
  %v3657 = vpop.f32.mrf.mxu0
  %v3658 = vadd.f32 0.0, %v3657
  %v3659 = vpop.f32.mrf.mxu0
  %v3660 = vadd.f32 0.0, %v3659
  %v3661 = vpop.f32.mrf.mxu0
  %v3662 = vadd.f32 0.0, %v3661
  %3663 = vmatprep.mubr.bf16.mxu0 0
  %3664 = vmatmul.mubr.bf16.gmra.mxu0 %v3495
  %v3665 = vpop.f32.mrf.mxu0
  %v3666 = vadd.f32 0.0, %v3665
  %v3667 = vpop.f32.mrf.mxu0
  %v3668 = vadd.f32 0.0, %v3667
  %v3669 = vpop.f32.mrf.mxu0
  %v3670 = vadd.f32 0.0, %v3669
  %v3671 = vpop.f32.mrf.mxu0
  %v3672 = vadd.f32 0.0, %v3671
  %3673 = vmatprep.mubr.bf16.mxu0 0
  %3674 = vmatmul.mubr.bf16.gmra.mxu0 %v3498
  %v3675 = vpop.f32.mrf.mxu0
  %v3676 = vadd.f32 0.0, %v3675
  %v3677 = vpop.f32.mrf.mxu0
  %v3678 = vadd.f32 0.0, %v3677
  %v3679 = vpop.f32.mrf.mxu0
  %v3680 = vadd.f32 0.0, %v3679
  %v3681 = vpop.f32.mrf.mxu0
  %v3682 = vadd.f32 0.0, %v3681
  %3683 = vmatprep.mubr.bf16.mxu0 0
  %3684 = vmatmul.mubr.bf16.gmra.mxu0 %v3501
  %v3685 = vpop.f32.mrf.mxu0
  %v3686 = vadd.f32 0.0, %v3685
  %v3687 = vpop.f32.mrf.mxu0
  %v3688 = vadd.f32 0.0, %v3687
  %v3689 = vpop.f32.mrf.mxu0
  %v3690 = vadd.f32 0.0, %v3689
  %v3691 = vpop.f32.mrf.mxu0
  %v3692 = vadd.f32 0.0, %v3691
  %3693 = vmatprep.mubr.bf16.mxu0 0
  %3694 = vmatmul.mubr.bf16.gmra.mxu0 %v3504
  %v3695 = vpop.f32.mrf.mxu0
  %v3696 = vadd.f32 0.0, %v3695
  %v3697 = vpop.f32.mrf.mxu0
  %v3698 = vadd.f32 0.0, %v3697
  %v3699 = vpop.f32.mrf.mxu0
  %v3700 = vadd.f32 0.0, %v3699
  %v3701 = vpop.f32.mrf.mxu0
  %v3702 = vadd.f32 0.0, %v3701
  %3703 = vmatprep.mubr.bf16.mxu0 0
  %3704 = vmatmul.mubr.bf16.gmra.mxu0 %v3507
  %v3705 = vpop.f32.mrf.mxu0
  %v3706 = vadd.f32 0.0, %v3705
  %v3707 = vpop.f32.mrf.mxu0
  %v3708 = vadd.f32 0.0, %v3707
  %v3709 = vpop.f32.mrf.mxu0
  %v3710 = vadd.f32 0.0, %v3709
  %v3711 = vpop.f32.mrf.mxu0
  %v3712 = vadd.f32 0.0, %v3711
  %3713 = vmatprep.mubr.bf16.mxu0 0
  %3714 = vmatmul.mubr.bf16.gmra.mxu0 %v3510
  %v3715 = vpop.f32.mrf.mxu0
  %v3716 = vadd.f32 0.0, %v3715
  %v3717 = vpop.f32.mrf.mxu0
  %v3718 = vadd.f32 0.0, %v3717
  %v3719 = vpop.f32.mrf.mxu0
  %v3720 = vadd.f32 0.0, %v3719
  %v3721 = vpop.f32.mrf.mxu0
  %v3722 = vadd.f32 0.0, %v3721
  %3723 = vmatprep.mubr.bf16.mxu0 0
  %3724 = vmatmul.mubr.bf16.gmra.mxu0 %v3513
  %v3725 = vpop.f32.mrf.mxu0
  %v3726 = vadd.f32 0.0, %v3725
  %v3727 = vpop.f32.mrf.mxu0
  %v3728 = vadd.f32 0.0, %v3727
  %v3729 = vpop.f32.mrf.mxu0
  %v3730 = vadd.f32 0.0, %v3729
  %v3731 = vpop.f32.mrf.mxu0
  %v3732 = vadd.f32 0.0, %v3731
  %3733 = vmatprep.mubr.bf16.mxu0 0
  %3734 = vmatmul.mubr.bf16.gmra.mxu0 %v3516
  %v3735 = vpop.f32.mrf.mxu0
  %v3736 = vadd.f32 0.0, %v3735
  %v3737 = vpop.f32.mrf.mxu0
  %v3738 = vadd.f32 0.0, %v3737
  %v3739 = vpop.f32.mrf.mxu0
  %v3740 = vadd.f32 0.0, %v3739
  %v3741 = vpop.f32.mrf.mxu0
  %v3742 = vadd.f32 0.0, %v3741
  %3743 = vmatprep.mubr.bf16.mxu0 0
  %3744 = vmatmul.mubr.bf16.gmra.mxu0 %v3519
  %v3745 = vpop.f32.mrf.mxu0
  %v3746 = vadd.f32 0.0, %v3745
  %v3747 = vpop.f32.mrf.mxu0
  %v3748 = vadd.f32 0.0, %v3747
  %v3749 = vpop.f32.mrf.mxu0
  %v3750 = vadd.f32 0.0, %v3749
  %v3751 = vpop.f32.mrf.mxu0
  %v3752 = vadd.f32 0.0, %v3751
  %3753 = vdwg.mxu0
  %3754 = vmatprep.subr.bf16.mxu0 0
  %3755 = vmatpush1.bf16.msra.mxu0 0
  %3756 = vmatprep.subr.bf16.mxu0 0
  %3757 = vmatpush1.bf16.msra.mxu0 0
  %3758 = vmatprep.subr.bf16.mxu0 0
  %3759 = vmatpush1.bf16.msra.mxu0 0
  %3760 = vmatprep.subr.bf16.mxu0 0
  %3761 = vmatpush1.bf16.msra.mxu0 0
  %3762 = vmatprep.subr.bf16.mxu0 0
  %3763 = vmatpush1.bf16.msra.mxu0 0
  %3764 = vmatprep.subr.bf16.mxu0 0
  %3765 = vmatpush1.bf16.msra.mxu0 0
  %3766 = vmatprep.subr.bf16.mxu0 0
  %3767 = vmatpush1.bf16.msra.mxu0 %v3454
  %3768 = vmatprep.subr.bf16.mxu0 0
  %3769 = vmatpush1.bf16.msra.mxu0 %v3451
  %3770 = vmatprep.subr.bf16.mxu0 0
  %3771 = vmatpush2.bf16.msra.mxu0 0
  %3772 = vmatprep.subr.bf16.mxu0 0
  %3773 = vmatpush2.bf16.msra.mxu0 0
  %3774 = vmatprep.subr.bf16.mxu0 0
  %3775 = vmatpush2.bf16.msra.mxu0 0
  %3776 = vmatprep.subr.bf16.mxu0 0
  %3777 = vmatpush2.bf16.msra.mxu0 0
  %3778 = vmatprep.subr.bf16.mxu0 0
  %3779 = vmatpush2.bf16.msra.mxu0 0
  %3780 = vmatprep.subr.bf16.mxu0 0
  %3781 = vmatpush2.bf16.msra.mxu0 0
  %3782 = vmatprep.subr.bf16.mxu0 0
  %3783 = vmatpush2.bf16.msra.mxu0 0
  %3784 = vmatprep.subr.bf16.mxu0 0
  %3785 = vmatpush2.bf16.msra.mxu0 0
  %3786 = vmatprep.mubr.bf16.mxu0 0
  %3787 = vmatmul.mubr.bf16.gmra.mxu0 %v3462
  %v3788 = vpop.f32.mrf.mxu0
  %v3789 = vadd.f32 0.0, %v3788
  %v3790 = vpop.f32.mrf.mxu0
  %v3791 = vpop.f32.mrf.mxu0
  %v3792 = vadd.f32 0.0, %v3791
  %v3793 = vpop.f32.mrf.mxu0
  %3794 = vmatprep.mubr.bf16.mxu0 0
  %3795 = vmatmul.mubr.bf16.gmra.mxu0 %v3465
  %v3796 = vpop.f32.mrf.mxu0
  %v3797 = vadd.f32 0.0, %v3796
  %v3798 = vpop.f32.mrf.mxu0
  %v3799 = vpop.f32.mrf.mxu0
  %v3800 = vadd.f32 0.0, %v3799
  %v3801 = vpop.f32.mrf.mxu0
  %3802 = vmatprep.mubr.bf16.mxu0 0
  %3803 = vmatmul.mubr.bf16.gmra.mxu0 %v3468
  %v3804 = vpop.f32.mrf.mxu0
  %v3805 = vadd.f32 0.0, %v3804
  %v3806 = vpop.f32.mrf.mxu0
  %v3807 = vpop.f32.mrf.mxu0
  %v3808 = vadd.f32 0.0, %v3807
  %v3809 = vpop.f32.mrf.mxu0
  %3810 = vmatprep.mubr.bf16.mxu0 0
  %3811 = vmatmul.mubr.bf16.gmra.mxu0 %v3471
  %v3812 = vpop.f32.mrf.mxu0
  %v3813 = vadd.f32 0.0, %v3812
  %v3814 = vpop.f32.mrf.mxu0
  %v3815 = vpop.f32.mrf.mxu0
  %v3816 = vadd.f32 0.0, %v3815
  %v3817 = vpop.f32.mrf.mxu0
  %3818 = vmatprep.mubr.bf16.mxu0 0
  %3819 = vmatmul.mubr.bf16.gmra.mxu0 %v3474
  %v3820 = vpop.f32.mrf.mxu0
  %v3821 = vadd.f32 0.0, %v3820
  %v3822 = vpop.f32.mrf.mxu0
  %v3823 = vpop.f32.mrf.mxu0
  %v3824 = vadd.f32 0.0, %v3823
  %v3825 = vpop.f32.mrf.mxu0
  %3826 = vmatprep.mubr.bf16.mxu0 0
  %3827 = vmatmul.mubr.bf16.gmra.mxu0 %v3477
  %v3828 = vpop.f32.mrf.mxu0
  %v3829 = vadd.f32 0.0, %v3828
  %v3830 = vpop.f32.mrf.mxu0
  %v3831 = vpop.f32.mrf.mxu0
  %v3832 = vadd.f32 0.0, %v3831
  %v3833 = vpop.f32.mrf.mxu0
  %3834 = vmatprep.mubr.bf16.mxu0 0
  %3835 = vmatmul.mubr.bf16.gmra.mxu0 %v3480
  %v3836 = vpop.f32.mrf.mxu0
  %v3837 = vadd.f32 0.0, %v3836
  %v3838 = vpop.f32.mrf.mxu0
  %v3839 = vpop.f32.mrf.mxu0
  %v3840 = vadd.f32 0.0, %v3839
  %v3841 = vpop.f32.mrf.mxu0
  %3842 = vmatprep.mubr.bf16.mxu0 0
  %3843 = vmatmul.mubr.bf16.gmra.mxu0 %v3483
  %v3844 = vpop.f32.mrf.mxu0
  %v3845 = vadd.f32 0.0, %v3844
  %v3846 = vpop.f32.mrf.mxu0
  %v3847 = vpop.f32.mrf.mxu0
  %v3848 = vadd.f32 0.0, %v3847
  %v3849 = vpop.f32.mrf.mxu0
  %3850 = vmatprep.mubr.bf16.mxu0 0
  %3851 = vmatmul.mubr.bf16.gmra.mxu0 %v3486
  %v3852 = vpop.f32.mrf.mxu0
  %v3853 = vadd.f32 0.0, %v3852
  %v3854 = vpop.f32.mrf.mxu0
  %v3855 = vpop.f32.mrf.mxu0
  %v3856 = vadd.f32 0.0, %v3855
  %v3857 = vpop.f32.mrf.mxu0
  %3858 = vmatprep.mubr.bf16.mxu0 0
  %3859 = vmatmul.mubr.bf16.gmra.mxu0 %v3489
  %v3860 = vpop.f32.mrf.mxu0
  %v3861 = vadd.f32 0.0, %v3860
  %v3862 = vpop.f32.mrf.mxu0
  %v3863 = vpop.f32.mrf.mxu0
  %v3864 = vadd.f32 0.0, %v3863
  %v3865 = vpop.f32.mrf.mxu0
  %3866 = vmatprep.mubr.bf16.mxu0 0
  %3867 = vmatmul.mubr.bf16.gmra.mxu0 %v3492
  %v3868 = vpop.f32.mrf.mxu0
  %v3869 = vadd.f32 0.0, %v3868
  %v3870 = vpop.f32.mrf.mxu0
  %v3871 = vpop.f32.mrf.mxu0
  %v3872 = vadd.f32 0.0, %v3871
  %v3873 = vpop.f32.mrf.mxu0
  %3874 = vmatprep.mubr.bf16.mxu0 0
  %3875 = vmatmul.mubr.bf16.gmra.mxu0 %v3495
  %v3876 = vpop.f32.mrf.mxu0
  %v3877 = vadd.f32 0.0, %v3876
  %v3878 = vpop.f32.mrf.mxu0
  %v3879 = vpop.f32.mrf.mxu0
  %v3880 = vadd.f32 0.0, %v3879
  %v3881 = vpop.f32.mrf.mxu0
  %3882 = vmatprep.mubr.bf16.mxu0 0
  %3883 = vmatmul.mubr.bf16.gmra.mxu0 %v3498
  %v3884 = vpop.f32.mrf.mxu0
  %v3885 = vadd.f32 0.0, %v3884
  %v3886 = vpop.f32.mrf.mxu0
  %v3887 = vpop.f32.mrf.mxu0
  %v3888 = vadd.f32 0.0, %v3887
  %v3889 = vpop.f32.mrf.mxu0
  %3890 = vmatprep.mubr.bf16.mxu0 0
  %3891 = vmatmul.mubr.bf16.gmra.mxu0 %v3501
  %v3892 = vpop.f32.mrf.mxu0
  %v3893 = vadd.f32 0.0, %v3892
  %v3894 = vpop.f32.mrf.mxu0
  %v3895 = vpop.f32.mrf.mxu0
  %v3896 = vadd.f32 0.0, %v3895
  %v3897 = vpop.f32.mrf.mxu0
  %3898 = vmatprep.mubr.bf16.mxu0 0
  %3899 = vmatmul.mubr.bf16.gmra.mxu0 %v3504
  %v3900 = vpop.f32.mrf.mxu0
  %v3901 = vadd.f32 0.0, %v3900
  %v3902 = vpop.f32.mrf.mxu0
  %v3903 = vpop.f32.mrf.mxu0
  %v3904 = vadd.f32 0.0, %v3903
  %v3905 = vpop.f32.mrf.mxu0
  %3906 = vmatprep.mubr.bf16.mxu0 0
  %3907 = vmatmul.mubr.bf16.gmra.mxu0 %v3507
  %v3908 = vpop.f32.mrf.mxu0
  %v3909 = vadd.f32 0.0, %v3908
  %v3910 = vpop.f32.mrf.mxu0
  %v3911 = vpop.f32.mrf.mxu0
  %v3912 = vadd.f32 0.0, %v3911
  %v3913 = vpop.f32.mrf.mxu0
  %3914 = vmatprep.mubr.bf16.mxu0 0
  %3915 = vmatmul.mubr.bf16.gmra.mxu0 %v3510
  %v3916 = vpop.f32.mrf.mxu0
  %v3917 = vadd.f32 0.0, %v3916
  %v3918 = vpop.f32.mrf.mxu0
  %v3919 = vpop.f32.mrf.mxu0
  %v3920 = vadd.f32 0.0, %v3919
  %v3921 = vpop.f32.mrf.mxu0
  %3922 = vmatprep.mubr.bf16.mxu0 0
  %3923 = vmatmul.mubr.bf16.gmra.mxu0 %v3513
  %v3924 = vpop.f32.mrf.mxu0
  %v3925 = vadd.f32 0.0, %v3924
  %v3926 = vpop.f32.mrf.mxu0
  %v3927 = vpop.f32.mrf.mxu0
  %v3928 = vadd.f32 0.0, %v3927
  %v3929 = vpop.f32.mrf.mxu0
  %3930 = vmatprep.mubr.bf16.mxu0 0
  %3931 = vmatmul.mubr.bf16.gmra.mxu0 %v3516
  %v3932 = vpop.f32.mrf.mxu0
  %v3933 = vadd.f32 0.0, %v3932
  %v3934 = vpop.f32.mrf.mxu0
  %v3935 = vpop.f32.mrf.mxu0
  %v3936 = vadd.f32 0.0, %v3935
  %v3937 = vpop.f32.mrf.mxu0
  %3938 = vmatprep.mubr.bf16.mxu0 0
  %3939 = vmatmul.mubr.bf16.gmra.mxu0 %v3519
  %v3940 = vpop.f32.mrf.mxu0
  %v3941 = vadd.f32 0.0, %v3940
  %v3942 = vpop.f32.mrf.mxu0
  %v3943 = vpop.f32.mrf.mxu0
  %v3944 = vadd.f32 0.0, %v3943
  %v3945 = vpop.f32.mrf.mxu0
  %3946 = vdwg.mxu0
  %3947 = vst [vmem:[#allocation3] sm:$0xff] %v3556
  %3948 = vst [vmem:[#allocation3 + $0x8] sm:$0xff] %v3558
  %3949 = vst.msk [vmem:[#allocation3 + $0x10] sm:$0xff] %vm547, %v3789
  %3950 = vst [vmem:[#allocation3 + $0x18] sm:$0xff] %v3560
  %3951 = vst [vmem:[#allocation3 + $0x20] sm:$0xff] %v3562
  %3952 = vst.msk [vmem:[#allocation3 + $0x28] sm:$0xff] %vm547, %v3792
  %3953 = vst [vmem:[#allocation3 + $0x30] sm:$0xff] %v3566
  %3954 = vst [vmem:[#allocation3 + $0x38] sm:$0xff] %v3568
  %3955 = vst.msk [vmem:[#allocation3 + $0x40] sm:$0xff] %vm547, %v3797
  %3956 = vst [vmem:[#allocation3 + $0x48] sm:$0xff] %v3570
  %3957 = vst [vmem:[#allocation3 + $0x50] sm:$0xff] %v3572
  %3958 = vst.msk [vmem:[#allocation3 + $0x58] sm:$0xff] %vm547, %v3800
  %3959 = vst [vmem:[#allocation3 + $0x60] sm:$0xff] %v3576
  %3960 = vst [vmem:[#allocation3 + $0x68] sm:$0xff] %v3578
  %3961 = vst.msk [vmem:[#allocation3 + $0x70] sm:$0xff] %vm547, %v3805
  %3962 = vst [vmem:[#allocation3 + $0x78] sm:$0xff] %v3580
  %3963 = vst [vmem:[#allocation3 + $0x80] sm:$0xff] %v3582
  %3964 = vst.msk [vmem:[#allocation3 + $0x88] sm:$0xff] %vm547, %v3808
  %3965 = vst [vmem:[#allocation3 + $0x90] sm:$0xff] %v3586
  %3966 = vst [vmem:[#allocation3 + $0x98] sm:$0xff] %v3588
  %3967 = vst.msk [vmem:[#allocation3 + $0xa0] sm:$0xff] %vm547, %v3813
  %3968 = vst [vmem:[#allocation3 + $0xa8] sm:$0xff] %v3590
  %3969 = vst [vmem:[#allocation3 + $0xb0] sm:$0xff] %v3592
  %3970 = vst.msk [vmem:[#allocation3 + $0xb8] sm:$0xff] %vm547, %v3816
  %3971 = vst [vmem:[#allocation3 + $0xc0] sm:$0xff] %v3596
  %3972 = vst [vmem:[#allocation3 + $0xc8] sm:$0xff] %v3598
  %3973 = vst.msk [vmem:[#allocation3 + $0xd0] sm:$0xff] %vm547, %v3821
  %3974 = vst [vmem:[#allocation3 + $0xd8] sm:$0xff] %v3600
  %3975 = vst [vmem:[#allocation3 + $0xe0] sm:$0xff] %v3602
  %3976 = vst.msk [vmem:[#allocation3 + $0xe8] sm:$0xff] %vm547, %v3824
  %3977 = vst [vmem:[#allocation3 + $0xf0] sm:$0xff] %v3606
  %3978 = vst [vmem:[#allocation3 + $0xf8] sm:$0xff] %v3608
  %3979 = vst.msk [vmem:[#allocation3 + $0x100] sm:$0xff] %vm547, %v3829
  %3980 = vst [vmem:[#allocation3 + $0x108] sm:$0xff] %v3610
  %3981 = vst [vmem:[#allocation3 + $0x110] sm:$0xff] %v3612
  %3982 = vst.msk [vmem:[#allocation3 + $0x118] sm:$0xff] %vm547, %v3832
  %3983 = vst [vmem:[#allocation3 + $0x120] sm:$0xff] %v3616
  %3984 = vst [vmem:[#allocation3 + $0x128] sm:$0xff] %v3618
  %3985 = vst.msk [vmem:[#allocation3 + $0x130] sm:$0xff] %vm547, %v3837
  %3986 = vst [vmem:[#allocation3 + $0x138] sm:$0xff] %v3620
  %3987 = vst [vmem:[#allocation3 + $0x140] sm:$0xff] %v3622
  %3988 = vst.msk [vmem:[#allocation3 + $0x148] sm:$0xff] %vm547, %v3840
  %3989 = vst [vmem:[#allocation3 + $0x150] sm:$0xff] %v3626
  %3990 = vst [vmem:[#allocation3 + $0x158] sm:$0xff] %v3628
  %3991 = vst.msk [vmem:[#allocation3 + $0x160] sm:$0xff] %vm547, %v3845
  %3992 = vst [vmem:[#allocation3 + $0x168] sm:$0xff] %v3630
  %3993 = vst [vmem:[#allocation3 + $0x170] sm:$0xff] %v3632
  %3994 = vst.msk [vmem:[#allocation3 + $0x178] sm:$0xff] %vm547, %v3848
  %3995 = vst [vmem:[#allocation3 + $0x180] sm:$0xff] %v3636
  %3996 = vst [vmem:[#allocation3 + $0x188] sm:$0xff] %v3638
  %3997 = vst.msk [vmem:[#allocation3 + $0x190] sm:$0xff] %vm547, %v3853
  %3998 = vst [vmem:[#allocation3 + $0x198] sm:$0xff] %v3640
  %3999 = vst [vmem:[#allocation3 + $0x1a0] sm:$0xff] %v3642
  %4000 = vst.msk [vmem:[#allocation3 + $0x1a8] sm:$0xff] %vm547, %v3856
  %4001 = vst [vmem:[#allocation3 + $0x1b0] sm:$0xff] %v3646
  %4002 = vst [vmem:[#allocation3 + $0x1b8] sm:$0xff] %v3648
  %4003 = vst.msk [vmem:[#allocation3 + $0x1c0] sm:$0xff] %vm547, %v3861
  %4004 = vst [vmem:[#allocation3 + $0x1c8] sm:$0xff] %v3650
  %4005 = vst [vmem:[#allocation3 + $0x1d0] sm:$0xff] %v3652
  %4006 = vst.msk [vmem:[#allocation3 + $0x1d8] sm:$0xff] %vm547, %v3864
  %4007 = vst [vmem:[#allocation3 + $0x1e0] sm:$0xff] %v3656
  %4008 = vst [vmem:[#allocation3 + $0x1e8] sm:$0xff] %v3658
  %4009 = vst.msk [vmem:[#allocation3 + $0x1f0] sm:$0xff] %vm547, %v3869
  %4010 = vst [vmem:[#allocation3 + $0x1f8] sm:$0xff] %v3660
  %4011 = vst [vmem:[#allocation3 + $0x200] sm:$0xff] %v3662
  %4012 = vst.msk [vmem:[#allocation3 + $0x208] sm:$0xff] %vm547, %v3872
  %4013 = vst [vmem:[#allocation3 + $0x210] sm:$0xff] %v3666
  %4014 = vst [vmem:[#allocation3 + $0x218] sm:$0xff] %v3668
  %4015 = vst.msk [vmem:[#allocation3 + $0x220] sm:$0xff] %vm547, %v3877
  %4016 = vst [vmem:[#allocation3 + $0x228] sm:$0xff] %v3670
  %4017 = vst [vmem:[#allocation3 + $0x230] sm:$0xff] %v3672
  %4018 = vst.msk [vmem:[#allocation3 + $0x238] sm:$0xff] %vm547, %v3880
  %4019 = vst [vmem:[#allocation3 + $0x240] sm:$0xff] %v3676
  %4020 = vst [vmem:[#allocation3 + $0x248] sm:$0xff] %v3678
  %4021 = vst.msk [vmem:[#allocation3 + $0x250] sm:$0xff] %vm547, %v3885
  %4022 = vst [vmem:[#allocation3 + $0x258] sm:$0xff] %v3680
  %4023 = vst [vmem:[#allocation3 + $0x260] sm:$0xff] %v3682
  %4024 = vst.msk [vmem:[#allocation3 + $0x268] sm:$0xff] %vm547, %v3888
  %4025 = vst [vmem:[#allocation3 + $0x270] sm:$0xff] %v3686
  %4026 = vst [vmem:[#allocation3 + $0x278] sm:$0xff] %v3688
  %4027 = vst.msk [vmem:[#allocation3 + $0x280] sm:$0xff] %vm547, %v3893
  %4028 = vst [vmem:[#allocation3 + $0x288] sm:$0xff] %v3690
  %4029 = vst [vmem:[#allocation3 + $0x290] sm:$0xff] %v3692
  %4030 = vst.msk [vmem:[#allocation3 + $0x298] sm:$0xff] %vm547, %v3896
  %4031 = vst [vmem:[#allocation3 + $0x2a0] sm:$0xff] %v3696
  %4032 = vst [vmem:[#allocation3 + $0x2a8] sm:$0xff] %v3698
  %4033 = vst.msk [vmem:[#allocation3 + $0x2b0] sm:$0xff] %vm547, %v3901
  %4034 = vst [vmem:[#allocation3 + $0x2b8] sm:$0xff] %v3700
  %4035 = vst [vmem:[#allocation3 + $0x2c0] sm:$0xff] %v3702
  %4036 = vst.msk [vmem:[#allocation3 + $0x2c8] sm:$0xff] %vm547, %v3904
  %4037 = vst [vmem:[#allocation3 + $0x2d0] sm:$0xff] %v3706
  %4038 = vst [vmem:[#allocation3 + $0x2d8] sm:$0xff] %v3708
  %4039 = vst.msk [vmem:[#allocation3 + $0x2e0] sm:$0xff] %vm547, %v3909
  %4040 = vst [vmem:[#allocation3 + $0x2e8] sm:$0xff] %v3710
  %4041 = vst [vmem:[#allocation3 + $0x2f0] sm:$0xff] %v3712
  %4042 = vst.msk [vmem:[#allocation3 + $0x2f8] sm:$0xff] %vm547, %v3912
  %4043 = vst [vmem:[#allocation3 + $0x300] sm:$0xff] %v3716
  %4044 = vst [vmem:[#allocation3 + $0x308] sm:$0xff] %v3718
  %4045 = vst.msk [vmem:[#allocation3 + $0x310] sm:$0xff] %vm547, %v3917
  %4046 = vst [vmem:[#allocation3 + $0x318] sm:$0xff] %v3720
  %4047 = vst [vmem:[#allocation3 + $0x320] sm:$0xff] %v3722
  %4048 = vst.msk [vmem:[#allocation3 + $0x328] sm:$0xff] %vm547, %v3920
  %4049 = vst [vmem:[#allocation3 + $0x330] sm:$0xff] %v3726
  %4050 = vst [vmem:[#allocation3 + $0x338] sm:$0xff] %v3728
  %4051 = vst.msk [vmem:[#allocation3 + $0x340] sm:$0xff] %vm547, %v3925
  %4052 = vst [vmem:[#allocation3 + $0x348] sm:$0xff] %v3730
  %4053 = vst [vmem:[#allocation3 + $0x350] sm:$0xff] %v3732
  %4054 = vst.msk [vmem:[#allocation3 + $0x358] sm:$0xff] %vm547, %v3928
  %4055 = vst [vmem:[#allocation3 + $0x360] sm:$0xff] %v3736
  %4056 = vst [vmem:[#allocation3 + $0x368] sm:$0xff] %v3738
  %4057 = vst.msk [vmem:[#allocation3 + $0x370] sm:$0xff] %vm547, %v3933
  %4058 = vst [vmem:[#allocation3 + $0x378] sm:$0xff] %v3740
  %4059 = vst [vmem:[#allocation3 + $0x380] sm:$0xff] %v3742
  %4060 = vst.msk [vmem:[#allocation3 + $0x388] sm:$0xff] %vm547, %v3936
  %4061 = vst [vmem:[#allocation3 + $0x390] sm:$0xff] %v3746
  %4062 = vst [vmem:[#allocation3 + $0x398] sm:$0xff] %v3748
  %4063 = vst.msk [vmem:[#allocation3 + $0x3a0] sm:$0xff] %vm547, %v3941
  %4064 = vst [vmem:[#allocation3 + $0x3a8] sm:$0xff] %v3750
  %4065 = vst [vmem:[#allocation3 + $0x3b0] sm:$0xff] %v3752
  %4066 = vst.msk [vmem:[#allocation3 + $0x3b8] sm:$0xff] %vm547, %v3944
  %v4067 = vld [vmem:[#allocation3] sm:$0xff]
  %v4068 = vld [vmem:[#allocation3 + $0x18] sm:$0xff]
  %v4069 = vld [vmem:[#allocation3 + $0x30] sm:$0xff]
  %v4070 = vld [vmem:[#allocation3 + $0x48] sm:$0xff]
  %v4071 = vld [vmem:[#allocation3 + $0x60] sm:$0xff]
  %v4072 = vld [vmem:[#allocation3 + $0x78] sm:$0xff]
  %v4073 = vld [vmem:[#allocation3 + $0x90] sm:$0xff]
  %v4074 = vld [vmem:[#allocation3 + $0xa8] sm:$0xff]
  %v4075 = vld [vmem:[#allocation3 + $0xc0] sm:$0xff]
  %v4076 = vld [vmem:[#allocation3 + $0xd8] sm:$0xff]
  %v4077 = vld [vmem:[#allocation3 + $0xf0] sm:$0xff]
  %v4078 = vld [vmem:[#allocation3 + $0x108] sm:$0xff]
  %v4079 = vld [vmem:[#allocation3 + $0x120] sm:$0xff]
  %v4080 = vld [vmem:[#allocation3 + $0x138] sm:$0xff]
  %v4081 = vld [vmem:[#allocation3 + $0x150] sm:$0xff]
  %v4082 = vld [vmem:[#allocation3 + $0x168] sm:$0xff]
  %v4083 = vld [vmem:[#allocation3 + $0x180] sm:$0xff]
  %v4084 = vld [vmem:[#allocation3 + $0x198] sm:$0xff]
  %v4085 = vld [vmem:[#allocation3 + $0x1b0] sm:$0xff]
  %v4086 = vld [vmem:[#allocation3 + $0x1c8] sm:$0xff]
  %v4087 = vld [vmem:[#allocation3 + $0x1e0] sm:$0xff]
  %v4088 = vld [vmem:[#allocation3 + $0x1f8] sm:$0xff]
  %v4089 = vld [vmem:[#allocation3 + $0x210] sm:$0xff]
  %v4090 = vld [vmem:[#allocation3 + $0x228] sm:$0xff]
  %v4091 = vld [vmem:[#allocation3 + $0x240] sm:$0xff]
  %v4092 = vld [vmem:[#allocation3 + $0x258] sm:$0xff]
  %v4093 = vld [vmem:[#allocation3 + $0x270] sm:$0xff]
  %v4094 = vld [vmem:[#allocation3 + $0x288] sm:$0xff]
  %v4095 = vld [vmem:[#allocation3 + $0x2a0] sm:$0xff]
  %v4096 = vld [vmem:[#allocation3 + $0x2b8] sm:$0xff]
  %v4097 = vld [vmem:[#allocation3 + $0x2d0] sm:$0xff]
  %v4098 = vld [vmem:[#allocation3 + $0x2e8] sm:$0xff]
  %v4099 = vld [vmem:[#allocation3 + $0x300] sm:$0xff]
  %v4100 = vld [vmem:[#allocation3 + $0x318] sm:$0xff]
  %v4101 = vld [vmem:[#allocation3 + $0x330] sm:$0xff]
  %v4102 = vld [vmem:[#allocation3 + $0x348] sm:$0xff]
  %v4103 = vadd.f32 %v4067, 0.0
  %v4104 = vadd.f32 %v4068, 0.0
  %v4105 = vadd.f32 %v4069, 0.0
  %v4106 = vadd.f32 %v4070, 0.0
  %v4107 = vadd.f32 %v4071, 0.0
  %v4108 = vadd.f32 %v4072, 0.0
  %v4109 = vadd.f32 %v4073, 0.0
  %v4110 = vadd.f32 %v4074, 0.0
  %v4111 = vadd.f32 %v4075, 0.0
  %v4112 = vadd.f32 %v4076, 0.0
  %v4113 = vadd.f32 %v4077, 0.0
  %v4114 = vadd.f32 %v4078, 0.0
  %v4115 = vadd.f32 %v4079, 0.0
  %v4116 = vadd.f32 %v4080, 0.0
  %v4117 = vadd.f32 %v4081, 0.0
  %v4118 = vadd.f32 %v4082, 0.0
  %v4119 = vadd.f32 %v4083, 0.0
  %v4120 = vadd.f32 %v4084, 0.0
  %v4121 = vadd.f32 %v4085, 0.0
  %v4122 = vadd.f32 %v4086, 0.0
  %v4123 = vadd.f32 %v4087, 0.0
  %v4124 = vadd.f32 %v4088, 0.0
  %v4125 = vadd.f32 %v4089, 0.0
  %v4126 = vadd.f32 %v4090, 0.0
  %v4127 = vadd.f32 %v4091, 0.0
  %v4128 = vadd.f32 %v4092, 0.0
  %v4129 = vadd.f32 %v4093, 0.0
  %v4130 = vadd.f32 %v4094, 0.0
  %v4131 = vadd.f32 %v4095, 0.0
  %v4132 = vadd.f32 %v4096, 0.0
  %v4133 = vadd.f32 %v4097, 0.0
  %v4134 = vadd.f32 %v4098, 0.0
  %v4135 = vadd.f32 %v4099, 0.0
  %v4136 = vadd.f32 %v4100, 0.0
  %v4137 = vadd.f32 %v4101, 0.0
  %v4138 = vadd.f32 %v4102, 0.0
  %v4139 = vld [vmem:[#allocation3] sm:$0xfe]
  %v4140 = vld [vmem:[#allocation3 + $0x360] sm:$0x1]
  %vm4178 = vcmask 1046528
  %v4179 = vrot.slane %v4139, 1
  %v4180 = vrot.slane %v4068, 1
  %v4181 = vsel %vm4178, %v4179, %v4180
  %v4182 = vrot.slane %v4069, 1
  %v4183 = vsel %vm4178, %v4180, %v4182
  %v4184 = vrot.slane %v4070, 1
  %v4185 = vsel %vm4178, %v4182, %v4184
  %v4186 = vrot.slane %v4071, 1
  %v4187 = vsel %vm4178, %v4184, %v4186
  %v4188 = vrot.slane %v4072, 1
  %v4189 = vsel %vm4178, %v4186, %v4188
  %v4190 = vrot.slane %v4073, 1
  %v4191 = vsel %vm4178, %v4188, %v4190
  %v4192 = vrot.slane %v4074, 1
  %v4193 = vsel %vm4178, %v4190, %v4192
  %v4194 = vrot.slane %v4075, 1
  %v4195 = vsel %vm4178, %v4192, %v4194
  %v4196 = vrot.slane %v4076, 1
  %v4197 = vsel %vm4178, %v4194, %v4196
  %v4198 = vrot.slane %v4077, 1
  %v4199 = vsel %vm4178, %v4196, %v4198
  %v4200 = vrot.slane %v4078, 1
  %v4201 = vsel %vm4178, %v4198, %v4200
  %v4202 = vrot.slane %v4079, 1
  %v4203 = vsel %vm4178, %v4200, %v4202
  %v4204 = vrot.slane %v4080, 1
  %v4205 = vsel %vm4178, %v4202, %v4204
  %v4206 = vrot.slane %v4081, 1
  %v4207 = vsel %vm4178, %v4204, %v4206
  %v4208 = vrot.slane %v4082, 1
  %v4209 = vsel %vm4178, %v4206, %v4208
  %v4210 = vrot.slane %v4083, 1
  %v4211 = vsel %vm4178, %v4208, %v4210
  %v4212 = vrot.slane %v4084, 1
  %v4213 = vsel %vm4178, %v4210, %v4212
  %v4214 = vrot.slane %v4085, 1
  %v4215 = vsel %vm4178, %v4212, %v4214
  %v4216 = vrot.slane %v4086, 1
  %v4217 = vsel %vm4178, %v4214, %v4216
  %v4218 = vrot.slane %v4087, 1
  %v4219 = vsel %vm4178, %v4216, %v4218
  %v4220 = vrot.slane %v4088, 1
  %v4221 = vsel %vm4178, %v4218, %v4220
  %v4222 = vrot.slane %v4089, 1
  %v4223 = vsel %vm4178, %v4220, %v4222
  %v4224 = vrot.slane %v4090, 1
  %v4225 = vsel %vm4178, %v4222, %v4224
  %v4226 = vrot.slane %v4091, 1
  %v4227 = vsel %vm4178, %v4224, %v4226
  %v4228 = vrot.slane %v4092, 1
  %v4229 = vsel %vm4178, %v4226, %v4228
  %v4230 = vrot.slane %v4093, 1
  %v4231 = vsel %vm4178, %v4228, %v4230
  %v4232 = vrot.slane %v4094, 1
  %v4233 = vsel %vm4178, %v4230, %v4232
  %v4234 = vrot.slane %v4095, 1
  %v4235 = vsel %vm4178, %v4232, %v4234
  %v4236 = vrot.slane %v4096, 1
  %v4237 = vsel %vm4178, %v4234, %v4236
  %v4238 = vrot.slane %v4097, 1
  %v4239 = vsel %vm4178, %v4236, %v4238
  %v4240 = vrot.slane %v4098, 1
  %v4241 = vsel %vm4178, %v4238, %v4240
  %v4242 = vrot.slane %v4099, 1
  %v4243 = vsel %vm4178, %v4240, %v4242
  %v4244 = vrot.slane %v4100, 1
  %v4245 = vsel %vm4178, %v4242, %v4244
  %v4246 = vrot.slane %v4101, 1
  %v4247 = vsel %vm4178, %v4244, %v4246
  %v4248 = vrot.slane %v4102, 1
  %v4249 = vsel %vm4178, %v4246, %v4248
  %v4250 = vrot.slane %v4140, 1
  %v4251 = vsel %vm4178, %v4248, %v4250
  %4252 = vrot.lane.b32.xlu0 %v4181, 96
  %v4253 = vpop.permute.xlu0 %4252
  %4254 = vrot.lane.b32.xlu0 %v4183, 96
  %v4255 = vpop.permute.xlu0 %4254
  %4256 = vrot.lane.b32.xlu0 %v4185, 96
  %v4257 = vpop.permute.xlu0 %4256
  %4258 = vrot.lane.b32.xlu0 %v4187, 96
  %v4259 = vpop.permute.xlu0 %4258
  %4260 = vrot.lane.b32.xlu0 %v4189, 96
  %v4261 = vpop.permute.xlu0 %4260
  %4262 = vrot.lane.b32.xlu0 %v4191, 96
  %v4263 = vpop.permute.xlu0 %4262
  %4264 = vrot.lane.b32.xlu0 %v4193, 96
  %v4265 = vpop.permute.xlu0 %4264
  %4266 = vrot.lane.b32.xlu0 %v4195, 96
  %v4267 = vpop.permute.xlu0 %4266
  %4268 = vrot.lane.b32.xlu0 %v4197, 96
  %v4269 = vpop.permute.xlu0 %4268
  %4270 = vrot.lane.b32.xlu0 %v4199, 96
  %v4271 = vpop.permute.xlu0 %4270
  %4272 = vrot.lane.b32.xlu0 %v4201, 96
  %v4273 = vpop.permute.xlu0 %4272
  %4274 = vrot.lane.b32.xlu0 %v4203, 96
  %v4275 = vpop.permute.xlu0 %4274
  %4276 = vrot.lane.b32.xlu0 %v4205, 96
  %v4277 = vpop.permute.xlu0 %4276
  %4278 = vrot.lane.b32.xlu0 %v4207, 96
  %v4279 = vpop.permute.xlu0 %4278
  %4280 = vrot.lane.b32.xlu0 %v4209, 96
  %v4281 = vpop.permute.xlu0 %4280
  %4282 = vrot.lane.b32.xlu0 %v4211, 96
  %v4283 = vpop.permute.xlu0 %4282
  %4284 = vrot.lane.b32.xlu0 %v4213, 96
  %v4285 = vpop.permute.xlu0 %4284
  %4286 = vrot.lane.b32.xlu0 %v4215, 96
  %v4287 = vpop.permute.xlu0 %4286
  %4288 = vrot.lane.b32.xlu0 %v4217, 96
  %v4289 = vpop.permute.xlu0 %4288
  %4290 = vrot.lane.b32.xlu0 %v4219, 96
  %v4291 = vpop.permute.xlu0 %4290
  %4292 = vrot.lane.b32.xlu0 %v4221, 96
  %v4293 = vpop.permute.xlu0 %4292
  %4294 = vrot.lane.b32.xlu0 %v4223, 96
  %v4295 = vpop.permute.xlu0 %4294
  %4296 = vrot.lane.b32.xlu0 %v4225, 96
  %v4297 = vpop.permute.xlu0 %4296
  %4298 = vrot.lane.b32.xlu0 %v4227, 96
  %v4299 = vpop.permute.xlu0 %4298
  %4300 = vrot.lane.b32.xlu0 %v4229, 96
  %v4301 = vpop.permute.xlu0 %4300
  %4302 = vrot.lane.b32.xlu0 %v4231, 96
  %v4303 = vpop.permute.xlu0 %4302
  %4304 = vrot.lane.b32.xlu0 %v4233, 96
  %v4305 = vpop.permute.xlu0 %4304
  %4306 = vrot.lane.b32.xlu0 %v4235, 96
  %v4307 = vpop.permute.xlu0 %4306
  %4308 = vrot.lane.b32.xlu0 %v4237, 96
  %v4309 = vpop.permute.xlu0 %4308
  %4310 = vrot.lane.b32.xlu0 %v4239, 96
  %v4311 = vpop.permute.xlu0 %4310
  %4312 = vrot.lane.b32.xlu0 %v4241, 96
  %v4313 = vpop.permute.xlu0 %4312
  %4314 = vrot.lane.b32.xlu0 %v4243, 96
  %v4315 = vpop.permute.xlu0 %4314
  %4316 = vrot.lane.b32.xlu0 %v4245, 96
  %v4317 = vpop.permute.xlu0 %4316
  %4318 = vrot.lane.b32.xlu0 %v4247, 96
  %v4319 = vpop.permute.xlu0 %4318
  %4320 = vrot.lane.b32.xlu0 %v4249, 96
  %v4321 = vpop.permute.xlu0 %4320
  %4322 = vrot.lane.b32.xlu0 %v4251, 96
  %v4323 = vpop.permute.xlu0 %4322
  %v4360 = vadd.f32 %v4103, %v4253
  %v4361 = vadd.f32 %v4104, %v4255
  %v4362 = vadd.f32 %v4105, %v4257
  %v4363 = vadd.f32 %v4106, %v4259
  %v4364 = vadd.f32 %v4107, %v4261
  %v4365 = vadd.f32 %v4108, %v4263
  %v4366 = vadd.f32 %v4109, %v4265
  %v4367 = vadd.f32 %v4110, %v4267
  %v4368 = vadd.f32 %v4111, %v4269
  %v4369 = vadd.f32 %v4112, %v4271
  %v4370 = vadd.f32 %v4113, %v4273
  %v4371 = vadd.f32 %v4114, %v4275
  %v4372 = vadd.f32 %v4115, %v4277
  %v4373 = vadd.f32 %v4116, %v4279
  %v4374 = vadd.f32 %v4117, %v4281
  %v4375 = vadd.f32 %v4118, %v4283
  %v4376 = vadd.f32 %v4119, %v4285
  %v4377 = vadd.f32 %v4120, %v4287
  %v4378 = vadd.f32 %v4121, %v4289
  %v4379 = vadd.f32 %v4122, %v4291
  %v4380 = vadd.f32 %v4123, %v4293
  %v4381 = vadd.f32 %v4124, %v4295
  %v4382 = vadd.f32 %v4125, %v4297
  %v4383 = vadd.f32 %v4126, %v4299
  %v4384 = vadd.f32 %v4127, %v4301
  %v4385 = vadd.f32 %v4128, %v4303
  %v4386 = vadd.f32 %v4129, %v4305
  %v4387 = vadd.f32 %v4130, %v4307
  %v4388 = vadd.f32 %v4131, %v4309
  %v4389 = vadd.f32 %v4132, %v4311
  %v4390 = vadd.f32 %v4133, %v4313
  %v4391 = vadd.f32 %v4134, %v4315
  %v4392 = vadd.f32 %v4135, %v4317
  %v4393 = vadd.f32 %v4136, %v4319
  %v4394 = vadd.f32 %v4137, %v4321
  %v4395 = vadd.f32 %v4138, %v4323
  %v4396 = vld [vmem:[#allocation3] sm:$0xfc]
  %v4397 = vld [vmem:[#allocation3 + $0x360] sm:$0x3]
  %vm4400 = vcmask 1045504
  %v4401 = vrot.slane %v4396, 2
  %v4402 = vrot.slane %v4068, 2
  %v4403 = vsel %vm4400, %v4401, %v4402
  %v4404 = vrot.slane %v4069, 2
  %v4405 = vsel %vm4400, %v4402, %v4404
  %v4406 = vrot.slane %v4070, 2
  %v4407 = vsel %vm4400, %v4404, %v4406
  %v4408 = vrot.slane %v4071, 2
  %v4409 = vsel %vm4400, %v4406, %v4408
  %v4410 = vrot.slane %v4072, 2
  %v4411 = vsel %vm4400, %v4408, %v4410
  %v4412 = vrot.slane %v4073, 2
  %v4413 = vsel %vm4400, %v4410, %v4412
  %v4414 = vrot.slane %v4074, 2
  %v4415 = vsel %vm4400, %v4412, %v4414
  %v4416 = vrot.slane %v4075, 2
  %v4417 = vsel %vm4400, %v4414, %v4416
  %v4418 = vrot.slane %v4076, 2
  %v4419 = vsel %vm4400, %v4416, %v4418
  %v4420 = vrot.slane %v4077, 2
  %v4421 = vsel %vm4400, %v4418, %v4420
  %v4422 = vrot.slane %v4078, 2
  %v4423 = vsel %vm4400, %v4420, %v4422
  %v4424 = vrot.slane %v4079, 2
  %v4425 = vsel %vm4400, %v4422, %v4424
  %v4426 = vrot.slane %v4080, 2
  %v4427 = vsel %vm4400, %v4424, %v4426
  %v4428 = vrot.slane %v4081, 2
  %v4429 = vsel %vm4400, %v4426, %v4428
  %v4430 = vrot.slane %v4082, 2
  %v4431 = vsel %vm4400, %v4428, %v4430
  %v4432 = vrot.slane %v4083, 2
  %v4433 = vsel %vm4400, %v4430, %v4432
  %v4434 = vrot.slane %v4084, 2
  %v4435 = vsel %vm4400, %v4432, %v4434
  %v4436 = vrot.slane %v4085, 2
  %v4437 = vsel %vm4400, %v4434, %v4436
  %v4438 = vrot.slane %v4086, 2
  %v4439 = vsel %vm4400, %v4436, %v4438
  %v4440 = vrot.slane %v4087, 2
  %v4441 = vsel %vm4400, %v4438, %v4440
  %v4442 = vrot.slane %v4088, 2
  %v4443 = vsel %vm4400, %v4440, %v4442
  %v4444 = vrot.slane %v4089, 2
  %v4445 = vsel %vm4400, %v4442, %v4444
  %v4446 = vrot.slane %v4090, 2
  %v4447 = vsel %vm4400, %v4444, %v4446
  %v4448 = vrot.slane %v4091, 2
  %v4449 = vsel %vm4400, %v4446, %v4448
  %v4450 = vrot.slane %v4092, 2
  %v4451 = vsel %vm4400, %v4448, %v4450
  %v4452 = vrot.slane %v4093, 2
  %v4453 = vsel %vm4400, %v4450, %v4452
  %v4454 = vrot.slane %v4094, 2
  %v4455 = vsel %vm4400, %v4452, %v4454
  %v4456 = vrot.slane %v4095, 2
  %v4457 = vsel %vm4400, %v4454, %v4456
  %v4458 = vrot.slane %v4096, 2
  %v4459 = vsel %vm4400, %v4456, %v4458
  %v4460 = vrot.slane %v4097, 2
  %v4461 = vsel %vm4400, %v4458, %v4460
  %v4462 = vrot.slane %v4098, 2
  %v4463 = vsel %vm4400, %v4460, %v4462
  %v4464 = vrot.slane %v4099, 2
  %v4465 = vsel %vm4400, %v4462, %v4464
  %v4466 = vrot.slane %v4100, 2
  %v4467 = vsel %vm4400, %v4464, %v4466
  %v4468 = vrot.slane %v4101, 2
  %v4469 = vsel %vm4400, %v4466, %v4468
  %v4470 = vrot.slane %v4102, 2
  %v4471 = vsel %vm4400, %v4468, %v4470
  %v4472 = vrot.slane %v4397, 2
  %v4473 = vsel %vm4400, %v4470, %v4472
  %4474 = vrot.lane.b32.xlu0 %v4403, 64
  %v4475 = vpop.permute.xlu0 %4474
  %4476 = vrot.lane.b32.xlu0 %v4405, 64
  %v4477 = vpop.permute.xlu0 %4476
  %4478 = vrot.lane.b32.xlu0 %v4407, 64
  %v4479 = vpop.permute.xlu0 %4478
  %4480 = vrot.lane.b32.xlu0 %v4409, 64
  %v4481 = vpop.permute.xlu0 %4480
  %4482 = vrot.lane.b32.xlu0 %v4411, 64
  %v4483 = vpop.permute.xlu0 %4482
  %4484 = vrot.lane.b32.xlu0 %v4413, 64
  %v4485 = vpop.permute.xlu0 %4484
  %4486 = vrot.lane.b32.xlu0 %v4415, 64
  %v4487 = vpop.permute.xlu0 %4486
  %4488 = vrot.lane.b32.xlu0 %v4417, 64
  %v4489 = vpop.permute.xlu0 %4488
  %4490 = vrot.lane.b32.xlu0 %v4419, 64
  %v4491 = vpop.permute.xlu0 %4490
  %4492 = vrot.lane.b32.xlu0 %v4421, 64
  %v4493 = vpop.permute.xlu0 %4492
  %4494 = vrot.lane.b32.xlu0 %v4423, 64
  %v4495 = vpop.permute.xlu0 %4494
  %4496 = vrot.lane.b32.xlu0 %v4425, 64
  %v4497 = vpop.permute.xlu0 %4496
  %4498 = vrot.lane.b32.xlu0 %v4427, 64
  %v4499 = vpop.permute.xlu0 %4498
  %4500 = vrot.lane.b32.xlu0 %v4429, 64
  %v4501 = vpop.permute.xlu0 %4500
  %4502 = vrot.lane.b32.xlu0 %v4431, 64
  %v4503 = vpop.permute.xlu0 %4502
  %4504 = vrot.lane.b32.xlu0 %v4433, 64
  %v4505 = vpop.permute.xlu0 %4504
  %4506 = vrot.lane.b32.xlu0 %v4435, 64
  %v4507 = vpop.permute.xlu0 %4506
  %4508 = vrot.lane.b32.xlu0 %v4437, 64
  %v4509 = vpop.permute.xlu0 %4508
  %4510 = vrot.lane.b32.xlu0 %v4439, 64
  %v4511 = vpop.permute.xlu0 %4510
  %4512 = vrot.lane.b32.xlu0 %v4441, 64
  %v4513 = vpop.permute.xlu0 %4512
  %4514 = vrot.lane.b32.xlu0 %v4443, 64
  %v4515 = vpop.permute.xlu0 %4514
  %4516 = vrot.lane.b32.xlu0 %v4445, 64
  %v4517 = vpop.permute.xlu0 %4516
  %4518 = vrot.lane.b32.xlu0 %v4447, 64
  %v4519 = vpop.permute.xlu0 %4518
  %4520 = vrot.lane.b32.xlu0 %v4449, 64
  %v4521 = vpop.permute.xlu0 %4520
  %4522 = vrot.lane.b32.xlu0 %v4451, 64
  %v4523 = vpop.permute.xlu0 %4522
  %4524 = vrot.lane.b32.xlu0 %v4453, 64
  %v4525 = vpop.permute.xlu0 %4524
  %4526 = vrot.lane.b32.xlu0 %v4455, 64
  %v4527 = vpop.permute.xlu0 %4526
  %4528 = vrot.lane.b32.xlu0 %v4457, 64
  %v4529 = vpop.permute.xlu0 %4528
  %4530 = vrot.lane.b32.xlu0 %v4459, 64
  %v4531 = vpop.permute.xlu0 %4530
  %4532 = vrot.lane.b32.xlu0 %v4461, 64
  %v4533 = vpop.permute.xlu0 %4532
  %4534 = vrot.lane.b32.xlu0 %v4463, 64
  %v4535 = vpop.permute.xlu0 %4534
  %4536 = vrot.lane.b32.xlu0 %v4465, 64
  %v4537 = vpop.permute.xlu0 %4536
  %4538 = vrot.lane.b32.xlu0 %v4467, 64
  %v4539 = vpop.permute.xlu0 %4538
  %4540 = vrot.lane.b32.xlu0 %v4469, 64
  %v4541 = vpop.permute.xlu0 %4540
  %4542 = vrot.lane.b32.xlu0 %v4471, 64
  %v4543 = vpop.permute.xlu0 %4542
  %4544 = vrot.lane.b32.xlu0 %v4473, 64
  %v4545 = vpop.permute.xlu0 %4544
  %v4582 = vadd.f32 %v4360, %v4475
  %v4583 = vadd.f32 %v4361, %v4477
  %v4584 = vadd.f32 %v4362, %v4479
  %v4585 = vadd.f32 %v4363, %v4481
  %v4586 = vadd.f32 %v4364, %v4483
  %v4587 = vadd.f32 %v4365, %v4485
  %v4588 = vadd.f32 %v4366, %v4487
  %v4589 = vadd.f32 %v4367, %v4489
  %v4590 = vadd.f32 %v4368, %v4491
  %v4591 = vadd.f32 %v4369, %v4493
  %v4592 = vadd.f32 %v4370, %v4495
  %v4593 = vadd.f32 %v4371, %v4497
  %v4594 = vadd.f32 %v4372, %v4499
  %v4595 = vadd.f32 %v4373, %v4501
  %v4596 = vadd.f32 %v4374, %v4503
  %v4597 = vadd.f32 %v4375, %v4505
  %v4598 = vadd.f32 %v4376, %v4507
  %v4599 = vadd.f32 %v4377, %v4509
  %v4600 = vadd.f32 %v4378, %v4511
  %v4601 = vadd.f32 %v4379, %v4513
  %v4602 = vadd.f32 %v4380, %v4515
  %v4603 = vadd.f32 %v4381, %v4517
  %v4604 = vadd.f32 %v4382, %v4519
  %v4605 = vadd.f32 %v4383, %v4521
  %v4606 = vadd.f32 %v4384, %v4523
  %v4607 = vadd.f32 %v4385, %v4525
  %v4608 = vadd.f32 %v4386, %v4527
  %v4609 = vadd.f32 %v4387, %v4529
  %v4610 = vadd.f32 %v4388, %v4531
  %v4611 = vadd.f32 %v4389, %v4533
  %v4612 = vadd.f32 %v4390, %v4535
  %v4613 = vadd.f32 %v4391, %v4537
  %v4614 = vadd.f32 %v4392, %v4539
  %v4615 = vadd.f32 %v4393, %v4541
  %v4616 = vadd.f32 %v4394, %v4543
  %v4617 = vadd.f32 %v4395, %v4545
  %v4618 = vld [vmem:[#allocation3 + $0x18] sm:$0xf0]
  %v4619 = vld [vmem:[#allocation3 + $0x360] sm:$0xff]
  %v4620 = vld [vmem:[#allocation3 + $0x378] sm:$0xf]
  %vm4624 = vcmask 1043456
  %v4625 = vrot.slane %v4618, 4
  %v4626 = vrot.slane %v4069, 4
  %v4627 = vsel %vm4624, %v4625, %v4626
  %v4628 = vrot.slane %v4070, 4
  %v4629 = vsel %vm4624, %v4626, %v4628
  %v4630 = vrot.slane %v4071, 4
  %v4631 = vsel %vm4624, %v4628, %v4630
  %v4632 = vrot.slane %v4072, 4
  %v4633 = vsel %vm4624, %v4630, %v4632
  %v4634 = vrot.slane %v4073, 4
  %v4635 = vsel %vm4624, %v4632, %v4634
  %v4636 = vrot.slane %v4074, 4
  %v4637 = vsel %vm4624, %v4634, %v4636
  %v4638 = vrot.slane %v4075, 4
  %v4639 = vsel %vm4624, %v4636, %v4638
  %v4640 = vrot.slane %v4076, 4
  %v4641 = vsel %vm4624, %v4638, %v4640
  %v4642 = vrot.slane %v4077, 4
  %v4643 = vsel %vm4624, %v4640, %v4642
  %v4644 = vrot.slane %v4078, 4
  %v4645 = vsel %vm4624, %v4642, %v4644
  %v4646 = vrot.slane %v4079, 4
  %v4647 = vsel %vm4624, %v4644, %v4646
  %v4648 = vrot.slane %v4080, 4
  %v4649 = vsel %vm4624, %v4646, %v4648
  %v4650 = vrot.slane %v4081, 4
  %v4651 = vsel %vm4624, %v4648, %v4650
  %v4652 = vrot.slane %v4082, 4
  %v4653 = vsel %vm4624, %v4650, %v4652
  %v4654 = vrot.slane %v4083, 4
  %v4655 = vsel %vm4624, %v4652, %v4654
  %v4656 = vrot.slane %v4084, 4
  %v4657 = vsel %vm4624, %v4654, %v4656
  %v4658 = vrot.slane %v4085, 4
  %v4659 = vsel %vm4624, %v4656, %v4658
  %v4660 = vrot.slane %v4086, 4
  %v4661 = vsel %vm4624, %v4658, %v4660
  %v4662 = vrot.slane %v4087, 4
  %v4663 = vsel %vm4624, %v4660, %v4662
  %v4664 = vrot.slane %v4088, 4
  %v4665 = vsel %vm4624, %v4662, %v4664
  %v4666 = vrot.slane %v4089, 4
  %v4667 = vsel %vm4624, %v4664, %v4666
  %v4668 = vrot.slane %v4090, 4
  %v4669 = vsel %vm4624, %v4666, %v4668
  %v4670 = vrot.slane %v4091, 4
  %v4671 = vsel %vm4624, %v4668, %v4670
  %v4672 = vrot.slane %v4092, 4
  %v4673 = vsel %vm4624, %v4670, %v4672
  %v4674 = vrot.slane %v4093, 4
  %v4675 = vsel %vm4624, %v4672, %v4674
  %v4676 = vrot.slane %v4094, 4
  %v4677 = vsel %vm4624, %v4674, %v4676
  %v4678 = vrot.slane %v4095, 4
  %v4679 = vsel %vm4624, %v4676, %v4678
  %v4680 = vrot.slane %v4096, 4
  %v4681 = vsel %vm4624, %v4678, %v4680
  %v4682 = vrot.slane %v4097, 4
  %v4683 = vsel %vm4624, %v4680, %v4682
  %v4684 = vrot.slane %v4098, 4
  %v4685 = vsel %vm4624, %v4682, %v4684
  %v4686 = vrot.slane %v4099, 4
  %v4687 = vsel %vm4624, %v4684, %v4686
  %v4688 = vrot.slane %v4100, 4
  %v4689 = vsel %vm4624, %v4686, %v4688
  %v4690 = vrot.slane %v4101, 4
  %v4691 = vsel %vm4624, %v4688, %v4690
  %v4692 = vrot.slane %v4102, 4
  %v4693 = vsel %vm4624, %v4690, %v4692
  %v4694 = vrot.slane %v4619, 4
  %v4695 = vsel %vm4624, %v4692, %v4694
  %v4696 = vrot.slane %v4620, 4
  %v4697 = vsel %vm4624, %v4694, %v4696
  %4698 = vrot.lane.b32.xlu0 %v4627, 32
  %v4699 = vpop.permute.xlu0 %4698
  %4700 = vrot.lane.b32.xlu0 %v4629, 32
  %v4701 = vpop.permute.xlu0 %4700
  %4702 = vrot.lane.b32.xlu0 %v4631, 32
  %v4703 = vpop.permute.xlu0 %4702
  %4704 = vrot.lane.b32.xlu0 %v4633, 32
  %v4705 = vpop.permute.xlu0 %4704
  %4706 = vrot.lane.b32.xlu0 %v4635, 32
  %v4707 = vpop.permute.xlu0 %4706
  %4708 = vrot.lane.b32.xlu0 %v4637, 32
  %v4709 = vpop.permute.xlu0 %4708
  %4710 = vrot.lane.b32.xlu0 %v4639, 32
  %v4711 = vpop.permute.xlu0 %4710
  %4712 = vrot.lane.b32.xlu0 %v4641, 32
  %v4713 = vpop.permute.xlu0 %4712
  %4714 = vrot.lane.b32.xlu0 %v4643, 32
  %v4715 = vpop.permute.xlu0 %4714
  %4716 = vrot.lane.b32.xlu0 %v4645, 32
  %v4717 = vpop.permute.xlu0 %4716
  %4718 = vrot.lane.b32.xlu0 %v4647, 32
  %v4719 = vpop.permute.xlu0 %4718
  %4720 = vrot.lane.b32.xlu0 %v4649, 32
  %v4721 = vpop.permute.xlu0 %4720
  %4722 = vrot.lane.b32.xlu0 %v4651, 32
  %v4723 = vpop.permute.xlu0 %4722
  %4724 = vrot.lane.b32.xlu0 %v4653, 32
  %v4725 = vpop.permute.xlu0 %4724
  %4726 = vrot.lane.b32.xlu0 %v4655, 32
  %v4727 = vpop.permute.xlu0 %4726
  %4728 = vrot.lane.b32.xlu0 %v4657, 32
  %v4729 = vpop.permute.xlu0 %4728
  %4730 = vrot.lane.b32.xlu0 %v4659, 32
  %v4731 = vpop.permute.xlu0 %4730
  %4732 = vrot.lane.b32.xlu0 %v4661, 32
  %v4733 = vpop.permute.xlu0 %4732
  %4734 = vrot.lane.b32.xlu0 %v4663, 32
  %v4735 = vpop.permute.xlu0 %4734
  %4736 = vrot.lane.b32.xlu0 %v4665, 32
  %v4737 = vpop.permute.xlu0 %4736
  %4738 = vrot.lane.b32.xlu0 %v4667, 32
  %v4739 = vpop.permute.xlu0 %4738
  %4740 = vrot.lane.b32.xlu0 %v4669, 32
  %v4741 = vpop.permute.xlu0 %4740
  %4742 = vrot.lane.b32.xlu0 %v4671, 32
  %v4743 = vpop.permute.xlu0 %4742
  %4744 = vrot.lane.b32.xlu0 %v4673, 32
  %v4745 = vpop.permute.xlu0 %4744
  %4746 = vrot.lane.b32.xlu0 %v4675, 32
  %v4747 = vpop.permute.xlu0 %4746
  %4748 = vrot.lane.b32.xlu0 %v4677, 32
  %v4749 = vpop.permute.xlu0 %4748
  %4750 = vrot.lane.b32.xlu0 %v4679, 32
  %v4751 = vpop.permute.xlu0 %4750
  %4752 = vrot.lane.b32.xlu0 %v4681, 32
  %v4753 = vpop.permute.xlu0 %4752
  %4754 = vrot.lane.b32.xlu0 %v4683, 32
  %v4755 = vpop.permute.xlu0 %4754
  %4756 = vrot.lane.b32.xlu0 %v4685, 32
  %v4757 = vpop.permute.xlu0 %4756
  %4758 = vrot.lane.b32.xlu0 %v4687, 32
  %v4759 = vpop.permute.xlu0 %4758
  %4760 = vrot.lane.b32.xlu0 %v4689, 32
  %v4761 = vpop.permute.xlu0 %4760
  %4762 = vrot.lane.b32.xlu0 %v4691, 32
  %v4763 = vpop.permute.xlu0 %4762
  %4764 = vrot.lane.b32.xlu0 %v4693, 32
  %v4765 = vpop.permute.xlu0 %4764
  %4766 = vrot.lane.b32.xlu0 %v4695, 32
  %v4767 = vpop.permute.xlu0 %4766
  %4768 = vrot.lane.b32.xlu0 %v4697, 32
  %v4769 = vpop.permute.xlu0 %4768
  %v4806 = vadd.f32 %v4582, %v4699
  %v4807 = vadd.f32 %v4583, %v4701
  %v4808 = vadd.f32 %v4584, %v4703
  %v4809 = vadd.f32 %v4585, %v4705
  %v4810 = vadd.f32 %v4586, %v4707
  %v4811 = vadd.f32 %v4587, %v4709
  %v4812 = vadd.f32 %v4588, %v4711
  %v4813 = vadd.f32 %v4589, %v4713
  %v4814 = vadd.f32 %v4590, %v4715
  %v4815 = vadd.f32 %v4591, %v4717
  %v4816 = vadd.f32 %v4592, %v4719
  %v4817 = vadd.f32 %v4593, %v4721
  %v4818 = vadd.f32 %v4594, %v4723
  %v4819 = vadd.f32 %v4595, %v4725
  %v4820 = vadd.f32 %v4596, %v4727
  %v4821 = vadd.f32 %v4597, %v4729
  %v4822 = vadd.f32 %v4598, %v4731
  %v4823 = vadd.f32 %v4599, %v4733
  %v4824 = vadd.f32 %v4600, %v4735
  %v4825 = vadd.f32 %v4601, %v4737
  %v4826 = vadd.f32 %v4602, %v4739
  %v4827 = vadd.f32 %v4603, %v4741
  %v4828 = vadd.f32 %v4604, %v4743
  %v4829 = vadd.f32 %v4605, %v4745
  %v4830 = vadd.f32 %v4606, %v4747
  %v4831 = vadd.f32 %v4607, %v4749
  %v4832 = vadd.f32 %v4608, %v4751
  %v4833 = vadd.f32 %v4609, %v4753
  %v4834 = vadd.f32 %v4610, %v4755
  %v4835 = vadd.f32 %v4611, %v4757
  %v4836 = vadd.f32 %v4612, %v4759
  %v4837 = vadd.f32 %v4613, %v4761
  %v4838 = vadd.f32 %v4614, %v4763
  %v4839 = vadd.f32 %v4615, %v4765
  %v4840 = vadd.f32 %v4616, %v4767
  %v4841 = vadd.f32 %v4617, %v4769
  %v4842 = vld [vmem:[#allocation3 + $0x20] sm:$0xe0]
  %v4843 = vld [vmem:[#allocation3 + $0x38] sm:$0xff]
  %v4844 = vld [vmem:[#allocation3 + $0x50] sm:$0xff]
  %v4845 = vld [vmem:[#allocation3 + $0x68] sm:$0xff]
  %v4846 = vld [vmem:[#allocation3 + $0x80] sm:$0xff]
  %v4847 = vld [vmem:[#allocation3 + $0x98] sm:$0xff]
  %v4848 = vld [vmem:[#allocation3 + $0xb0] sm:$0xff]
  %v4849 = vld [vmem:[#allocation3 + $0xc8] sm:$0xff]
  %v4850 = vld [vmem:[#allocation3 + $0xe0] sm:$0xff]
  %v4851 = vld [vmem:[#allocation3 + $0xf8] sm:$0xff]
  %v4852 = vld [vmem:[#allocation3 + $0x110] sm:$0xff]
  %v4853 = vld [vmem:[#allocation3 + $0x128] sm:$0xff]
  %v4854 = vld [vmem:[#allocation3 + $0x140] sm:$0xff]
  %v4855 = vld [vmem:[#allocation3 + $0x158] sm:$0xff]
  %v4856 = vld [vmem:[#allocation3 + $0x170] sm:$0xff]
  %v4857 = vld [vmem:[#allocation3 + $0x188] sm:$0xff]
  %v4858 = vld [vmem:[#allocation3 + $0x1a0] sm:$0xff]
  %v4859 = vld [vmem:[#allocation3 + $0x1b8] sm:$0xff]
  %v4860 = vld [vmem:[#allocation3 + $0x1d0] sm:$0xff]
  %v4861 = vld [vmem:[#allocation3 + $0x1e8] sm:$0xff]
  %v4862 = vld [vmem:[#allocation3 + $0x200] sm:$0xff]
  %v4863 = vld [vmem:[#allocation3 + $0x218] sm:$0xff]
  %v4864 = vld [vmem:[#allocation3 + $0x230] sm:$0xff]
  %v4865 = vld [vmem:[#allocation3 + $0x248] sm:$0xff]
  %v4866 = vld [vmem:[#allocation3 + $0x260] sm:$0xff]
  %v4867 = vld [vmem:[#allocation3 + $0x278] sm:$0xff]
  %v4868 = vld [vmem:[#allocation3 + $0x290] sm:$0xff]
  %v4869 = vld [vmem:[#allocation3 + $0x2a8] sm:$0xff]
  %v4870 = vld [vmem:[#allocation3 + $0x2c0] sm:$0xff]
  %v4871 = vld [vmem:[#allocation3 + $0x2d8] sm:$0xff]
  %v4872 = vld [vmem:[#allocation3 + $0x2f0] sm:$0xff]
  %v4873 = vld [vmem:[#allocation3 + $0x308] sm:$0xff]
  %v4874 = vld [vmem:[#allocation3 + $0x320] sm:$0xff]
  %v4875 = vld [vmem:[#allocation3 + $0x338] sm:$0xff]
  %v4876 = vld [vmem:[#allocation3 + $0x350] sm:$0xff]
  %v4877 = vld [vmem:[#allocation3 + $0x368] sm:$0xff]
  %v4878 = vld [vmem:[#allocation3 + $0x380] sm:$0x1f]
  %vm4916 = vcmask 1042432
  %v4917 = vrot.slane %v4842, 5
  %v4918 = vrot.slane %v4843, 5
  %v4919 = vsel %vm4916, %v4917, %v4918
  %v4920 = vrot.slane %v4844, 5
  %v4921 = vsel %vm4916, %v4918, %v4920
  %v4922 = vrot.slane %v4845, 5
  %v4923 = vsel %vm4916, %v4920, %v4922
  %v4924 = vrot.slane %v4846, 5
  %v4925 = vsel %vm4916, %v4922, %v4924
  %v4926 = vrot.slane %v4847, 5
  %v4927 = vsel %vm4916, %v4924, %v4926
  %v4928 = vrot.slane %v4848, 5
  %v4929 = vsel %vm4916, %v4926, %v4928
  %v4930 = vrot.slane %v4849, 5
  %v4931 = vsel %vm4916, %v4928, %v4930
  %v4932 = vrot.slane %v4850, 5
  %v4933 = vsel %vm4916, %v4930, %v4932
  %v4934 = vrot.slane %v4851, 5
  %v4935 = vsel %vm4916, %v4932, %v4934
  %v4936 = vrot.slane %v4852, 5
  %v4937 = vsel %vm4916, %v4934, %v4936
  %v4938 = vrot.slane %v4853, 5
  %v4939 = vsel %vm4916, %v4936, %v4938
  %v4940 = vrot.slane %v4854, 5
  %v4941 = vsel %vm4916, %v4938, %v4940
  %v4942 = vrot.slane %v4855, 5
  %v4943 = vsel %vm4916, %v4940, %v4942
  %v4944 = vrot.slane %v4856, 5
  %v4945 = vsel %vm4916, %v4942, %v4944
  %v4946 = vrot.slane %v4857, 5
  %v4947 = vsel %vm4916, %v4944, %v4946
  %v4948 = vrot.slane %v4858, 5
  %v4949 = vsel %vm4916, %v4946, %v4948
  %v4950 = vrot.slane %v4859, 5
  %v4951 = vsel %vm4916, %v4948, %v4950
  %v4952 = vrot.slane %v4860, 5
  %v4953 = vsel %vm4916, %v4950, %v4952
  %v4954 = vrot.slane %v4861, 5
  %v4955 = vsel %vm4916, %v4952, %v4954
  %v4956 = vrot.slane %v4862, 5
  %v4957 = vsel %vm4916, %v4954, %v4956
  %v4958 = vrot.slane %v4863, 5
  %v4959 = vsel %vm4916, %v4956, %v4958
  %v4960 = vrot.slane %v4864, 5
  %v4961 = vsel %vm4916, %v4958, %v4960
  %v4962 = vrot.slane %v4865, 5
  %v4963 = vsel %vm4916, %v4960, %v4962
  %v4964 = vrot.slane %v4866, 5
  %v4965 = vsel %vm4916, %v4962, %v4964
  %v4966 = vrot.slane %v4867, 5
  %v4967 = vsel %vm4916, %v4964, %v4966
  %v4968 = vrot.slane %v4868, 5
  %v4969 = vsel %vm4916, %v4966, %v4968
  %v4970 = vrot.slane %v4869, 5
  %v4971 = vsel %vm4916, %v4968, %v4970
  %v4972 = vrot.slane %v4870, 5
  %v4973 = vsel %vm4916, %v4970, %v4972
  %v4974 = vrot.slane %v4871, 5
  %v4975 = vsel %vm4916, %v4972, %v4974
  %v4976 = vrot.slane %v4872, 5
  %v4977 = vsel %vm4916, %v4974, %v4976
  %v4978 = vrot.slane %v4873, 5
  %v4979 = vsel %vm4916, %v4976, %v4978
  %v4980 = vrot.slane %v4874, 5
  %v4981 = vsel %vm4916, %v4978, %v4980
  %v4982 = vrot.slane %v4875, 5
  %v4983 = vsel %vm4916, %v4980, %v4982
  %v4984 = vrot.slane %v4876, 5
  %v4985 = vsel %vm4916, %v4982, %v4984
  %v4986 = vrot.slane %v4877, 5
  %v4987 = vsel %vm4916, %v4984, %v4986
  %v4988 = vrot.slane %v4878, 5
  %v4989 = vsel %vm4916, %v4986, %v4988
  %v5026 = vadd.f32 %v4806, %v4919
  %v5027 = vadd.f32 %v4807, %v4921
  %v5028 = vadd.f32 %v4808, %v4923
  %v5029 = vadd.f32 %v4809, %v4925
  %v5030 = vadd.f32 %v4810, %v4927
  %v5031 = vadd.f32 %v4811, %v4929
  %v5032 = vadd.f32 %v4812, %v4931
  %v5033 = vadd.f32 %v4813, %v4933
  %v5034 = vadd.f32 %v4814, %v4935
  %v5035 = vadd.f32 %v4815, %v4937
  %v5036 = vadd.f32 %v4816, %v4939
  %v5037 = vadd.f32 %v4817, %v4941
  %v5038 = vadd.f32 %v4818, %v4943
  %v5039 = vadd.f32 %v4819, %v4945
  %v5040 = vadd.f32 %v4820, %v4947
  %v5041 = vadd.f32 %v4821, %v4949
  %v5042 = vadd.f32 %v4822, %v4951
  %v5043 = vadd.f32 %v4823, %v4953
  %v5044 = vadd.f32 %v4824, %v4955
  %v5045 = vadd.f32 %v4825, %v4957
  %v5046 = vadd.f32 %v4826, %v4959
  %v5047 = vadd.f32 %v4827, %v4961
  %v5048 = vadd.f32 %v4828, %v4963
  %v5049 = vadd.f32 %v4829, %v4965
  %v5050 = vadd.f32 %v4830, %v4967
  %v5051 = vadd.f32 %v4831, %v4969
  %v5052 = vadd.f32 %v4832, %v4971
  %v5053 = vadd.f32 %v4833, %v4973
  %v5054 = vadd.f32 %v4834, %v4975
  %v5055 = vadd.f32 %v4835, %v4977
  %v5056 = vadd.f32 %v4836, %v4979
  %v5057 = vadd.f32 %v4837, %v4981
  %v5058 = vadd.f32 %v4838, %v4983
  %v5059 = vadd.f32 %v4839, %v4985
  %v5060 = vadd.f32 %v4840, %v4987
  %v5061 = vadd.f32 %v4841, %v4989
  %v5062 = vld [vmem:[#allocation3 + $0x20] sm:$0xc0]
  %v5063 = vld [vmem:[#allocation3 + $0x380] sm:$0x3f]
  %vm5066 = vcmask 1041408
  %v5067 = vrot.slane %v5062, 6
  %v5068 = vrot.slane %v4843, 6
  %v5069 = vsel %vm5066, %v5067, %v5068
  %v5070 = vrot.slane %v4844, 6
  %v5071 = vsel %vm5066, %v5068, %v5070
  %v5072 = vrot.slane %v4845, 6
  %v5073 = vsel %vm5066, %v5070, %v5072
  %v5074 = vrot.slane %v4846, 6
  %v5075 = vsel %vm5066, %v5072, %v5074
  %v5076 = vrot.slane %v4847, 6
  %v5077 = vsel %vm5066, %v5074, %v5076
  %v5078 = vrot.slane %v4848, 6
  %v5079 = vsel %vm5066, %v5076, %v5078
  %v5080 = vrot.slane %v4849, 6
  %v5081 = vsel %vm5066, %v5078, %v5080
  %v5082 = vrot.slane %v4850, 6
  %v5083 = vsel %vm5066, %v5080, %v5082
  %v5084 = vrot.slane %v4851, 6
  %v5085 = vsel %vm5066, %v5082, %v5084
  %v5086 = vrot.slane %v4852, 6
  %v5087 = vsel %vm5066, %v5084, %v5086
  %v5088 = vrot.slane %v4853, 6
  %v5089 = vsel %vm5066, %v5086, %v5088
  %v5090 = vrot.slane %v4854, 6
  %v5091 = vsel %vm5066, %v5088, %v5090
  %v5092 = vrot.slane %v4855, 6
  %v5093 = vsel %vm5066, %v5090, %v5092
  %v5094 = vrot.slane %v4856, 6
  %v5095 = vsel %vm5066, %v5092, %v5094
  %v5096 = vrot.slane %v4857, 6
  %v5097 = vsel %vm5066, %v5094, %v5096
  %v5098 = vrot.slane %v4858, 6
  %v5099 = vsel %vm5066, %v5096, %v5098
  %v5100 = vrot.slane %v4859, 6
  %v5101 = vsel %vm5066, %v5098, %v5100
  %v5102 = vrot.slane %v4860, 6
  %v5103 = vsel %vm5066, %v5100, %v5102
  %v5104 = vrot.slane %v4861, 6
  %v5105 = vsel %vm5066, %v5102, %v5104
  %v5106 = vrot.slane %v4862, 6
  %v5107 = vsel %vm5066, %v5104, %v5106
  %v5108 = vrot.slane %v4863, 6
  %v5109 = vsel %vm5066, %v5106, %v5108
  %v5110 = vrot.slane %v4864, 6
  %v5111 = vsel %vm5066, %v5108, %v5110
  %v5112 = vrot.slane %v4865, 6
  %v5113 = vsel %vm5066, %v5110, %v5112
  %v5114 = vrot.slane %v4866, 6
  %v5115 = vsel %vm5066, %v5112, %v5114
  %v5116 = vrot.slane %v4867, 6
  %v5117 = vsel %vm5066, %v5114, %v5116
  %v5118 = vrot.slane %v4868, 6
  %v5119 = vsel %vm5066, %v5116, %v5118
  %v5120 = vrot.slane %v4869, 6
  %v5121 = vsel %vm5066, %v5118, %v5120
  %v5122 = vrot.slane %v4870, 6
  %v5123 = vsel %vm5066, %v5120, %v5122
  %v5124 = vrot.slane %v4871, 6
  %v5125 = vsel %vm5066, %v5122, %v5124
  %v5126 = vrot.slane %v4872, 6
  %v5127 = vsel %vm5066, %v5124, %v5126
  %v5128 = vrot.slane %v4873, 6
  %v5129 = vsel %vm5066, %v5126, %v5128
  %v5130 = vrot.slane %v4874, 6
  %v5131 = vsel %vm5066, %v5128, %v5130
  %v5132 = vrot.slane %v4875, 6
  %v5133 = vsel %vm5066, %v5130, %v5132
  %v5134 = vrot.slane %v4876, 6
  %v5135 = vsel %vm5066, %v5132, %v5134
  %v5136 = vrot.slane %v4877, 6
  %v5137 = vsel %vm5066, %v5134, %v5136
  %v5138 = vrot.slane %v5063, 6
  %v5139 = vsel %vm5066, %v5136, %v5138
  %5140 = vrot.lane.b32.xlu0 %v5069, 96
  %v5141 = vpop.permute.xlu0 %5140
  %5142 = vrot.lane.b32.xlu0 %v5071, 96
  %v5143 = vpop.permute.xlu0 %5142
  %5144 = vrot.lane.b32.xlu0 %v5073, 96
  %v5145 = vpop.permute.xlu0 %5144
  %5146 = vrot.lane.b32.xlu0 %v5075, 96
  %v5147 = vpop.permute.xlu0 %5146
  %5148 = vrot.lane.b32.xlu0 %v5077, 96
  %v5149 = vpop.permute.xlu0 %5148
  %5150 = vrot.lane.b32.xlu0 %v5079, 96
  %v5151 = vpop.permute.xlu0 %5150
  %5152 = vrot.lane.b32.xlu0 %v5081, 96
  %v5153 = vpop.permute.xlu0 %5152
  %5154 = vrot.lane.b32.xlu0 %v5083, 96
  %v5155 = vpop.permute.xlu0 %5154
  %5156 = vrot.lane.b32.xlu0 %v5085, 96
  %v5157 = vpop.permute.xlu0 %5156
  %5158 = vrot.lane.b32.xlu0 %v5087, 96
  %v5159 = vpop.permute.xlu0 %5158
  %5160 = vrot.lane.b32.xlu0 %v5089, 96
  %v5161 = vpop.permute.xlu0 %5160
  %5162 = vrot.lane.b32.xlu0 %v5091, 96
  %v5163 = vpop.permute.xlu0 %5162
  %5164 = vrot.lane.b32.xlu0 %v5093, 96
  %v5165 = vpop.permute.xlu0 %5164
  %5166 = vrot.lane.b32.xlu0 %v5095, 96
  %v5167 = vpop.permute.xlu0 %5166
  %5168 = vrot.lane.b32.xlu0 %v5097, 96
  %v5169 = vpop.permute.xlu0 %5168
  %5170 = vrot.lane.b32.xlu0 %v5099, 96
  %v5171 = vpop.permute.xlu0 %5170
  %5172 = vrot.lane.b32.xlu0 %v5101, 96
  %v5173 = vpop.permute.xlu0 %5172
  %5174 = vrot.lane.b32.xlu0 %v5103, 96
  %v5175 = vpop.permute.xlu0 %5174
  %5176 = vrot.lane.b32.xlu0 %v5105, 96
  %v5177 = vpop.permute.xlu0 %5176
  %5178 = vrot.lane.b32.xlu0 %v5107, 96
  %v5179 = vpop.permute.xlu0 %5178
  %5180 = vrot.lane.b32.xlu0 %v5109, 96
  %v5181 = vpop.permute.xlu0 %5180
  %5182 = vrot.lane.b32.xlu0 %v5111, 96
  %v5183 = vpop.permute.xlu0 %5182
  %5184 = vrot.lane.b32.xlu0 %v5113, 96
  %v5185 = vpop.permute.xlu0 %5184
  %5186 = vrot.lane.b32.xlu0 %v5115, 96
  %v5187 = vpop.permute.xlu0 %5186
  %5188 = vrot.lane.b32.xlu0 %v5117, 96
  %v5189 = vpop.permute.xlu0 %5188
  %5190 = vrot.lane.b32.xlu0 %v5119, 96
  %v5191 = vpop.permute.xlu0 %5190
  %5192 = vrot.lane.b32.xlu0 %v5121, 96
  %v5193 = vpop.permute.xlu0 %5192
  %5194 = vrot.lane.b32.xlu0 %v5123, 96
  %v5195 = vpop.permute.xlu0 %5194
  %5196 = vrot.lane.b32.xlu0 %v5125, 96
  %v5197 = vpop.permute.xlu0 %5196
  %5198 = vrot.lane.b32.xlu0 %v5127, 96
  %v5199 = vpop.permute.xlu0 %5198
  %5200 = vrot.lane.b32.xlu0 %v5129, 96
  %v5201 = vpop.permute.xlu0 %5200
  %5202 = vrot.lane.b32.xlu0 %v5131, 96
  %v5203 = vpop.permute.xlu0 %5202
  %5204 = vrot.lane.b32.xlu0 %v5133, 96
  %v5205 = vpop.permute.xlu0 %5204
  %5206 = vrot.lane.b32.xlu0 %v5135, 96
  %v5207 = vpop.permute.xlu0 %5206
  %5208 = vrot.lane.b32.xlu0 %v5137, 96
  %v5209 = vpop.permute.xlu0 %5208
  %5210 = vrot.lane.b32.xlu0 %v5139, 96
  %v5211 = vpop.permute.xlu0 %5210
  %v5248 = vadd.f32 %v5026, %v5141
  %v5249 = vadd.f32 %v5027, %v5143
  %v5250 = vadd.f32 %v5028, %v5145
  %v5251 = vadd.f32 %v5029, %v5147
  %v5252 = vadd.f32 %v5030, %v5149
  %v5253 = vadd.f32 %v5031, %v5151
  %v5254 = vadd.f32 %v5032, %v5153
  %v5255 = vadd.f32 %v5033, %v5155
  %v5256 = vadd.f32 %v5034, %v5157
  %v5257 = vadd.f32 %v5035, %v5159
  %v5258 = vadd.f32 %v5036, %v5161
  %v5259 = vadd.f32 %v5037, %v5163
  %v5260 = vadd.f32 %v5038, %v5165
  %v5261 = vadd.f32 %v5039, %v5167
  %v5262 = vadd.f32 %v5040, %v5169
  %v5263 = vadd.f32 %v5041, %v5171
  %v5264 = vadd.f32 %v5042, %v5173
  %v5265 = vadd.f32 %v5043, %v5175
  %v5266 = vadd.f32 %v5044, %v5177
  %v5267 = vadd.f32 %v5045, %v5179
  %v5268 = vadd.f32 %v5046, %v5181
  %v5269 = vadd.f32 %v5047, %v5183
  %v5270 = vadd.f32 %v5048, %v5185
  %v5271 = vadd.f32 %v5049, %v5187
  %v5272 = vadd.f32 %v5050, %v5189
  %v5273 = vadd.f32 %v5051, %v5191
  %v5274 = vadd.f32 %v5052, %v5193
  %v5275 = vadd.f32 %v5053, %v5195
  %v5276 = vadd.f32 %v5054, %v5197
  %v5277 = vadd.f32 %v5055, %v5199
  %v5278 = vadd.f32 %v5056, %v5201
  %v5279 = vadd.f32 %v5057, %v5203
  %v5280 = vadd.f32 %v5058, %v5205
  %v5281 = vadd.f32 %v5059, %v5207
  %v5282 = vadd.f32 %v5060, %v5209
  %v5283 = vadd.f32 %v5061, %v5211
  %v5284 = vld [vmem:[#allocation3 + $0x380] sm:$0xff]
  %v5285 = vld [vmem:[#allocation3 + $0x398] sm:$0xff]
  %5288 = vrot.lane.b32.xlu0 %v4844, 64
  %v5289 = vpop.permute.xlu0 %5288
  %5290 = vrot.lane.b32.xlu0 %v4845, 64
  %v5291 = vpop.permute.xlu0 %5290
  %5292 = vrot.lane.b32.xlu0 %v4846, 64
  %v5293 = vpop.permute.xlu0 %5292
  %5294 = vrot.lane.b32.xlu0 %v4847, 64
  %v5295 = vpop.permute.xlu0 %5294
  %5296 = vrot.lane.b32.xlu0 %v4848, 64
  %v5297 = vpop.permute.xlu0 %5296
  %5298 = vrot.lane.b32.xlu0 %v4849, 64
  %v5299 = vpop.permute.xlu0 %5298
  %5300 = vrot.lane.b32.xlu0 %v4850, 64
  %v5301 = vpop.permute.xlu0 %5300
  %5302 = vrot.lane.b32.xlu0 %v4851, 64
  %v5303 = vpop.permute.xlu0 %5302
  %5304 = vrot.lane.b32.xlu0 %v4852, 64
  %v5305 = vpop.permute.xlu0 %5304
  %5306 = vrot.lane.b32.xlu0 %v4853, 64
  %v5307 = vpop.permute.xlu0 %5306
  %5308 = vrot.lane.b32.xlu0 %v4854, 64
  %v5309 = vpop.permute.xlu0 %5308
  %5310 = vrot.lane.b32.xlu0 %v4855, 64
  %v5311 = vpop.permute.xlu0 %5310
  %5312 = vrot.lane.b32.xlu0 %v4856, 64
  %v5313 = vpop.permute.xlu0 %5312
  %5314 = vrot.lane.b32.xlu0 %v4857, 64
  %v5315 = vpop.permute.xlu0 %5314
  %5316 = vrot.lane.b32.xlu0 %v4858, 64
  %v5317 = vpop.permute.xlu0 %5316
  %5318 = vrot.lane.b32.xlu0 %v4859, 64
  %v5319 = vpop.permute.xlu0 %5318
  %5320 = vrot.lane.b32.xlu0 %v4860, 64
  %v5321 = vpop.permute.xlu0 %5320
  %5322 = vrot.lane.b32.xlu0 %v4861, 64
  %v5323 = vpop.permute.xlu0 %5322
  %5324 = vrot.lane.b32.xlu0 %v4862, 64
  %v5325 = vpop.permute.xlu0 %5324
  %5326 = vrot.lane.b32.xlu0 %v4863, 64
  %v5327 = vpop.permute.xlu0 %5326
  %5328 = vrot.lane.b32.xlu0 %v4864, 64
  %v5329 = vpop.permute.xlu0 %5328
  %5330 = vrot.lane.b32.xlu0 %v4865, 64
  %v5331 = vpop.permute.xlu0 %5330
  %5332 = vrot.lane.b32.xlu0 %v4866, 64
  %v5333 = vpop.permute.xlu0 %5332
  %5334 = vrot.lane.b32.xlu0 %v4867, 64
  %v5335 = vpop.permute.xlu0 %5334
  %5336 = vrot.lane.b32.xlu0 %v4868, 64
  %v5337 = vpop.permute.xlu0 %5336
  %5338 = vrot.lane.b32.xlu0 %v4869, 64
  %v5339 = vpop.permute.xlu0 %5338
  %5340 = vrot.lane.b32.xlu0 %v4870, 64
  %v5341 = vpop.permute.xlu0 %5340
  %5342 = vrot.lane.b32.xlu0 %v4871, 64
  %v5343 = vpop.permute.xlu0 %5342
  %5344 = vrot.lane.b32.xlu0 %v4872, 64
  %v5345 = vpop.permute.xlu0 %5344
  %5346 = vrot.lane.b32.xlu0 %v4873, 64
  %v5347 = vpop.permute.xlu0 %5346
  %5348 = vrot.lane.b32.xlu0 %v4874, 64
  %v5349 = vpop.permute.xlu0 %5348
  %5350 = vrot.lane.b32.xlu0 %v4875, 64
  %v5351 = vpop.permute.xlu0 %5350
  %5352 = vrot.lane.b32.xlu0 %v4876, 64
  %v5353 = vpop.permute.xlu0 %5352
  %5354 = vrot.lane.b32.xlu0 %v4877, 64
  %v5355 = vpop.permute.xlu0 %5354
  %5356 = vrot.lane.b32.xlu0 %v5284, 64
  %v5357 = vpop.permute.xlu0 %5356
  %5358 = vrot.lane.b32.xlu0 %v5285, 64
  %v5359 = vpop.permute.xlu0 %5358
  %v5396 = vadd.f32 %v5248, %v5289
  %v5397 = vadd.f32 %v5249, %v5291
  %v5398 = vadd.f32 %v5250, %v5293
  %v5399 = vadd.f32 %v5251, %v5295
  %v5400 = vadd.f32 %v5252, %v5297
  %v5401 = vadd.f32 %v5253, %v5299
  %v5402 = vadd.f32 %v5254, %v5301
  %v5403 = vadd.f32 %v5255, %v5303
  %v5404 = vadd.f32 %v5256, %v5305
  %v5405 = vadd.f32 %v5257, %v5307
  %v5406 = vadd.f32 %v5258, %v5309
  %v5407 = vadd.f32 %v5259, %v5311
  %v5408 = vadd.f32 %v5260, %v5313
  %v5409 = vadd.f32 %v5261, %v5315
  %v5410 = vadd.f32 %v5262, %v5317
  %v5411 = vadd.f32 %v5263, %v5319
  %v5412 = vadd.f32 %v5264, %v5321
  %v5413 = vadd.f32 %v5265, %v5323
  %v5414 = vadd.f32 %v5266, %v5325
  %v5415 = vadd.f32 %v5267, %v5327
  %v5416 = vadd.f32 %v5268, %v5329
  %v5417 = vadd.f32 %v5269, %v5331
  %v5418 = vadd.f32 %v5270, %v5333
  %v5419 = vadd.f32 %v5271, %v5335
  %v5420 = vadd.f32 %v5272, %v5337
  %v5421 = vadd.f32 %v5273, %v5339
  %v5422 = vadd.f32 %v5274, %v5341
  %v5423 = vadd.f32 %v5275, %v5343
  %v5424 = vadd.f32 %v5276, %v5345
  %v5425 = vadd.f32 %v5277, %v5347
  %v5426 = vadd.f32 %v5278, %v5349
  %v5427 = vadd.f32 %v5279, %v5351
  %v5428 = vadd.f32 %v5280, %v5353
  %v5429 = vadd.f32 %v5281, %v5355
  %v5430 = vadd.f32 %v5282, %v5357
  %v5431 = vadd.f32 %v5283, %v5359
  %v5432 = vld [vmem:[#allocation3 + $0x50] sm:$0xfe]
  %v5433 = vld [vmem:[#allocation3 + $0x3b0] sm:$0x1]
  %v5436 = vrot.slane %v5432, 1
  %v5437 = vrot.slane %v4845, 1
  %v5438 = vsel %vm4178, %v5436, %v5437
  %v5439 = vrot.slane %v4846, 1
  %v5440 = vsel %vm4178, %v5437, %v5439
  %v5441 = vrot.slane %v4847, 1
  %v5442 = vsel %vm4178, %v5439, %v5441
  %v5443 = vrot.slane %v4848, 1
  %v5444 = vsel %vm4178, %v5441, %v5443
  %v5445 = vrot.slane %v4849, 1
  %v5446 = vsel %vm4178, %v5443, %v5445
  %v5447 = vrot.slane %v4850, 1
  %v5448 = vsel %vm4178, %v5445, %v5447
  %v5449 = vrot.slane %v4851, 1
  %v5450 = vsel %vm4178, %v5447, %v5449
  %v5451 = vrot.slane %v4852, 1
  %v5452 = vsel %vm4178, %v5449, %v5451
  %v5453 = vrot.slane %v4853, 1
  %v5454 = vsel %vm4178, %v5451, %v5453
  %v5455 = vrot.slane %v4854, 1
  %v5456 = vsel %vm4178, %v5453, %v5455
  %v5457 = vrot.slane %v4855, 1
  %v5458 = vsel %vm4178, %v5455, %v5457
  %v5459 = vrot.slane %v4856, 1
  %v5460 = vsel %vm4178, %v5457, %v5459
  %v5461 = vrot.slane %v4857, 1
  %v5462 = vsel %vm4178, %v5459, %v5461
  %v5463 = vrot.slane %v4858, 1
  %v5464 = vsel %vm4178, %v5461, %v5463
  %v5465 = vrot.slane %v4859, 1
  %v5466 = vsel %vm4178, %v5463, %v5465
  %v5467 = vrot.slane %v4860, 1
  %v5468 = vsel %vm4178, %v5465, %v5467
  %v5469 = vrot.slane %v4861, 1
  %v5470 = vsel %vm4178, %v5467, %v5469
  %v5471 = vrot.slane %v4862, 1
  %v5472 = vsel %vm4178, %v5469, %v5471
  %v5473 = vrot.slane %v4863, 1
  %v5474 = vsel %vm4178, %v5471, %v5473
  %v5475 = vrot.slane %v4864, 1
  %v5476 = vsel %vm4178, %v5473, %v5475
  %v5477 = vrot.slane %v4865, 1
  %v5478 = vsel %vm4178, %v5475, %v5477
  %v5479 = vrot.slane %v4866, 1
  %v5480 = vsel %vm4178, %v5477, %v5479
  %v5481 = vrot.slane %v4867, 1
  %v5482 = vsel %vm4178, %v5479, %v5481
  %v5483 = vrot.slane %v4868, 1
  %v5484 = vsel %vm4178, %v5481, %v5483
  %v5485 = vrot.slane %v4869, 1
  %v5486 = vsel %vm4178, %v5483, %v5485
  %v5487 = vrot.slane %v4870, 1
  %v5488 = vsel %vm4178, %v5485, %v5487
  %v5489 = vrot.slane %v4871, 1
  %v5490 = vsel %vm4178, %v5487, %v5489
  %v5491 = vrot.slane %v4872, 1
  %v5492 = vsel %vm4178, %v5489, %v5491
  %v5493 = vrot.slane %v4873, 1
  %v5494 = vsel %vm4178, %v5491, %v5493
  %v5495 = vrot.slane %v4874, 1
  %v5496 = vsel %vm4178, %v5493, %v5495
  %v5497 = vrot.slane %v4875, 1
  %v5498 = vsel %vm4178, %v5495, %v5497
  %v5499 = vrot.slane %v4876, 1
  %v5500 = vsel %vm4178, %v5497, %v5499
  %v5501 = vrot.slane %v4877, 1
  %v5502 = vsel %vm4178, %v5499, %v5501
  %v5503 = vrot.slane %v5284, 1
  %v5504 = vsel %vm4178, %v5501, %v5503
  %v5505 = vrot.slane %v5285, 1
  %v5506 = vsel %vm4178, %v5503, %v5505
  %v5507 = vrot.slane %v5433, 1
  %v5508 = vsel %vm4178, %v5505, %v5507
  %5509 = vrot.lane.b32.xlu0 %v5438, 32
  %v5510 = vpop.permute.xlu0 %5509
  %5511 = vrot.lane.b32.xlu0 %v5440, 32
  %v5512 = vpop.permute.xlu0 %5511
  %5513 = vrot.lane.b32.xlu0 %v5442, 32
  %v5514 = vpop.permute.xlu0 %5513
  %5515 = vrot.lane.b32.xlu0 %v5444, 32
  %v5516 = vpop.permute.xlu0 %5515
  %5517 = vrot.lane.b32.xlu0 %v5446, 32
  %v5518 = vpop.permute.xlu0 %5517
  %5519 = vrot.lane.b32.xlu0 %v5448, 32
  %v5520 = vpop.permute.xlu0 %5519
  %5521 = vrot.lane.b32.xlu0 %v5450, 32
  %v5522 = vpop.permute.xlu0 %5521
  %5523 = vrot.lane.b32.xlu0 %v5452, 32
  %v5524 = vpop.permute.xlu0 %5523
  %5525 = vrot.lane.b32.xlu0 %v5454, 32
  %v5526 = vpop.permute.xlu0 %5525
  %5527 = vrot.lane.b32.xlu0 %v5456, 32
  %v5528 = vpop.permute.xlu0 %5527
  %5529 = vrot.lane.b32.xlu0 %v5458, 32
  %v5530 = vpop.permute.xlu0 %5529
  %5531 = vrot.lane.b32.xlu0 %v5460, 32
  %v5532 = vpop.permute.xlu0 %5531
  %5533 = vrot.lane.b32.xlu0 %v5462, 32
  %v5534 = vpop.permute.xlu0 %5533
  %5535 = vrot.lane.b32.xlu0 %v5464, 32
  %v5536 = vpop.permute.xlu0 %5535
  %5537 = vrot.lane.b32.xlu0 %v5466, 32
  %v5538 = vpop.permute.xlu0 %5537
  %5539 = vrot.lane.b32.xlu0 %v5468, 32
  %v5540 = vpop.permute.xlu0 %5539
  %5541 = vrot.lane.b32.xlu0 %v5470, 32
  %v5542 = vpop.permute.xlu0 %5541
  %5543 = vrot.lane.b32.xlu0 %v5472, 32
  %v5544 = vpop.permute.xlu0 %5543
  %5545 = vrot.lane.b32.xlu0 %v5474, 32
  %v5546 = vpop.permute.xlu0 %5545
  %5547 = vrot.lane.b32.xlu0 %v5476, 32
  %v5548 = vpop.permute.xlu0 %5547
  %5549 = vrot.lane.b32.xlu0 %v5478, 32
  %v5550 = vpop.permute.xlu0 %5549
  %5551 = vrot.lane.b32.xlu0 %v5480, 32
  %v5552 = vpop.permute.xlu0 %5551
  %5553 = vrot.lane.b32.xlu0 %v5482, 32
  %v5554 = vpop.permute.xlu0 %5553
  %5555 = vrot.lane.b32.xlu0 %v5484, 32
  %v5556 = vpop.permute.xlu0 %5555
  %5557 = vrot.lane.b32.xlu0 %v5486, 32
  %v5558 = vpop.permute.xlu0 %5557
  %5559 = vrot.lane.b32.xlu0 %v5488, 32
  %v5560 = vpop.permute.xlu0 %5559
  %5561 = vrot.lane.b32.xlu0 %v5490, 32
  %v5562 = vpop.permute.xlu0 %5561
  %5563 = vrot.lane.b32.xlu0 %v5492, 32
  %v5564 = vpop.permute.xlu0 %5563
  %5565 = vrot.lane.b32.xlu0 %v5494, 32
  %v5566 = vpop.permute.xlu0 %5565
  %5567 = vrot.lane.b32.xlu0 %v5496, 32
  %v5568 = vpop.permute.xlu0 %5567
  %5569 = vrot.lane.b32.xlu0 %v5498, 32
  %v5570 = vpop.permute.xlu0 %5569
  %5571 = vrot.lane.b32.xlu0 %v5500, 32
  %v5572 = vpop.permute.xlu0 %5571
  %5573 = vrot.lane.b32.xlu0 %v5502, 32
  %v5574 = vpop.permute.xlu0 %5573
  %5575 = vrot.lane.b32.xlu0 %v5504, 32
  %v5576 = vpop.permute.xlu0 %5575
  %5577 = vrot.lane.b32.xlu0 %v5506, 32
  %v5578 = vpop.permute.xlu0 %5577
  %5579 = vrot.lane.b32.xlu0 %v5508, 32
  %v5580 = vpop.permute.xlu0 %5579
  %v5617 = vadd.f32 %v5396, %v5510
  %v5618 = vadd.f32 %v5397, %v5512
  %v5619 = vadd.f32 %v5398, %v5514
  %v5620 = vadd.f32 %v5399, %v5516
  %v5621 = vadd.f32 %v5400, %v5518
  %v5622 = vadd.f32 %v5401, %v5520
  %v5623 = vadd.f32 %v5402, %v5522
  %v5624 = vadd.f32 %v5403, %v5524
  %v5625 = vadd.f32 %v5404, %v5526
  %v5626 = vadd.f32 %v5405, %v5528
  %v5627 = vadd.f32 %v5406, %v5530
  %v5628 = vadd.f32 %v5407, %v5532
  %v5629 = vadd.f32 %v5408, %v5534
  %v5630 = vadd.f32 %v5409, %v5536
  %v5631 = vadd.f32 %v5410, %v5538
  %v5632 = vadd.f32 %v5411, %v5540
  %v5633 = vadd.f32 %v5412, %v5542
  %v5634 = vadd.f32 %v5413, %v5544
  %v5635 = vadd.f32 %v5414, %v5546
  %v5636 = vadd.f32 %v5415, %v5548
  %v5637 = vadd.f32 %v5416, %v5550
  %v5638 = vadd.f32 %v5417, %v5552
  %v5639 = vadd.f32 %v5418, %v5554
  %v5640 = vadd.f32 %v5419, %v5556
  %v5641 = vadd.f32 %v5420, %v5558
  %v5642 = vadd.f32 %v5421, %v5560
  %v5643 = vadd.f32 %v5422, %v5562
  %v5644 = vadd.f32 %v5423, %v5564
  %v5645 = vadd.f32 %v5424, %v5566
  %v5646 = vadd.f32 %v5425, %v5568
  %v5647 = vadd.f32 %v5426, %v5570
  %v5648 = vadd.f32 %v5427, %v5572
  %v5649 = vadd.f32 %v5428, %v5574
  %v5650 = vadd.f32 %v5429, %v5576
  %v5651 = vadd.f32 %v5430, %v5578
  %v5652 = vadd.f32 %v5431, %v5580
  %v5653 = vld [vmem:[#allocation3 + $0x58] sm:$0xfc]
  %v5654 = vld [vmem:[#allocation3 + $0x70] sm:$0xff]
  %v5655 = vld [vmem:[#allocation3 + $0x88] sm:$0xff]
  %v5656 = vld [vmem:[#allocation3 + $0xa0] sm:$0xff]
  %v5657 = vld [vmem:[#allocation3 + $0xb8] sm:$0xff]
  %v5658 = vld [vmem:[#allocation3 + $0xd0] sm:$0xff]
  %v5659 = vld [vmem:[#allocation3 + $0xe8] sm:$0xff]
  %v5660 = vld [vmem:[#allocation3 + $0x100] sm:$0xff]
  %v5661 = vld [vmem:[#allocation3 + $0x118] sm:$0xff]
  %v5662 = vld [vmem:[#allocation3 + $0x130] sm:$0xff]
  %v5663 = vld [vmem:[#allocation3 + $0x148] sm:$0xff]
  %v5664 = vld [vmem:[#allocation3 + $0x160] sm:$0xff]
  %v5665 = vld [vmem:[#allocation3 + $0x178] sm:$0xff]
  %v5666 = vld [vmem:[#allocation3 + $0x190] sm:$0xff]
  %v5667 = vld [vmem:[#allocation3 + $0x1a8] sm:$0xff]
  %v5668 = vld [vmem:[#allocation3 + $0x1c0] sm:$0xff]
  %v5669 = vld [vmem:[#allocation3 + $0x1d8] sm:$0xff]
  %v5670 = vld [vmem:[#allocation3 + $0x1f0] sm:$0xff]
  %v5671 = vld [vmem:[#allocation3 + $0x208] sm:$0xff]
  %v5672 = vld [vmem:[#allocation3 + $0x220] sm:$0xff]
  %v5673 = vld [vmem:[#allocation3 + $0x238] sm:$0xff]
  %v5674 = vld [vmem:[#allocation3 + $0x250] sm:$0xff]
  %v5675 = vld [vmem:[#allocation3 + $0x268] sm:$0xff]
  %v5676 = vld [vmem:[#allocation3 + $0x280] sm:$0xff]
  %v5677 = vld [vmem:[#allocation3 + $0x298] sm:$0xff]
  %v5678 = vld [vmem:[#allocation3 + $0x2b0] sm:$0xff]
  %v5679 = vld [vmem:[#allocation3 + $0x2c8] sm:$0xff]
  %v5680 = vld [vmem:[#allocation3 + $0x2e0] sm:$0xff]
  %v5681 = vld [vmem:[#allocation3 + $0x2f8] sm:$0xff]
  %v5682 = vld [vmem:[#allocation3 + $0x310] sm:$0xff]
  %v5683 = vld [vmem:[#allocation3 + $0x328] sm:$0xff]
  %v5684 = vld [vmem:[#allocation3 + $0x340] sm:$0xff]
  %v5685 = vld [vmem:[#allocation3 + $0x358] sm:$0xff]
  %v5686 = vld [vmem:[#allocation3 + $0x370] sm:$0xff]
  %v5687 = vld [vmem:[#allocation3 + $0x388] sm:$0xff]
  %v5688 = vld [vmem:[#allocation3 + $0x3a0] sm:$0xff]
  %v5689 = vld [vmem:[#allocation3 + $0x3b8] sm:$0x3]
  %v5727 = vrot.slane %v5653, 2
  %v5728 = vrot.slane %v5654, 2
  %v5729 = vsel %vm4400, %v5727, %v5728
  %v5730 = vrot.slane %v5655, 2
  %v5731 = vsel %vm4400, %v5728, %v5730
  %v5732 = vrot.slane %v5656, 2
  %v5733 = vsel %vm4400, %v5730, %v5732
  %v5734 = vrot.slane %v5657, 2
  %v5735 = vsel %vm4400, %v5732, %v5734
  %v5736 = vrot.slane %v5658, 2
  %v5737 = vsel %vm4400, %v5734, %v5736
  %v5738 = vrot.slane %v5659, 2
  %v5739 = vsel %vm4400, %v5736, %v5738
  %v5740 = vrot.slane %v5660, 2
  %v5741 = vsel %vm4400, %v5738, %v5740
  %v5742 = vrot.slane %v5661, 2
  %v5743 = vsel %vm4400, %v5740, %v5742
  %v5744 = vrot.slane %v5662, 2
  %v5745 = vsel %vm4400, %v5742, %v5744
  %v5746 = vrot.slane %v5663, 2
  %v5747 = vsel %vm4400, %v5744, %v5746
  %v5748 = vrot.slane %v5664, 2
  %v5749 = vsel %vm4400, %v5746, %v5748
  %v5750 = vrot.slane %v5665, 2
  %v5751 = vsel %vm4400, %v5748, %v5750
  %v5752 = vrot.slane %v5666, 2
  %v5753 = vsel %vm4400, %v5750, %v5752
  %v5754 = vrot.slane %v5667, 2
  %v5755 = vsel %vm4400, %v5752, %v5754
  %v5756 = vrot.slane %v5668, 2
  %v5757 = vsel %vm4400, %v5754, %v5756
  %v5758 = vrot.slane %v5669, 2
  %v5759 = vsel %vm4400, %v5756, %v5758
  %v5760 = vrot.slane %v5670, 2
  %v5761 = vsel %vm4400, %v5758, %v5760
  %v5762 = vrot.slane %v5671, 2
  %v5763 = vsel %vm4400, %v5760, %v5762
  %v5764 = vrot.slane %v5672, 2
  %v5765 = vsel %vm4400, %v5762, %v5764
  %v5766 = vrot.slane %v5673, 2
  %v5767 = vsel %vm4400, %v5764, %v5766
  %v5768 = vrot.slane %v5674, 2
  %v5769 = vsel %vm4400, %v5766, %v5768
  %v5770 = vrot.slane %v5675, 2
  %v5771 = vsel %vm4400, %v5768, %v5770
  %v5772 = vrot.slane %v5676, 2
  %v5773 = vsel %vm4400, %v5770, %v5772
  %v5774 = vrot.slane %v5677, 2
  %v5775 = vsel %vm4400, %v5772, %v5774
  %v5776 = vrot.slane %v5678, 2
  %v5777 = vsel %vm4400, %v5774, %v5776
  %v5778 = vrot.slane %v5679, 2
  %v5779 = vsel %vm4400, %v5776, %v5778
  %v5780 = vrot.slane %v5680, 2
  %v5781 = vsel %vm4400, %v5778, %v5780
  %v5782 = vrot.slane %v5681, 2
  %v5783 = vsel %vm4400, %v5780, %v5782
  %v5784 = vrot.slane %v5682, 2
  %v5785 = vsel %vm4400, %v5782, %v5784
  %v5786 = vrot.slane %v5683, 2
  %v5787 = vsel %vm4400, %v5784, %v5786
  %v5788 = vrot.slane %v5684, 2
  %v5789 = vsel %vm4400, %v5786, %v5788
  %v5790 = vrot.slane %v5685, 2
  %v5791 = vsel %vm4400, %v5788, %v5790
  %v5792 = vrot.slane %v5686, 2
  %v5793 = vsel %vm4400, %v5790, %v5792
  %v5794 = vrot.slane %v5687, 2
  %v5795 = vsel %vm4400, %v5792, %v5794
  %v5796 = vrot.slane %v5688, 2
  %v5797 = vsel %vm4400, %v5794, %v5796
  %v5798 = vrot.slane %v5689, 2
  %v5799 = vsel %vm4400, %v5796, %v5798
  %v5836 = vadd.f32 %v5617, %v5729
  %v5837 = vadd.f32 %v5618, %v5731
  %v5838 = vadd.f32 %v5619, %v5733
  %v5839 = vadd.f32 %v5620, %v5735
  %v5840 = vadd.f32 %v5621, %v5737
  %v5841 = vadd.f32 %v5622, %v5739
  %v5842 = vadd.f32 %v5623, %v5741
  %v5843 = vadd.f32 %v5624, %v5743
  %v5844 = vadd.f32 %v5625, %v5745
  %v5845 = vadd.f32 %v5626, %v5747
  %v5846 = vadd.f32 %v5627, %v5749
  %v5847 = vadd.f32 %v5628, %v5751
  %v5848 = vadd.f32 %v5629, %v5753
  %v5849 = vadd.f32 %v5630, %v5755
  %v5850 = vadd.f32 %v5631, %v5757
  %v5851 = vadd.f32 %v5632, %v5759
  %v5852 = vadd.f32 %v5633, %v5761
  %v5853 = vadd.f32 %v5634, %v5763
  %v5854 = vadd.f32 %v5635, %v5765
  %v5855 = vadd.f32 %v5636, %v5767
  %v5856 = vadd.f32 %v5637, %v5769
  %v5857 = vadd.f32 %v5638, %v5771
  %v5858 = vadd.f32 %v5639, %v5773
  %v5859 = vadd.f32 %v5640, %v5775
  %v5860 = vadd.f32 %v5641, %v5777
  %v5861 = vadd.f32 %v5642, %v5779
  %v5862 = vadd.f32 %v5643, %v5781
  %v5863 = vadd.f32 %v5644, %v5783
  %v5864 = vadd.f32 %v5645, %v5785
  %v5865 = vadd.f32 %v5646, %v5787
  %v5866 = vadd.f32 %v5647, %v5789
  %v5867 = vadd.f32 %v5648, %v5791
  %v5868 = vadd.f32 %v5649, %v5793
  %v5869 = vadd.f32 %v5650, %v5795
  %v5870 = vadd.f32 %v5651, %v5797
  %v5871 = vadd.f32 %v5652, %v5799
  %v5872 = vld [vmem:[#allocation2 + $0x90] sm:$0xf]
  %v5873 = vld [vmem:[#allocation2 + $0x94] sm:$0xf]
  %v5874 = vld [vmem:[#allocation2 + $0x98] sm:$0xf]
  %v5875 = vld [vmem:[#allocation2 + $0x9c] sm:$0xf]
  %v5876 = vld [vmem:[#allocation2 + $0xa0] sm:$0xf]
  %v5877 = vld [vmem:[#allocation2 + $0xa4] sm:$0xf]
  %v5878 = vld [vmem:[#allocation2 + $0xa8] sm:$0xf]
  %v5879 = vld [vmem:[#allocation2 + $0xac] sm:$0xf]
  %v5880 = vld [vmem:[#allocation2 + $0xb0] sm:$0xf]
  %v5881 = vld [vmem:[#allocation2 + $0xb4] sm:$0xf]
  %v5882 = vld [vmem:[#allocation2 + $0xb8] sm:$0xf]
  %v5883 = vld [vmem:[#allocation2 + $0xbc] sm:$0xf]
  %v5884 = vld [vmem:[#allocation2 + $0xc0] sm:$0xf]
  %v5885 = vld [vmem:[#allocation2 + $0xc4] sm:$0xf]
  %v5886 = vld [vmem:[#allocation2 + $0xc8] sm:$0xf]
  %v5887 = vld [vmem:[#allocation2 + $0xcc] sm:$0xf]
  %v5888 = vld [vmem:[#allocation2 + $0xd0] sm:$0xf]
  %v5889 = vld [vmem:[#allocation2 + $0xd4] sm:$0xf]
  %v5890 = vld [vmem:[#allocation2 + $0xd8] sm:$0xf]
  %v5891 = vld [vmem:[#allocation2 + $0xdc] sm:$0xf]
  %v5892 = vld [vmem:[#allocation2 + $0xe0] sm:$0xf]
  %v5893 = vld [vmem:[#allocation2 + $0xe4] sm:$0xf]
  %v5894 = vld [vmem:[#allocation2 + $0xe8] sm:$0xf]
  %v5895 = vld [vmem:[#allocation2 + $0xec] sm:$0xf]
  %v5896 = vld [vmem:[#allocation2 + $0xf0] sm:$0xf]
  %v5897 = vld [vmem:[#allocation2 + $0xf4] sm:$0xf]
  %v5898 = vld [vmem:[#allocation2 + $0xf8] sm:$0xf]
  %v5899 = vld [vmem:[#allocation2 + $0xfc] sm:$0xf]
  %v5900 = vld [vmem:[#allocation2 + $0x100] sm:$0xf]
  %v5901 = vld [vmem:[#allocation2 + $0x104] sm:$0xf]
  %v5902 = vld [vmem:[#allocation2 + $0x108] sm:$0xf]
  %v5903 = vld [vmem:[#allocation2 + $0x10c] sm:$0xf]
  %v5904 = vld [vmem:[#allocation2 + $0x110] sm:$0xf]
  %v5905 = vld [vmem:[#allocation2 + $0x114] sm:$0xf]
  %v5906 = vld [vmem:[#allocation2 + $0x118] sm:$0xf]
  %v5907 = vld [vmem:[#allocation2 + $0x11c] sm:$0xf]
  %v5908 = vld [vmem:[#allocation2 + $0x120] sm:$0xf]
  %v5909 = vld [vmem:[#allocation2 + $0x124] sm:$0xf]
  %v5910 = vld [vmem:[#allocation2 + $0x128] sm:$0xf]
  %v5911 = vld [vmem:[#allocation2 + $0x12c] sm:$0xf]
  %v5912 = vld [vmem:[%s2 + $0x30] sm:$0xff]
  %v5913 = vld [vmem:[%s2 + $0x38] sm:$0xf]
  %v5914 = vld [vmem:[%s2 + $0x3c] sm:$0xff]
  %v5915 = vld [vmem:[%s2 + $0x44] sm:$0xf]
  %v5916 = vld [vmem:[%s2 + $0x48] sm:$0xff]
  %v5917 = vld [vmem:[%s2 + $0x50] sm:$0xf]
  %v5918 = vld [vmem:[%s2 + $0x54] sm:$0xff]
  %v5919 = vld [vmem:[%s2 + $0x5c] sm:$0xf]
  %v5960 = vunpack.c.l.b16 %v5872
  %v5961 = vunpack.c.l.b16 %v5873
  %v5962 = vunpack.c.l.b16 %v5874
  %v5963 = vunpack.c.l.b16 %v5875
  %v5964 = vunpack.c.l.b16 %v5876
  %v5965 = vunpack.c.l.b16 %v5877
  %v5966 = vunpack.c.l.b16 %v5878
  %v5967 = vunpack.c.l.b16 %v5879
  %v5968 = vunpack.c.l.b16 %v5880
  %v5969 = vunpack.c.l.b16 %v5881
  %v5970 = vunpack.c.l.b16 %v5882
  %v5971 = vunpack.c.l.b16 %v5883
  %v5972 = vunpack.c.l.b16 %v5884
  %v5973 = vunpack.c.l.b16 %v5885
  %v5974 = vunpack.c.l.b16 %v5886
  %v5975 = vunpack.c.l.b16 %v5887
  %v5976 = vunpack.c.l.b16 %v5888
  %v5977 = vunpack.c.l.b16 %v5889
  %v5978 = vunpack.c.l.b16 %v5890
  %v5979 = vunpack.c.l.b16 %v5891
  %v5980 = vunpack.c.l.b16 %v5892
  %v5981 = vunpack.c.l.b16 %v5893
  %v5982 = vunpack.c.l.b16 %v5894
  %v5983 = vunpack.c.l.b16 %v5895
  %v5984 = vunpack.c.l.b16 %v5896
  %v5985 = vunpack.c.l.b16 %v5897
  %v5986 = vunpack.c.l.b16 %v5898
  %v5987 = vunpack.c.l.b16 %v5899
  %v5988 = vunpack.c.l.b16 %v5900
  %v5989 = vunpack.c.l.b16 %v5901
  %v5990 = vunpack.c.l.b16 %v5902
  %v5991 = vunpack.c.l.b16 %v5903
  %v5992 = vunpack.c.l.b16 %v5904
  %v5993 = vunpack.c.l.b16 %v5905
  %v5994 = vunpack.c.l.b16 %v5906
  %v5995 = vunpack.c.l.b16 %v5907
  %v5996 = vunpack.c.l.b16 %v5908
  %v5997 = vunpack.c.l.b16 %v5909
  %v5998 = vunpack.c.l.b16 %v5910
  %v5999 = vunpack.c.l.b16 %v5911
  %v6000 = vpack.c.b16 %v5961, %v5960
  %v6001 = vpack.c.b16 %v5963, %v5962
  %v6002 = vpack.c.b16 %v5965, %v5964
  %v6003 = vpack.c.b16 %v5967, %v5966
  %v6004 = vpack.c.b16 %v5969, %v5968
  %v6005 = vpack.c.b16 %v5971, %v5970
  %v6006 = vpack.c.b16 %v5973, %v5972
  %v6007 = vpack.c.b16 %v5975, %v5974
  %v6008 = vpack.c.b16 %v5977, %v5976
  %v6009 = vpack.c.b16 %v5979, %v5978
  %v6010 = vpack.c.b16 %v5981, %v5980
  %v6011 = vpack.c.b16 %v5983, %v5982
  %v6012 = vpack.c.b16 %v5985, %v5984
  %v6013 = vpack.c.b16 %v5987, %v5986
  %v6014 = vpack.c.b16 %v5989, %v5988
  %v6015 = vpack.c.b16 %v5991, %v5990
  %v6016 = vpack.c.b16 %v5993, %v5992
  %v6017 = vpack.c.b16 %v5995, %v5994
  %v6018 = vpack.c.b16 %v5997, %v5996
  %v6019 = vpack.c.b16 %v5999, %v5998
  %v6028 = vunpack.c.l.b16 %v5912
  %v6029 = vunpack.c.h.b16 %v5912
  %v6030 = vunpack.c.l.b16 %v5913
  %v6031 = vunpack.c.l.b16 %v5914
  %v6032 = vunpack.c.h.b16 %v5914
  %v6033 = vunpack.c.l.b16 %v5915
  %v6034 = vunpack.c.l.b16 %v5916
  %v6035 = vunpack.c.h.b16 %v5916
  %v6036 = vunpack.c.l.b16 %v5917
  %v6037 = vunpack.c.l.b16 %v5918
  %v6038 = vunpack.c.h.b16 %v5918
  %v6039 = vunpack.c.l.b16 %v5919
  %v6040 = vpack.c.b16 %v6031, %v6028
  %v6041 = vpack.c.b16 %v6032, %v6029
  %v6042 = vpack.c.b16 %v6033, %v6030
  %v6043 = vpack.c.b16 %v6037, %v6034
  %v6044 = vpack.c.b16 %v6038, %v6035
  %v6045 = vpack.c.b16 %v6039, %v6036
  %v6053 = vsel %vm547, %v6000, 0
  %v6056 = vsel %vm547, %v6001, 0
  %v6059 = vsel %vm547, %v6002, 0
  %v6062 = vsel %vm547, %v6003, 0
  %v6065 = vsel %vm547, %v6004, 0
  %v6068 = vsel %vm547, %v6005, 0
  %v6071 = vsel %vm547, %v6006, 0
  %v6074 = vsel %vm547, %v6007, 0
  %v6077 = vsel %vm547, %v6008, 0
  %v6080 = vsel %vm547, %v6009, 0
  %v6083 = vsel %vm547, %v6010, 0
  %v6086 = vsel %vm547, %v6011, 0
  %v6089 = vsel %vm547, %v6012, 0
  %v6092 = vsel %vm547, %v6013, 0
  %v6095 = vsel %vm547, %v6014, 0
  %v6098 = vsel %vm547, %v6015, 0
  %v6101 = vsel %vm547, %v6016, 0
  %v6104 = vsel %vm547, %v6017, 0
  %v6107 = vsel %vm547, %v6018, 0
  %v6110 = vsel %vm547, %v6019, 0
  %6112 = vmatprep.subr.bf16.mxu0 0
  %6113 = vmatpush1.bf16.msra.mxu0 0
  %6114 = vmatprep.subr.bf16.mxu0 0
  %6115 = vmatpush1.bf16.msra.mxu0 0
  %6116 = vmatprep.subr.bf16.mxu0 0
  %6117 = vmatpush1.bf16.msra.mxu0 0
  %6118 = vmatprep.subr.bf16.mxu0 0
  %6119 = vmatpush1.bf16.msra.mxu0 0
  %6120 = vmatprep.subr.bf16.mxu0 0
  %6121 = vmatpush1.bf16.msra.mxu0 0
  %6122 = vmatprep.subr.bf16.mxu0 0
  %6123 = vmatpush1.bf16.msra.mxu0 0
  %6124 = vmatprep.subr.bf16.mxu0 %v6044
  %6125 = vmatpush1.bf16.msra.mxu0 %v6043
  %6126 = vmatprep.subr.bf16.mxu0 %v6041
  %6127 = vmatpush1.bf16.msra.mxu0 %v6040
  %6128 = vmatprep.subr.bf16.mxu0 0
  %6129 = vmatpush2.bf16.msra.mxu0 0
  %6130 = vmatprep.subr.bf16.mxu0 0
  %6131 = vmatpush2.bf16.msra.mxu0 0
  %6132 = vmatprep.subr.bf16.mxu0 0
  %6133 = vmatpush2.bf16.msra.mxu0 0
  %6134 = vmatprep.subr.bf16.mxu0 0
  %6135 = vmatpush2.bf16.msra.mxu0 0
  %6136 = vmatprep.subr.bf16.mxu0 0
  %6137 = vmatpush2.bf16.msra.mxu0 0
  %6138 = vmatprep.subr.bf16.mxu0 0
  %6139 = vmatpush2.bf16.msra.mxu0 0
  %6140 = vmatprep.subr.bf16.mxu0 0
  %6141 = vmatpush2.bf16.msra.mxu0 0
  %6142 = vmatprep.subr.bf16.mxu0 0
  %6143 = vmatpush2.bf16.msra.mxu0 0
  %6144 = vmatprep.mubr.bf16.mxu0 0
  %6145 = vmatmul.mubr.bf16.gmra.mxu0 %v6053
  %v6146 = vpop.f32.mrf.mxu0
  %v6147 = vadd.f32 0.0, %v6146
  %v6148 = vpop.f32.mrf.mxu0
  %v6149 = vadd.f32 0.0, %v6148
  %v6150 = vpop.f32.mrf.mxu0
  %v6151 = vadd.f32 0.0, %v6150
  %v6152 = vpop.f32.mrf.mxu0
  %v6153 = vadd.f32 0.0, %v6152
  %6154 = vmatprep.mubr.bf16.mxu0 0
  %6155 = vmatmul.mubr.bf16.gmra.mxu0 %v6056
  %v6156 = vpop.f32.mrf.mxu0
  %v6157 = vadd.f32 0.0, %v6156
  %v6158 = vpop.f32.mrf.mxu0
  %v6159 = vadd.f32 0.0, %v6158
  %v6160 = vpop.f32.mrf.mxu0
  %v6161 = vadd.f32 0.0, %v6160
  %v6162 = vpop.f32.mrf.mxu0
  %v6163 = vadd.f32 0.0, %v6162
  %6164 = vmatprep.mubr.bf16.mxu0 0
  %6165 = vmatmul.mubr.bf16.gmra.mxu0 %v6059
  %v6166 = vpop.f32.mrf.mxu0
  %v6167 = vadd.f32 0.0, %v6166
  %v6168 = vpop.f32.mrf.mxu0
  %v6169 = vadd.f32 0.0, %v6168
  %v6170 = vpop.f32.mrf.mxu0
  %v6171 = vadd.f32 0.0, %v6170
  %v6172 = vpop.f32.mrf.mxu0
  %v6173 = vadd.f32 0.0, %v6172
  %6174 = vmatprep.mubr.bf16.mxu0 0
  %6175 = vmatmul.mubr.bf16.gmra.mxu0 %v6062
  %v6176 = vpop.f32.mrf.mxu0
  %v6177 = vadd.f32 0.0, %v6176
  %v6178 = vpop.f32.mrf.mxu0
  %v6179 = vadd.f32 0.0, %v6178
  %v6180 = vpop.f32.mrf.mxu0
  %v6181 = vadd.f32 0.0, %v6180
  %v6182 = vpop.f32.mrf.mxu0
  %v6183 = vadd.f32 0.0, %v6182
  %6184 = vmatprep.mubr.bf16.mxu0 0
  %6185 = vmatmul.mubr.bf16.gmra.mxu0 %v6065
  %v6186 = vpop.f32.mrf.mxu0
  %v6187 = vadd.f32 0.0, %v6186
  %v6188 = vpop.f32.mrf.mxu0
  %v6189 = vadd.f32 0.0, %v6188
  %v6190 = vpop.f32.mrf.mxu0
  %v6191 = vadd.f32 0.0, %v6190
  %v6192 = vpop.f32.mrf.mxu0
  %v6193 = vadd.f32 0.0, %v6192
  %6194 = vmatprep.mubr.bf16.mxu0 0
  %6195 = vmatmul.mubr.bf16.gmra.mxu0 %v6068
  %v6196 = vpop.f32.mrf.mxu0
  %v6197 = vadd.f32 0.0, %v6196
  %v6198 = vpop.f32.mrf.mxu0
  %v6199 = vadd.f32 0.0, %v6198
  %v6200 = vpop.f32.mrf.mxu0
  %v6201 = vadd.f32 0.0, %v6200
  %v6202 = vpop.f32.mrf.mxu0
  %v6203 = vadd.f32 0.0, %v6202
  %6204 = vmatprep.mubr.bf16.mxu0 0
  %6205 = vmatmul.mubr.bf16.gmra.mxu0 %v6071
  %v6206 = vpop.f32.mrf.mxu0
  %v6207 = vadd.f32 0.0, %v6206
  %v6208 = vpop.f32.mrf.mxu0
  %v6209 = vadd.f32 0.0, %v6208
  %v6210 = vpop.f32.mrf.mxu0
  %v6211 = vadd.f32 0.0, %v6210
  %v6212 = vpop.f32.mrf.mxu0
  %v6213 = vadd.f32 0.0, %v6212
  %6214 = vmatprep.mubr.bf16.mxu0 0
  %6215 = vmatmul.mubr.bf16.gmra.mxu0 %v6074
  %v6216 = vpop.f32.mrf.mxu0
  %v6217 = vadd.f32 0.0, %v6216
  %v6218 = vpop.f32.mrf.mxu0
  %v6219 = vadd.f32 0.0, %v6218
  %v6220 = vpop.f32.mrf.mxu0
  %v6221 = vadd.f32 0.0, %v6220
  %v6222 = vpop.f32.mrf.mxu0
  %v6223 = vadd.f32 0.0, %v6222
  %6224 = vmatprep.mubr.bf16.mxu0 0
  %6225 = vmatmul.mubr.bf16.gmra.mxu0 %v6077
  %v6226 = vpop.f32.mrf.mxu0
  %v6227 = vadd.f32 0.0, %v6226
  %v6228 = vpop.f32.mrf.mxu0
  %v6229 = vadd.f32 0.0, %v6228
  %v6230 = vpop.f32.mrf.mxu0
  %v6231 = vadd.f32 0.0, %v6230
  %v6232 = vpop.f32.mrf.mxu0
  %v6233 = vadd.f32 0.0, %v6232
  %6234 = vmatprep.mubr.bf16.mxu0 0
  %6235 = vmatmul.mubr.bf16.gmra.mxu0 %v6080
  %v6236 = vpop.f32.mrf.mxu0
  %v6237 = vadd.f32 0.0, %v6236
  %v6238 = vpop.f32.mrf.mxu0
  %v6239 = vadd.f32 0.0, %v6238
  %v6240 = vpop.f32.mrf.mxu0
  %v6241 = vadd.f32 0.0, %v6240
  %v6242 = vpop.f32.mrf.mxu0
  %v6243 = vadd.f32 0.0, %v6242
  %6244 = vmatprep.mubr.bf16.mxu0 0
  %6245 = vmatmul.mubr.bf16.gmra.mxu0 %v6083
  %v6246 = vpop.f32.mrf.mxu0
  %v6247 = vadd.f32 0.0, %v6246
  %v6248 = vpop.f32.mrf.mxu0
  %v6249 = vadd.f32 0.0, %v6248
  %v6250 = vpop.f32.mrf.mxu0
  %v6251 = vadd.f32 0.0, %v6250
  %v6252 = vpop.f32.mrf.mxu0
  %v6253 = vadd.f32 0.0, %v6252
  %6254 = vmatprep.mubr.bf16.mxu0 0
  %6255 = vmatmul.mubr.bf16.gmra.mxu0 %v6086
  %v6256 = vpop.f32.mrf.mxu0
  %v6257 = vadd.f32 0.0, %v6256
  %v6258 = vpop.f32.mrf.mxu0
  %v6259 = vadd.f32 0.0, %v6258
  %v6260 = vpop.f32.mrf.mxu0
  %v6261 = vadd.f32 0.0, %v6260
  %v6262 = vpop.f32.mrf.mxu0
  %v6263 = vadd.f32 0.0, %v6262
  %6264 = vmatprep.mubr.bf16.mxu0 0
  %6265 = vmatmul.mubr.bf16.gmra.mxu0 %v6089
  %v6266 = vpop.f32.mrf.mxu0
  %v6267 = vadd.f32 0.0, %v6266
  %v6268 = vpop.f32.mrf.mxu0
  %v6269 = vadd.f32 0.0, %v6268
  %v6270 = vpop.f32.mrf.mxu0
  %v6271 = vadd.f32 0.0, %v6270
  %v6272 = vpop.f32.mrf.mxu0
  %v6273 = vadd.f32 0.0, %v6272
  %6274 = vmatprep.mubr.bf16.mxu0 0
  %6275 = vmatmul.mubr.bf16.gmra.mxu0 %v6092
  %v6276 = vpop.f32.mrf.mxu0
  %v6277 = vadd.f32 0.0, %v6276
  %v6278 = vpop.f32.mrf.mxu0
  %v6279 = vadd.f32 0.0, %v6278
  %v6280 = vpop.f32.mrf.mxu0
  %v6281 = vadd.f32 0.0, %v6280
  %v6282 = vpop.f32.mrf.mxu0
  %v6283 = vadd.f32 0.0, %v6282
  %6284 = vmatprep.mubr.bf16.mxu0 0
  %6285 = vmatmul.mubr.bf16.gmra.mxu0 %v6095
  %v6286 = vpop.f32.mrf.mxu0
  %v6287 = vadd.f32 0.0, %v6286
  %v6288 = vpop.f32.mrf.mxu0
  %v6289 = vadd.f32 0.0, %v6288
  %v6290 = vpop.f32.mrf.mxu0
  %v6291 = vadd.f32 0.0, %v6290
  %v6292 = vpop.f32.mrf.mxu0
  %v6293 = vadd.f32 0.0, %v6292
  %6294 = vmatprep.mubr.bf16.mxu0 0
  %6295 = vmatmul.mubr.bf16.gmra.mxu0 %v6098
  %v6296 = vpop.f32.mrf.mxu0
  %v6297 = vadd.f32 0.0, %v6296
  %v6298 = vpop.f32.mrf.mxu0
  %v6299 = vadd.f32 0.0, %v6298
  %v6300 = vpop.f32.mrf.mxu0
  %v6301 = vadd.f32 0.0, %v6300
  %v6302 = vpop.f32.mrf.mxu0
  %v6303 = vadd.f32 0.0, %v6302
  %6304 = vmatprep.mubr.bf16.mxu0 0
  %6305 = vmatmul.mubr.bf16.gmra.mxu0 %v6101
  %v6306 = vpop.f32.mrf.mxu0
  %v6307 = vadd.f32 0.0, %v6306
  %v6308 = vpop.f32.mrf.mxu0
  %v6309 = vadd.f32 0.0, %v6308
  %v6310 = vpop.f32.mrf.mxu0
  %v6311 = vadd.f32 0.0, %v6310
  %v6312 = vpop.f32.mrf.mxu0
  %v6313 = vadd.f32 0.0, %v6312
  %6314 = vmatprep.mubr.bf16.mxu0 0
  %6315 = vmatmul.mubr.bf16.gmra.mxu0 %v6104
  %v6316 = vpop.f32.mrf.mxu0
  %v6317 = vadd.f32 0.0, %v6316
  %v6318 = vpop.f32.mrf.mxu0
  %v6319 = vadd.f32 0.0, %v6318
  %v6320 = vpop.f32.mrf.mxu0
  %v6321 = vadd.f32 0.0, %v6320
  %v6322 = vpop.f32.mrf.mxu0
  %v6323 = vadd.f32 0.0, %v6322
  %6324 = vmatprep.mubr.bf16.mxu0 0
  %6325 = vmatmul.mubr.bf16.gmra.mxu0 %v6107
  %v6326 = vpop.f32.mrf.mxu0
  %v6327 = vadd.f32 0.0, %v6326
  %v6328 = vpop.f32.mrf.mxu0
  %v6329 = vadd.f32 0.0, %v6328
  %v6330 = vpop.f32.mrf.mxu0
  %v6331 = vadd.f32 0.0, %v6330
  %v6332 = vpop.f32.mrf.mxu0
  %v6333 = vadd.f32 0.0, %v6332
  %6334 = vmatprep.mubr.bf16.mxu0 0
  %6335 = vmatmul.mubr.bf16.gmra.mxu0 %v6110
  %v6336 = vpop.f32.mrf.mxu0
  %v6337 = vadd.f32 0.0, %v6336
  %v6338 = vpop.f32.mrf.mxu0
  %v6339 = vadd.f32 0.0, %v6338
  %v6340 = vpop.f32.mrf.mxu0
  %v6341 = vadd.f32 0.0, %v6340
  %v6342 = vpop.f32.mrf.mxu0
  %v6343 = vadd.f32 0.0, %v6342
  %6344 = vdwg.mxu0
  %6345 = vmatprep.subr.bf16.mxu0 0
  %6346 = vmatpush1.bf16.msra.mxu0 0
  %6347 = vmatprep.subr.bf16.mxu0 0
  %6348 = vmatpush1.bf16.msra.mxu0 0
  %6349 = vmatprep.subr.bf16.mxu0 0
  %6350 = vmatpush1.bf16.msra.mxu0 0
  %6351 = vmatprep.subr.bf16.mxu0 0
  %6352 = vmatpush1.bf16.msra.mxu0 0
  %6353 = vmatprep.subr.bf16.mxu0 0
  %6354 = vmatpush1.bf16.msra.mxu0 0
  %6355 = vmatprep.subr.bf16.mxu0 0
  %6356 = vmatpush1.bf16.msra.mxu0 0
  %6357 = vmatprep.subr.bf16.mxu0 0
  %6358 = vmatpush1.bf16.msra.mxu0 %v6045
  %6359 = vmatprep.subr.bf16.mxu0 0
  %6360 = vmatpush1.bf16.msra.mxu0 %v6042
  %6361 = vmatprep.subr.bf16.mxu0 0
  %6362 = vmatpush2.bf16.msra.mxu0 0
  %6363 = vmatprep.subr.bf16.mxu0 0
  %6364 = vmatpush2.bf16.msra.mxu0 0
  %6365 = vmatprep.subr.bf16.mxu0 0
  %6366 = vmatpush2.bf16.msra.mxu0 0
  %6367 = vmatprep.subr.bf16.mxu0 0
  %6368 = vmatpush2.bf16.msra.mxu0 0
  %6369 = vmatprep.subr.bf16.mxu0 0
  %6370 = vmatpush2.bf16.msra.mxu0 0
  %6371 = vmatprep.subr.bf16.mxu0 0
  %6372 = vmatpush2.bf16.msra.mxu0 0
  %6373 = vmatprep.subr.bf16.mxu0 0
  %6374 = vmatpush2.bf16.msra.mxu0 0
  %6375 = vmatprep.subr.bf16.mxu0 0
  %6376 = vmatpush2.bf16.msra.mxu0 0
  %6377 = vmatprep.mubr.bf16.mxu0 0
  %6378 = vmatmul.mubr.bf16.gmra.mxu0 %v6053
  %v6379 = vpop.f32.mrf.mxu0
  %v6380 = vadd.f32 0.0, %v6379
  %v6381 = vpop.f32.mrf.mxu0
  %v6382 = vpop.f32.mrf.mxu0
  %v6383 = vadd.f32 0.0, %v6382
  %v6384 = vpop.f32.mrf.mxu0
  %6385 = vmatprep.mubr.bf16.mxu0 0
  %6386 = vmatmul.mubr.bf16.gmra.mxu0 %v6056
  %v6387 = vpop.f32.mrf.mxu0
  %v6388 = vadd.f32 0.0, %v6387
  %v6389 = vpop.f32.mrf.mxu0
  %v6390 = vpop.f32.mrf.mxu0
  %v6391 = vadd.f32 0.0, %v6390
  %v6392 = vpop.f32.mrf.mxu0
  %6393 = vmatprep.mubr.bf16.mxu0 0
  %6394 = vmatmul.mubr.bf16.gmra.mxu0 %v6059
  %v6395 = vpop.f32.mrf.mxu0
  %v6396 = vadd.f32 0.0, %v6395
  %v6397 = vpop.f32.mrf.mxu0
  %v6398 = vpop.f32.mrf.mxu0
  %v6399 = vadd.f32 0.0, %v6398
  %v6400 = vpop.f32.mrf.mxu0
  %6401 = vmatprep.mubr.bf16.mxu0 0
  %6402 = vmatmul.mubr.bf16.gmra.mxu0 %v6062
  %v6403 = vpop.f32.mrf.mxu0
  %v6404 = vadd.f32 0.0, %v6403
  %v6405 = vpop.f32.mrf.mxu0
  %v6406 = vpop.f32.mrf.mxu0
  %v6407 = vadd.f32 0.0, %v6406
  %v6408 = vpop.f32.mrf.mxu0
  %6409 = vmatprep.mubr.bf16.mxu0 0
  %6410 = vmatmul.mubr.bf16.gmra.mxu0 %v6065
  %v6411 = vpop.f32.mrf.mxu0
  %v6412 = vadd.f32 0.0, %v6411
  %v6413 = vpop.f32.mrf.mxu0
  %v6414 = vpop.f32.mrf.mxu0
  %v6415 = vadd.f32 0.0, %v6414
  %v6416 = vpop.f32.mrf.mxu0
  %6417 = vmatprep.mubr.bf16.mxu0 0
  %6418 = vmatmul.mubr.bf16.gmra.mxu0 %v6068
  %v6419 = vpop.f32.mrf.mxu0
  %v6420 = vadd.f32 0.0, %v6419
  %v6421 = vpop.f32.mrf.mxu0
  %v6422 = vpop.f32.mrf.mxu0
  %v6423 = vadd.f32 0.0, %v6422
  %v6424 = vpop.f32.mrf.mxu0
  %6425 = vmatprep.mubr.bf16.mxu0 0
  %6426 = vmatmul.mubr.bf16.gmra.mxu0 %v6071
  %v6427 = vpop.f32.mrf.mxu0
  %v6428 = vadd.f32 0.0, %v6427
  %v6429 = vpop.f32.mrf.mxu0
  %v6430 = vpop.f32.mrf.mxu0
  %v6431 = vadd.f32 0.0, %v6430
  %v6432 = vpop.f32.mrf.mxu0
  %6433 = vmatprep.mubr.bf16.mxu0 0
  %6434 = vmatmul.mubr.bf16.gmra.mxu0 %v6074
  %v6435 = vpop.f32.mrf.mxu0
  %v6436 = vadd.f32 0.0, %v6435
  %v6437 = vpop.f32.mrf.mxu0
  %v6438 = vpop.f32.mrf.mxu0
  %v6439 = vadd.f32 0.0, %v6438
  %v6440 = vpop.f32.mrf.mxu0
  %6441 = vmatprep.mubr.bf16.mxu0 0
  %6442 = vmatmul.mubr.bf16.gmra.mxu0 %v6077
  %v6443 = vpop.f32.mrf.mxu0
  %v6444 = vadd.f32 0.0, %v6443
  %v6445 = vpop.f32.mrf.mxu0
  %v6446 = vpop.f32.mrf.mxu0
  %v6447 = vadd.f32 0.0, %v6446
  %v6448 = vpop.f32.mrf.mxu0
  %6449 = vmatprep.mubr.bf16.mxu0 0
  %6450 = vmatmul.mubr.bf16.gmra.mxu0 %v6080
  %v6451 = vpop.f32.mrf.mxu0
  %v6452 = vadd.f32 0.0, %v6451
  %v6453 = vpop.f32.mrf.mxu0
  %v6454 = vpop.f32.mrf.mxu0
  %v6455 = vadd.f32 0.0, %v6454
  %v6456 = vpop.f32.mrf.mxu0
  %6457 = vmatprep.mubr.bf16.mxu0 0
  %6458 = vmatmul.mubr.bf16.gmra.mxu0 %v6083
  %v6459 = vpop.f32.mrf.mxu0
  %v6460 = vadd.f32 0.0, %v6459
  %v6461 = vpop.f32.mrf.mxu0
  %v6462 = vpop.f32.mrf.mxu0
  %v6463 = vadd.f32 0.0, %v6462
  %v6464 = vpop.f32.mrf.mxu0
  %6465 = vmatprep.mubr.bf16.mxu0 0
  %6466 = vmatmul.mubr.bf16.gmra.mxu0 %v6086
  %v6467 = vpop.f32.mrf.mxu0
  %v6468 = vadd.f32 0.0, %v6467
  %v6469 = vpop.f32.mrf.mxu0
  %v6470 = vpop.f32.mrf.mxu0
  %v6471 = vadd.f32 0.0, %v6470
  %v6472 = vpop.f32.mrf.mxu0
  %6473 = vmatprep.mubr.bf16.mxu0 0
  %6474 = vmatmul.mubr.bf16.gmra.mxu0 %v6089
  %v6475 = vpop.f32.mrf.mxu0
  %v6476 = vadd.f32 0.0, %v6475
  %v6477 = vpop.f32.mrf.mxu0
  %v6478 = vpop.f32.mrf.mxu0
  %v6479 = vadd.f32 0.0, %v6478
  %v6480 = vpop.f32.mrf.mxu0
  %6481 = vmatprep.mubr.bf16.mxu0 0
  %6482 = vmatmul.mubr.bf16.gmra.mxu0 %v6092
  %v6483 = vpop.f32.mrf.mxu0
  %v6484 = vadd.f32 0.0, %v6483
  %v6485 = vpop.f32.mrf.mxu0
  %v6486 = vpop.f32.mrf.mxu0
  %v6487 = vadd.f32 0.0, %v6486
  %v6488 = vpop.f32.mrf.mxu0
  %6489 = vmatprep.mubr.bf16.mxu0 0
  %6490 = vmatmul.mubr.bf16.gmra.mxu0 %v6095
  %v6491 = vpop.f32.mrf.mxu0
  %v6492 = vadd.f32 0.0, %v6491
  %v6493 = vpop.f32.mrf.mxu0
  %v6494 = vpop.f32.mrf.mxu0
  %v6495 = vadd.f32 0.0, %v6494
  %v6496 = vpop.f32.mrf.mxu0
  %6497 = vmatprep.mubr.bf16.mxu0 0
  %6498 = vmatmul.mubr.bf16.gmra.mxu0 %v6098
  %v6499 = vpop.f32.mrf.mxu0
  %v6500 = vadd.f32 0.0, %v6499
  %v6501 = vpop.f32.mrf.mxu0
  %v6502 = vpop.f32.mrf.mxu0
  %v6503 = vadd.f32 0.0, %v6502
  %v6504 = vpop.f32.mrf.mxu0
  %6505 = vmatprep.mubr.bf16.mxu0 0
  %6506 = vmatmul.mubr.bf16.gmra.mxu0 %v6101
  %v6507 = vpop.f32.mrf.mxu0
  %v6508 = vadd.f32 0.0, %v6507
  %v6509 = vpop.f32.mrf.mxu0
  %v6510 = vpop.f32.mrf.mxu0
  %v6511 = vadd.f32 0.0, %v6510
  %v6512 = vpop.f32.mrf.mxu0
  %6513 = vmatprep.mubr.bf16.mxu0 0
  %6514 = vmatmul.mubr.bf16.gmra.mxu0 %v6104
  %v6515 = vpop.f32.mrf.mxu0
  %v6516 = vadd.f32 0.0, %v6515
  %v6517 = vpop.f32.mrf.mxu0
  %v6518 = vpop.f32.mrf.mxu0
  %v6519 = vadd.f32 0.0, %v6518
  %v6520 = vpop.f32.mrf.mxu0
  %6521 = vmatprep.mubr.bf16.mxu0 0
  %6522 = vmatmul.mubr.bf16.gmra.mxu0 %v6107
  %v6523 = vpop.f32.mrf.mxu0
  %v6524 = vadd.f32 0.0, %v6523
  %v6525 = vpop.f32.mrf.mxu0
  %v6526 = vpop.f32.mrf.mxu0
  %v6527 = vadd.f32 0.0, %v6526
  %v6528 = vpop.f32.mrf.mxu0
  %6529 = vmatprep.mubr.bf16.mxu0 0
  %6530 = vmatmul.mubr.bf16.gmra.mxu0 %v6110
  %v6531 = vpop.f32.mrf.mxu0
  %v6532 = vadd.f32 0.0, %v6531
  %v6533 = vpop.f32.mrf.mxu0
  %v6534 = vpop.f32.mrf.mxu0
  %v6535 = vadd.f32 0.0, %v6534
  %v6536 = vpop.f32.mrf.mxu0
  %6537 = vdwg.mxu0
  %6538 = vst [vmem:[#allocation3] sm:$0xff] %v6147
  %6539 = vst [vmem:[#allocation3 + $0x8] sm:$0xff] %v6149
  %6540 = vst.msk [vmem:[#allocation3 + $0x10] sm:$0xff] %vm547, %v6380
  %6541 = vst [vmem:[#allocation3 + $0x18] sm:$0xff] %v6151
  %6542 = vst [vmem:[#allocation3 + $0x20] sm:$0xff] %v6153
  %6543 = vst.msk [vmem:[#allocation3 + $0x28] sm:$0xff] %vm547, %v6383
  %6544 = vst [vmem:[#allocation3 + $0x30] sm:$0xff] %v6157
  %6545 = vst [vmem:[#allocation3 + $0x38] sm:$0xff] %v6159
  %6546 = vst.msk [vmem:[#allocation3 + $0x40] sm:$0xff] %vm547, %v6388
  %6547 = vst [vmem:[#allocation3 + $0x48] sm:$0xff] %v6161
  %6548 = vst [vmem:[#allocation3 + $0x50] sm:$0xff] %v6163
  %6549 = vst.msk [vmem:[#allocation3 + $0x58] sm:$0xff] %vm547, %v6391
  %6550 = vst [vmem:[#allocation3 + $0x60] sm:$0xff] %v6167
  %6551 = vst [vmem:[#allocation3 + $0x68] sm:$0xff] %v6169
  %6552 = vst.msk [vmem:[#allocation3 + $0x70] sm:$0xff] %vm547, %v6396
  %6553 = vst [vmem:[#allocation3 + $0x78] sm:$0xff] %v6171
  %6554 = vst [vmem:[#allocation3 + $0x80] sm:$0xff] %v6173
  %6555 = vst.msk [vmem:[#allocation3 + $0x88] sm:$0xff] %vm547, %v6399
  %6556 = vst [vmem:[#allocation3 + $0x90] sm:$0xff] %v6177
  %6557 = vst [vmem:[#allocation3 + $0x98] sm:$0xff] %v6179
  %6558 = vst.msk [vmem:[#allocation3 + $0xa0] sm:$0xff] %vm547, %v6404
  %6559 = vst [vmem:[#allocation3 + $0xa8] sm:$0xff] %v6181
  %6560 = vst [vmem:[#allocation3 + $0xb0] sm:$0xff] %v6183
  %6561 = vst.msk [vmem:[#allocation3 + $0xb8] sm:$0xff] %vm547, %v6407
  %6562 = vst [vmem:[#allocation3 + $0xc0] sm:$0xff] %v6187
  %6563 = vst [vmem:[#allocation3 + $0xc8] sm:$0xff] %v6189
  %6564 = vst.msk [vmem:[#allocation3 + $0xd0] sm:$0xff] %vm547, %v6412
  %6565 = vst [vmem:[#allocation3 + $0xd8] sm:$0xff] %v6191
  %6566 = vst [vmem:[#allocation3 + $0xe0] sm:$0xff] %v6193
  %6567 = vst.msk [vmem:[#allocation3 + $0xe8] sm:$0xff] %vm547, %v6415
  %6568 = vst [vmem:[#allocation3 + $0xf0] sm:$0xff] %v6197
  %6569 = vst [vmem:[#allocation3 + $0xf8] sm:$0xff] %v6199
  %6570 = vst.msk [vmem:[#allocation3 + $0x100] sm:$0xff] %vm547, %v6420
  %6571 = vst [vmem:[#allocation3 + $0x108] sm:$0xff] %v6201
  %6572 = vst [vmem:[#allocation3 + $0x110] sm:$0xff] %v6203
  %6573 = vst.msk [vmem:[#allocation3 + $0x118] sm:$0xff] %vm547, %v6423
  %6574 = vst [vmem:[#allocation3 + $0x120] sm:$0xff] %v6207
  %6575 = vst [vmem:[#allocation3 + $0x128] sm:$0xff] %v6209
  %6576 = vst.msk [vmem:[#allocation3 + $0x130] sm:$0xff] %vm547, %v6428
  %6577 = vst [vmem:[#allocation3 + $0x138] sm:$0xff] %v6211
  %6578 = vst [vmem:[#allocation3 + $0x140] sm:$0xff] %v6213
  %6579 = vst.msk [vmem:[#allocation3 + $0x148] sm:$0xff] %vm547, %v6431
  %6580 = vst [vmem:[#allocation3 + $0x150] sm:$0xff] %v6217
  %6581 = vst [vmem:[#allocation3 + $0x158] sm:$0xff] %v6219
  %6582 = vst.msk [vmem:[#allocation3 + $0x160] sm:$0xff] %vm547, %v6436
  %6583 = vst [vmem:[#allocation3 + $0x168] sm:$0xff] %v6221
  %6584 = vst [vmem:[#allocation3 + $0x170] sm:$0xff] %v6223
  %6585 = vst.msk [vmem:[#allocation3 + $0x178] sm:$0xff] %vm547, %v6439
  %6586 = vst [vmem:[#allocation3 + $0x180] sm:$0xff] %v6227
  %6587 = vst [vmem:[#allocation3 + $0x188] sm:$0xff] %v6229
  %6588 = vst.msk [vmem:[#allocation3 + $0x190] sm:$0xff] %vm547, %v6444
  %6589 = vst [vmem:[#allocation3 + $0x198] sm:$0xff] %v6231
  %6590 = vst [vmem:[#allocation3 + $0x1a0] sm:$0xff] %v6233
  %6591 = vst.msk [vmem:[#allocation3 + $0x1a8] sm:$0xff] %vm547, %v6447
  %6592 = vst [vmem:[#allocation3 + $0x1b0] sm:$0xff] %v6237
  %6593 = vst [vmem:[#allocation3 + $0x1b8] sm:$0xff] %v6239
  %6594 = vst.msk [vmem:[#allocation3 + $0x1c0] sm:$0xff] %vm547, %v6452
  %6595 = vst [vmem:[#allocation3 + $0x1c8] sm:$0xff] %v6241
  %6596 = vst [vmem:[#allocation3 + $0x1d0] sm:$0xff] %v6243
  %6597 = vst.msk [vmem:[#allocation3 + $0x1d8] sm:$0xff] %vm547, %v6455
  %6598 = vst [vmem:[#allocation3 + $0x1e0] sm:$0xff] %v6247
  %6599 = vst [vmem:[#allocation3 + $0x1e8] sm:$0xff] %v6249
  %6600 = vst.msk [vmem:[#allocation3 + $0x1f0] sm:$0xff] %vm547, %v6460
  %6601 = vst [vmem:[#allocation3 + $0x1f8] sm:$0xff] %v6251
  %6602 = vst [vmem:[#allocation3 + $0x200] sm:$0xff] %v6253
  %6603 = vst.msk [vmem:[#allocation3 + $0x208] sm:$0xff] %vm547, %v6463
  %6604 = vst [vmem:[#allocation3 + $0x210] sm:$0xff] %v6257
  %6605 = vst [vmem:[#allocation3 + $0x218] sm:$0xff] %v6259
  %6606 = vst.msk [vmem:[#allocation3 + $0x220] sm:$0xff] %vm547, %v6468
  %6607 = vst [vmem:[#allocation3 + $0x228] sm:$0xff] %v6261
  %6608 = vst [vmem:[#allocation3 + $0x230] sm:$0xff] %v6263
  %6609 = vst.msk [vmem:[#allocation3 + $0x238] sm:$0xff] %vm547, %v6471
  %6610 = vst [vmem:[#allocation3 + $0x240] sm:$0xff] %v6267
  %6611 = vst [vmem:[#allocation3 + $0x248] sm:$0xff] %v6269
  %6612 = vst.msk [vmem:[#allocation3 + $0x250] sm:$0xff] %vm547, %v6476
  %6613 = vst [vmem:[#allocation3 + $0x258] sm:$0xff] %v6271
  %6614 = vst [vmem:[#allocation3 + $0x260] sm:$0xff] %v6273
  %6615 = vst.msk [vmem:[#allocation3 + $0x268] sm:$0xff] %vm547, %v6479
  %6616 = vst [vmem:[#allocation3 + $0x270] sm:$0xff] %v6277
  %6617 = vst [vmem:[#allocation3 + $0x278] sm:$0xff] %v6279
  %6618 = vst.msk [vmem:[#allocation3 + $0x280] sm:$0xff] %vm547, %v6484
  %6619 = vst [vmem:[#allocation3 + $0x288] sm:$0xff] %v6281
  %6620 = vst [vmem:[#allocation3 + $0x290] sm:$0xff] %v6283
  %6621 = vst.msk [vmem:[#allocation3 + $0x298] sm:$0xff] %vm547, %v6487
  %6622 = vst [vmem:[#allocation3 + $0x2a0] sm:$0xff] %v6287
  %6623 = vst [vmem:[#allocation3 + $0x2a8] sm:$0xff] %v6289
  %6624 = vst.msk [vmem:[#allocation3 + $0x2b0] sm:$0xff] %vm547, %v6492
  %6625 = vst [vmem:[#allocation3 + $0x2b8] sm:$0xff] %v6291
  %6626 = vst [vmem:[#allocation3 + $0x2c0] sm:$0xff] %v6293
  %6627 = vst.msk [vmem:[#allocation3 + $0x2c8] sm:$0xff] %vm547, %v6495
  %6628 = vst [vmem:[#allocation3 + $0x2d0] sm:$0xff] %v6297
  %6629 = vst [vmem:[#allocation3 + $0x2d8] sm:$0xff] %v6299
  %6630 = vst.msk [vmem:[#allocation3 + $0x2e0] sm:$0xff] %vm547, %v6500
  %6631 = vst [vmem:[#allocation3 + $0x2e8] sm:$0xff] %v6301
  %6632 = vst [vmem:[#allocation3 + $0x2f0] sm:$0xff] %v6303
  %6633 = vst.msk [vmem:[#allocation3 + $0x2f8] sm:$0xff] %vm547, %v6503
  %6634 = vst [vmem:[#allocation3 + $0x300] sm:$0xff] %v6307
  %6635 = vst [vmem:[#allocation3 + $0x308] sm:$0xff] %v6309
  %6636 = vst.msk [vmem:[#allocation3 + $0x310] sm:$0xff] %vm547, %v6508
  %6637 = vst [vmem:[#allocation3 + $0x318] sm:$0xff] %v6311
  %6638 = vst [vmem:[#allocation3 + $0x320] sm:$0xff] %v6313
  %6639 = vst.msk [vmem:[#allocation3 + $0x328] sm:$0xff] %vm547, %v6511
  %6640 = vst [vmem:[#allocation3 + $0x330] sm:$0xff] %v6317
  %6641 = vst [vmem:[#allocation3 + $0x338] sm:$0xff] %v6319
  %6642 = vst.msk [vmem:[#allocation3 + $0x340] sm:$0xff] %vm547, %v6516
  %6643 = vst [vmem:[#allocation3 + $0x348] sm:$0xff] %v6321
  %6644 = vst [vmem:[#allocation3 + $0x350] sm:$0xff] %v6323
  %6645 = vst.msk [vmem:[#allocation3 + $0x358] sm:$0xff] %vm547, %v6519
  %6646 = vst [vmem:[#allocation3 + $0x360] sm:$0xff] %v6327
  %6647 = vst [vmem:[#allocation3 + $0x368] sm:$0xff] %v6329
  %6648 = vst.msk [vmem:[#allocation3 + $0x370] sm:$0xff] %vm547, %v6524
  %6649 = vst [vmem:[#allocation3 + $0x378] sm:$0xff] %v6331
  %6650 = vst [vmem:[#allocation3 + $0x380] sm:$0xff] %v6333
  %6651 = vst.msk [vmem:[#allocation3 + $0x388] sm:$0xff] %vm547, %v6527
  %6652 = vst [vmem:[#allocation3 + $0x390] sm:$0xff] %v6337
  %6653 = vst [vmem:[#allocation3 + $0x398] sm:$0xff] %v6339
  %6654 = vst.msk [vmem:[#allocation3 + $0x3a0] sm:$0xff] %vm547, %v6532
  %6655 = vst [vmem:[#allocation3 + $0x3a8] sm:$0xff] %v6341
  %6656 = vst [vmem:[#allocation3 + $0x3b0] sm:$0xff] %v6343
  %6657 = vst.msk [vmem:[#allocation3 + $0x3b8] sm:$0xff] %vm547, %v6535
  %v6658 = vld [vmem:[#allocation3] sm:$0xff]
  %v6659 = vld [vmem:[#allocation3 + $0x18] sm:$0xff]
  %v6660 = vld [vmem:[#allocation3 + $0x30] sm:$0xff]
  %v6661 = vld [vmem:[#allocation3 + $0x48] sm:$0xff]
  %v6662 = vld [vmem:[#allocation3 + $0x60] sm:$0xff]
  %v6663 = vld [vmem:[#allocation3 + $0x78] sm:$0xff]
  %v6664 = vld [vmem:[#allocation3 + $0x90] sm:$0xff]
  %v6665 = vld [vmem:[#allocation3 + $0xa8] sm:$0xff]
  %v6666 = vld [vmem:[#allocation3 + $0xc0] sm:$0xff]
  %v6667 = vld [vmem:[#allocation3 + $0xd8] sm:$0xff]
  %v6668 = vld [vmem:[#allocation3 + $0xf0] sm:$0xff]
  %v6669 = vld [vmem:[#allocation3 + $0x108] sm:$0xff]
  %v6670 = vld [vmem:[#allocation3 + $0x120] sm:$0xff]
  %v6671 = vld [vmem:[#allocation3 + $0x138] sm:$0xff]
  %v6672 = vld [vmem:[#allocation3 + $0x150] sm:$0xff]
  %v6673 = vld [vmem:[#allocation3 + $0x168] sm:$0xff]
  %v6674 = vld [vmem:[#allocation3 + $0x180] sm:$0xff]
  %v6675 = vld [vmem:[#allocation3 + $0x198] sm:$0xff]
  %v6676 = vld [vmem:[#allocation3 + $0x1b0] sm:$0xff]
  %v6677 = vld [vmem:[#allocation3 + $0x1c8] sm:$0xff]
  %v6678 = vld [vmem:[#allocation3 + $0x1e0] sm:$0xff]
  %v6679 = vld [vmem:[#allocation3 + $0x1f8] sm:$0xff]
  %v6680 = vld [vmem:[#allocation3 + $0x210] sm:$0xff]
  %v6681 = vld [vmem:[#allocation3 + $0x228] sm:$0xff]
  %v6682 = vld [vmem:[#allocation3 + $0x240] sm:$0xff]
  %v6683 = vld [vmem:[#allocation3 + $0x258] sm:$0xff]
  %v6684 = vld [vmem:[#allocation3 + $0x270] sm:$0xff]
  %v6685 = vld [vmem:[#allocation3 + $0x288] sm:$0xff]
  %v6686 = vld [vmem:[#allocation3 + $0x2a0] sm:$0xff]
  %v6687 = vld [vmem:[#allocation3 + $0x2b8] sm:$0xff]
  %v6688 = vld [vmem:[#allocation3 + $0x2d0] sm:$0xff]
  %v6689 = vld [vmem:[#allocation3 + $0x2e8] sm:$0xff]
  %v6690 = vld [vmem:[#allocation3 + $0x300] sm:$0xff]
  %v6691 = vld [vmem:[#allocation3 + $0x318] sm:$0xff]
  %v6692 = vld [vmem:[#allocation3 + $0x330] sm:$0xff]
  %v6693 = vld [vmem:[#allocation3 + $0x348] sm:$0xff]
  %v6694 = vadd.f32 %v5836, %v6658
  %v6695 = vadd.f32 %v5837, %v6659
  %v6696 = vadd.f32 %v5838, %v6660
  %v6697 = vadd.f32 %v5839, %v6661
  %v6698 = vadd.f32 %v5840, %v6662
  %v6699 = vadd.f32 %v5841, %v6663
  %v6700 = vadd.f32 %v5842, %v6664
  %v6701 = vadd.f32 %v5843, %v6665
  %v6702 = vadd.f32 %v5844, %v6666
  %v6703 = vadd.f32 %v5845, %v6667
  %v6704 = vadd.f32 %v5846, %v6668
  %v6705 = vadd.f32 %v5847, %v6669
  %v6706 = vadd.f32 %v5848, %v6670
  %v6707 = vadd.f32 %v5849, %v6671
  %v6708 = vadd.f32 %v5850, %v6672
  %v6709 = vadd.f32 %v5851, %v6673
  %v6710 = vadd.f32 %v5852, %v6674
  %v6711 = vadd.f32 %v5853, %v6675
  %v6712 = vadd.f32 %v5854, %v6676
  %v6713 = vadd.f32 %v5855, %v6677
  %v6714 = vadd.f32 %v5856, %v6678
  %v6715 = vadd.f32 %v5857, %v6679
  %v6716 = vadd.f32 %v5858, %v6680
  %v6717 = vadd.f32 %v5859, %v6681
  %v6718 = vadd.f32 %v5860, %v6682
  %v6719 = vadd.f32 %v5861, %v6683
  %v6720 = vadd.f32 %v5862, %v6684
  %v6721 = vadd.f32 %v5863, %v6685
  %v6722 = vadd.f32 %v5864, %v6686
  %v6723 = vadd.f32 %v5865, %v6687
  %v6724 = vadd.f32 %v5866, %v6688
  %v6725 = vadd.f32 %v5867, %v6689
  %v6726 = vadd.f32 %v5868, %v6690
  %v6727 = vadd.f32 %v5869, %v6691
  %v6728 = vadd.f32 %v5870, %v6692
  %v6729 = vadd.f32 %v5871, %v6693
  %v6730 = vld [vmem:[#allocation3] sm:$0xfe]
  %v6731 = vld [vmem:[#allocation3 + $0x360] sm:$0x1]
  %v6769 = vrot.slane %v6730, 1
  %v6770 = vrot.slane %v6659, 1
  %v6771 = vsel %vm4178, %v6769, %v6770
  %v6772 = vrot.slane %v6660, 1
  %v6773 = vsel %vm4178, %v6770, %v6772
  %v6774 = vrot.slane %v6661, 1
  %v6775 = vsel %vm4178, %v6772, %v6774
  %v6776 = vrot.slane %v6662, 1
  %v6777 = vsel %vm4178, %v6774, %v6776
  %v6778 = vrot.slane %v6663, 1
  %v6779 = vsel %vm4178, %v6776, %v6778
  %v6780 = vrot.slane %v6664, 1
  %v6781 = vsel %vm4178, %v6778, %v6780
  %v6782 = vrot.slane %v6665, 1
  %v6783 = vsel %vm4178, %v6780, %v6782
  %v6784 = vrot.slane %v6666, 1
  %v6785 = vsel %vm4178, %v6782, %v6784
  %v6786 = vrot.slane %v6667, 1
  %v6787 = vsel %vm4178, %v6784, %v6786
  %v6788 = vrot.slane %v6668, 1
  %v6789 = vsel %vm4178, %v6786, %v6788
  %v6790 = vrot.slane %v6669, 1
  %v6791 = vsel %vm4178, %v6788, %v6790
  %v6792 = vrot.slane %v6670, 1
  %v6793 = vsel %vm4178, %v6790, %v6792
  %v6794 = vrot.slane %v6671, 1
  %v6795 = vsel %vm4178, %v6792, %v6794
  %v6796 = vrot.slane %v6672, 1
  %v6797 = vsel %vm4178, %v6794, %v6796
  %v6798 = vrot.slane %v6673, 1
  %v6799 = vsel %vm4178, %v6796, %v6798
  %v6800 = vrot.slane %v6674, 1
  %v6801 = vsel %vm4178, %v6798, %v6800
  %v6802 = vrot.slane %v6675, 1
  %v6803 = vsel %vm4178, %v6800, %v6802
  %v6804 = vrot.slane %v6676, 1
  %v6805 = vsel %vm4178, %v6802, %v6804
  %v6806 = vrot.slane %v6677, 1
  %v6807 = vsel %vm4178, %v6804, %v6806
  %v6808 = vrot.slane %v6678, 1
  %v6809 = vsel %vm4178, %v6806, %v6808
  %v6810 = vrot.slane %v6679, 1
  %v6811 = vsel %vm4178, %v6808, %v6810
  %v6812 = vrot.slane %v6680, 1
  %v6813 = vsel %vm4178, %v6810, %v6812
  %v6814 = vrot.slane %v6681, 1
  %v6815 = vsel %vm4178, %v6812, %v6814
  %v6816 = vrot.slane %v6682, 1
  %v6817 = vsel %vm4178, %v6814, %v6816
  %v6818 = vrot.slane %v6683, 1
  %v6819 = vsel %vm4178, %v6816, %v6818
  %v6820 = vrot.slane %v6684, 1
  %v6821 = vsel %vm4178, %v6818, %v6820
  %v6822 = vrot.slane %v6685, 1
  %v6823 = vsel %vm4178, %v6820, %v6822
  %v6824 = vrot.slane %v6686, 1
  %v6825 = vsel %vm4178, %v6822, %v6824
  %v6826 = vrot.slane %v6687, 1
  %v6827 = vsel %vm4178, %v6824, %v6826
  %v6828 = vrot.slane %v6688, 1
  %v6829 = vsel %vm4178, %v6826, %v6828
  %v6830 = vrot.slane %v6689, 1
  %v6831 = vsel %vm4178, %v6828, %v6830
  %v6832 = vrot.slane %v6690, 1
  %v6833 = vsel %vm4178, %v6830, %v6832
  %v6834 = vrot.slane %v6691, 1
  %v6835 = vsel %vm4178, %v6832, %v6834
  %v6836 = vrot.slane %v6692, 1
  %v6837 = vsel %vm4178, %v6834, %v6836
  %v6838 = vrot.slane %v6693, 1
  %v6839 = vsel %vm4178, %v6836, %v6838
  %v6840 = vrot.slane %v6731, 1
  %v6841 = vsel %vm4178, %v6838, %v6840
  %6842 = vrot.lane.b32.xlu0 %v6771, 96
  %v6843 = vpop.permute.xlu0 %6842
  %6844 = vrot.lane.b32.xlu0 %v6773, 96
  %v6845 = vpop.permute.xlu0 %6844
  %6846 = vrot.lane.b32.xlu0 %v6775, 96
  %v6847 = vpop.permute.xlu0 %6846
  %6848 = vrot.lane.b32.xlu0 %v6777, 96
  %v6849 = vpop.permute.xlu0 %6848
  %6850 = vrot.lane.b32.xlu0 %v6779, 96
  %v6851 = vpop.permute.xlu0 %6850
  %6852 = vrot.lane.b32.xlu0 %v6781, 96
  %v6853 = vpop.permute.xlu0 %6852
  %6854 = vrot.lane.b32.xlu0 %v6783, 96
  %v6855 = vpop.permute.xlu0 %6854
  %6856 = vrot.lane.b32.xlu0 %v6785, 96
  %v6857 = vpop.permute.xlu0 %6856
  %6858 = vrot.lane.b32.xlu0 %v6787, 96
  %v6859 = vpop.permute.xlu0 %6858
  %6860 = vrot.lane.b32.xlu0 %v6789, 96
  %v6861 = vpop.permute.xlu0 %6860
  %6862 = vrot.lane.b32.xlu0 %v6791, 96
  %v6863 = vpop.permute.xlu0 %6862
  %6864 = vrot.lane.b32.xlu0 %v6793, 96
  %v6865 = vpop.permute.xlu0 %6864
  %6866 = vrot.lane.b32.xlu0 %v6795, 96
  %v6867 = vpop.permute.xlu0 %6866
  %6868 = vrot.lane.b32.xlu0 %v6797, 96
  %v6869 = vpop.permute.xlu0 %6868
  %6870 = vrot.lane.b32.xlu0 %v6799, 96
  %v6871 = vpop.permute.xlu0 %6870
  %6872 = vrot.lane.b32.xlu0 %v6801, 96
  %v6873 = vpop.permute.xlu0 %6872
  %6874 = vrot.lane.b32.xlu0 %v6803, 96
  %v6875 = vpop.permute.xlu0 %6874
  %6876 = vrot.lane.b32.xlu0 %v6805, 96
  %v6877 = vpop.permute.xlu0 %6876
  %6878 = vrot.lane.b32.xlu0 %v6807, 96
  %v6879 = vpop.permute.xlu0 %6878
  %6880 = vrot.lane.b32.xlu0 %v6809, 96
  %v6881 = vpop.permute.xlu0 %6880
  %6882 = vrot.lane.b32.xlu0 %v6811, 96
  %v6883 = vpop.permute.xlu0 %6882
  %6884 = vrot.lane.b32.xlu0 %v6813, 96
  %v6885 = vpop.permute.xlu0 %6884
  %6886 = vrot.lane.b32.xlu0 %v6815, 96
  %v6887 = vpop.permute.xlu0 %6886
  %6888 = vrot.lane.b32.xlu0 %v6817, 96
  %v6889 = vpop.permute.xlu0 %6888
  %6890 = vrot.lane.b32.xlu0 %v6819, 96
  %v6891 = vpop.permute.xlu0 %6890
  %6892 = vrot.lane.b32.xlu0 %v6821, 96
  %v6893 = vpop.permute.xlu0 %6892
  %6894 = vrot.lane.b32.xlu0 %v6823, 96
  %v6895 = vpop.permute.xlu0 %6894
  %6896 = vrot.lane.b32.xlu0 %v6825, 96
  %v6897 = vpop.permute.xlu0 %6896
  %6898 = vrot.lane.b32.xlu0 %v6827, 96
  %v6899 = vpop.permute.xlu0 %6898
  %6900 = vrot.lane.b32.xlu0 %v6829, 96
  %v6901 = vpop.permute.xlu0 %6900
  %6902 = vrot.lane.b32.xlu0 %v6831, 96
  %v6903 = vpop.permute.xlu0 %6902
  %6904 = vrot.lane.b32.xlu0 %v6833, 96
  %v6905 = vpop.permute.xlu0 %6904
  %6906 = vrot.lane.b32.xlu0 %v6835, 96
  %v6907 = vpop.permute.xlu0 %6906
  %6908 = vrot.lane.b32.xlu0 %v6837, 96
  %v6909 = vpop.permute.xlu0 %6908
  %6910 = vrot.lane.b32.xlu0 %v6839, 96
  %v6911 = vpop.permute.xlu0 %6910
  %6912 = vrot.lane.b32.xlu0 %v6841, 96
  %v6913 = vpop.permute.xlu0 %6912
  %v6950 = vadd.f32 %v6694, %v6843
  %v6951 = vadd.f32 %v6695, %v6845
  %v6952 = vadd.f32 %v6696, %v6847
  %v6953 = vadd.f32 %v6697, %v6849
  %v6954 = vadd.f32 %v6698, %v6851
  %v6955 = vadd.f32 %v6699, %v6853
  %v6956 = vadd.f32 %v6700, %v6855
  %v6957 = vadd.f32 %v6701, %v6857
  %v6958 = vadd.f32 %v6702, %v6859
  %v6959 = vadd.f32 %v6703, %v6861
  %v6960 = vadd.f32 %v6704, %v6863
  %v6961 = vadd.f32 %v6705, %v6865
  %v6962 = vadd.f32 %v6706, %v6867
  %v6963 = vadd.f32 %v6707, %v6869
  %v6964 = vadd.f32 %v6708, %v6871
  %v6965 = vadd.f32 %v6709, %v6873
  %v6966 = vadd.f32 %v6710, %v6875
  %v6967 = vadd.f32 %v6711, %v6877
  %v6968 = vadd.f32 %v6712, %v6879
  %v6969 = vadd.f32 %v6713, %v6881
  %v6970 = vadd.f32 %v6714, %v6883
  %v6971 = vadd.f32 %v6715, %v6885
  %v6972 = vadd.f32 %v6716, %v6887
  %v6973 = vadd.f32 %v6717, %v6889
  %v6974 = vadd.f32 %v6718, %v6891
  %v6975 = vadd.f32 %v6719, %v6893
  %v6976 = vadd.f32 %v6720, %v6895
  %v6977 = vadd.f32 %v6721, %v6897
  %v6978 = vadd.f32 %v6722, %v6899
  %v6979 = vadd.f32 %v6723, %v6901
  %v6980 = vadd.f32 %v6724, %v6903
  %v6981 = vadd.f32 %v6725, %v6905
  %v6982 = vadd.f32 %v6726, %v6907
  %v6983 = vadd.f32 %v6727, %v6909
  %v6984 = vadd.f32 %v6728, %v6911
  %v6985 = vadd.f32 %v6729, %v6913
  %v6986 = vld [vmem:[#allocation3 + $0x18] sm:$0xf0]
  %v6987 = vld [vmem:[#allocation3 + $0x360] sm:$0xff]
  %v6988 = vld [vmem:[#allocation3 + $0x378] sm:$0xf]
  %v6992 = vrot.slane %v6986, 4
  %v6993 = vrot.slane %v6660, 4
  %v6994 = vsel %vm4624, %v6992, %v6993
  %v6995 = vrot.slane %v6661, 4
  %v6996 = vsel %vm4624, %v6993, %v6995
  %v6997 = vrot.slane %v6662, 4
  %v6998 = vsel %vm4624, %v6995, %v6997
  %v6999 = vrot.slane %v6663, 4
  %v7000 = vsel %vm4624, %v6997, %v6999
  %v7001 = vrot.slane %v6664, 4
  %v7002 = vsel %vm4624, %v6999, %v7001
  %v7003 = vrot.slane %v6665, 4
  %v7004 = vsel %vm4624, %v7001, %v7003
  %v7005 = vrot.slane %v6666, 4
  %v7006 = vsel %vm4624, %v7003, %v7005
  %v7007 = vrot.slane %v6667, 4
  %v7008 = vsel %vm4624, %v7005, %v7007
  %v7009 = vrot.slane %v6668, 4
  %v7010 = vsel %vm4624, %v7007, %v7009
  %v7011 = vrot.slane %v6669, 4
  %v7012 = vsel %vm4624, %v7009, %v7011
  %v7013 = vrot.slane %v6670, 4
  %v7014 = vsel %vm4624, %v7011, %v7013
  %v7015 = vrot.slane %v6671, 4
  %v7016 = vsel %vm4624, %v7013, %v7015
  %v7017 = vrot.slane %v6672, 4
  %v7018 = vsel %vm4624, %v7015, %v7017
  %v7019 = vrot.slane %v6673, 4
  %v7020 = vsel %vm4624, %v7017, %v7019
  %v7021 = vrot.slane %v6674, 4
  %v7022 = vsel %vm4624, %v7019, %v7021
  %v7023 = vrot.slane %v6675, 4
  %v7024 = vsel %vm4624, %v7021, %v7023
  %v7025 = vrot.slane %v6676, 4
  %v7026 = vsel %vm4624, %v7023, %v7025
  %v7027 = vrot.slane %v6677, 4
  %v7028 = vsel %vm4624, %v7025, %v7027
  %v7029 = vrot.slane %v6678, 4
  %v7030 = vsel %vm4624, %v7027, %v7029
  %v7031 = vrot.slane %v6679, 4
  %v7032 = vsel %vm4624, %v7029, %v7031
  %v7033 = vrot.slane %v6680, 4
  %v7034 = vsel %vm4624, %v7031, %v7033
  %v7035 = vrot.slane %v6681, 4
  %v7036 = vsel %vm4624, %v7033, %v7035
  %v7037 = vrot.slane %v6682, 4
  %v7038 = vsel %vm4624, %v7035, %v7037
  %v7039 = vrot.slane %v6683, 4
  %v7040 = vsel %vm4624, %v7037, %v7039
  %v7041 = vrot.slane %v6684, 4
  %v7042 = vsel %vm4624, %v7039, %v7041
  %v7043 = vrot.slane %v6685, 4
  %v7044 = vsel %vm4624, %v7041, %v7043
  %v7045 = vrot.slane %v6686, 4
  %v7046 = vsel %vm4624, %v7043, %v7045
  %v7047 = vrot.slane %v6687, 4
  %v7048 = vsel %vm4624, %v7045, %v7047
  %v7049 = vrot.slane %v6688, 4
  %v7050 = vsel %vm4624, %v7047, %v7049
  %v7051 = vrot.slane %v6689, 4
  %v7052 = vsel %vm4624, %v7049, %v7051
  %v7053 = vrot.slane %v6690, 4
  %v7054 = vsel %vm4624, %v7051, %v7053
  %v7055 = vrot.slane %v6691, 4
  %v7056 = vsel %vm4624, %v7053, %v7055
  %v7057 = vrot.slane %v6692, 4
  %v7058 = vsel %vm4624, %v7055, %v7057
  %v7059 = vrot.slane %v6693, 4
  %v7060 = vsel %vm4624, %v7057, %v7059
  %v7061 = vrot.slane %v6987, 4
  %v7062 = vsel %vm4624, %v7059, %v7061
  %v7063 = vrot.slane %v6988, 4
  %v7064 = vsel %vm4624, %v7061, %v7063
  %7065 = vrot.lane.b32.xlu0 %v6994, 64
  %v7066 = vpop.permute.xlu0 %7065
  %7067 = vrot.lane.b32.xlu0 %v6996, 64
  %v7068 = vpop.permute.xlu0 %7067
  %7069 = vrot.lane.b32.xlu0 %v6998, 64
  %v7070 = vpop.permute.xlu0 %7069
  %7071 = vrot.lane.b32.xlu0 %v7000, 64
  %v7072 = vpop.permute.xlu0 %7071
  %7073 = vrot.lane.b32.xlu0 %v7002, 64
  %v7074 = vpop.permute.xlu0 %7073
  %7075 = vrot.lane.b32.xlu0 %v7004, 64
  %v7076 = vpop.permute.xlu0 %7075
  %7077 = vrot.lane.b32.xlu0 %v7006, 64
  %v7078 = vpop.permute.xlu0 %7077
  %7079 = vrot.lane.b32.xlu0 %v7008, 64
  %v7080 = vpop.permute.xlu0 %7079
  %7081 = vrot.lane.b32.xlu0 %v7010, 64
  %v7082 = vpop.permute.xlu0 %7081
  %7083 = vrot.lane.b32.xlu0 %v7012, 64
  %v7084 = vpop.permute.xlu0 %7083
  %7085 = vrot.lane.b32.xlu0 %v7014, 64
  %v7086 = vpop.permute.xlu0 %7085
  %7087 = vrot.lane.b32.xlu0 %v7016, 64
  %v7088 = vpop.permute.xlu0 %7087
  %7089 = vrot.lane.b32.xlu0 %v7018, 64
  %v7090 = vpop.permute.xlu0 %7089
  %7091 = vrot.lane.b32.xlu0 %v7020, 64
  %v7092 = vpop.permute.xlu0 %7091
  %7093 = vrot.lane.b32.xlu0 %v7022, 64
  %v7094 = vpop.permute.xlu0 %7093
  %7095 = vrot.lane.b32.xlu0 %v7024, 64
  %v7096 = vpop.permute.xlu0 %7095
  %7097 = vrot.lane.b32.xlu0 %v7026, 64
  %v7098 = vpop.permute.xlu0 %7097
  %7099 = vrot.lane.b32.xlu0 %v7028, 64
  %v7100 = vpop.permute.xlu0 %7099
  %7101 = vrot.lane.b32.xlu0 %v7030, 64
  %v7102 = vpop.permute.xlu0 %7101
  %7103 = vrot.lane.b32.xlu0 %v7032, 64
  %v7104 = vpop.permute.xlu0 %7103
  %7105 = vrot.lane.b32.xlu0 %v7034, 64
  %v7106 = vpop.permute.xlu0 %7105
  %7107 = vrot.lane.b32.xlu0 %v7036, 64
  %v7108 = vpop.permute.xlu0 %7107
  %7109 = vrot.lane.b32.xlu0 %v7038, 64
  %v7110 = vpop.permute.xlu0 %7109
  %7111 = vrot.lane.b32.xlu0 %v7040, 64
  %v7112 = vpop.permute.xlu0 %7111
  %7113 = vrot.lane.b32.xlu0 %v7042, 64
  %v7114 = vpop.permute.xlu0 %7113
  %7115 = vrot.lane.b32.xlu0 %v7044, 64
  %v7116 = vpop.permute.xlu0 %7115
  %7117 = vrot.lane.b32.xlu0 %v7046, 64
  %v7118 = vpop.permute.xlu0 %7117
  %7119 = vrot.lane.b32.xlu0 %v7048, 64
  %v7120 = vpop.permute.xlu0 %7119
  %7121 = vrot.lane.b32.xlu0 %v7050, 64
  %v7122 = vpop.permute.xlu0 %7121
  %7123 = vrot.lane.b32.xlu0 %v7052, 64
  %v7124 = vpop.permute.xlu0 %7123
  %7125 = vrot.lane.b32.xlu0 %v7054, 64
  %v7126 = vpop.permute.xlu0 %7125
  %7127 = vrot.lane.b32.xlu0 %v7056, 64
  %v7128 = vpop.permute.xlu0 %7127
  %7129 = vrot.lane.b32.xlu0 %v7058, 64
  %v7130 = vpop.permute.xlu0 %7129
  %7131 = vrot.lane.b32.xlu0 %v7060, 64
  %v7132 = vpop.permute.xlu0 %7131
  %7133 = vrot.lane.b32.xlu0 %v7062, 64
  %v7134 = vpop.permute.xlu0 %7133
  %7135 = vrot.lane.b32.xlu0 %v7064, 64
  %v7136 = vpop.permute.xlu0 %7135
  %v7173 = vadd.f32 %v6950, %v7066
  %v7174 = vadd.f32 %v6951, %v7068
  %v7175 = vadd.f32 %v6952, %v7070
  %v7176 = vadd.f32 %v6953, %v7072
  %v7177 = vadd.f32 %v6954, %v7074
  %v7178 = vadd.f32 %v6955, %v7076
  %v7179 = vadd.f32 %v6956, %v7078
  %v7180 = vadd.f32 %v6957, %v7080
  %v7181 = vadd.f32 %v6958, %v7082
  %v7182 = vadd.f32 %v6959, %v7084
  %v7183 = vadd.f32 %v6960, %v7086
  %v7184 = vadd.f32 %v6961, %v7088
  %v7185 = vadd.f32 %v6962, %v7090
  %v7186 = vadd.f32 %v6963, %v7092
  %v7187 = vadd.f32 %v6964, %v7094
  %v7188 = vadd.f32 %v6965, %v7096
  %v7189 = vadd.f32 %v6966, %v7098
  %v7190 = vadd.f32 %v6967, %v7100
  %v7191 = vadd.f32 %v6968, %v7102
  %v7192 = vadd.f32 %v6969, %v7104
  %v7193 = vadd.f32 %v6970, %v7106
  %v7194 = vadd.f32 %v6971, %v7108
  %v7195 = vadd.f32 %v6972, %v7110
  %v7196 = vadd.f32 %v6973, %v7112
  %v7197 = vadd.f32 %v6974, %v7114
  %v7198 = vadd.f32 %v6975, %v7116
  %v7199 = vadd.f32 %v6976, %v7118
  %v7200 = vadd.f32 %v6977, %v7120
  %v7201 = vadd.f32 %v6978, %v7122
  %v7202 = vadd.f32 %v6979, %v7124
  %v7203 = vadd.f32 %v6980, %v7126
  %v7204 = vadd.f32 %v6981, %v7128
  %v7205 = vadd.f32 %v6982, %v7130
  %v7206 = vadd.f32 %v6983, %v7132
  %v7207 = vadd.f32 %v6984, %v7134
  %v7208 = vadd.f32 %v6985, %v7136
  %v7209 = vld [vmem:[#allocation3 + $0x18] sm:$0xe0]
  %v7210 = vld [vmem:[#allocation3 + $0x378] sm:$0x1f]
  %v7213 = vrot.slane %v7209, 5
  %v7214 = vrot.slane %v6660, 5
  %v7215 = vsel %vm4916, %v7213, %v7214
  %v7216 = vrot.slane %v6661, 5
  %v7217 = vsel %vm4916, %v7214, %v7216
  %v7218 = vrot.slane %v6662, 5
  %v7219 = vsel %vm4916, %v7216, %v7218
  %v7220 = vrot.slane %v6663, 5
  %v7221 = vsel %vm4916, %v7218, %v7220
  %v7222 = vrot.slane %v6664, 5
  %v7223 = vsel %vm4916, %v7220, %v7222
  %v7224 = vrot.slane %v6665, 5
  %v7225 = vsel %vm4916, %v7222, %v7224
  %v7226 = vrot.slane %v6666, 5
  %v7227 = vsel %vm4916, %v7224, %v7226
  %v7228 = vrot.slane %v6667, 5
  %v7229 = vsel %vm4916, %v7226, %v7228
  %v7230 = vrot.slane %v6668, 5
  %v7231 = vsel %vm4916, %v7228, %v7230
  %v7232 = vrot.slane %v6669, 5
  %v7233 = vsel %vm4916, %v7230, %v7232
  %v7234 = vrot.slane %v6670, 5
  %v7235 = vsel %vm4916, %v7232, %v7234
  %v7236 = vrot.slane %v6671, 5
  %v7237 = vsel %vm4916, %v7234, %v7236
  %v7238 = vrot.slane %v6672, 5
  %v7239 = vsel %vm4916, %v7236, %v7238
  %v7240 = vrot.slane %v6673, 5
  %v7241 = vsel %vm4916, %v7238, %v7240
  %v7242 = vrot.slane %v6674, 5
  %v7243 = vsel %vm4916, %v7240, %v7242
  %v7244 = vrot.slane %v6675, 5
  %v7245 = vsel %vm4916, %v7242, %v7244
  %v7246 = vrot.slane %v6676, 5
  %v7247 = vsel %vm4916, %v7244, %v7246
  %v7248 = vrot.slane %v6677, 5
  %v7249 = vsel %vm4916, %v7246, %v7248
  %v7250 = vrot.slane %v6678, 5
  %v7251 = vsel %vm4916, %v7248, %v7250
  %v7252 = vrot.slane %v6679, 5
  %v7253 = vsel %vm4916, %v7250, %v7252
  %v7254 = vrot.slane %v6680, 5
  %v7255 = vsel %vm4916, %v7252, %v7254
  %v7256 = vrot.slane %v6681, 5
  %v7257 = vsel %vm4916, %v7254, %v7256
  %v7258 = vrot.slane %v6682, 5
  %v7259 = vsel %vm4916, %v7256, %v7258
  %v7260 = vrot.slane %v6683, 5
  %v7261 = vsel %vm4916, %v7258, %v7260
  %v7262 = vrot.slane %v6684, 5
  %v7263 = vsel %vm4916, %v7260, %v7262
  %v7264 = vrot.slane %v6685, 5
  %v7265 = vsel %vm4916, %v7262, %v7264
  %v7266 = vrot.slane %v6686, 5
  %v7267 = vsel %vm4916, %v7264, %v7266
  %v7268 = vrot.slane %v6687, 5
  %v7269 = vsel %vm4916, %v7266, %v7268
  %v7270 = vrot.slane %v6688, 5
  %v7271 = vsel %vm4916, %v7268, %v7270
  %v7272 = vrot.slane %v6689, 5
  %v7273 = vsel %vm4916, %v7270, %v7272
  %v7274 = vrot.slane %v6690, 5
  %v7275 = vsel %vm4916, %v7272, %v7274
  %v7276 = vrot.slane %v6691, 5
  %v7277 = vsel %vm4916, %v7274, %v7276
  %v7278 = vrot.slane %v6692, 5
  %v7279 = vsel %vm4916, %v7276, %v7278
  %v7280 = vrot.slane %v6693, 5
  %v7281 = vsel %vm4916, %v7278, %v7280
  %v7282 = vrot.slane %v6987, 5
  %v7283 = vsel %vm4916, %v7280, %v7282
  %v7284 = vrot.slane %v7210, 5
  %v7285 = vsel %vm4916, %v7282, %v7284
  %7286 = vrot.lane.b32.xlu0 %v7215, 32
  %v7287 = vpop.permute.xlu0 %7286
  %7288 = vrot.lane.b32.xlu0 %v7217, 32
  %v7289 = vpop.permute.xlu0 %7288
  %7290 = vrot.lane.b32.xlu0 %v7219, 32
  %v7291 = vpop.permute.xlu0 %7290
  %7292 = vrot.lane.b32.xlu0 %v7221, 32
  %v7293 = vpop.permute.xlu0 %7292
  %7294 = vrot.lane.b32.xlu0 %v7223, 32
  %v7295 = vpop.permute.xlu0 %7294
  %7296 = vrot.lane.b32.xlu0 %v7225, 32
  %v7297 = vpop.permute.xlu0 %7296
  %7298 = vrot.lane.b32.xlu0 %v7227, 32
  %v7299 = vpop.permute.xlu0 %7298
  %7300 = vrot.lane.b32.xlu0 %v7229, 32
  %v7301 = vpop.permute.xlu0 %7300
  %7302 = vrot.lane.b32.xlu0 %v7231, 32
  %v7303 = vpop.permute.xlu0 %7302
  %7304 = vrot.lane.b32.xlu0 %v7233, 32
  %v7305 = vpop.permute.xlu0 %7304
  %7306 = vrot.lane.b32.xlu0 %v7235, 32
  %v7307 = vpop.permute.xlu0 %7306
  %7308 = vrot.lane.b32.xlu0 %v7237, 32
  %v7309 = vpop.permute.xlu0 %7308
  %7310 = vrot.lane.b32.xlu0 %v7239, 32
  %v7311 = vpop.permute.xlu0 %7310
  %7312 = vrot.lane.b32.xlu0 %v7241, 32
  %v7313 = vpop.permute.xlu0 %7312
  %7314 = vrot.lane.b32.xlu0 %v7243, 32
  %v7315 = vpop.permute.xlu0 %7314
  %7316 = vrot.lane.b32.xlu0 %v7245, 32
  %v7317 = vpop.permute.xlu0 %7316
  %7318 = vrot.lane.b32.xlu0 %v7247, 32
  %v7319 = vpop.permute.xlu0 %7318
  %7320 = vrot.lane.b32.xlu0 %v7249, 32
  %v7321 = vpop.permute.xlu0 %7320
  %7322 = vrot.lane.b32.xlu0 %v7251, 32
  %v7323 = vpop.permute.xlu0 %7322
  %7324 = vrot.lane.b32.xlu0 %v7253, 32
  %v7325 = vpop.permute.xlu0 %7324
  %7326 = vrot.lane.b32.xlu0 %v7255, 32
  %v7327 = vpop.permute.xlu0 %7326
  %7328 = vrot.lane.b32.xlu0 %v7257, 32
  %v7329 = vpop.permute.xlu0 %7328
  %7330 = vrot.lane.b32.xlu0 %v7259, 32
  %v7331 = vpop.permute.xlu0 %7330
  %7332 = vrot.lane.b32.xlu0 %v7261, 32
  %v7333 = vpop.permute.xlu0 %7332
  %7334 = vrot.lane.b32.xlu0 %v7263, 32
  %v7335 = vpop.permute.xlu0 %7334
  %7336 = vrot.lane.b32.xlu0 %v7265, 32
  %v7337 = vpop.permute.xlu0 %7336
  %7338 = vrot.lane.b32.xlu0 %v7267, 32
  %v7339 = vpop.permute.xlu0 %7338
  %7340 = vrot.lane.b32.xlu0 %v7269, 32
  %v7341 = vpop.permute.xlu0 %7340
  %7342 = vrot.lane.b32.xlu0 %v7271, 32
  %v7343 = vpop.permute.xlu0 %7342
  %7344 = vrot.lane.b32.xlu0 %v7273, 32
  %v7345 = vpop.permute.xlu0 %7344
  %7346 = vrot.lane.b32.xlu0 %v7275, 32
  %v7347 = vpop.permute.xlu0 %7346
  %7348 = vrot.lane.b32.xlu0 %v7277, 32
  %v7349 = vpop.permute.xlu0 %7348
  %7350 = vrot.lane.b32.xlu0 %v7279, 32
  %v7351 = vpop.permute.xlu0 %7350
  %7352 = vrot.lane.b32.xlu0 %v7281, 32
  %v7353 = vpop.permute.xlu0 %7352
  %7354 = vrot.lane.b32.xlu0 %v7283, 32
  %v7355 = vpop.permute.xlu0 %7354
  %7356 = vrot.lane.b32.xlu0 %v7285, 32
  %v7357 = vpop.permute.xlu0 %7356
  %v7394 = vadd.f32 %v7173, %v7287
  %v7395 = vadd.f32 %v7174, %v7289
  %v7396 = vadd.f32 %v7175, %v7291
  %v7397 = vadd.f32 %v7176, %v7293
  %v7398 = vadd.f32 %v7177, %v7295
  %v7399 = vadd.f32 %v7178, %v7297
  %v7400 = vadd.f32 %v7179, %v7299
  %v7401 = vadd.f32 %v7180, %v7301
  %v7402 = vadd.f32 %v7181, %v7303
  %v7403 = vadd.f32 %v7182, %v7305
  %v7404 = vadd.f32 %v7183, %v7307
  %v7405 = vadd.f32 %v7184, %v7309
  %v7406 = vadd.f32 %v7185, %v7311
  %v7407 = vadd.f32 %v7186, %v7313
  %v7408 = vadd.f32 %v7187, %v7315
  %v7409 = vadd.f32 %v7188, %v7317
  %v7410 = vadd.f32 %v7189, %v7319
  %v7411 = vadd.f32 %v7190, %v7321
  %v7412 = vadd.f32 %v7191, %v7323
  %v7413 = vadd.f32 %v7192, %v7325
  %v7414 = vadd.f32 %v7193, %v7327
  %v7415 = vadd.f32 %v7194, %v7329
  %v7416 = vadd.f32 %v7195, %v7331
  %v7417 = vadd.f32 %v7196, %v7333
  %v7418 = vadd.f32 %v7197, %v7335
  %v7419 = vadd.f32 %v7198, %v7337
  %v7420 = vadd.f32 %v7199, %v7339
  %v7421 = vadd.f32 %v7200, %v7341
  %v7422 = vadd.f32 %v7201, %v7343
  %v7423 = vadd.f32 %v7202, %v7345
  %v7424 = vadd.f32 %v7203, %v7347
  %v7425 = vadd.f32 %v7204, %v7349
  %v7426 = vadd.f32 %v7205, %v7351
  %v7427 = vadd.f32 %v7206, %v7353
  %v7428 = vadd.f32 %v7207, %v7355
  %v7429 = vadd.f32 %v7208, %v7357
  %v7430 = vld [vmem:[#allocation3 + $0x50] sm:$0xff]
  %v7431 = vld [vmem:[#allocation3 + $0x68] sm:$0xff]
  %v7432 = vld [vmem:[#allocation3 + $0x80] sm:$0xff]
  %v7433 = vld [vmem:[#allocation3 + $0x98] sm:$0xff]
  %v7434 = vld [vmem:[#allocation3 + $0xb0] sm:$0xff]
  %v7435 = vld [vmem:[#allocation3 + $0xc8] sm:$0xff]
  %v7436 = vld [vmem:[#allocation3 + $0xe0] sm:$0xff]
  %v7437 = vld [vmem:[#allocation3 + $0xf8] sm:$0xff]
  %v7438 = vld [vmem:[#allocation3 + $0x110] sm:$0xff]
  %v7439 = vld [vmem:[#allocation3 + $0x128] sm:$0xff]
  %v7440 = vld [vmem:[#allocation3 + $0x140] sm:$0xff]
  %v7441 = vld [vmem:[#allocation3 + $0x158] sm:$0xff]
  %v7442 = vld [vmem:[#allocation3 + $0x170] sm:$0xff]
  %v7443 = vld [vmem:[#allocation3 + $0x188] sm:$0xff]
  %v7444 = vld [vmem:[#allocation3 + $0x1a0] sm:$0xff]
  %v7445 = vld [vmem:[#allocation3 + $0x1b8] sm:$0xff]
  %v7446 = vld [vmem:[#allocation3 + $0x1d0] sm:$0xff]
  %v7447 = vld [vmem:[#allocation3 + $0x1e8] sm:$0xff]
  %v7448 = vld [vmem:[#allocation3 + $0x200] sm:$0xff]
  %v7449 = vld [vmem:[#allocation3 + $0x218] sm:$0xff]
  %v7450 = vld [vmem:[#allocation3 + $0x230] sm:$0xff]
  %v7451 = vld [vmem:[#allocation3 + $0x248] sm:$0xff]
  %v7452 = vld [vmem:[#allocation3 + $0x260] sm:$0xff]
  %v7453 = vld [vmem:[#allocation3 + $0x278] sm:$0xff]
  %v7454 = vld [vmem:[#allocation3 + $0x290] sm:$0xff]
  %v7455 = vld [vmem:[#allocation3 + $0x2a8] sm:$0xff]
  %v7456 = vld [vmem:[#allocation3 + $0x2c0] sm:$0xff]
  %v7457 = vld [vmem:[#allocation3 + $0x2d8] sm:$0xff]
  %v7458 = vld [vmem:[#allocation3 + $0x2f0] sm:$0xff]
  %v7459 = vld [vmem:[#allocation3 + $0x308] sm:$0xff]
  %v7460 = vld [vmem:[#allocation3 + $0x320] sm:$0xff]
  %v7461 = vld [vmem:[#allocation3 + $0x338] sm:$0xff]
  %v7462 = vld [vmem:[#allocation3 + $0x350] sm:$0xff]
  %v7463 = vld [vmem:[#allocation3 + $0x368] sm:$0xff]
  %v7464 = vld [vmem:[#allocation3 + $0x380] sm:$0xff]
  %v7465 = vld [vmem:[#allocation3 + $0x398] sm:$0xff]
  %v7466 = vadd.f32 %v7394, %v7430
  %v7467 = vadd.f32 %v7395, %v7431
  %v7468 = vadd.f32 %v7396, %v7432
  %v7469 = vadd.f32 %v7397, %v7433
  %v7470 = vadd.f32 %v7398, %v7434
  %v7471 = vadd.f32 %v7399, %v7435
  %v7472 = vadd.f32 %v7400, %v7436
  %v7473 = vadd.f32 %v7401, %v7437
  %v7474 = vadd.f32 %v7402, %v7438
  %v7475 = vadd.f32 %v7403, %v7439
  %v7476 = vadd.f32 %v7404, %v7440
  %v7477 = vadd.f32 %v7405, %v7441
  %v7478 = vadd.f32 %v7406, %v7442
  %v7479 = vadd.f32 %v7407, %v7443
  %v7480 = vadd.f32 %v7408, %v7444
  %v7481 = vadd.f32 %v7409, %v7445
  %v7482 = vadd.f32 %v7410, %v7446
  %v7483 = vadd.f32 %v7411, %v7447
  %v7484 = vadd.f32 %v7412, %v7448
  %v7485 = vadd.f32 %v7413, %v7449
  %v7486 = vadd.f32 %v7414, %v7450
  %v7487 = vadd.f32 %v7415, %v7451
  %v7488 = vadd.f32 %v7416, %v7452
  %v7489 = vadd.f32 %v7417, %v7453
  %v7490 = vadd.f32 %v7418, %v7454
  %v7491 = vadd.f32 %v7419, %v7455
  %v7492 = vadd.f32 %v7420, %v7456
  %v7493 = vadd.f32 %v7421, %v7457
  %v7494 = vadd.f32 %v7422, %v7458
  %v7495 = vadd.f32 %v7423, %v7459
  %v7496 = vadd.f32 %v7424, %v7460
  %v7497 = vadd.f32 %v7425, %v7461
  %v7498 = vadd.f32 %v7426, %v7462
  %v7499 = vadd.f32 %v7427, %v7463
  %v7500 = vadd.f32 %v7428, %v7464
  %v7501 = vadd.f32 %v7429, %v7465
  %v7502 = vld [vmem:[#allocation3 + $0x50] sm:$0xfe]
  %v7503 = vld [vmem:[#allocation3 + $0x3b0] sm:$0x1]
  %v7541 = vrot.slane %v7502, 1
  %v7542 = vrot.slane %v7431, 1
  %v7543 = vsel %vm4178, %v7541, %v7542
  %v7544 = vrot.slane %v7432, 1
  %v7545 = vsel %vm4178, %v7542, %v7544
  %v7546 = vrot.slane %v7433, 1
  %v7547 = vsel %vm4178, %v7544, %v7546
  %v7548 = vrot.slane %v7434, 1
  %v7549 = vsel %vm4178, %v7546, %v7548
  %v7550 = vrot.slane %v7435, 1
  %v7551 = vsel %vm4178, %v7548, %v7550
  %v7552 = vrot.slane %v7436, 1
  %v7553 = vsel %vm4178, %v7550, %v7552
  %v7554 = vrot.slane %v7437, 1
  %v7555 = vsel %vm4178, %v7552, %v7554
  %v7556 = vrot.slane %v7438, 1
  %v7557 = vsel %vm4178, %v7554, %v7556
  %v7558 = vrot.slane %v7439, 1
  %v7559 = vsel %vm4178, %v7556, %v7558
  %v7560 = vrot.slane %v7440, 1
  %v7561 = vsel %vm4178, %v7558, %v7560
  %v7562 = vrot.slane %v7441, 1
  %v7563 = vsel %vm4178, %v7560, %v7562
  %v7564 = vrot.slane %v7442, 1
  %v7565 = vsel %vm4178, %v7562, %v7564
  %v7566 = vrot.slane %v7443, 1
  %v7567 = vsel %vm4178, %v7564, %v7566
  %v7568 = vrot.slane %v7444, 1
  %v7569 = vsel %vm4178, %v7566, %v7568
  %v7570 = vrot.slane %v7445, 1
  %v7571 = vsel %vm4178, %v7568, %v7570
  %v7572 = vrot.slane %v7446, 1
  %v7573 = vsel %vm4178, %v7570, %v7572
  %v7574 = vrot.slane %v7447, 1
  %v7575 = vsel %vm4178, %v7572, %v7574
  %v7576 = vrot.slane %v7448, 1
  %v7577 = vsel %vm4178, %v7574, %v7576
  %v7578 = vrot.slane %v7449, 1
  %v7579 = vsel %vm4178, %v7576, %v7578
  %v7580 = vrot.slane %v7450, 1
  %v7581 = vsel %vm4178, %v7578, %v7580
  %v7582 = vrot.slane %v7451, 1
  %v7583 = vsel %vm4178, %v7580, %v7582
  %v7584 = vrot.slane %v7452, 1
  %v7585 = vsel %vm4178, %v7582, %v7584
  %v7586 = vrot.slane %v7453, 1
  %v7587 = vsel %vm4178, %v7584, %v7586
  %v7588 = vrot.slane %v7454, 1
  %v7589 = vsel %vm4178, %v7586, %v7588
  %v7590 = vrot.slane %v7455, 1
  %v7591 = vsel %vm4178, %v7588, %v7590
  %v7592 = vrot.slane %v7456, 1
  %v7593 = vsel %vm4178, %v7590, %v7592
  %v7594 = vrot.slane %v7457, 1
  %v7595 = vsel %vm4178, %v7592, %v7594
  %v7596 = vrot.slane %v7458, 1
  %v7597 = vsel %vm4178, %v7594, %v7596
  %v7598 = vrot.slane %v7459, 1
  %v7599 = vsel %vm4178, %v7596, %v7598
  %v7600 = vrot.slane %v7460, 1
  %v7601 = vsel %vm4178, %v7598, %v7600
  %v7602 = vrot.slane %v7461, 1
  %v7603 = vsel %vm4178, %v7600, %v7602
  %v7604 = vrot.slane %v7462, 1
  %v7605 = vsel %vm4178, %v7602, %v7604
  %v7606 = vrot.slane %v7463, 1
  %v7607 = vsel %vm4178, %v7604, %v7606
  %v7608 = vrot.slane %v7464, 1
  %v7609 = vsel %vm4178, %v7606, %v7608
  %v7610 = vrot.slane %v7465, 1
  %v7611 = vsel %vm4178, %v7608, %v7610
  %v7612 = vrot.slane %v7503, 1
  %v7613 = vsel %vm4178, %v7610, %v7612
  %7614 = vrot.lane.b32.xlu0 %v7543, 96
  %v7615 = vpop.permute.xlu0 %7614
  %7616 = vrot.lane.b32.xlu0 %v7545, 96
  %v7617 = vpop.permute.xlu0 %7616
  %7618 = vrot.lane.b32.xlu0 %v7547, 96
  %v7619 = vpop.permute.xlu0 %7618
  %7620 = vrot.lane.b32.xlu0 %v7549, 96
  %v7621 = vpop.permute.xlu0 %7620
  %7622 = vrot.lane.b32.xlu0 %v7551, 96
  %v7623 = vpop.permute.xlu0 %7622
  %7624 = vrot.lane.b32.xlu0 %v7553, 96
  %v7625 = vpop.permute.xlu0 %7624
  %7626 = vrot.lane.b32.xlu0 %v7555, 96
  %v7627 = vpop.permute.xlu0 %7626
  %7628 = vrot.lane.b32.xlu0 %v7557, 96
  %v7629 = vpop.permute.xlu0 %7628
  %7630 = vrot.lane.b32.xlu0 %v7559, 96
  %v7631 = vpop.permute.xlu0 %7630
  %7632 = vrot.lane.b32.xlu0 %v7561, 96
  %v7633 = vpop.permute.xlu0 %7632
  %7634 = vrot.lane.b32.xlu0 %v7563, 96
  %v7635 = vpop.permute.xlu0 %7634
  %7636 = vrot.lane.b32.xlu0 %v7565, 96
  %v7637 = vpop.permute.xlu0 %7636
  %7638 = vrot.lane.b32.xlu0 %v7567, 96
  %v7639 = vpop.permute.xlu0 %7638
  %7640 = vrot.lane.b32.xlu0 %v7569, 96
  %v7641 = vpop.permute.xlu0 %7640
  %7642 = vrot.lane.b32.xlu0 %v7571, 96
  %v7643 = vpop.permute.xlu0 %7642
  %7644 = vrot.lane.b32.xlu0 %v7573, 96
  %v7645 = vpop.permute.xlu0 %7644
  %7646 = vrot.lane.b32.xlu0 %v7575, 96
  %v7647 = vpop.permute.xlu0 %7646
  %7648 = vrot.lane.b32.xlu0 %v7577, 96
  %v7649 = vpop.permute.xlu0 %7648
  %7650 = vrot.lane.b32.xlu0 %v7579, 96
  %v7651 = vpop.permute.xlu0 %7650
  %7652 = vrot.lane.b32.xlu0 %v7581, 96
  %v7653 = vpop.permute.xlu0 %7652
  %7654 = vrot.lane.b32.xlu0 %v7583, 96
  %v7655 = vpop.permute.xlu0 %7654
  %7656 = vrot.lane.b32.xlu0 %v7585, 96
  %v7657 = vpop.permute.xlu0 %7656
  %7658 = vrot.lane.b32.xlu0 %v7587, 96
  %v7659 = vpop.permute.xlu0 %7658
  %7660 = vrot.lane.b32.xlu0 %v7589, 96
  %v7661 = vpop.permute.xlu0 %7660
  %7662 = vrot.lane.b32.xlu0 %v7591, 96
  %v7663 = vpop.permute.xlu0 %7662
  %7664 = vrot.lane.b32.xlu0 %v7593, 96
  %v7665 = vpop.permute.xlu0 %7664
  %7666 = vrot.lane.b32.xlu0 %v7595, 96
  %v7667 = vpop.permute.xlu0 %7666
  %7668 = vrot.lane.b32.xlu0 %v7597, 96
  %v7669 = vpop.permute.xlu0 %7668
  %7670 = vrot.lane.b32.xlu0 %v7599, 96
  %v7671 = vpop.permute.xlu0 %7670
  %7672 = vrot.lane.b32.xlu0 %v7601, 96
  %v7673 = vpop.permute.xlu0 %7672
  %7674 = vrot.lane.b32.xlu0 %v7603, 96
  %v7675 = vpop.permute.xlu0 %7674
  %7676 = vrot.lane.b32.xlu0 %v7605, 96
  %v7677 = vpop.permute.xlu0 %7676
  %7678 = vrot.lane.b32.xlu0 %v7607, 96
  %v7679 = vpop.permute.xlu0 %7678
  %7680 = vrot.lane.b32.xlu0 %v7609, 96
  %v7681 = vpop.permute.xlu0 %7680
  %7682 = vrot.lane.b32.xlu0 %v7611, 96
  %v7683 = vpop.permute.xlu0 %7682
  %7684 = vrot.lane.b32.xlu0 %v7613, 96
  %v7685 = vpop.permute.xlu0 %7684
  %v7722 = vadd.f32 %v7466, %v7615
  %v7723 = vadd.f32 %v7467, %v7617
  %v7724 = vadd.f32 %v7468, %v7619
  %v7725 = vadd.f32 %v7469, %v7621
  %v7726 = vadd.f32 %v7470, %v7623
  %v7727 = vadd.f32 %v7471, %v7625
  %v7728 = vadd.f32 %v7472, %v7627
  %v7729 = vadd.f32 %v7473, %v7629
  %v7730 = vadd.f32 %v7474, %v7631
  %v7731 = vadd.f32 %v7475, %v7633
  %v7732 = vadd.f32 %v7476, %v7635
  %v7733 = vadd.f32 %v7477, %v7637
  %v7734 = vadd.f32 %v7478, %v7639
  %v7735 = vadd.f32 %v7479, %v7641
  %v7736 = vadd.f32 %v7480, %v7643
  %v7737 = vadd.f32 %v7481, %v7645
  %v7738 = vadd.f32 %v7482, %v7647
  %v7739 = vadd.f32 %v7483, %v7649
  %v7740 = vadd.f32 %v7484, %v7651
  %v7741 = vadd.f32 %v7485, %v7653
  %v7742 = vadd.f32 %v7486, %v7655
  %v7743 = vadd.f32 %v7487, %v7657
  %v7744 = vadd.f32 %v7488, %v7659
  %v7745 = vadd.f32 %v7489, %v7661
  %v7746 = vadd.f32 %v7490, %v7663
  %v7747 = vadd.f32 %v7491, %v7665
  %v7748 = vadd.f32 %v7492, %v7667
  %v7749 = vadd.f32 %v7493, %v7669
  %v7750 = vadd.f32 %v7494, %v7671
  %v7751 = vadd.f32 %v7495, %v7673
  %v7752 = vadd.f32 %v7496, %v7675
  %v7753 = vadd.f32 %v7497, %v7677
  %v7754 = vadd.f32 %v7498, %v7679
  %v7755 = vadd.f32 %v7499, %v7681
  %v7756 = vadd.f32 %v7500, %v7683
  %v7757 = vadd.f32 %v7501, %v7685
  %v7758 = vld [vmem:[#allocation2 + $0x120] sm:$0xf]
  %v7759 = vld [vmem:[#allocation2 + $0x124] sm:$0xf]
  %v7760 = vld [vmem:[#allocation2 + $0x128] sm:$0xf]
  %v7761 = vld [vmem:[#allocation2 + $0x12c] sm:$0xf]
  %v7762 = vld [vmem:[#allocation2 + $0x130] sm:$0xf]
  %v7763 = vld [vmem:[#allocation2 + $0x134] sm:$0xf]
  %v7764 = vld [vmem:[#allocation2 + $0x138] sm:$0xf]
  %v7765 = vld [vmem:[#allocation2 + $0x13c] sm:$0xf]
  %v7766 = vld [vmem:[#allocation2 + $0x140] sm:$0xf]
  %v7767 = vld [vmem:[#allocation2 + $0x144] sm:$0xf]
  %v7768 = vld [vmem:[#allocation2 + $0x148] sm:$0xf]
  %v7769 = vld [vmem:[#allocation2 + $0x14c] sm:$0xf]
  %v7770 = vld [vmem:[#allocation2 + $0x150] sm:$0xf]
  %v7771 = vld [vmem:[#allocation2 + $0x154] sm:$0xf]
  %v7772 = vld [vmem:[#allocation2 + $0x158] sm:$0xf]
  %v7773 = vld [vmem:[#allocation2 + $0x15c] sm:$0xf]
  %v7774 = vld [vmem:[#allocation2 + $0x160] sm:$0xf]
  %v7775 = vld [vmem:[#allocation2 + $0x164] sm:$0xf]
  %v7776 = vld [vmem:[#allocation2 + $0x168] sm:$0xf]
  %v7777 = vld [vmem:[#allocation2 + $0x16c] sm:$0xf]
  %v7778 = vld [vmem:[#allocation2 + $0x170] sm:$0xf]
  %v7779 = vld [vmem:[#allocation2 + $0x174] sm:$0xf]
  %v7780 = vld [vmem:[#allocation2 + $0x178] sm:$0xf]
  %v7781 = vld [vmem:[#allocation2 + $0x17c] sm:$0xf]
  %v7782 = vld [vmem:[#allocation2 + $0x180] sm:$0xf]
  %v7783 = vld [vmem:[#allocation2 + $0x184] sm:$0xf]
  %v7784 = vld [vmem:[#allocation2 + $0x188] sm:$0xf]
  %v7785 = vld [vmem:[#allocation2 + $0x18c] sm:$0xf]
  %v7786 = vld [vmem:[#allocation2 + $0x190] sm:$0xf]
  %v7787 = vld [vmem:[#allocation2 + $0x194] sm:$0xf]
  %v7788 = vld [vmem:[#allocation2 + $0x198] sm:$0xf]
  %v7789 = vld [vmem:[#allocation2 + $0x19c] sm:$0xf]
  %v7790 = vld [vmem:[#allocation2 + $0x1a0] sm:$0xf]
  %v7791 = vld [vmem:[#allocation2 + $0x1a4] sm:$0xf]
  %v7792 = vld [vmem:[#allocation2 + $0x1a8] sm:$0xf]
  %v7793 = vld [vmem:[#allocation2 + $0x1ac] sm:$0xf]
  %v7794 = vld [vmem:[#allocation2 + $0x1b0] sm:$0xf]
  %v7795 = vld [vmem:[#allocation2 + $0x1b4] sm:$0xf]
  %v7796 = vld [vmem:[#allocation2 + $0x1b8] sm:$0xf]
  %v7797 = vld [vmem:[#allocation2 + $0x1bc] sm:$0xf]
  %v7798 = vld [vmem:[%s2 + $0x60] sm:$0xff]
  %v7799 = vld [vmem:[%s2 + $0x68] sm:$0xf]
  %v7800 = vld [vmem:[%s2 + $0x6c] sm:$0xff]
  %v7801 = vld [vmem:[%s2 + $0x74] sm:$0xf]
  %v7802 = vld [vmem:[%s2 + $0x78] sm:$0xff]
  %v7803 = vld [vmem:[%s2 + $0x80] sm:$0xf]
  %v7804 = vld [vmem:[%s2 + $0x84] sm:$0xff]
  %v7805 = vld [vmem:[%s2 + $0x8c] sm:$0xf]
  %v7846 = vunpack.c.l.b16 %v7758
  %v7847 = vunpack.c.l.b16 %v7759
  %v7848 = vunpack.c.l.b16 %v7760
  %v7849 = vunpack.c.l.b16 %v7761
  %v7850 = vunpack.c.l.b16 %v7762
  %v7851 = vunpack.c.l.b16 %v7763
  %v7852 = vunpack.c.l.b16 %v7764
  %v7853 = vunpack.c.l.b16 %v7765
  %v7854 = vunpack.c.l.b16 %v7766
  %v7855 = vunpack.c.l.b16 %v7767
  %v7856 = vunpack.c.l.b16 %v7768
  %v7857 = vunpack.c.l.b16 %v7769
  %v7858 = vunpack.c.l.b16 %v7770
  %v7859 = vunpack.c.l.b16 %v7771
  %v7860 = vunpack.c.l.b16 %v7772
  %v7861 = vunpack.c.l.b16 %v7773
  %v7862 = vunpack.c.l.b16 %v7774
  %v7863 = vunpack.c.l.b16 %v7775
  %v7864 = vunpack.c.l.b16 %v7776
  %v7865 = vunpack.c.l.b16 %v7777
  %v7866 = vunpack.c.l.b16 %v7778
  %v7867 = vunpack.c.l.b16 %v7779
  %v7868 = vunpack.c.l.b16 %v7780
  %v7869 = vunpack.c.l.b16 %v7781
  %v7870 = vunpack.c.l.b16 %v7782
  %v7871 = vunpack.c.l.b16 %v7783
  %v7872 = vunpack.c.l.b16 %v7784
  %v7873 = vunpack.c.l.b16 %v7785
  %v7874 = vunpack.c.l.b16 %v7786
  %v7875 = vunpack.c.l.b16 %v7787
  %v7876 = vunpack.c.l.b16 %v7788
  %v7877 = vunpack.c.l.b16 %v7789
  %v7878 = vunpack.c.l.b16 %v7790
  %v7879 = vunpack.c.l.b16 %v7791
  %v7880 = vunpack.c.l.b16 %v7792
  %v7881 = vunpack.c.l.b16 %v7793
  %v7882 = vunpack.c.l.b16 %v7794
  %v7883 = vunpack.c.l.b16 %v7795
  %v7884 = vunpack.c.l.b16 %v7796
  %v7885 = vunpack.c.l.b16 %v7797
  %v7886 = vpack.c.b16 %v7847, %v7846
  %v7887 = vpack.c.b16 %v7849, %v7848
  %v7888 = vpack.c.b16 %v7851, %v7850
  %v7889 = vpack.c.b16 %v7853, %v7852
  %v7890 = vpack.c.b16 %v7855, %v7854
  %v7891 = vpack.c.b16 %v7857, %v7856
  %v7892 = vpack.c.b16 %v7859, %v7858
  %v7893 = vpack.c.b16 %v7861, %v7860
  %v7894 = vpack.c.b16 %v7863, %v7862
  %v7895 = vpack.c.b16 %v7865, %v7864
  %v7896 = vpack.c.b16 %v7867, %v7866
  %v7897 = vpack.c.b16 %v7869, %v7868
  %v7898 = vpack.c.b16 %v7871, %v7870
  %v7899 = vpack.c.b16 %v7873, %v7872
  %v7900 = vpack.c.b16 %v7875, %v7874
  %v7901 = vpack.c.b16 %v7877, %v7876
  %v7902 = vpack.c.b16 %v7879, %v7878
  %v7903 = vpack.c.b16 %v7881, %v7880
  %v7904 = vpack.c.b16 %v7883, %v7882
  %v7905 = vpack.c.b16 %v7885, %v7884
  %v7914 = vunpack.c.l.b16 %v7798
  %v7915 = vunpack.c.h.b16 %v7798
  %v7916 = vunpack.c.l.b16 %v7799
  %v7917 = vunpack.c.l.b16 %v7800
  %v7918 = vunpack.c.h.b16 %v7800
  %v7919 = vunpack.c.l.b16 %v7801
  %v7920 = vunpack.c.l.b16 %v7802
  %v7921 = vunpack.c.h.b16 %v7802
  %v7922 = vunpack.c.l.b16 %v7803
  %v7923 = vunpack.c.l.b16 %v7804
  %v7924 = vunpack.c.h.b16 %v7804
  %v7925 = vunpack.c.l.b16 %v7805
  %v7926 = vpack.c.b16 %v7917, %v7914
  %v7927 = vpack.c.b16 %v7918, %v7915
  %v7928 = vpack.c.b16 %v7919, %v7916
  %v7929 = vpack.c.b16 %v7923, %v7920
  %v7930 = vpack.c.b16 %v7924, %v7921
  %v7931 = vpack.c.b16 %v7925, %v7922
  %v7939 = vsel %vm547, %v7886, 0
  %v7942 = vsel %vm547, %v7887, 0
  %v7945 = vsel %vm547, %v7888, 0
  %v7948 = vsel %vm547, %v7889, 0
  %v7951 = vsel %vm547, %v7890, 0
  %v7954 = vsel %vm547, %v7891, 0
  %v7957 = vsel %vm547, %v7892, 0
  %v7960 = vsel %vm547, %v7893, 0
  %v7963 = vsel %vm547, %v7894, 0
  %v7966 = vsel %vm547, %v7895, 0
  %v7969 = vsel %vm547, %v7896, 0
  %v7972 = vsel %vm547, %v7897, 0
  %v7975 = vsel %vm547, %v7898, 0
  %v7978 = vsel %vm547, %v7899, 0
  %v7981 = vsel %vm547, %v7900, 0
  %v7984 = vsel %vm547, %v7901, 0
  %v7987 = vsel %vm547, %v7902, 0
  %v7990 = vsel %vm547, %v7903, 0
  %v7993 = vsel %vm547, %v7904, 0
  %v7996 = vsel %vm547, %v7905, 0
  %7998 = vmatprep.subr.bf16.mxu0 0
  %7999 = vmatpush1.bf16.msra.mxu0 0
  %8000 = vmatprep.subr.bf16.mxu0 0
  %8001 = vmatpush1.bf16.msra.mxu0 0
  %8002 = vmatprep.subr.bf16.mxu0 0
  %8003 = vmatpush1.bf16.msra.mxu0 0
  %8004 = vmatprep.subr.bf16.mxu0 0
  %8005 = vmatpush1.bf16.msra.mxu0 0
  %8006 = vmatprep.subr.bf16.mxu0 0
  %8007 = vmatpush1.bf16.msra.mxu0 0
  %8008 = vmatprep.subr.bf16.mxu0 0
  %8009 = vmatpush1.bf16.msra.mxu0 0
  %8010 = vmatprep.subr.bf16.mxu0 %v7930
  %8011 = vmatpush1.bf16.msra.mxu0 %v7929
  %8012 = vmatprep.subr.bf16.mxu0 %v7927
  %8013 = vmatpush1.bf16.msra.mxu0 %v7926
  %8014 = vmatprep.subr.bf16.mxu0 0
  %8015 = vmatpush2.bf16.msra.mxu0 0
  %8016 = vmatprep.subr.bf16.mxu0 0
  %8017 = vmatpush2.bf16.msra.mxu0 0
  %8018 = vmatprep.subr.bf16.mxu0 0
  %8019 = vmatpush2.bf16.msra.mxu0 0
  %8020 = vmatprep.subr.bf16.mxu0 0
  %8021 = vmatpush2.bf16.msra.mxu0 0
  %8022 = vmatprep.subr.bf16.mxu0 0
  %8023 = vmatpush2.bf16.msra.mxu0 0
  %8024 = vmatprep.subr.bf16.mxu0 0
  %8025 = vmatpush2.bf16.msra.mxu0 0
  %8026 = vmatprep.subr.bf16.mxu0 0
  %8027 = vmatpush2.bf16.msra.mxu0 0
  %8028 = vmatprep.subr.bf16.mxu0 0
  %8029 = vmatpush2.bf16.msra.mxu0 0
  %8030 = vmatprep.mubr.bf16.mxu0 0
  %8031 = vmatmul.mubr.bf16.gmra.mxu0 %v7939
  %v8032 = vpop.f32.mrf.mxu0
  %v8033 = vadd.f32 0.0, %v8032
  %v8034 = vpop.f32.mrf.mxu0
  %v8035 = vadd.f32 0.0, %v8034
  %v8036 = vpop.f32.mrf.mxu0
  %v8037 = vadd.f32 0.0, %v8036
  %v8038 = vpop.f32.mrf.mxu0
  %v8039 = vadd.f32 0.0, %v8038
  %8040 = vmatprep.mubr.bf16.mxu0 0
  %8041 = vmatmul.mubr.bf16.gmra.mxu0 %v7942
  %v8042 = vpop.f32.mrf.mxu0
  %v8043 = vadd.f32 0.0, %v8042
  %v8044 = vpop.f32.mrf.mxu0
  %v8045 = vadd.f32 0.0, %v8044
  %v8046 = vpop.f32.mrf.mxu0
  %v8047 = vadd.f32 0.0, %v8046
  %v8048 = vpop.f32.mrf.mxu0
  %v8049 = vadd.f32 0.0, %v8048
  %8050 = vmatprep.mubr.bf16.mxu0 0
  %8051 = vmatmul.mubr.bf16.gmra.mxu0 %v7945
  %v8052 = vpop.f32.mrf.mxu0
  %v8053 = vadd.f32 0.0, %v8052
  %v8054 = vpop.f32.mrf.mxu0
  %v8055 = vadd.f32 0.0, %v8054
  %v8056 = vpop.f32.mrf.mxu0
  %v8057 = vadd.f32 0.0, %v8056
  %v8058 = vpop.f32.mrf.mxu0
  %v8059 = vadd.f32 0.0, %v8058
  %8060 = vmatprep.mubr.bf16.mxu0 0
  %8061 = vmatmul.mubr.bf16.gmra.mxu0 %v7948
  %v8062 = vpop.f32.mrf.mxu0
  %v8063 = vadd.f32 0.0, %v8062
  %v8064 = vpop.f32.mrf.mxu0
  %v8065 = vadd.f32 0.0, %v8064
  %v8066 = vpop.f32.mrf.mxu0
  %v8067 = vadd.f32 0.0, %v8066
  %v8068 = vpop.f32.mrf.mxu0
  %v8069 = vadd.f32 0.0, %v8068
  %8070 = vmatprep.mubr.bf16.mxu0 0
  %8071 = vmatmul.mubr.bf16.gmra.mxu0 %v7951
  %v8072 = vpop.f32.mrf.mxu0
  %v8073 = vadd.f32 0.0, %v8072
  %v8074 = vpop.f32.mrf.mxu0
  %v8075 = vadd.f32 0.0, %v8074
  %v8076 = vpop.f32.mrf.mxu0
  %v8077 = vadd.f32 0.0, %v8076
  %v8078 = vpop.f32.mrf.mxu0
  %v8079 = vadd.f32 0.0, %v8078
  %8080 = vmatprep.mubr.bf16.mxu0 0
  %8081 = vmatmul.mubr.bf16.gmra.mxu0 %v7954
  %v8082 = vpop.f32.mrf.mxu0
  %v8083 = vadd.f32 0.0, %v8082
  %v8084 = vpop.f32.mrf.mxu0
  %v8085 = vadd.f32 0.0, %v8084
  %v8086 = vpop.f32.mrf.mxu0
  %v8087 = vadd.f32 0.0, %v8086
  %v8088 = vpop.f32.mrf.mxu0
  %v8089 = vadd.f32 0.0, %v8088
  %8090 = vmatprep.mubr.bf16.mxu0 0
  %8091 = vmatmul.mubr.bf16.gmra.mxu0 %v7957
  %v8092 = vpop.f32.mrf.mxu0
  %v8093 = vadd.f32 0.0, %v8092
  %v8094 = vpop.f32.mrf.mxu0
  %v8095 = vadd.f32 0.0, %v8094
  %v8096 = vpop.f32.mrf.mxu0
  %v8097 = vadd.f32 0.0, %v8096
  %v8098 = vpop.f32.mrf.mxu0
  %v8099 = vadd.f32 0.0, %v8098
  %8100 = vmatprep.mubr.bf16.mxu0 0
  %8101 = vmatmul.mubr.bf16.gmra.mxu0 %v7960
  %v8102 = vpop.f32.mrf.mxu0
  %v8103 = vadd.f32 0.0, %v8102
  %v8104 = vpop.f32.mrf.mxu0
  %v8105 = vadd.f32 0.0, %v8104
  %v8106 = vpop.f32.mrf.mxu0
  %v8107 = vadd.f32 0.0, %v8106
  %v8108 = vpop.f32.mrf.mxu0
  %v8109 = vadd.f32 0.0, %v8108
  %8110 = vmatprep.mubr.bf16.mxu0 0
  %8111 = vmatmul.mubr.bf16.gmra.mxu0 %v7963
  %v8112 = vpop.f32.mrf.mxu0
  %v8113 = vadd.f32 0.0, %v8112
  %v8114 = vpop.f32.mrf.mxu0
  %v8115 = vadd.f32 0.0, %v8114
  %v8116 = vpop.f32.mrf.mxu0
  %v8117 = vadd.f32 0.0, %v8116
  %v8118 = vpop.f32.mrf.mxu0
  %v8119 = vadd.f32 0.0, %v8118
  %8120 = vmatprep.mubr.bf16.mxu0 0
  %8121 = vmatmul.mubr.bf16.gmra.mxu0 %v7966
  %v8122 = vpop.f32.mrf.mxu0
  %v8123 = vadd.f32 0.0, %v8122
  %v8124 = vpop.f32.mrf.mxu0
  %v8125 = vadd.f32 0.0, %v8124
  %v8126 = vpop.f32.mrf.mxu0
  %v8127 = vadd.f32 0.0, %v8126
  %v8128 = vpop.f32.mrf.mxu0
  %v8129 = vadd.f32 0.0, %v8128
  %8130 = vmatprep.mubr.bf16.mxu0 0
  %8131 = vmatmul.mubr.bf16.gmra.mxu0 %v7969
  %v8132 = vpop.f32.mrf.mxu0
  %v8133 = vadd.f32 0.0, %v8132
  %v8134 = vpop.f32.mrf.mxu0
  %v8135 = vadd.f32 0.0, %v8134
  %v8136 = vpop.f32.mrf.mxu0
  %v8137 = vadd.f32 0.0, %v8136
  %v8138 = vpop.f32.mrf.mxu0
  %v8139 = vadd.f32 0.0, %v8138
  %8140 = vmatprep.mubr.bf16.mxu0 0
  %8141 = vmatmul.mubr.bf16.gmra.mxu0 %v7972
  %v8142 = vpop.f32.mrf.mxu0
  %v8143 = vadd.f32 0.0, %v8142
  %v8144 = vpop.f32.mrf.mxu0
  %v8145 = vadd.f32 0.0, %v8144
  %v8146 = vpop.f32.mrf.mxu0
  %v8147 = vadd.f32 0.0, %v8146
  %v8148 = vpop.f32.mrf.mxu0
  %v8149 = vadd.f32 0.0, %v8148
  %8150 = vmatprep.mubr.bf16.mxu0 0
  %8151 = vmatmul.mubr.bf16.gmra.mxu0 %v7975
  %v8152 = vpop.f32.mrf.mxu0
  %v8153 = vadd.f32 0.0, %v8152
  %v8154 = vpop.f32.mrf.mxu0
  %v8155 = vadd.f32 0.0, %v8154
  %v8156 = vpop.f32.mrf.mxu0
  %v8157 = vadd.f32 0.0, %v8156
  %v8158 = vpop.f32.mrf.mxu0
  %v8159 = vadd.f32 0.0, %v8158
  %8160 = vmatprep.mubr.bf16.mxu0 0
  %8161 = vmatmul.mubr.bf16.gmra.mxu0 %v7978
  %v8162 = vpop.f32.mrf.mxu0
  %v8163 = vadd.f32 0.0, %v8162
  %v8164 = vpop.f32.mrf.mxu0
  %v8165 = vadd.f32 0.0, %v8164
  %v8166 = vpop.f32.mrf.mxu0
  %v8167 = vadd.f32 0.0, %v8166
  %v8168 = vpop.f32.mrf.mxu0
  %v8169 = vadd.f32 0.0, %v8168
  %8170 = vmatprep.mubr.bf16.mxu0 0
  %8171 = vmatmul.mubr.bf16.gmra.mxu0 %v7981
  %v8172 = vpop.f32.mrf.mxu0
  %v8173 = vadd.f32 0.0, %v8172
  %v8174 = vpop.f32.mrf.mxu0
  %v8175 = vadd.f32 0.0, %v8174
  %v8176 = vpop.f32.mrf.mxu0
  %v8177 = vadd.f32 0.0, %v8176
  %v8178 = vpop.f32.mrf.mxu0
  %v8179 = vadd.f32 0.0, %v8178
  %8180 = vmatprep.mubr.bf16.mxu0 0
  %8181 = vmatmul.mubr.bf16.gmra.mxu0 %v7984
  %v8182 = vpop.f32.mrf.mxu0
  %v8183 = vadd.f32 0.0, %v8182
  %v8184 = vpop.f32.mrf.mxu0
  %v8185 = vadd.f32 0.0, %v8184
  %v8186 = vpop.f32.mrf.mxu0
  %v8187 = vadd.f32 0.0, %v8186
  %v8188 = vpop.f32.mrf.mxu0
  %v8189 = vadd.f32 0.0, %v8188
  %8190 = vmatprep.mubr.bf16.mxu0 0
  %8191 = vmatmul.mubr.bf16.gmra.mxu0 %v7987
  %v8192 = vpop.f32.mrf.mxu0
  %v8193 = vadd.f32 0.0, %v8192
  %v8194 = vpop.f32.mrf.mxu0
  %v8195 = vadd.f32 0.0, %v8194
  %v8196 = vpop.f32.mrf.mxu0
  %v8197 = vadd.f32 0.0, %v8196
  %v8198 = vpop.f32.mrf.mxu0
  %v8199 = vadd.f32 0.0, %v8198
  %8200 = vmatprep.mubr.bf16.mxu0 0
  %8201 = vmatmul.mubr.bf16.gmra.mxu0 %v7990
  %v8202 = vpop.f32.mrf.mxu0
  %v8203 = vadd.f32 0.0, %v8202
  %v8204 = vpop.f32.mrf.mxu0
  %v8205 = vadd.f32 0.0, %v8204
  %v8206 = vpop.f32.mrf.mxu0
  %v8207 = vadd.f32 0.0, %v8206
  %v8208 = vpop.f32.mrf.mxu0
  %v8209 = vadd.f32 0.0, %v8208
  %8210 = vmatprep.mubr.bf16.mxu0 0
  %8211 = vmatmul.mubr.bf16.gmra.mxu0 %v7993
  %v8212 = vpop.f32.mrf.mxu0
  %v8213 = vadd.f32 0.0, %v8212
  %v8214 = vpop.f32.mrf.mxu0
  %v8215 = vadd.f32 0.0, %v8214
  %v8216 = vpop.f32.mrf.mxu0
  %v8217 = vadd.f32 0.0, %v8216
  %v8218 = vpop.f32.mrf.mxu0
  %v8219 = vadd.f32 0.0, %v8218
  %8220 = vmatprep.mubr.bf16.mxu0 0
  %8221 = vmatmul.mubr.bf16.gmra.mxu0 %v7996
  %v8222 = vpop.f32.mrf.mxu0
  %v8223 = vadd.f32 0.0, %v8222
  %v8224 = vpop.f32.mrf.mxu0
  %v8225 = vadd.f32 0.0, %v8224
  %v8226 = vpop.f32.mrf.mxu0
  %v8227 = vadd.f32 0.0, %v8226
  %v8228 = vpop.f32.mrf.mxu0
  %v8229 = vadd.f32 0.0, %v8228
  %8230 = vdwg.mxu0
  %8231 = vmatprep.subr.bf16.mxu0 0
  %8232 = vmatpush1.bf16.msra.mxu0 0
  %8233 = vmatprep.subr.bf16.mxu0 0
  %8234 = vmatpush1.bf16.msra.mxu0 0
  %8235 = vmatprep.subr.bf16.mxu0 0
  %8236 = vmatpush1.bf16.msra.mxu0 0
  %8237 = vmatprep.subr.bf16.mxu0 0
  %8238 = vmatpush1.bf16.msra.mxu0 0
  %8239 = vmatprep.subr.bf16.mxu0 0
  %8240 = vmatpush1.bf16.msra.mxu0 0
  %8241 = vmatprep.subr.bf16.mxu0 0
  %8242 = vmatpush1.bf16.msra.mxu0 0
  %8243 = vmatprep.subr.bf16.mxu0 0
  %8244 = vmatpush1.bf16.msra.mxu0 %v7931
  %8245 = vmatprep.subr.bf16.mxu0 0
  %8246 = vmatpush1.bf16.msra.mxu0 %v7928
  %8247 = vmatprep.subr.bf16.mxu0 0
  %8248 = vmatpush2.bf16.msra.mxu0 0
  %8249 = vmatprep.subr.bf16.mxu0 0
  %8250 = vmatpush2.bf16.msra.mxu0 0
  %8251 = vmatprep.subr.bf16.mxu0 0
  %8252 = vmatpush2.bf16.msra.mxu0 0
  %8253 = vmatprep.subr.bf16.mxu0 0
  %8254 = vmatpush2.bf16.msra.mxu0 0
  %8255 = vmatprep.subr.bf16.mxu0 0
  %8256 = vmatpush2.bf16.msra.mxu0 0
  %8257 = vmatprep.subr.bf16.mxu0 0
  %8258 = vmatpush2.bf16.msra.mxu0 0
  %8259 = vmatprep.subr.bf16.mxu0 0
  %8260 = vmatpush2.bf16.msra.mxu0 0
  %8261 = vmatprep.subr.bf16.mxu0 0
  %8262 = vmatpush2.bf16.msra.mxu0 0
  %8263 = vmatprep.mubr.bf16.mxu0 0
  %8264 = vmatmul.mubr.bf16.gmra.mxu0 %v7939
  %v8265 = vpop.f32.mrf.mxu0
  %v8266 = vadd.f32 0.0, %v8265
  %v8267 = vpop.f32.mrf.mxu0
  %v8268 = vpop.f32.mrf.mxu0
  %v8269 = vadd.f32 0.0, %v8268
  %v8270 = vpop.f32.mrf.mxu0
  %8271 = vmatprep.mubr.bf16.mxu0 0
  %8272 = vmatmul.mubr.bf16.gmra.mxu0 %v7942
  %v8273 = vpop.f32.mrf.mxu0
  %v8274 = vadd.f32 0.0, %v8273
  %v8275 = vpop.f32.mrf.mxu0
  %v8276 = vpop.f32.mrf.mxu0
  %v8277 = vadd.f32 0.0, %v8276
  %v8278 = vpop.f32.mrf.mxu0
  %8279 = vmatprep.mubr.bf16.mxu0 0
  %8280 = vmatmul.mubr.bf16.gmra.mxu0 %v7945
  %v8281 = vpop.f32.mrf.mxu0
  %v8282 = vadd.f32 0.0, %v8281
  %v8283 = vpop.f32.mrf.mxu0
  %v8284 = vpop.f32.mrf.mxu0
  %v8285 = vadd.f32 0.0, %v8284
  %v8286 = vpop.f32.mrf.mxu0
  %8287 = vmatprep.mubr.bf16.mxu0 0
  %8288 = vmatmul.mubr.bf16.gmra.mxu0 %v7948
  %v8289 = vpop.f32.mrf.mxu0
  %v8290 = vadd.f32 0.0, %v8289
  %v8291 = vpop.f32.mrf.mxu0
  %v8292 = vpop.f32.mrf.mxu0
  %v8293 = vadd.f32 0.0, %v8292
  %v8294 = vpop.f32.mrf.mxu0
  %8295 = vmatprep.mubr.bf16.mxu0 0
  %8296 = vmatmul.mubr.bf16.gmra.mxu0 %v7951
  %v8297 = vpop.f32.mrf.mxu0
  %v8298 = vadd.f32 0.0, %v8297
  %v8299 = vpop.f32.mrf.mxu0
  %v8300 = vpop.f32.mrf.mxu0
  %v8301 = vadd.f32 0.0, %v8300
  %v8302 = vpop.f32.mrf.mxu0
  %8303 = vmatprep.mubr.bf16.mxu0 0
  %8304 = vmatmul.mubr.bf16.gmra.mxu0 %v7954
  %v8305 = vpop.f32.mrf.mxu0
  %v8306 = vadd.f32 0.0, %v8305
  %v8307 = vpop.f32.mrf.mxu0
  %v8308 = vpop.f32.mrf.mxu0
  %v8309 = vadd.f32 0.0, %v8308
  %v8310 = vpop.f32.mrf.mxu0
  %8311 = vmatprep.mubr.bf16.mxu0 0
  %8312 = vmatmul.mubr.bf16.gmra.mxu0 %v7957
  %v8313 = vpop.f32.mrf.mxu0
  %v8314 = vadd.f32 0.0, %v8313
  %v8315 = vpop.f32.mrf.mxu0
  %v8316 = vpop.f32.mrf.mxu0
  %v8317 = vadd.f32 0.0, %v8316
  %v8318 = vpop.f32.mrf.mxu0
  %8319 = vmatprep.mubr.bf16.mxu0 0
  %8320 = vmatmul.mubr.bf16.gmra.mxu0 %v7960
  %v8321 = vpop.f32.mrf.mxu0
  %v8322 = vadd.f32 0.0, %v8321
  %v8323 = vpop.f32.mrf.mxu0
  %v8324 = vpop.f32.mrf.mxu0
  %v8325 = vadd.f32 0.0, %v8324
  %v8326 = vpop.f32.mrf.mxu0
  %8327 = vmatprep.mubr.bf16.mxu0 0
  %8328 = vmatmul.mubr.bf16.gmra.mxu0 %v7963
  %v8329 = vpop.f32.mrf.mxu0
  %v8330 = vadd.f32 0.0, %v8329
  %v8331 = vpop.f32.mrf.mxu0
  %v8332 = vpop.f32.mrf.mxu0
  %v8333 = vadd.f32 0.0, %v8332
  %v8334 = vpop.f32.mrf.mxu0
  %8335 = vmatprep.mubr.bf16.mxu0 0
  %8336 = vmatmul.mubr.bf16.gmra.mxu0 %v7966
  %v8337 = vpop.f32.mrf.mxu0
  %v8338 = vadd.f32 0.0, %v8337
  %v8339 = vpop.f32.mrf.mxu0
  %v8340 = vpop.f32.mrf.mxu0
  %v8341 = vadd.f32 0.0, %v8340
  %v8342 = vpop.f32.mrf.mxu0
  %8343 = vmatprep.mubr.bf16.mxu0 0
  %8344 = vmatmul.mubr.bf16.gmra.mxu0 %v7969
  %v8345 = vpop.f32.mrf.mxu0
  %v8346 = vadd.f32 0.0, %v8345
  %v8347 = vpop.f32.mrf.mxu0
  %v8348 = vpop.f32.mrf.mxu0
  %v8349 = vadd.f32 0.0, %v8348
  %v8350 = vpop.f32.mrf.mxu0
  %8351 = vmatprep.mubr.bf16.mxu0 0
  %8352 = vmatmul.mubr.bf16.gmra.mxu0 %v7972
  %v8353 = vpop.f32.mrf.mxu0
  %v8354 = vadd.f32 0.0, %v8353
  %v8355 = vpop.f32.mrf.mxu0
  %v8356 = vpop.f32.mrf.mxu0
  %v8357 = vadd.f32 0.0, %v8356
  %v8358 = vpop.f32.mrf.mxu0
  %8359 = vmatprep.mubr.bf16.mxu0 0
  %8360 = vmatmul.mubr.bf16.gmra.mxu0 %v7975
  %v8361 = vpop.f32.mrf.mxu0
  %v8362 = vadd.f32 0.0, %v8361
  %v8363 = vpop.f32.mrf.mxu0
  %v8364 = vpop.f32.mrf.mxu0
  %v8365 = vadd.f32 0.0, %v8364
  %v8366 = vpop.f32.mrf.mxu0
  %8367 = vmatprep.mubr.bf16.mxu0 0
  %8368 = vmatmul.mubr.bf16.gmra.mxu0 %v7978
  %v8369 = vpop.f32.mrf.mxu0
  %v8370 = vadd.f32 0.0, %v8369
  %v8371 = vpop.f32.mrf.mxu0
  %v8372 = vpop.f32.mrf.mxu0
  %v8373 = vadd.f32 0.0, %v8372
  %v8374 = vpop.f32.mrf.mxu0
  %8375 = vmatprep.mubr.bf16.mxu0 0
  %8376 = vmatmul.mubr.bf16.gmra.mxu0 %v7981
  %v8377 = vpop.f32.mrf.mxu0
  %v8378 = vadd.f32 0.0, %v8377
  %v8379 = vpop.f32.mrf.mxu0
  %v8380 = vpop.f32.mrf.mxu0
  %v8381 = vadd.f32 0.0, %v8380
  %v8382 = vpop.f32.mrf.mxu0
  %8383 = vmatprep.mubr.bf16.mxu0 0
  %8384 = vmatmul.mubr.bf16.gmra.mxu0 %v7984
  %v8385 = vpop.f32.mrf.mxu0
  %v8386 = vadd.f32 0.0, %v8385
  %v8387 = vpop.f32.mrf.mxu0
  %v8388 = vpop.f32.mrf.mxu0
  %v8389 = vadd.f32 0.0, %v8388
  %v8390 = vpop.f32.mrf.mxu0
  %8391 = vmatprep.mubr.bf16.mxu0 0
  %8392 = vmatmul.mubr.bf16.gmra.mxu0 %v7987
  %v8393 = vpop.f32.mrf.mxu0
  %v8394 = vadd.f32 0.0, %v8393
  %v8395 = vpop.f32.mrf.mxu0
  %v8396 = vpop.f32.mrf.mxu0
  %v8397 = vadd.f32 0.0, %v8396
  %v8398 = vpop.f32.mrf.mxu0
  %8399 = vmatprep.mubr.bf16.mxu0 0
  %8400 = vmatmul.mubr.bf16.gmra.mxu0 %v7990
  %v8401 = vpop.f32.mrf.mxu0
  %v8402 = vadd.f32 0.0, %v8401
  %v8403 = vpop.f32.mrf.mxu0
  %v8404 = vpop.f32.mrf.mxu0
  %v8405 = vadd.f32 0.0, %v8404
  %v8406 = vpop.f32.mrf.mxu0
  %8407 = vmatprep.mubr.bf16.mxu0 0
  %8408 = vmatmul.mubr.bf16.gmra.mxu0 %v7993
  %v8409 = vpop.f32.mrf.mxu0
  %v8410 = vadd.f32 0.0, %v8409
  %v8411 = vpop.f32.mrf.mxu0
  %v8412 = vpop.f32.mrf.mxu0
  %v8413 = vadd.f32 0.0, %v8412
  %v8414 = vpop.f32.mrf.mxu0
  %8415 = vmatprep.mubr.bf16.mxu0 0
  %8416 = vmatmul.mubr.bf16.gmra.mxu0 %v7996
  %v8417 = vpop.f32.mrf.mxu0
  %v8418 = vadd.f32 0.0, %v8417
  %v8419 = vpop.f32.mrf.mxu0
  %v8420 = vpop.f32.mrf.mxu0
  %v8421 = vadd.f32 0.0, %v8420
  %v8422 = vpop.f32.mrf.mxu0
  %8423 = vdwg.mxu0
  %8424 = vst [vmem:[#allocation3] sm:$0xff] %v8033
  %8425 = vst [vmem:[#allocation3 + $0x8] sm:$0xff] %v8035
  %8426 = vst.msk [vmem:[#allocation3 + $0x10] sm:$0xff] %vm547, %v8266
  %8427 = vst [vmem:[#allocation3 + $0x18] sm:$0xff] %v8037
  %8428 = vst [vmem:[#allocation3 + $0x20] sm:$0xff] %v8039
  %8429 = vst.msk [vmem:[#allocation3 + $0x28] sm:$0xff] %vm547, %v8269
  %8430 = vst [vmem:[#allocation3 + $0x30] sm:$0xff] %v8043
  %8431 = vst [vmem:[#allocation3 + $0x38] sm:$0xff] %v8045
  %8432 = vst.msk [vmem:[#allocation3 + $0x40] sm:$0xff] %vm547, %v8274
  %8433 = vst [vmem:[#allocation3 + $0x48] sm:$0xff] %v8047
  %8434 = vst [vmem:[#allocation3 + $0x50] sm:$0xff] %v8049
  %8435 = vst.msk [vmem:[#allocation3 + $0x58] sm:$0xff] %vm547, %v8277
  %8436 = vst [vmem:[#allocation3 + $0x60] sm:$0xff] %v8053
  %8437 = vst [vmem:[#allocation3 + $0x68] sm:$0xff] %v8055
  %8438 = vst.msk [vmem:[#allocation3 + $0x70] sm:$0xff] %vm547, %v8282
  %8439 = vst [vmem:[#allocation3 + $0x78] sm:$0xff] %v8057
  %8440 = vst [vmem:[#allocation3 + $0x80] sm:$0xff] %v8059
  %8441 = vst.msk [vmem:[#allocation3 + $0x88] sm:$0xff] %vm547, %v8285
  %8442 = vst [vmem:[#allocation3 + $0x90] sm:$0xff] %v8063
  %8443 = vst [vmem:[#allocation3 + $0x98] sm:$0xff] %v8065
  %8444 = vst.msk [vmem:[#allocation3 + $0xa0] sm:$0xff] %vm547, %v8290
  %8445 = vst [vmem:[#allocation3 + $0xa8] sm:$0xff] %v8067
  %8446 = vst [vmem:[#allocation3 + $0xb0] sm:$0xff] %v8069
  %8447 = vst.msk [vmem:[#allocation3 + $0xb8] sm:$0xff] %vm547, %v8293
  %8448 = vst [vmem:[#allocation3 + $0xc0] sm:$0xff] %v8073
  %8449 = vst [vmem:[#allocation3 + $0xc8] sm:$0xff] %v8075
  %8450 = vst.msk [vmem:[#allocation3 + $0xd0] sm:$0xff] %vm547, %v8298
  %8451 = vst [vmem:[#allocation3 + $0xd8] sm:$0xff] %v8077
  %8452 = vst [vmem:[#allocation3 + $0xe0] sm:$0xff] %v8079
  %8453 = vst.msk [vmem:[#allocation3 + $0xe8] sm:$0xff] %vm547, %v8301
  %8454 = vst [vmem:[#allocation3 + $0xf0] sm:$0xff] %v8083
  %8455 = vst [vmem:[#allocation3 + $0xf8] sm:$0xff] %v8085
  %8456 = vst.msk [vmem:[#allocation3 + $0x100] sm:$0xff] %vm547, %v8306
  %8457 = vst [vmem:[#allocation3 + $0x108] sm:$0xff] %v8087
  %8458 = vst [vmem:[#allocation3 + $0x110] sm:$0xff] %v8089
  %8459 = vst.msk [vmem:[#allocation3 + $0x118] sm:$0xff] %vm547, %v8309
  %8460 = vst [vmem:[#allocation3 + $0x120] sm:$0xff] %v8093
  %8461 = vst [vmem:[#allocation3 + $0x128] sm:$0xff] %v8095
  %8462 = vst.msk [vmem:[#allocation3 + $0x130] sm:$0xff] %vm547, %v8314
  %8463 = vst [vmem:[#allocation3 + $0x138] sm:$0xff] %v8097
  %8464 = vst [vmem:[#allocation3 + $0x140] sm:$0xff] %v8099
  %8465 = vst.msk [vmem:[#allocation3 + $0x148] sm:$0xff] %vm547, %v8317
  %8466 = vst [vmem:[#allocation3 + $0x150] sm:$0xff] %v8103
  %8467 = vst [vmem:[#allocation3 + $0x158] sm:$0xff] %v8105
  %8468 = vst.msk [vmem:[#allocation3 + $0x160] sm:$0xff] %vm547, %v8322
  %8469 = vst [vmem:[#allocation3 + $0x168] sm:$0xff] %v8107
  %8470 = vst [vmem:[#allocation3 + $0x170] sm:$0xff] %v8109
  %8471 = vst.msk [vmem:[#allocation3 + $0x178] sm:$0xff] %vm547, %v8325
  %8472 = vst [vmem:[#allocation3 + $0x180] sm:$0xff] %v8113
  %8473 = vst [vmem:[#allocation3 + $0x188] sm:$0xff] %v8115
  %8474 = vst.msk [vmem:[#allocation3 + $0x190] sm:$0xff] %vm547, %v8330
  %8475 = vst [vmem:[#allocation3 + $0x198] sm:$0xff] %v8117
  %8476 = vst [vmem:[#allocation3 + $0x1a0] sm:$0xff] %v8119
  %8477 = vst.msk [vmem:[#allocation3 + $0x1a8] sm:$0xff] %vm547, %v8333
  %8478 = vst [vmem:[#allocation3 + $0x1b0] sm:$0xff] %v8123
  %8479 = vst [vmem:[#allocation3 + $0x1b8] sm:$0xff] %v8125
  %8480 = vst.msk [vmem:[#allocation3 + $0x1c0] sm:$0xff] %vm547, %v8338
  %8481 = vst [vmem:[#allocation3 + $0x1c8] sm:$0xff] %v8127
  %8482 = vst [vmem:[#allocation3 + $0x1d0] sm:$0xff] %v8129
  %8483 = vst.msk [vmem:[#allocation3 + $0x1d8] sm:$0xff] %vm547, %v8341
  %8484 = vst [vmem:[#allocation3 + $0x1e0] sm:$0xff] %v8133
  %8485 = vst [vmem:[#allocation3 + $0x1e8] sm:$0xff] %v8135
  %8486 = vst.msk [vmem:[#allocation3 + $0x1f0] sm:$0xff] %vm547, %v8346
  %8487 = vst [vmem:[#allocation3 + $0x1f8] sm:$0xff] %v8137
  %8488 = vst [vmem:[#allocation3 + $0x200] sm:$0xff] %v8139
  %8489 = vst.msk [vmem:[#allocation3 + $0x208] sm:$0xff] %vm547, %v8349
  %8490 = vst [vmem:[#allocation3 + $0x210] sm:$0xff] %v8143
  %8491 = vst [vmem:[#allocation3 + $0x218] sm:$0xff] %v8145
  %8492 = vst.msk [vmem:[#allocation3 + $0x220] sm:$0xff] %vm547, %v8354
  %8493 = vst [vmem:[#allocation3 + $0x228] sm:$0xff] %v8147
  %8494 = vst [vmem:[#allocation3 + $0x230] sm:$0xff] %v8149
  %8495 = vst.msk [vmem:[#allocation3 + $0x238] sm:$0xff] %vm547, %v8357
  %8496 = vst [vmem:[#allocation3 + $0x240] sm:$0xff] %v8153
  %8497 = vst [vmem:[#allocation3 + $0x248] sm:$0xff] %v8155
  %8498 = vst.msk [vmem:[#allocation3 + $0x250] sm:$0xff] %vm547, %v8362
  %8499 = vst [vmem:[#allocation3 + $0x258] sm:$0xff] %v8157
  %8500 = vst [vmem:[#allocation3 + $0x260] sm:$0xff] %v8159
  %8501 = vst.msk [vmem:[#allocation3 + $0x268] sm:$0xff] %vm547, %v8365
  %8502 = vst [vmem:[#allocation3 + $0x270] sm:$0xff] %v8163
  %8503 = vst [vmem:[#allocation3 + $0x278] sm:$0xff] %v8165
  %8504 = vst.msk [vmem:[#allocation3 + $0x280] sm:$0xff] %vm547, %v8370
  %8505 = vst [vmem:[#allocation3 + $0x288] sm:$0xff] %v8167
  %8506 = vst [vmem:[#allocation3 + $0x290] sm:$0xff] %v8169
  %8507 = vst.msk [vmem:[#allocation3 + $0x298] sm:$0xff] %vm547, %v8373
  %8508 = vst [vmem:[#allocation3 + $0x2a0] sm:$0xff] %v8173
  %8509 = vst [vmem:[#allocation3 + $0x2a8] sm:$0xff] %v8175
  %8510 = vst.msk [vmem:[#allocation3 + $0x2b0] sm:$0xff] %vm547, %v8378
  %8511 = vst [vmem:[#allocation3 + $0x2b8] sm:$0xff] %v8177
  %8512 = vst [vmem:[#allocation3 + $0x2c0] sm:$0xff] %v8179
  %8513 = vst.msk [vmem:[#allocation3 + $0x2c8] sm:$0xff] %vm547, %v8381
  %8514 = vst [vmem:[#allocation3 + $0x2d0] sm:$0xff] %v8183
  %8515 = vst [vmem:[#allocation3 + $0x2d8] sm:$0xff] %v8185
  %8516 = vst.msk [vmem:[#allocation3 + $0x2e0] sm:$0xff] %vm547, %v8386
  %8517 = vst [vmem:[#allocation3 + $0x2e8] sm:$0xff] %v8187
  %8518 = vst [vmem:[#allocation3 + $0x2f0] sm:$0xff] %v8189
  %8519 = vst.msk [vmem:[#allocation3 + $0x2f8] sm:$0xff] %vm547, %v8389
  %8520 = vst [vmem:[#allocation3 + $0x300] sm:$0xff] %v8193
  %8521 = vst [vmem:[#allocation3 + $0x308] sm:$0xff] %v8195
  %8522 = vst.msk [vmem:[#allocation3 + $0x310] sm:$0xff] %vm547, %v8394
  %8523 = vst [vmem:[#allocation3 + $0x318] sm:$0xff] %v8197
  %8524 = vst [vmem:[#allocation3 + $0x320] sm:$0xff] %v8199
  %8525 = vst.msk [vmem:[#allocation3 + $0x328] sm:$0xff] %vm547, %v8397
  %8526 = vst [vmem:[#allocation3 + $0x330] sm:$0xff] %v8203
  %8527 = vst [vmem:[#allocation3 + $0x338] sm:$0xff] %v8205
  %8528 = vst.msk [vmem:[#allocation3 + $0x340] sm:$0xff] %vm547, %v8402
  %8529 = vst [vmem:[#allocation3 + $0x348] sm:$0xff] %v8207
  %8530 = vst [vmem:[#allocation3 + $0x350] sm:$0xff] %v8209
  %8531 = vst.msk [vmem:[#allocation3 + $0x358] sm:$0xff] %vm547, %v8405
  %8532 = vst [vmem:[#allocation3 + $0x360] sm:$0xff] %v8213
  %8533 = vst [vmem:[#allocation3 + $0x368] sm:$0xff] %v8215
  %8534 = vst.msk [vmem:[#allocation3 + $0x370] sm:$0xff] %vm547, %v8410
  %8535 = vst [vmem:[#allocation3 + $0x378] sm:$0xff] %v8217
  %8536 = vst [vmem:[#allocation3 + $0x380] sm:$0xff] %v8219
  %8537 = vst.msk [vmem:[#allocation3 + $0x388] sm:$0xff] %vm547, %v8413
  %8538 = vst [vmem:[#allocation3 + $0x390] sm:$0xff] %v8223
  %8539 = vst [vmem:[#allocation3 + $0x398] sm:$0xff] %v8225
  %8540 = vst.msk [vmem:[#allocation3 + $0x3a0] sm:$0xff] %vm547, %v8418
  %8541 = vst [vmem:[#allocation3 + $0x3a8] sm:$0xff] %v8227
  %8542 = vst [vmem:[#allocation3 + $0x3b0] sm:$0xff] %v8229
  %8543 = vst.msk [vmem:[#allocation3 + $0x3b8] sm:$0xff] %vm547, %v8421
  %v8544 = vld [vmem:[#allocation3] sm:$0xff]
  %v8545 = vld [vmem:[#allocation3 + $0x18] sm:$0xff]
  %v8546 = vld [vmem:[#allocation3 + $0x30] sm:$0xff]
  %v8547 = vld [vmem:[#allocation3 + $0x48] sm:$0xff]
  %v8548 = vld [vmem:[#allocation3 + $0x60] sm:$0xff]
  %v8549 = vld [vmem:[#allocation3 + $0x78] sm:$0xff]
  %v8550 = vld [vmem:[#allocation3 + $0x90] sm:$0xff]
  %v8551 = vld [vmem:[#allocation3 + $0xa8] sm:$0xff]
  %v8552 = vld [vmem:[#allocation3 + $0xc0] sm:$0xff]
  %v8553 = vld [vmem:[#allocation3 + $0xd8] sm:$0xff]
  %v8554 = vld [vmem:[#allocation3 + $0xf0] sm:$0xff]
  %v8555 = vld [vmem:[#allocation3 + $0x108] sm:$0xff]
  %v8556 = vld [vmem:[#allocation3 + $0x120] sm:$0xff]
  %v8557 = vld [vmem:[#allocation3 + $0x138] sm:$0xff]
  %v8558 = vld [vmem:[#allocation3 + $0x150] sm:$0xff]
  %v8559 = vld [vmem:[#allocation3 + $0x168] sm:$0xff]
  %v8560 = vld [vmem:[#allocation3 + $0x180] sm:$0xff]
  %v8561 = vld [vmem:[#allocation3 + $0x198] sm:$0xff]
  %v8562 = vld [vmem:[#allocation3 + $0x1b0] sm:$0xff]
  %v8563 = vld [vmem:[#allocation3 + $0x1c8] sm:$0xff]
  %v8564 = vld [vmem:[#allocation3 + $0x1e0] sm:$0xff]
  %v8565 = vld [vmem:[#allocation3 + $0x1f8] sm:$0xff]
  %v8566 = vld [vmem:[#allocation3 + $0x210] sm:$0xff]
  %v8567 = vld [vmem:[#allocation3 + $0x228] sm:$0xff]
  %v8568 = vld [vmem:[#allocation3 + $0x240] sm:$0xff]
  %v8569 = vld [vmem:[#allocation3 + $0x258] sm:$0xff]
  %v8570 = vld [vmem:[#allocation3 + $0x270] sm:$0xff]
  %v8571 = vld [vmem:[#allocation3 + $0x288] sm:$0xff]
  %v8572 = vld [vmem:[#allocation3 + $0x2a0] sm:$0xff]
  %v8573 = vld [vmem:[#allocation3 + $0x2b8] sm:$0xff]
  %v8574 = vld [vmem:[#allocation3 + $0x2d0] sm:$0xff]
  %v8575 = vld [vmem:[#allocation3 + $0x2e8] sm:$0xff]
  %v8576 = vld [vmem:[#allocation3 + $0x300] sm:$0xff]
  %v8577 = vld [vmem:[#allocation3 + $0x318] sm:$0xff]
  %v8578 = vld [vmem:[#allocation3 + $0x330] sm:$0xff]
  %v8579 = vld [vmem:[#allocation3 + $0x348] sm:$0xff]
  %v8580 = vadd.f32 %v7722, %v8544
  %v8581 = vadd.f32 %v7723, %v8545
  %v8582 = vadd.f32 %v7724, %v8546
  %v8583 = vadd.f32 %v7725, %v8547
  %v8584 = vadd.f32 %v7726, %v8548
  %v8585 = vadd.f32 %v7727, %v8549
  %v8586 = vadd.f32 %v7728, %v8550
  %v8587 = vadd.f32 %v7729, %v8551
  %v8588 = vadd.f32 %v7730, %v8552
  %v8589 = vadd.f32 %v7731, %v8553
  %v8590 = vadd.f32 %v7732, %v8554
  %v8591 = vadd.f32 %v7733, %v8555
  %v8592 = vadd.f32 %v7734, %v8556
  %v8593 = vadd.f32 %v7735, %v8557
  %v8594 = vadd.f32 %v7736, %v8558
  %v8595 = vadd.f32 %v7737, %v8559
  %v8596 = vadd.f32 %v7738, %v8560
  %v8597 = vadd.f32 %v7739, %v8561
  %v8598 = vadd.f32 %v7740, %v8562
  %v8599 = vadd.f32 %v7741, %v8563
  %v8600 = vadd.f32 %v7742, %v8564
  %v8601 = vadd.f32 %v7743, %v8565
  %v8602 = vadd.f32 %v7744, %v8566
  %v8603 = vadd.f32 %v7745, %v8567
  %v8604 = vadd.f32 %v7746, %v8568
  %v8605 = vadd.f32 %v7747, %v8569
  %v8606 = vadd.f32 %v7748, %v8570
  %v8607 = vadd.f32 %v7749, %v8571
  %v8608 = vadd.f32 %v7750, %v8572
  %v8609 = vadd.f32 %v7751, %v8573
  %v8610 = vadd.f32 %v7752, %v8574
  %v8611 = vadd.f32 %v7753, %v8575
  %v8612 = vadd.f32 %v7754, %v8576
  %v8613 = vadd.f32 %v7755, %v8577
  %v8614 = vadd.f32 %v7756, %v8578
  %v8615 = vadd.f32 %v7757, %v8579
  %v8616 = vld [vmem:[#allocation3] sm:$0xfe]
  %v8617 = vld [vmem:[#allocation3 + $0x360] sm:$0x1]
  %v8655 = vrot.slane %v8616, 1
  %v8656 = vrot.slane %v8545, 1
  %v8657 = vsel %vm4178, %v8655, %v8656
  %v8658 = vrot.slane %v8546, 1
  %v8659 = vsel %vm4178, %v8656, %v8658
  %v8660 = vrot.slane %v8547, 1
  %v8661 = vsel %vm4178, %v8658, %v8660
  %v8662 = vrot.slane %v8548, 1
  %v8663 = vsel %vm4178, %v8660, %v8662
  %v8664 = vrot.slane %v8549, 1
  %v8665 = vsel %vm4178, %v8662, %v8664
  %v8666 = vrot.slane %v8550, 1
  %v8667 = vsel %vm4178, %v8664, %v8666
  %v8668 = vrot.slane %v8551, 1
  %v8669 = vsel %vm4178, %v8666, %v8668
  %v8670 = vrot.slane %v8552, 1
  %v8671 = vsel %vm4178, %v8668, %v8670
  %v8672 = vrot.slane %v8553, 1
  %v8673 = vsel %vm4178, %v8670, %v8672
  %v8674 = vrot.slane %v8554, 1
  %v8675 = vsel %vm4178, %v8672, %v8674
  %v8676 = vrot.slane %v8555, 1
  %v8677 = vsel %vm4178, %v8674, %v8676
  %v8678 = vrot.slane %v8556, 1
  %v8679 = vsel %vm4178, %v8676, %v8678
  %v8680 = vrot.slane %v8557, 1
  %v8681 = vsel %vm4178, %v8678, %v8680
  %v8682 = vrot.slane %v8558, 1
  %v8683 = vsel %vm4178, %v8680, %v8682
  %v8684 = vrot.slane %v8559, 1
  %v8685 = vsel %vm4178, %v8682, %v8684
  %v8686 = vrot.slane %v8560, 1
  %v8687 = vsel %vm4178, %v8684, %v8686
  %v8688 = vrot.slane %v8561, 1
  %v8689 = vsel %vm4178, %v8686, %v8688
  %v8690 = vrot.slane %v8562, 1
  %v8691 = vsel %vm4178, %v8688, %v8690
  %v8692 = vrot.slane %v8563, 1
  %v8693 = vsel %vm4178, %v8690, %v8692
  %v8694 = vrot.slane %v8564, 1
  %v8695 = vsel %vm4178, %v8692, %v8694
  %v8696 = vrot.slane %v8565, 1
  %v8697 = vsel %vm4178, %v8694, %v8696
  %v8698 = vrot.slane %v8566, 1
  %v8699 = vsel %vm4178, %v8696, %v8698
  %v8700 = vrot.slane %v8567, 1
  %v8701 = vsel %vm4178, %v8698, %v8700
  %v8702 = vrot.slane %v8568, 1
  %v8703 = vsel %vm4178, %v8700, %v8702
  %v8704 = vrot.slane %v8569, 1
  %v8705 = vsel %vm4178, %v8702, %v8704
  %v8706 = vrot.slane %v8570, 1
  %v8707 = vsel %vm4178, %v8704, %v8706
  %v8708 = vrot.slane %v8571, 1
  %v8709 = vsel %vm4178, %v8706, %v8708
  %v8710 = vrot.slane %v8572, 1
  %v8711 = vsel %vm4178, %v8708, %v8710
  %v8712 = vrot.slane %v8573, 1
  %v8713 = vsel %vm4178, %v8710, %v8712
  %v8714 = vrot.slane %v8574, 1
  %v8715 = vsel %vm4178, %v8712, %v8714
  %v8716 = vrot.slane %v8575, 1
  %v8717 = vsel %vm4178, %v8714, %v8716
  %v8718 = vrot.slane %v8576, 1
  %v8719 = vsel %vm4178, %v8716, %v8718
  %v8720 = vrot.slane %v8577, 1
  %v8721 = vsel %vm4178, %v8718, %v8720
  %v8722 = vrot.slane %v8578, 1
  %v8723 = vsel %vm4178, %v8720, %v8722
  %v8724 = vrot.slane %v8579, 1
  %v8725 = vsel %vm4178, %v8722, %v8724
  %v8726 = vrot.slane %v8617, 1
  %v8727 = vsel %vm4178, %v8724, %v8726
  %8728 = vrot.lane.b32.xlu0 %v8657, 96
  %v8729 = vpop.permute.xlu0 %8728
  %8730 = vrot.lane.b32.xlu0 %v8659, 96
  %v8731 = vpop.permute.xlu0 %8730
  %8732 = vrot.lane.b32.xlu0 %v8661, 96
  %v8733 = vpop.permute.xlu0 %8732
  %8734 = vrot.lane.b32.xlu0 %v8663, 96
  %v8735 = vpop.permute.xlu0 %8734
  %8736 = vrot.lane.b32.xlu0 %v8665, 96
  %v8737 = vpop.permute.xlu0 %8736
  %8738 = vrot.lane.b32.xlu0 %v8667, 96
  %v8739 = vpop.permute.xlu0 %8738
  %8740 = vrot.lane.b32.xlu0 %v8669, 96
  %v8741 = vpop.permute.xlu0 %8740
  %8742 = vrot.lane.b32.xlu0 %v8671, 96
  %v8743 = vpop.permute.xlu0 %8742
  %8744 = vrot.lane.b32.xlu0 %v8673, 96
  %v8745 = vpop.permute.xlu0 %8744
  %8746 = vrot.lane.b32.xlu0 %v8675, 96
  %v8747 = vpop.permute.xlu0 %8746
  %8748 = vrot.lane.b32.xlu0 %v8677, 96
  %v8749 = vpop.permute.xlu0 %8748
  %8750 = vrot.lane.b32.xlu0 %v8679, 96
  %v8751 = vpop.permute.xlu0 %8750
  %8752 = vrot.lane.b32.xlu0 %v8681, 96
  %v8753 = vpop.permute.xlu0 %8752
  %8754 = vrot.lane.b32.xlu0 %v8683, 96
  %v8755 = vpop.permute.xlu0 %8754
  %8756 = vrot.lane.b32.xlu0 %v8685, 96
  %v8757 = vpop.permute.xlu0 %8756
  %8758 = vrot.lane.b32.xlu0 %v8687, 96
  %v8759 = vpop.permute.xlu0 %8758
  %8760 = vrot.lane.b32.xlu0 %v8689, 96
  %v8761 = vpop.permute.xlu0 %8760
  %8762 = vrot.lane.b32.xlu0 %v8691, 96
  %v8763 = vpop.permute.xlu0 %8762
  %8764 = vrot.lane.b32.xlu0 %v8693, 96
  %v8765 = vpop.permute.xlu0 %8764
  %8766 = vrot.lane.b32.xlu0 %v8695, 96
  %v8767 = vpop.permute.xlu0 %8766
  %8768 = vrot.lane.b32.xlu0 %v8697, 96
  %v8769 = vpop.permute.xlu0 %8768
  %8770 = vrot.lane.b32.xlu0 %v8699, 96
  %v8771 = vpop.permute.xlu0 %8770
  %8772 = vrot.lane.b32.xlu0 %v8701, 96
  %v8773 = vpop.permute.xlu0 %8772
  %8774 = vrot.lane.b32.xlu0 %v8703, 96
  %v8775 = vpop.permute.xlu0 %8774
  %8776 = vrot.lane.b32.xlu0 %v8705, 96
  %v8777 = vpop.permute.xlu0 %8776
  %8778 = vrot.lane.b32.xlu0 %v8707, 96
  %v8779 = vpop.permute.xlu0 %8778
  %8780 = vrot.lane.b32.xlu0 %v8709, 96
  %v8781 = vpop.permute.xlu0 %8780
  %8782 = vrot.lane.b32.xlu0 %v8711, 96
  %v8783 = vpop.permute.xlu0 %8782
  %8784 = vrot.lane.b32.xlu0 %v8713, 96
  %v8785 = vpop.permute.xlu0 %8784
  %8786 = vrot.lane.b32.xlu0 %v8715, 96
  %v8787 = vpop.permute.xlu0 %8786
  %8788 = vrot.lane.b32.xlu0 %v8717, 96
  %v8789 = vpop.permute.xlu0 %8788
  %8790 = vrot.lane.b32.xlu0 %v8719, 96
  %v8791 = vpop.permute.xlu0 %8790
  %8792 = vrot.lane.b32.xlu0 %v8721, 96
  %v8793 = vpop.permute.xlu0 %8792
  %8794 = vrot.lane.b32.xlu0 %v8723, 96
  %v8795 = vpop.permute.xlu0 %8794
  %8796 = vrot.lane.b32.xlu0 %v8725, 96
  %v8797 = vpop.permute.xlu0 %8796
  %8798 = vrot.lane.b32.xlu0 %v8727, 96
  %v8799 = vpop.permute.xlu0 %8798
  %v8836 = vadd.f32 %v8580, %v8729
  %v8837 = vadd.f32 %v8581, %v8731
  %v8838 = vadd.f32 %v8582, %v8733
  %v8839 = vadd.f32 %v8583, %v8735
  %v8840 = vadd.f32 %v8584, %v8737
  %v8841 = vadd.f32 %v8585, %v8739
  %v8842 = vadd.f32 %v8586, %v8741
  %v8843 = vadd.f32 %v8587, %v8743
  %v8844 = vadd.f32 %v8588, %v8745
  %v8845 = vadd.f32 %v8589, %v8747
  %v8846 = vadd.f32 %v8590, %v8749
  %v8847 = vadd.f32 %v8591, %v8751
  %v8848 = vadd.f32 %v8592, %v8753
  %v8849 = vadd.f32 %v8593, %v8755
  %v8850 = vadd.f32 %v8594, %v8757
  %v8851 = vadd.f32 %v8595, %v8759
  %v8852 = vadd.f32 %v8596, %v8761
  %v8853 = vadd.f32 %v8597, %v8763
  %v8854 = vadd.f32 %v8598, %v8765
  %v8855 = vadd.f32 %v8599, %v8767
  %v8856 = vadd.f32 %v8600, %v8769
  %v8857 = vadd.f32 %v8601, %v8771
  %v8858 = vadd.f32 %v8602, %v8773
  %v8859 = vadd.f32 %v8603, %v8775
  %v8860 = vadd.f32 %v8604, %v8777
  %v8861 = vadd.f32 %v8605, %v8779
  %v8862 = vadd.f32 %v8606, %v8781
  %v8863 = vadd.f32 %v8607, %v8783
  %v8864 = vadd.f32 %v8608, %v8785
  %v8865 = vadd.f32 %v8609, %v8787
  %v8866 = vadd.f32 %v8610, %v8789
  %v8867 = vadd.f32 %v8611, %v8791
  %v8868 = vadd.f32 %v8612, %v8793
  %v8869 = vadd.f32 %v8613, %v8795
  %v8870 = vadd.f32 %v8614, %v8797
  %v8871 = vadd.f32 %v8615, %v8799
  %v8872 = vld [vmem:[#allocation3] sm:$0xfc]
  %v8873 = vld [vmem:[#allocation3 + $0x360] sm:$0x3]
  %v8876 = vrot.slane %v8872, 2
  %v8877 = vrot.slane %v8545, 2
  %v8878 = vsel %vm4400, %v8876, %v8877
  %v8879 = vrot.slane %v8546, 2
  %v8880 = vsel %vm4400, %v8877, %v8879
  %v8881 = vrot.slane %v8547, 2
  %v8882 = vsel %vm4400, %v8879, %v8881
  %v8883 = vrot.slane %v8548, 2
  %v8884 = vsel %vm4400, %v8881, %v8883
  %v8885 = vrot.slane %v8549, 2
  %v8886 = vsel %vm4400, %v8883, %v8885
  %v8887 = vrot.slane %v8550, 2
  %v8888 = vsel %vm4400, %v8885, %v8887
  %v8889 = vrot.slane %v8551, 2
  %v8890 = vsel %vm4400, %v8887, %v8889
  %v8891 = vrot.slane %v8552, 2
  %v8892 = vsel %vm4400, %v8889, %v8891
  %v8893 = vrot.slane %v8553, 2
  %v8894 = vsel %vm4400, %v8891, %v8893
  %v8895 = vrot.slane %v8554, 2
  %v8896 = vsel %vm4400, %v8893, %v8895
  %v8897 = vrot.slane %v8555, 2
  %v8898 = vsel %vm4400, %v8895, %v8897
  %v8899 = vrot.slane %v8556, 2
  %v8900 = vsel %vm4400, %v8897, %v8899
  %v8901 = vrot.slane %v8557, 2
  %v8902 = vsel %vm4400, %v8899, %v8901
  %v8903 = vrot.slane %v8558, 2
  %v8904 = vsel %vm4400, %v8901, %v8903
  %v8905 = vrot.slane %v8559, 2
  %v8906 = vsel %vm4400, %v8903, %v8905
  %v8907 = vrot.slane %v8560, 2
  %v8908 = vsel %vm4400, %v8905, %v8907
  %v8909 = vrot.slane %v8561, 2
  %v8910 = vsel %vm4400, %v8907, %v8909
  %v8911 = vrot.slane %v8562, 2
  %v8912 = vsel %vm4400, %v8909, %v8911
  %v8913 = vrot.slane %v8563, 2
  %v8914 = vsel %vm4400, %v8911, %v8913
  %v8915 = vrot.slane %v8564, 2
  %v8916 = vsel %vm4400, %v8913, %v8915
  %v8917 = vrot.slane %v8565, 2
  %v8918 = vsel %vm4400, %v8915, %v8917
  %v8919 = vrot.slane %v8566, 2
  %v8920 = vsel %vm4400, %v8917, %v8919
  %v8921 = vrot.slane %v8567, 2
  %v8922 = vsel %vm4400, %v8919, %v8921
  %v8923 = vrot.slane %v8568, 2
  %v8924 = vsel %vm4400, %v8921, %v8923
  %v8925 = vrot.slane %v8569, 2
  %v8926 = vsel %vm4400, %v8923, %v8925
  %v8927 = vrot.slane %v8570, 2
  %v8928 = vsel %vm4400, %v8925, %v8927
  %v8929 = vrot.slane %v8571, 2
  %v8930 = vsel %vm4400, %v8927, %v8929
  %v8931 = vrot.slane %v8572, 2
  %v8932 = vsel %vm4400, %v8929, %v8931
  %v8933 = vrot.slane %v8573, 2
  %v8934 = vsel %vm4400, %v8931, %v8933
  %v8935 = vrot.slane %v8574, 2
  %v8936 = vsel %vm4400, %v8933, %v8935
  %v8937 = vrot.slane %v8575, 2
  %v8938 = vsel %vm4400, %v8935, %v8937
  %v8939 = vrot.slane %v8576, 2
  %v8940 = vsel %vm4400, %v8937, %v8939
  %v8941 = vrot.slane %v8577, 2
  %v8942 = vsel %vm4400, %v8939, %v8941
  %v8943 = vrot.slane %v8578, 2
  %v8944 = vsel %vm4400, %v8941, %v8943
  %v8945 = vrot.slane %v8579, 2
  %v8946 = vsel %vm4400, %v8943, %v8945
  %v8947 = vrot.slane %v8873, 2
  %v8948 = vsel %vm4400, %v8945, %v8947
  %8949 = vrot.lane.b32.xlu0 %v8878, 64
  %v8950 = vpop.permute.xlu0 %8949
  %8951 = vrot.lane.b32.xlu0 %v8880, 64
  %v8952 = vpop.permute.xlu0 %8951
  %8953 = vrot.lane.b32.xlu0 %v8882, 64
  %v8954 = vpop.permute.xlu0 %8953
  %8955 = vrot.lane.b32.xlu0 %v8884, 64
  %v8956 = vpop.permute.xlu0 %8955
  %8957 = vrot.lane.b32.xlu0 %v8886, 64
  %v8958 = vpop.permute.xlu0 %8957
  %8959 = vrot.lane.b32.xlu0 %v8888, 64
  %v8960 = vpop.permute.xlu0 %8959
  %8961 = vrot.lane.b32.xlu0 %v8890, 64
  %v8962 = vpop.permute.xlu0 %8961
  %8963 = vrot.lane.b32.xlu0 %v8892, 64
  %v8964 = vpop.permute.xlu0 %8963
  %8965 = vrot.lane.b32.xlu0 %v8894, 64
  %v8966 = vpop.permute.xlu0 %8965
  %8967 = vrot.lane.b32.xlu0 %v8896, 64
  %v8968 = vpop.permute.xlu0 %8967
  %8969 = vrot.lane.b32.xlu0 %v8898, 64
  %v8970 = vpop.permute.xlu0 %8969
  %8971 = vrot.lane.b32.xlu0 %v8900, 64
  %v8972 = vpop.permute.xlu0 %8971
  %8973 = vrot.lane.b32.xlu0 %v8902, 64
  %v8974 = vpop.permute.xlu0 %8973
  %8975 = vrot.lane.b32.xlu0 %v8904, 64
  %v8976 = vpop.permute.xlu0 %8975
  %8977 = vrot.lane.b32.xlu0 %v8906, 64
  %v8978 = vpop.permute.xlu0 %8977
  %8979 = vrot.lane.b32.xlu0 %v8908, 64
  %v8980 = vpop.permute.xlu0 %8979
  %8981 = vrot.lane.b32.xlu0 %v8910, 64
  %v8982 = vpop.permute.xlu0 %8981
  %8983 = vrot.lane.b32.xlu0 %v8912, 64
  %v8984 = vpop.permute.xlu0 %8983
  %8985 = vrot.lane.b32.xlu0 %v8914, 64
  %v8986 = vpop.permute.xlu0 %8985
  %8987 = vrot.lane.b32.xlu0 %v8916, 64
  %v8988 = vpop.permute.xlu0 %8987
  %8989 = vrot.lane.b32.xlu0 %v8918, 64
  %v8990 = vpop.permute.xlu0 %8989
  %8991 = vrot.lane.b32.xlu0 %v8920, 64
  %v8992 = vpop.permute.xlu0 %8991
  %8993 = vrot.lane.b32.xlu0 %v8922, 64
  %v8994 = vpop.permute.xlu0 %8993
  %8995 = vrot.lane.b32.xlu0 %v8924, 64
  %v8996 = vpop.permute.xlu0 %8995
  %8997 = vrot.lane.b32.xlu0 %v8926, 64
  %v8998 = vpop.permute.xlu0 %8997
  %8999 = vrot.lane.b32.xlu0 %v8928, 64
  %v9000 = vpop.permute.xlu0 %8999
  %9001 = vrot.lane.b32.xlu0 %v8930, 64
  %v9002 = vpop.permute.xlu0 %9001
  %9003 = vrot.lane.b32.xlu0 %v8932, 64
  %v9004 = vpop.permute.xlu0 %9003
  %9005 = vrot.lane.b32.xlu0 %v8934, 64
  %v9006 = vpop.permute.xlu0 %9005
  %9007 = vrot.lane.b32.xlu0 %v8936, 64
  %v9008 = vpop.permute.xlu0 %9007
  %9009 = vrot.lane.b32.xlu0 %v8938, 64
  %v9010 = vpop.permute.xlu0 %9009
  %9011 = vrot.lane.b32.xlu0 %v8940, 64
  %v9012 = vpop.permute.xlu0 %9011
  %9013 = vrot.lane.b32.xlu0 %v8942, 64
  %v9014 = vpop.permute.xlu0 %9013
  %9015 = vrot.lane.b32.xlu0 %v8944, 64
  %v9016 = vpop.permute.xlu0 %9015
  %9017 = vrot.lane.b32.xlu0 %v8946, 64
  %v9018 = vpop.permute.xlu0 %9017
  %9019 = vrot.lane.b32.xlu0 %v8948, 64
  %v9020 = vpop.permute.xlu0 %9019
  %v9057 = vadd.f32 %v8836, %v8950
  %v9058 = vadd.f32 %v8837, %v8952
  %v9059 = vadd.f32 %v8838, %v8954
  %v9060 = vadd.f32 %v8839, %v8956
  %v9061 = vadd.f32 %v8840, %v8958
  %v9062 = vadd.f32 %v8841, %v8960
  %v9063 = vadd.f32 %v8842, %v8962
  %v9064 = vadd.f32 %v8843, %v8964
  %v9065 = vadd.f32 %v8844, %v8966
  %v9066 = vadd.f32 %v8845, %v8968
  %v9067 = vadd.f32 %v8846, %v8970
  %v9068 = vadd.f32 %v8847, %v8972
  %v9069 = vadd.f32 %v8848, %v8974
  %v9070 = vadd.f32 %v8849, %v8976
  %v9071 = vadd.f32 %v8850, %v8978
  %v9072 = vadd.f32 %v8851, %v8980
  %v9073 = vadd.f32 %v8852, %v8982
  %v9074 = vadd.f32 %v8853, %v8984
  %v9075 = vadd.f32 %v8854, %v8986
  %v9076 = vadd.f32 %v8855, %v8988
  %v9077 = vadd.f32 %v8856, %v8990
  %v9078 = vadd.f32 %v8857, %v8992
  %v9079 = vadd.f32 %v8858, %v8994
  %v9080 = vadd.f32 %v8859, %v8996
  %v9081 = vadd.f32 %v8860, %v8998
  %v9082 = vadd.f32 %v8861, %v9000
  %v9083 = vadd.f32 %v8862, %v9002
  %v9084 = vadd.f32 %v8863, %v9004
  %v9085 = vadd.f32 %v8864, %v9006
  %v9086 = vadd.f32 %v8865, %v9008
  %v9087 = vadd.f32 %v8866, %v9010
  %v9088 = vadd.f32 %v8867, %v9012
  %v9089 = vadd.f32 %v8868, %v9014
  %v9090 = vadd.f32 %v8869, %v9016
  %v9091 = vadd.f32 %v8870, %v9018
  %v9092 = vadd.f32 %v8871, %v9020
  %v9093 = vld [vmem:[#allocation3 + $0x18] sm:$0xf0]
  %v9094 = vld [vmem:[#allocation3 + $0x360] sm:$0xff]
  %v9095 = vld [vmem:[#allocation3 + $0x378] sm:$0xf]
  %v9099 = vrot.slane %v9093, 4
  %v9100 = vrot.slane %v8546, 4
  %v9101 = vsel %vm4624, %v9099, %v9100
  %v9102 = vrot.slane %v8547, 4
  %v9103 = vsel %vm4624, %v9100, %v9102
  %v9104 = vrot.slane %v8548, 4
  %v9105 = vsel %vm4624, %v9102, %v9104
  %v9106 = vrot.slane %v8549, 4
  %v9107 = vsel %vm4624, %v9104, %v9106
  %v9108 = vrot.slane %v8550, 4
  %v9109 = vsel %vm4624, %v9106, %v9108
  %v9110 = vrot.slane %v8551, 4
  %v9111 = vsel %vm4624, %v9108, %v9110
  %v9112 = vrot.slane %v8552, 4
  %v9113 = vsel %vm4624, %v9110, %v9112
  %v9114 = vrot.slane %v8553, 4
  %v9115 = vsel %vm4624, %v9112, %v9114
  %v9116 = vrot.slane %v8554, 4
  %v9117 = vsel %vm4624, %v9114, %v9116
  %v9118 = vrot.slane %v8555, 4
  %v9119 = vsel %vm4624, %v9116, %v9118
  %v9120 = vrot.slane %v8556, 4
  %v9121 = vsel %vm4624, %v9118, %v9120
  %v9122 = vrot.slane %v8557, 4
  %v9123 = vsel %vm4624, %v9120, %v9122
  %v9124 = vrot.slane %v8558, 4
  %v9125 = vsel %vm4624, %v9122, %v9124
  %v9126 = vrot.slane %v8559, 4
  %v9127 = vsel %vm4624, %v9124, %v9126
  %v9128 = vrot.slane %v8560, 4
  %v9129 = vsel %vm4624, %v9126, %v9128
  %v9130 = vrot.slane %v8561, 4
  %v9131 = vsel %vm4624, %v9128, %v9130
  %v9132 = vrot.slane %v8562, 4
  %v9133 = vsel %vm4624, %v9130, %v9132
  %v9134 = vrot.slane %v8563, 4
  %v9135 = vsel %vm4624, %v9132, %v9134
  %v9136 = vrot.slane %v8564, 4
  %v9137 = vsel %vm4624, %v9134, %v9136
  %v9138 = vrot.slane %v8565, 4
  %v9139 = vsel %vm4624, %v9136, %v9138
  %v9140 = vrot.slane %v8566, 4
  %v9141 = vsel %vm4624, %v9138, %v9140
  %v9142 = vrot.slane %v8567, 4
  %v9143 = vsel %vm4624, %v9140, %v9142
  %v9144 = vrot.slane %v8568, 4
  %v9145 = vsel %vm4624, %v9142, %v9144
  %v9146 = vrot.slane %v8569, 4
  %v9147 = vsel %vm4624, %v9144, %v9146
  %v9148 = vrot.slane %v8570, 4
  %v9149 = vsel %vm4624, %v9146, %v9148
  %v9150 = vrot.slane %v8571, 4
  %v9151 = vsel %vm4624, %v9148, %v9150
  %v9152 = vrot.slane %v8572, 4
  %v9153 = vsel %vm4624, %v9150, %v9152
  %v9154 = vrot.slane %v8573, 4
  %v9155 = vsel %vm4624, %v9152, %v9154
  %v9156 = vrot.slane %v8574, 4
  %v9157 = vsel %vm4624, %v9154, %v9156
  %v9158 = vrot.slane %v8575, 4
  %v9159 = vsel %vm4624, %v9156, %v9158
  %v9160 = vrot.slane %v8576, 4
  %v9161 = vsel %vm4624, %v9158, %v9160
  %v9162 = vrot.slane %v8577, 4
  %v9163 = vsel %vm4624, %v9160, %v9162
  %v9164 = vrot.slane %v8578, 4
  %v9165 = vsel %vm4624, %v9162, %v9164
  %v9166 = vrot.slane %v8579, 4
  %v9167 = vsel %vm4624, %v9164, %v9166
  %v9168 = vrot.slane %v9094, 4
  %v9169 = vsel %vm4624, %v9166, %v9168
  %v9170 = vrot.slane %v9095, 4
  %v9171 = vsel %vm4624, %v9168, %v9170
  %9172 = vrot.lane.b32.xlu0 %v9101, 32
  %v9173 = vpop.permute.xlu0 %9172
  %9174 = vrot.lane.b32.xlu0 %v9103, 32
  %v9175 = vpop.permute.xlu0 %9174
  %9176 = vrot.lane.b32.xlu0 %v9105, 32
  %v9177 = vpop.permute.xlu0 %9176
  %9178 = vrot.lane.b32.xlu0 %v9107, 32
  %v9179 = vpop.permute.xlu0 %9178
  %9180 = vrot.lane.b32.xlu0 %v9109, 32
  %v9181 = vpop.permute.xlu0 %9180
  %9182 = vrot.lane.b32.xlu0 %v9111, 32
  %v9183 = vpop.permute.xlu0 %9182
  %9184 = vrot.lane.b32.xlu0 %v9113, 32
  %v9185 = vpop.permute.xlu0 %9184
  %9186 = vrot.lane.b32.xlu0 %v9115, 32
  %v9187 = vpop.permute.xlu0 %9186
  %9188 = vrot.lane.b32.xlu0 %v9117, 32
  %v9189 = vpop.permute.xlu0 %9188
  %9190 = vrot.lane.b32.xlu0 %v9119, 32
  %v9191 = vpop.permute.xlu0 %9190
  %9192 = vrot.lane.b32.xlu0 %v9121, 32
  %v9193 = vpop.permute.xlu0 %9192
  %9194 = vrot.lane.b32.xlu0 %v9123, 32
  %v9195 = vpop.permute.xlu0 %9194
  %9196 = vrot.lane.b32.xlu0 %v9125, 32
  %v9197 = vpop.permute.xlu0 %9196
  %9198 = vrot.lane.b32.xlu0 %v9127, 32
  %v9199 = vpop.permute.xlu0 %9198
  %9200 = vrot.lane.b32.xlu0 %v9129, 32
  %v9201 = vpop.permute.xlu0 %9200
  %9202 = vrot.lane.b32.xlu0 %v9131, 32
  %v9203 = vpop.permute.xlu0 %9202
  %9204 = vrot.lane.b32.xlu0 %v9133, 32
  %v9205 = vpop.permute.xlu0 %9204
  %9206 = vrot.lane.b32.xlu0 %v9135, 32
  %v9207 = vpop.permute.xlu0 %9206
  %9208 = vrot.lane.b32.xlu0 %v9137, 32
  %v9209 = vpop.permute.xlu0 %9208
  %9210 = vrot.lane.b32.xlu0 %v9139, 32
  %v9211 = vpop.permute.xlu0 %9210
  %9212 = vrot.lane.b32.xlu0 %v9141, 32
  %v9213 = vpop.permute.xlu0 %9212
  %9214 = vrot.lane.b32.xlu0 %v9143, 32
  %v9215 = vpop.permute.xlu0 %9214
  %9216 = vrot.lane.b32.xlu0 %v9145, 32
  %v9217 = vpop.permute.xlu0 %9216
  %9218 = vrot.lane.b32.xlu0 %v9147, 32
  %v9219 = vpop.permute.xlu0 %9218
  %9220 = vrot.lane.b32.xlu0 %v9149, 32
  %v9221 = vpop.permute.xlu0 %9220
  %9222 = vrot.lane.b32.xlu0 %v9151, 32
  %v9223 = vpop.permute.xlu0 %9222
  %9224 = vrot.lane.b32.xlu0 %v9153, 32
  %v9225 = vpop.permute.xlu0 %9224
  %9226 = vrot.lane.b32.xlu0 %v9155, 32
  %v9227 = vpop.permute.xlu0 %9226
  %9228 = vrot.lane.b32.xlu0 %v9157, 32
  %v9229 = vpop.permute.xlu0 %9228
  %9230 = vrot.lane.b32.xlu0 %v9159, 32
  %v9231 = vpop.permute.xlu0 %9230
  %9232 = vrot.lane.b32.xlu0 %v9161, 32
  %v9233 = vpop.permute.xlu0 %9232
  %9234 = vrot.lane.b32.xlu0 %v9163, 32
  %v9235 = vpop.permute.xlu0 %9234
  %9236 = vrot.lane.b32.xlu0 %v9165, 32
  %v9237 = vpop.permute.xlu0 %9236
  %9238 = vrot.lane.b32.xlu0 %v9167, 32
  %v9239 = vpop.permute.xlu0 %9238
  %9240 = vrot.lane.b32.xlu0 %v9169, 32
  %v9241 = vpop.permute.xlu0 %9240
  %9242 = vrot.lane.b32.xlu0 %v9171, 32
  %v9243 = vpop.permute.xlu0 %9242
  %v9280 = vadd.f32 %v9057, %v9173
  %v9281 = vadd.f32 %v9058, %v9175
  %v9282 = vadd.f32 %v9059, %v9177
  %v9283 = vadd.f32 %v9060, %v9179
  %v9284 = vadd.f32 %v9061, %v9181
  %v9285 = vadd.f32 %v9062, %v9183
  %v9286 = vadd.f32 %v9063, %v9185
  %v9287 = vadd.f32 %v9064, %v9187
  %v9288 = vadd.f32 %v9065, %v9189
  %v9289 = vadd.f32 %v9066, %v9191
  %v9290 = vadd.f32 %v9067, %v9193
  %v9291 = vadd.f32 %v9068, %v9195
  %v9292 = vadd.f32 %v9069, %v9197
  %v9293 = vadd.f32 %v9070, %v9199
  %v9294 = vadd.f32 %v9071, %v9201
  %v9295 = vadd.f32 %v9072, %v9203
  %v9296 = vadd.f32 %v9073, %v9205
  %v9297 = vadd.f32 %v9074, %v9207
  %v9298 = vadd.f32 %v9075, %v9209
  %v9299 = vadd.f32 %v9076, %v9211
  %v9300 = vadd.f32 %v9077, %v9213
  %v9301 = vadd.f32 %v9078, %v9215
  %v9302 = vadd.f32 %v9079, %v9217
  %v9303 = vadd.f32 %v9080, %v9219
  %v9304 = vadd.f32 %v9081, %v9221
  %v9305 = vadd.f32 %v9082, %v9223
  %v9306 = vadd.f32 %v9083, %v9225
  %v9307 = vadd.f32 %v9084, %v9227
  %v9308 = vadd.f32 %v9085, %v9229
  %v9309 = vadd.f32 %v9086, %v9231
  %v9310 = vadd.f32 %v9087, %v9233
  %v9311 = vadd.f32 %v9088, %v9235
  %v9312 = vadd.f32 %v9089, %v9237
  %v9313 = vadd.f32 %v9090, %v9239
  %v9314 = vadd.f32 %v9091, %v9241
  %v9315 = vadd.f32 %v9092, %v9243
  %v9316 = vld [vmem:[#allocation3 + $0x20] sm:$0xe0]
  %v9317 = vld [vmem:[#allocation3 + $0x38] sm:$0xff]
  %v9318 = vld [vmem:[#allocation3 + $0x50] sm:$0xff]
  %v9319 = vld [vmem:[#allocation3 + $0x68] sm:$0xff]
  %v9320 = vld [vmem:[#allocation3 + $0x80] sm:$0xff]
  %v9321 = vld [vmem:[#allocation3 + $0x98] sm:$0xff]
  %v9322 = vld [vmem:[#allocation3 + $0xb0] sm:$0xff]
  %v9323 = vld [vmem:[#allocation3 + $0xc8] sm:$0xff]
  %v9324 = vld [vmem:[#allocation3 + $0xe0] sm:$0xff]
  %v9325 = vld [vmem:[#allocation3 + $0xf8] sm:$0xff]
  %v9326 = vld [vmem:[#allocation3 + $0x110] sm:$0xff]
  %v9327 = vld [vmem:[#allocation3 + $0x128] sm:$0xff]
  %v9328 = vld [vmem:[#allocation3 + $0x140] sm:$0xff]
  %v9329 = vld [vmem:[#allocation3 + $0x158] sm:$0xff]
  %v9330 = vld [vmem:[#allocation3 + $0x170] sm:$0xff]
  %v9331 = vld [vmem:[#allocation3 + $0x188] sm:$0xff]
  %v9332 = vld [vmem:[#allocation3 + $0x1a0] sm:$0xff]
  %v9333 = vld [vmem:[#allocation3 + $0x1b8] sm:$0xff]
  %v9334 = vld [vmem:[#allocation3 + $0x1d0] sm:$0xff]
  %v9335 = vld [vmem:[#allocation3 + $0x1e8] sm:$0xff]
  %v9336 = vld [vmem:[#allocation3 + $0x200] sm:$0xff]
  %v9337 = vld [vmem:[#allocation3 + $0x218] sm:$0xff]
  %v9338 = vld [vmem:[#allocation3 + $0x230] sm:$0xff]
  %v9339 = vld [vmem:[#allocation3 + $0x248] sm:$0xff]
  %v9340 = vld [vmem:[#allocation3 + $0x260] sm:$0xff]
  %v9341 = vld [vmem:[#allocation3 + $0x278] sm:$0xff]
  %v9342 = vld [vmem:[#allocation3 + $0x290] sm:$0xff]
  %v9343 = vld [vmem:[#allocation3 + $0x2a8] sm:$0xff]
  %v9344 = vld [vmem:[#allocation3 + $0x2c0] sm:$0xff]
  %v9345 = vld [vmem:[#allocation3 + $0x2d8] sm:$0xff]
  %v9346 = vld [vmem:[#allocation3 + $0x2f0] sm:$0xff]
  %v9347 = vld [vmem:[#allocation3 + $0x308] sm:$0xff]
  %v9348 = vld [vmem:[#allocation3 + $0x320] sm:$0xff]
  %v9349 = vld [vmem:[#allocation3 + $0x338] sm:$0xff]
  %v9350 = vld [vmem:[#allocation3 + $0x350] sm:$0xff]
  %v9351 = vld [vmem:[#allocation3 + $0x368] sm:$0xff]
  %v9352 = vld [vmem:[#allocation3 + $0x380] sm:$0x1f]
  %v9390 = vrot.slane %v9316, 5
  %v9391 = vrot.slane %v9317, 5
  %v9392 = vsel %vm4916, %v9390, %v9391
  %v9393 = vrot.slane %v9318, 5
  %v9394 = vsel %vm4916, %v9391, %v9393
  %v9395 = vrot.slane %v9319, 5
  %v9396 = vsel %vm4916, %v9393, %v9395
  %v9397 = vrot.slane %v9320, 5
  %v9398 = vsel %vm4916, %v9395, %v9397
  %v9399 = vrot.slane %v9321, 5
  %v9400 = vsel %vm4916, %v9397, %v9399
  %v9401 = vrot.slane %v9322, 5
  %v9402 = vsel %vm4916, %v9399, %v9401
  %v9403 = vrot.slane %v9323, 5
  %v9404 = vsel %vm4916, %v9401, %v9403
  %v9405 = vrot.slane %v9324, 5
  %v9406 = vsel %vm4916, %v9403, %v9405
  %v9407 = vrot.slane %v9325, 5
  %v9408 = vsel %vm4916, %v9405, %v9407
  %v9409 = vrot.slane %v9326, 5
  %v9410 = vsel %vm4916, %v9407, %v9409
  %v9411 = vrot.slane %v9327, 5
  %v9412 = vsel %vm4916, %v9409, %v9411
  %v9413 = vrot.slane %v9328, 5
  %v9414 = vsel %vm4916, %v9411, %v9413
  %v9415 = vrot.slane %v9329, 5
  %v9416 = vsel %vm4916, %v9413, %v9415
  %v9417 = vrot.slane %v9330, 5
  %v9418 = vsel %vm4916, %v9415, %v9417
  %v9419 = vrot.slane %v9331, 5
  %v9420 = vsel %vm4916, %v9417, %v9419
  %v9421 = vrot.slane %v9332, 5
  %v9422 = vsel %vm4916, %v9419, %v9421
  %v9423 = vrot.slane %v9333, 5
  %v9424 = vsel %vm4916, %v9421, %v9423
  %v9425 = vrot.slane %v9334, 5
  %v9426 = vsel %vm4916, %v9423, %v9425
  %v9427 = vrot.slane %v9335, 5
  %v9428 = vsel %vm4916, %v9425, %v9427
  %v9429 = vrot.slane %v9336, 5
  %v9430 = vsel %vm4916, %v9427, %v9429
  %v9431 = vrot.slane %v9337, 5
  %v9432 = vsel %vm4916, %v9429, %v9431
  %v9433 = vrot.slane %v9338, 5
  %v9434 = vsel %vm4916, %v9431, %v9433
  %v9435 = vrot.slane %v9339, 5
  %v9436 = vsel %vm4916, %v9433, %v9435
  %v9437 = vrot.slane %v9340, 5
  %v9438 = vsel %vm4916, %v9435, %v9437
  %v9439 = vrot.slane %v9341, 5
  %v9440 = vsel %vm4916, %v9437, %v9439
  %v9441 = vrot.slane %v9342, 5
  %v9442 = vsel %vm4916, %v9439, %v9441
  %v9443 = vrot.slane %v9343, 5
  %v9444 = vsel %vm4916, %v9441, %v9443
  %v9445 = vrot.slane %v9344, 5
  %v9446 = vsel %vm4916, %v9443, %v9445
  %v9447 = vrot.slane %v9345, 5
  %v9448 = vsel %vm4916, %v9445, %v9447
  %v9449 = vrot.slane %v9346, 5
  %v9450 = vsel %vm4916, %v9447, %v9449
  %v9451 = vrot.slane %v9347, 5
  %v9452 = vsel %vm4916, %v9449, %v9451
  %v9453 = vrot.slane %v9348, 5
  %v9454 = vsel %vm4916, %v9451, %v9453
  %v9455 = vrot.slane %v9349, 5
  %v9456 = vsel %vm4916, %v9453, %v9455
  %v9457 = vrot.slane %v9350, 5
  %v9458 = vsel %vm4916, %v9455, %v9457
  %v9459 = vrot.slane %v9351, 5
  %v9460 = vsel %vm4916, %v9457, %v9459
  %v9461 = vrot.slane %v9352, 5
  %v9462 = vsel %vm4916, %v9459, %v9461
  %v9499 = vadd.f32 %v9280, %v9392
  %v9500 = vadd.f32 %v9281, %v9394
  %v9501 = vadd.f32 %v9282, %v9396
  %v9502 = vadd.f32 %v9283, %v9398
  %v9503 = vadd.f32 %v9284, %v9400
  %v9504 = vadd.f32 %v9285, %v9402
  %v9505 = vadd.f32 %v9286, %v9404
  %v9506 = vadd.f32 %v9287, %v9406
  %v9507 = vadd.f32 %v9288, %v9408
  %v9508 = vadd.f32 %v9289, %v9410
  %v9509 = vadd.f32 %v9290, %v9412
  %v9510 = vadd.f32 %v9291, %v9414
  %v9511 = vadd.f32 %v9292, %v9416
  %v9512 = vadd.f32 %v9293, %v9418
  %v9513 = vadd.f32 %v9294, %v9420
  %v9514 = vadd.f32 %v9295, %v9422
  %v9515 = vadd.f32 %v9296, %v9424
  %v9516 = vadd.f32 %v9297, %v9426
  %v9517 = vadd.f32 %v9298, %v9428
  %v9518 = vadd.f32 %v9299, %v9430
  %v9519 = vadd.f32 %v9300, %v9432
  %v9520 = vadd.f32 %v9301, %v9434
  %v9521 = vadd.f32 %v9302, %v9436
  %v9522 = vadd.f32 %v9303, %v9438
  %v9523 = vadd.f32 %v9304, %v9440
  %v9524 = vadd.f32 %v9305, %v9442
  %v9525 = vadd.f32 %v9306, %v9444
  %v9526 = vadd.f32 %v9307, %v9446
  %v9527 = vadd.f32 %v9308, %v9448
  %v9528 = vadd.f32 %v9309, %v9450
  %v9529 = vadd.f32 %v9310, %v9452
  %v9530 = vadd.f32 %v9311, %v9454
  %v9531 = vadd.f32 %v9312, %v9456
  %v9532 = vadd.f32 %v9313, %v9458
  %v9533 = vadd.f32 %v9314, %v9460
  %v9534 = vadd.f32 %v9315, %v9462
  %v9535 = vld [vmem:[#allocation3 + $0x20] sm:$0xc0]
  %v9536 = vld [vmem:[#allocation3 + $0x380] sm:$0x3f]
  %v9539 = vrot.slane %v9535, 6
  %v9540 = vrot.slane %v9317, 6
  %v9541 = vsel %vm5066, %v9539, %v9540
  %v9542 = vrot.slane %v9318, 6
  %v9543 = vsel %vm5066, %v9540, %v9542
  %v9544 = vrot.slane %v9319, 6
  %v9545 = vsel %vm5066, %v9542, %v9544
  %v9546 = vrot.slane %v9320, 6
  %v9547 = vsel %vm5066, %v9544, %v9546
  %v9548 = vrot.slane %v9321, 6
  %v9549 = vsel %vm5066, %v9546, %v9548
  %v9550 = vrot.slane %v9322, 6
  %v9551 = vsel %vm5066, %v9548, %v9550
  %v9552 = vrot.slane %v9323, 6
  %v9553 = vsel %vm5066, %v9550, %v9552
  %v9554 = vrot.slane %v9324, 6
  %v9555 = vsel %vm5066, %v9552, %v9554
  %v9556 = vrot.slane %v9325, 6
  %v9557 = vsel %vm5066, %v9554, %v9556
  %v9558 = vrot.slane %v9326, 6
  %v9559 = vsel %vm5066, %v9556, %v9558
  %v9560 = vrot.slane %v9327, 6
  %v9561 = vsel %vm5066, %v9558, %v9560
  %v9562 = vrot.slane %v9328, 6
  %v9563 = vsel %vm5066, %v9560, %v9562
  %v9564 = vrot.slane %v9329, 6
  %v9565 = vsel %vm5066, %v9562, %v9564
  %v9566 = vrot.slane %v9330, 6
  %v9567 = vsel %vm5066, %v9564, %v9566
  %v9568 = vrot.slane %v9331, 6
  %v9569 = vsel %vm5066, %v9566, %v9568
  %v9570 = vrot.slane %v9332, 6
  %v9571 = vsel %vm5066, %v9568, %v9570
  %v9572 = vrot.slane %v9333, 6
  %v9573 = vsel %vm5066, %v9570, %v9572
  %v9574 = vrot.slane %v9334, 6
  %v9575 = vsel %vm5066, %v9572, %v9574
  %v9576 = vrot.slane %v9335, 6
  %v9577 = vsel %vm5066, %v9574, %v9576
  %v9578 = vrot.slane %v9336, 6
  %v9579 = vsel %vm5066, %v9576, %v9578
  %v9580 = vrot.slane %v9337, 6
  %v9581 = vsel %vm5066, %v9578, %v9580
  %v9582 = vrot.slane %v9338, 6
  %v9583 = vsel %vm5066, %v9580, %v9582
  %v9584 = vrot.slane %v9339, 6
  %v9585 = vsel %vm5066, %v9582, %v9584
  %v9586 = vrot.slane %v9340, 6
  %v9587 = vsel %vm5066, %v9584, %v9586
  %v9588 = vrot.slane %v9341, 6
  %v9589 = vsel %vm5066, %v9586, %v9588
  %v9590 = vrot.slane %v9342, 6
  %v9591 = vsel %vm5066, %v9588, %v9590
  %v9592 = vrot.slane %v9343, 6
  %v9593 = vsel %vm5066, %v9590, %v9592
  %v9594 = vrot.slane %v9344, 6
  %v9595 = vsel %vm5066, %v9592, %v9594
  %v9596 = vrot.slane %v9345, 6
  %v9597 = vsel %vm5066, %v9594, %v9596
  %v9598 = vrot.slane %v9346, 6
  %v9599 = vsel %vm5066, %v9596, %v9598
  %v9600 = vrot.slane %v9347, 6
  %v9601 = vsel %vm5066, %v9598, %v9600
  %v9602 = vrot.slane %v9348, 6
  %v9603 = vsel %vm5066, %v9600, %v9602
  %v9604 = vrot.slane %v9349, 6
  %v9605 = vsel %vm5066, %v9602, %v9604
  %v9606 = vrot.slane %v9350, 6
  %v9607 = vsel %vm5066, %v9604, %v9606
  %v9608 = vrot.slane %v9351, 6
  %v9609 = vsel %vm5066, %v9606, %v9608
  %v9610 = vrot.slane %v9536, 6
  %v9611 = vsel %vm5066, %v9608, %v9610
  %9612 = vrot.lane.b32.xlu0 %v9541, 96
  %v9613 = vpop.permute.xlu0 %9612
  %9614 = vrot.lane.b32.xlu0 %v9543, 96
  %v9615 = vpop.permute.xlu0 %9614
  %9616 = vrot.lane.b32.xlu0 %v9545, 96
  %v9617 = vpop.permute.xlu0 %9616
  %9618 = vrot.lane.b32.xlu0 %v9547, 96
  %v9619 = vpop.permute.xlu0 %9618
  %9620 = vrot.lane.b32.xlu0 %v9549, 96
  %v9621 = vpop.permute.xlu0 %9620
  %9622 = vrot.lane.b32.xlu0 %v9551, 96
  %v9623 = vpop.permute.xlu0 %9622
  %9624 = vrot.lane.b32.xlu0 %v9553, 96
  %v9625 = vpop.permute.xlu0 %9624
  %9626 = vrot.lane.b32.xlu0 %v9555, 96
  %v9627 = vpop.permute.xlu0 %9626
  %9628 = vrot.lane.b32.xlu0 %v9557, 96
  %v9629 = vpop.permute.xlu0 %9628
  %9630 = vrot.lane.b32.xlu0 %v9559, 96
  %v9631 = vpop.permute.xlu0 %9630
  %9632 = vrot.lane.b32.xlu0 %v9561, 96
  %v9633 = vpop.permute.xlu0 %9632
  %9634 = vrot.lane.b32.xlu0 %v9563, 96
  %v9635 = vpop.permute.xlu0 %9634
  %9636 = vrot.lane.b32.xlu0 %v9565, 96
  %v9637 = vpop.permute.xlu0 %9636
  %9638 = vrot.lane.b32.xlu0 %v9567, 96
  %v9639 = vpop.permute.xlu0 %9638
  %9640 = vrot.lane.b32.xlu0 %v9569, 96
  %v9641 = vpop.permute.xlu0 %9640
  %9642 = vrot.lane.b32.xlu0 %v9571, 96
  %v9643 = vpop.permute.xlu0 %9642
  %9644 = vrot.lane.b32.xlu0 %v9573, 96
  %v9645 = vpop.permute.xlu0 %9644
  %9646 = vrot.lane.b32.xlu0 %v9575, 96
  %v9647 = vpop.permute.xlu0 %9646
  %9648 = vrot.lane.b32.xlu0 %v9577, 96
  %v9649 = vpop.permute.xlu0 %9648
  %9650 = vrot.lane.b32.xlu0 %v9579, 96
  %v9651 = vpop.permute.xlu0 %9650
  %9652 = vrot.lane.b32.xlu0 %v9581, 96
  %v9653 = vpop.permute.xlu0 %9652
  %9654 = vrot.lane.b32.xlu0 %v9583, 96
  %v9655 = vpop.permute.xlu0 %9654
  %9656 = vrot.lane.b32.xlu0 %v9585, 96
  %v9657 = vpop.permute.xlu0 %9656
  %9658 = vrot.lane.b32.xlu0 %v9587, 96
  %v9659 = vpop.permute.xlu0 %9658
  %9660 = vrot.lane.b32.xlu0 %v9589, 96
  %v9661 = vpop.permute.xlu0 %9660
  %9662 = vrot.lane.b32.xlu0 %v9591, 96
  %v9663 = vpop.permute.xlu0 %9662
  %9664 = vrot.lane.b32.xlu0 %v9593, 96
  %v9665 = vpop.permute.xlu0 %9664
  %9666 = vrot.lane.b32.xlu0 %v9595, 96
  %v9667 = vpop.permute.xlu0 %9666
  %9668 = vrot.lane.b32.xlu0 %v9597, 96
  %v9669 = vpop.permute.xlu0 %9668
  %9670 = vrot.lane.b32.xlu0 %v9599, 96
  %v9671 = vpop.permute.xlu0 %9670
  %9672 = vrot.lane.b32.xlu0 %v9601, 96
  %v9673 = vpop.permute.xlu0 %9672
  %9674 = vrot.lane.b32.xlu0 %v9603, 96
  %v9675 = vpop.permute.xlu0 %9674
  %9676 = vrot.lane.b32.xlu0 %v9605, 96
  %v9677 = vpop.permute.xlu0 %9676
  %9678 = vrot.lane.b32.xlu0 %v9607, 96
  %v9679 = vpop.permute.xlu0 %9678
  %9680 = vrot.lane.b32.xlu0 %v9609, 96
  %v9681 = vpop.permute.xlu0 %9680
  %9682 = vrot.lane.b32.xlu0 %v9611, 96
  %v9683 = vpop.permute.xlu0 %9682
  %v9720 = vadd.f32 %v9499, %v9613
  %v9721 = vadd.f32 %v9500, %v9615
  %v9722 = vadd.f32 %v9501, %v9617
  %v9723 = vadd.f32 %v9502, %v9619
  %v9724 = vadd.f32 %v9503, %v9621
  %v9725 = vadd.f32 %v9504, %v9623
  %v9726 = vadd.f32 %v9505, %v9625
  %v9727 = vadd.f32 %v9506, %v9627
  %v9728 = vadd.f32 %v9507, %v9629
  %v9729 = vadd.f32 %v9508, %v9631
  %v9730 = vadd.f32 %v9509, %v9633
  %v9731 = vadd.f32 %v9510, %v9635
  %v9732 = vadd.f32 %v9511, %v9637
  %v9733 = vadd.f32 %v9512, %v9639
  %v9734 = vadd.f32 %v9513, %v9641
  %v9735 = vadd.f32 %v9514, %v9643
  %v9736 = vadd.f32 %v9515, %v9645
  %v9737 = vadd.f32 %v9516, %v9647
  %v9738 = vadd.f32 %v9517, %v9649
  %v9739 = vadd.f32 %v9518, %v9651
  %v9740 = vadd.f32 %v9519, %v9653
  %v9741 = vadd.f32 %v9520, %v9655
  %v9742 = vadd.f32 %v9521, %v9657
  %v9743 = vadd.f32 %v9522, %v9659
  %v9744 = vadd.f32 %v9523, %v9661
  %v9745 = vadd.f32 %v9524, %v9663
  %v9746 = vadd.f32 %v9525, %v9665
  %v9747 = vadd.f32 %v9526, %v9667
  %v9748 = vadd.f32 %v9527, %v9669
  %v9749 = vadd.f32 %v9528, %v9671
  %v9750 = vadd.f32 %v9529, %v9673
  %v9751 = vadd.f32 %v9530, %v9675
  %v9752 = vadd.f32 %v9531, %v9677
  %v9753 = vadd.f32 %v9532, %v9679
  %v9754 = vadd.f32 %v9533, %v9681
  %v9755 = vadd.f32 %v9534, %v9683
  %v9756 = vld [vmem:[#allocation2 + $0x1b0] sm:$0xf]
  %v9757 = vld [vmem:[#allocation2 + $0x1b4] sm:$0xf]
  %v9758 = vld [vmem:[#allocation2 + $0x1b8] sm:$0xf]
  %v9759 = vld [vmem:[#allocation2 + $0x1bc] sm:$0xf]
  %v9760 = vld [vmem:[#allocation2 + $0x1c0] sm:$0xf]
  %v9761 = vld [vmem:[#allocation2 + $0x1c4] sm:$0xf]
  %v9762 = vld [vmem:[#allocation2 + $0x1c8] sm:$0xf]
  %v9763 = vld [vmem:[#allocation2 + $0x1cc] sm:$0xf]
  %v9764 = vld [vmem:[#allocation2 + $0x1d0] sm:$0xf]
  %v9765 = vld [vmem:[#allocation2 + $0x1d4] sm:$0xf]
  %v9766 = vld [vmem:[#allocation2 + $0x1d8] sm:$0xf]
  %v9767 = vld [vmem:[#allocation2 + $0x1dc] sm:$0xf]
  %v9768 = vld [vmem:[#allocation2 + $0x1e0] sm:$0xf]
  %v9769 = vld [vmem:[#allocation2 + $0x1e4] sm:$0xf]
  %v9770 = vld [vmem:[#allocation2 + $0x1e8] sm:$0xf]
  %v9771 = vld [vmem:[#allocation2 + $0x1ec] sm:$0xf]
  %v9772 = vld [vmem:[#allocation2 + $0x1f0] sm:$0xf]
  %v9773 = vld [vmem:[#allocation2 + $0x1f4] sm:$0xf]
  %v9774 = vld [vmem:[#allocation2 + $0x1f8] sm:$0xf]
  %v9775 = vld [vmem:[#allocation2 + $0x1fc] sm:$0xf]
  %v9776 = vld [vmem:[#allocation2 + $0x200] sm:$0xf]
  %v9777 = vld [vmem:[#allocation2 + $0x204] sm:$0xf]
  %v9778 = vld [vmem:[#allocation2 + $0x208] sm:$0xf]
  %v9779 = vld [vmem:[#allocation2 + $0x20c] sm:$0xf]
  %v9780 = vld [vmem:[#allocation2 + $0x210] sm:$0xf]
  %v9781 = vld [vmem:[#allocation2 + $0x214] sm:$0xf]
  %v9782 = vld [vmem:[#allocation2 + $0x218] sm:$0xf]
  %v9783 = vld [vmem:[#allocation2 + $0x21c] sm:$0xf]
  %v9784 = vld [vmem:[#allocation2 + $0x220] sm:$0xf]
  %v9785 = vld [vmem:[#allocation2 + $0x224] sm:$0xf]
  %v9786 = vld [vmem:[#allocation2 + $0x228] sm:$0xf]
  %v9787 = vld [vmem:[#allocation2 + $0x22c] sm:$0xf]
  %v9788 = vld [vmem:[#allocation2 + $0x230] sm:$0xf]
  %v9789 = vld [vmem:[#allocation2 + $0x234] sm:$0xf]
  %v9790 = vld [vmem:[#allocation2 + $0x238] sm:$0xf]
  %v9791 = vld [vmem:[#allocation2 + $0x23c] sm:$0xf]
  %v9792 = vld [vmem:[#allocation2 + $0x240] sm:$0xf]
  %v9793 = vld [vmem:[#allocation2 + $0x244] sm:$0xf]
  %v9794 = vld [vmem:[#allocation2 + $0x248] sm:$0xf]
  %v9795 = vld [vmem:[#allocation2 + $0x24c] sm:$0xf]
  %v9796 = vld [vmem:[%s2 + $0x90] sm:$0xff]
  %v9797 = vld [vmem:[%s2 + $0x98] sm:$0xf]
  %v9798 = vld [vmem:[%s2 + $0x9c] sm:$0xff]
  %v9799 = vld [vmem:[%s2 + $0xa4] sm:$0xf]
  %v9800 = vld [vmem:[%s2 + $0xa8] sm:$0xff]
  %v9801 = vld [vmem:[%s2 + $0xb0] sm:$0xf]
  %v9802 = vld [vmem:[%s2 + $0xb4] sm:$0xff]
  %v9803 = vld [vmem:[%s2 + $0xbc] sm:$0xf]
  %v9844 = vunpack.c.l.b16 %v9756
  %v9845 = vunpack.c.l.b16 %v9757
  %v9846 = vunpack.c.l.b16 %v9758
  %v9847 = vunpack.c.l.b16 %v9759
  %v9848 = vunpack.c.l.b16 %v9760
  %v9849 = vunpack.c.l.b16 %v9761
  %v9850 = vunpack.c.l.b16 %v9762
  %v9851 = vunpack.c.l.b16 %v9763
  %v9852 = vunpack.c.l.b16 %v9764
  %v9853 = vunpack.c.l.b16 %v9765
  %v9854 = vunpack.c.l.b16 %v9766
  %v9855 = vunpack.c.l.b16 %v9767
  %v9856 = vunpack.c.l.b16 %v9768
  %v9857 = vunpack.c.l.b16 %v9769
  %v9858 = vunpack.c.l.b16 %v9770
  %v9859 = vunpack.c.l.b16 %v9771
  %v9860 = vunpack.c.l.b16 %v9772
  %v9861 = vunpack.c.l.b16 %v9773
  %v9862 = vunpack.c.l.b16 %v9774
  %v9863 = vunpack.c.l.b16 %v9775
  %v9864 = vunpack.c.l.b16 %v9776
  %v9865 = vunpack.c.l.b16 %v9777
  %v9866 = vunpack.c.l.b16 %v9778
  %v9867 = vunpack.c.l.b16 %v9779
  %v9868 = vunpack.c.l.b16 %v9780
  %v9869 = vunpack.c.l.b16 %v9781
  %v9870 = vunpack.c.l.b16 %v9782
  %v9871 = vunpack.c.l.b16 %v9783
  %v9872 = vunpack.c.l.b16 %v9784
  %v9873 = vunpack.c.l.b16 %v9785
  %v9874 = vunpack.c.l.b16 %v9786
  %v9875 = vunpack.c.l.b16 %v9787
  %v9876 = vunpack.c.l.b16 %v9788
  %v9877 = vunpack.c.l.b16 %v9789
  %v9878 = vunpack.c.l.b16 %v9790
  %v9879 = vunpack.c.l.b16 %v9791
  %v9880 = vunpack.c.l.b16 %v9792
  %v9881 = vunpack.c.l.b16 %v9793
  %v9882 = vunpack.c.l.b16 %v9794
  %v9883 = vunpack.c.l.b16 %v9795
  %v9884 = vpack.c.b16 %v9845, %v9844
  %v9885 = vpack.c.b16 %v9847, %v9846
  %v9886 = vpack.c.b16 %v9849, %v9848
  %v9887 = vpack.c.b16 %v9851, %v9850
  %v9888 = vpack.c.b16 %v9853, %v9852
  %v9889 = vpack.c.b16 %v9855, %v9854
  %v9890 = vpack.c.b16 %v9857, %v9856
  %v9891 = vpack.c.b16 %v9859, %v9858
  %v9892 = vpack.c.b16 %v9861, %v9860
  %v9893 = vpack.c.b16 %v9863, %v9862
  %v9894 = vpack.c.b16 %v9865, %v9864
  %v9895 = vpack.c.b16 %v9867, %v9866
  %v9896 = vpack.c.b16 %v9869, %v9868
  %v9897 = vpack.c.b16 %v9871, %v9870
  %v9898 = vpack.c.b16 %v9873, %v9872
  %v9899 = vpack.c.b16 %v9875, %v9874
  %v9900 = vpack.c.b16 %v9877, %v9876
  %v9901 = vpack.c.b16 %v9879, %v9878
  %v9902 = vpack.c.b16 %v9881, %v9880
  %v9903 = vpack.c.b16 %v9883, %v9882
  %v9912 = vunpack.c.l.b16 %v9796
  %v9913 = vunpack.c.h.b16 %v9796
  %v9914 = vunpack.c.l.b16 %v9797
  %v9915 = vunpack.c.l.b16 %v9798
  %v9916 = vunpack.c.h.b16 %v9798
  %v9917 = vunpack.c.l.b16 %v9799
  %v9918 = vunpack.c.l.b16 %v9800
  %v9919 = vunpack.c.h.b16 %v9800
  %v9920 = vunpack.c.l.b16 %v9801
  %v9921 = vunpack.c.l.b16 %v9802
  %v9922 = vunpack.c.h.b16 %v9802
  %v9923 = vunpack.c.l.b16 %v9803
  %v9924 = vpack.c.b16 %v9915, %v9912
  %v9925 = vpack.c.b16 %v9916, %v9913
  %v9926 = vpack.c.b16 %v9917, %v9914
  %v9927 = vpack.c.b16 %v9921, %v9918
  %v9928 = vpack.c.b16 %v9922, %v9919
  %v9929 = vpack.c.b16 %v9923, %v9920
  %v9937 = vsel %vm547, %v9884, 0
  %v9940 = vsel %vm547, %v9885, 0
  %v9943 = vsel %vm547, %v9886, 0
  %v9946 = vsel %vm547, %v9887, 0
  %v9949 = vsel %vm547, %v9888, 0
  %v9952 = vsel %vm547, %v9889, 0
  %v9955 = vsel %vm547, %v9890, 0
  %v9958 = vsel %vm547, %v9891, 0
  %v9961 = vsel %vm547, %v9892, 0
  %v9964 = vsel %vm547, %v9893, 0
  %v9967 = vsel %vm547, %v9894, 0
  %v9970 = vsel %vm547, %v9895, 0
  %v9973 = vsel %vm547, %v9896, 0
  %v9976 = vsel %vm547, %v9897, 0
  %v9979 = vsel %vm547, %v9898, 0
  %v9982 = vsel %vm547, %v9899, 0
  %v9985 = vsel %vm547, %v9900, 0
  %v9988 = vsel %vm547, %v9901, 0
  %v9991 = vsel %vm547, %v9902, 0
  %v9994 = vsel %vm547, %v9903, 0
  %9996 = vmatprep.subr.bf16.mxu0 0
  %9997 = vmatpush1.bf16.msra.mxu0 0
  %9998 = vmatprep.subr.bf16.mxu0 0
  %9999 = vmatpush1.bf16.msra.mxu0 0
  %10000 = vmatprep.subr.bf16.mxu0 0
  %10001 = vmatpush1.bf16.msra.mxu0 0
  %10002 = vmatprep.subr.bf16.mxu0 0
  %10003 = vmatpush1.bf16.msra.mxu0 0
  %10004 = vmatprep.subr.bf16.mxu0 0
  %10005 = vmatpush1.bf16.msra.mxu0 0
  %10006 = vmatprep.subr.bf16.mxu0 0
  %10007 = vmatpush1.bf16.msra.mxu0 0
  %10008 = vmatprep.subr.bf16.mxu0 %v9928
  %10009 = vmatpush1.bf16.msra.mxu0 %v9927
  %10010 = vmatprep.subr.bf16.mxu0 %v9925
  %10011 = vmatpush1.bf16.msra.mxu0 %v9924
  %10012 = vmatprep.subr.bf16.mxu0 0
  %10013 = vmatpush2.bf16.msra.mxu0 0
  %10014 = vmatprep.subr.bf16.mxu0 0
  %10015 = vmatpush2.bf16.msra.mxu0 0
  %10016 = vmatprep.subr.bf16.mxu0 0
  %10017 = vmatpush2.bf16.msra.mxu0 0
  %10018 = vmatprep.subr.bf16.mxu0 0
  %10019 = vmatpush2.bf16.msra.mxu0 0
  %10020 = vmatprep.subr.bf16.mxu0 0
  %10021 = vmatpush2.bf16.msra.mxu0 0
  %10022 = vmatprep.subr.bf16.mxu0 0
  %10023 = vmatpush2.bf16.msra.mxu0 0
  %10024 = vmatprep.subr.bf16.mxu0 0
  %10025 = vmatpush2.bf16.msra.mxu0 0
  %10026 = vmatprep.subr.bf16.mxu0 0
  %10027 = vmatpush2.bf16.msra.mxu0 0
  %10028 = vmatprep.mubr.bf16.mxu0 0
  %10029 = vmatmul.mubr.bf16.gmra.mxu0 %v9937
  %v10030 = vpop.f32.mrf.mxu0
  %v10031 = vadd.f32 0.0, %v10030
  %v10032 = vpop.f32.mrf.mxu0
  %v10033 = vadd.f32 0.0, %v10032
  %v10034 = vpop.f32.mrf.mxu0
  %v10035 = vadd.f32 0.0, %v10034
  %v10036 = vpop.f32.mrf.mxu0
  %v10037 = vadd.f32 0.0, %v10036
  %10038 = vmatprep.mubr.bf16.mxu0 0
  %10039 = vmatmul.mubr.bf16.gmra.mxu0 %v9940
  %v10040 = vpop.f32.mrf.mxu0
  %v10041 = vadd.f32 0.0, %v10040
  %v10042 = vpop.f32.mrf.mxu0
  %v10043 = vadd.f32 0.0, %v10042
  %v10044 = vpop.f32.mrf.mxu0
  %v10045 = vadd.f32 0.0, %v10044
  %v10046 = vpop.f32.mrf.mxu0
  %v10047 = vadd.f32 0.0, %v10046
  %10048 = vmatprep.mubr.bf16.mxu0 0
  %10049 = vmatmul.mubr.bf16.gmra.mxu0 %v9943
  %v10050 = vpop.f32.mrf.mxu0
  %v10051 = vadd.f32 0.0, %v10050
  %v10052 = vpop.f32.mrf.mxu0
  %v10053 = vadd.f32 0.0, %v10052
  %v10054 = vpop.f32.mrf.mxu0
  %v10055 = vadd.f32 0.0, %v10054
  %v10056 = vpop.f32.mrf.mxu0
  %v10057 = vadd.f32 0.0, %v10056
  %10058 = vmatprep.mubr.bf16.mxu0 0
  %10059 = vmatmul.mubr.bf16.gmra.mxu0 %v9946
  %v10060 = vpop.f32.mrf.mxu0
  %v10061 = vadd.f32 0.0, %v10060
  %v10062 = vpop.f32.mrf.mxu0
  %v10063 = vadd.f32 0.0, %v10062
  %v10064 = vpop.f32.mrf.mxu0
  %v10065 = vadd.f32 0.0, %v10064
  %v10066 = vpop.f32.mrf.mxu0
  %v10067 = vadd.f32 0.0, %v10066
  %10068 = vmatprep.mubr.bf16.mxu0 0
  %10069 = vmatmul.mubr.bf16.gmra.mxu0 %v9949
  %v10070 = vpop.f32.mrf.mxu0
  %v10071 = vadd.f32 0.0, %v10070
  %v10072 = vpop.f32.mrf.mxu0
  %v10073 = vadd.f32 0.0, %v10072
  %v10074 = vpop.f32.mrf.mxu0
  %v10075 = vadd.f32 0.0, %v10074
  %v10076 = vpop.f32.mrf.mxu0
  %v10077 = vadd.f32 0.0, %v10076
  %10078 = vmatprep.mubr.bf16.mxu0 0
  %10079 = vmatmul.mubr.bf16.gmra.mxu0 %v9952
  %v10080 = vpop.f32.mrf.mxu0
  %v10081 = vadd.f32 0.0, %v10080
  %v10082 = vpop.f32.mrf.mxu0
  %v10083 = vadd.f32 0.0, %v10082
  %v10084 = vpop.f32.mrf.mxu0
  %v10085 = vadd.f32 0.0, %v10084
  %v10086 = vpop.f32.mrf.mxu0
  %v10087 = vadd.f32 0.0, %v10086
  %10088 = vmatprep.mubr.bf16.mxu0 0
  %10089 = vmatmul.mubr.bf16.gmra.mxu0 %v9955
  %v10090 = vpop.f32.mrf.mxu0
  %v10091 = vadd.f32 0.0, %v10090
  %v10092 = vpop.f32.mrf.mxu0
  %v10093 = vadd.f32 0.0, %v10092
  %v10094 = vpop.f32.mrf.mxu0
  %v10095 = vadd.f32 0.0, %v10094
  %v10096 = vpop.f32.mrf.mxu0
  %v10097 = vadd.f32 0.0, %v10096
  %10098 = vmatprep.mubr.bf16.mxu0 0
  %10099 = vmatmul.mubr.bf16.gmra.mxu0 %v9958
  %v10100 = vpop.f32.mrf.mxu0
  %v10101 = vadd.f32 0.0, %v10100
  %v10102 = vpop.f32.mrf.mxu0
  %v10103 = vadd.f32 0.0, %v10102
  %v10104 = vpop.f32.mrf.mxu0
  %v10105 = vadd.f32 0.0, %v10104
  %v10106 = vpop.f32.mrf.mxu0
  %v10107 = vadd.f32 0.0, %v10106
  %10108 = vmatprep.mubr.bf16.mxu0 0
  %10109 = vmatmul.mubr.bf16.gmra.mxu0 %v9961
  %v10110 = vpop.f32.mrf.mxu0
  %v10111 = vadd.f32 0.0, %v10110
  %v10112 = vpop.f32.mrf.mxu0
  %v10113 = vadd.f32 0.0, %v10112
  %v10114 = vpop.f32.mrf.mxu0
  %v10115 = vadd.f32 0.0, %v10114
  %v10116 = vpop.f32.mrf.mxu0
  %v10117 = vadd.f32 0.0, %v10116
  %10118 = vmatprep.mubr.bf16.mxu0 0
  %10119 = vmatmul.mubr.bf16.gmra.mxu0 %v9964
  %v10120 = vpop.f32.mrf.mxu0
  %v10121 = vadd.f32 0.0, %v10120
  %v10122 = vpop.f32.mrf.mxu0
  %v10123 = vadd.f32 0.0, %v10122
  %v10124 = vpop.f32.mrf.mxu0
  %v10125 = vadd.f32 0.0, %v10124
  %v10126 = vpop.f32.mrf.mxu0
  %v10127 = vadd.f32 0.0, %v10126
  %10128 = vmatprep.mubr.bf16.mxu0 0
  %10129 = vmatmul.mubr.bf16.gmra.mxu0 %v9967
  %v10130 = vpop.f32.mrf.mxu0
  %v10131 = vadd.f32 0.0, %v10130
  %v10132 = vpop.f32.mrf.mxu0
  %v10133 = vadd.f32 0.0, %v10132
  %v10134 = vpop.f32.mrf.mxu0
  %v10135 = vadd.f32 0.0, %v10134
  %v10136 = vpop.f32.mrf.mxu0
  %v10137 = vadd.f32 0.0, %v10136
  %10138 = vmatprep.mubr.bf16.mxu0 0
  %10139 = vmatmul.mubr.bf16.gmra.mxu0 %v9970
  %v10140 = vpop.f32.mrf.mxu0
  %v10141 = vadd.f32 0.0, %v10140
  %v10142 = vpop.f32.mrf.mxu0
  %v10143 = vadd.f32 0.0, %v10142
  %v10144 = vpop.f32.mrf.mxu0
  %v10145 = vadd.f32 0.0, %v10144
  %v10146 = vpop.f32.mrf.mxu0
  %v10147 = vadd.f32 0.0, %v10146
  %10148 = vmatprep.mubr.bf16.mxu0 0
  %10149 = vmatmul.mubr.bf16.gmra.mxu0 %v9973
  %v10150 = vpop.f32.mrf.mxu0
  %v10151 = vadd.f32 0.0, %v10150
  %v10152 = vpop.f32.mrf.mxu0
  %v10153 = vadd.f32 0.0, %v10152
  %v10154 = vpop.f32.mrf.mxu0
  %v10155 = vadd.f32 0.0, %v10154
  %v10156 = vpop.f32.mrf.mxu0
  %v10157 = vadd.f32 0.0, %v10156
  %10158 = vmatprep.mubr.bf16.mxu0 0
  %10159 = vmatmul.mubr.bf16.gmra.mxu0 %v9976
  %v10160 = vpop.f32.mrf.mxu0
  %v10161 = vadd.f32 0.0, %v10160
  %v10162 = vpop.f32.mrf.mxu0
  %v10163 = vadd.f32 0.0, %v10162
  %v10164 = vpop.f32.mrf.mxu0
  %v10165 = vadd.f32 0.0, %v10164
  %v10166 = vpop.f32.mrf.mxu0
  %v10167 = vadd.f32 0.0, %v10166
  %10168 = vmatprep.mubr.bf16.mxu0 0
  %10169 = vmatmul.mubr.bf16.gmra.mxu0 %v9979
  %v10170 = vpop.f32.mrf.mxu0
  %v10171 = vadd.f32 0.0, %v10170
  %v10172 = vpop.f32.mrf.mxu0
  %v10173 = vadd.f32 0.0, %v10172
  %v10174 = vpop.f32.mrf.mxu0
  %v10175 = vadd.f32 0.0, %v10174
  %v10176 = vpop.f32.mrf.mxu0
  %v10177 = vadd.f32 0.0, %v10176
  %10178 = vmatprep.mubr.bf16.mxu0 0
  %10179 = vmatmul.mubr.bf16.gmra.mxu0 %v9982
  %v10180 = vpop.f32.mrf.mxu0
  %v10181 = vadd.f32 0.0, %v10180
  %v10182 = vpop.f32.mrf.mxu0
  %v10183 = vadd.f32 0.0, %v10182
  %v10184 = vpop.f32.mrf.mxu0
  %v10185 = vadd.f32 0.0, %v10184
  %v10186 = vpop.f32.mrf.mxu0
  %v10187 = vadd.f32 0.0, %v10186
  %10188 = vmatprep.mubr.bf16.mxu0 0
  %10189 = vmatmul.mubr.bf16.gmra.mxu0 %v9985
  %v10190 = vpop.f32.mrf.mxu0
  %v10191 = vadd.f32 0.0, %v10190
  %v10192 = vpop.f32.mrf.mxu0
  %v10193 = vadd.f32 0.0, %v10192
  %v10194 = vpop.f32.mrf.mxu0
  %v10195 = vadd.f32 0.0, %v10194
  %v10196 = vpop.f32.mrf.mxu0
  %v10197 = vadd.f32 0.0, %v10196
  %10198 = vmatprep.mubr.bf16.mxu0 0
  %10199 = vmatmul.mubr.bf16.gmra.mxu0 %v9988
  %v10200 = vpop.f32.mrf.mxu0
  %v10201 = vadd.f32 0.0, %v10200
  %v10202 = vpop.f32.mrf.mxu0
  %v10203 = vadd.f32 0.0, %v10202
  %v10204 = vpop.f32.mrf.mxu0
  %v10205 = vadd.f32 0.0, %v10204
  %v10206 = vpop.f32.mrf.mxu0
  %v10207 = vadd.f32 0.0, %v10206
  %10208 = vmatprep.mubr.bf16.mxu0 0
  %10209 = vmatmul.mubr.bf16.gmra.mxu0 %v9991
  %v10210 = vpop.f32.mrf.mxu0
  %v10211 = vadd.f32 0.0, %v10210
  %v10212 = vpop.f32.mrf.mxu0
  %v10213 = vadd.f32 0.0, %v10212
  %v10214 = vpop.f32.mrf.mxu0
  %v10215 = vadd.f32 0.0, %v10214
  %v10216 = vpop.f32.mrf.mxu0
  %v10217 = vadd.f32 0.0, %v10216
  %10218 = vmatprep.mubr.bf16.mxu0 0
  %10219 = vmatmul.mubr.bf16.gmra.mxu0 %v9994
  %v10220 = vpop.f32.mrf.mxu0
  %v10221 = vadd.f32 0.0, %v10220
  %v10222 = vpop.f32.mrf.mxu0
  %v10223 = vadd.f32 0.0, %v10222
  %v10224 = vpop.f32.mrf.mxu0
  %v10225 = vadd.f32 0.0, %v10224
  %v10226 = vpop.f32.mrf.mxu0
  %v10227 = vadd.f32 0.0, %v10226
  %10228 = vdwg.mxu0
  %10229 = vmatprep.subr.bf16.mxu0 0
  %10230 = vmatpush1.bf16.msra.mxu0 0
  %10231 = vmatprep.subr.bf16.mxu0 0
  %10232 = vmatpush1.bf16.msra.mxu0 0
  %10233 = vmatprep.subr.bf16.mxu0 0
  %10234 = vmatpush1.bf16.msra.mxu0 0
  %10235 = vmatprep.subr.bf16.mxu0 0
  %10236 = vmatpush1.bf16.msra.mxu0 0
  %10237 = vmatprep.subr.bf16.mxu0 0
  %10238 = vmatpush1.bf16.msra.mxu0 0
  %10239 = vmatprep.subr.bf16.mxu0 0
  %10240 = vmatpush1.bf16.msra.mxu0 0
  %10241 = vmatprep.subr.bf16.mxu0 0
  %10242 = vmatpush1.bf16.msra.mxu0 %v9929
  %10243 = vmatprep.subr.bf16.mxu0 0
  %10244 = vmatpush1.bf16.msra.mxu0 %v9926
  %10245 = vmatprep.subr.bf16.mxu0 0
  %10246 = vmatpush2.bf16.msra.mxu0 0
  %10247 = vmatprep.subr.bf16.mxu0 0
  %10248 = vmatpush2.bf16.msra.mxu0 0
  %10249 = vmatprep.subr.bf16.mxu0 0
  %10250 = vmatpush2.bf16.msra.mxu0 0
  %10251 = vmatprep.subr.bf16.mxu0 0
  %10252 = vmatpush2.bf16.msra.mxu0 0
  %10253 = vmatprep.subr.bf16.mxu0 0
  %10254 = vmatpush2.bf16.msra.mxu0 0
  %10255 = vmatprep.subr.bf16.mxu0 0
  %10256 = vmatpush2.bf16.msra.mxu0 0
  %10257 = vmatprep.subr.bf16.mxu0 0
  %10258 = vmatpush2.bf16.msra.mxu0 0
  %10259 = vmatprep.subr.bf16.mxu0 0
  %10260 = vmatpush2.bf16.msra.mxu0 0
  %10261 = vmatprep.mubr.bf16.mxu0 0
  %10262 = vmatmul.mubr.bf16.gmra.mxu0 %v9937
  %v10263 = vpop.f32.mrf.mxu0
  %v10264 = vadd.f32 0.0, %v10263
  %v10265 = vpop.f32.mrf.mxu0
  %v10266 = vpop.f32.mrf.mxu0
  %v10267 = vadd.f32 0.0, %v10266
  %v10268 = vpop.f32.mrf.mxu0
  %10269 = vmatprep.mubr.bf16.mxu0 0
  %10270 = vmatmul.mubr.bf16.gmra.mxu0 %v9940
  %v10271 = vpop.f32.mrf.mxu0
  %v10272 = vadd.f32 0.0, %v10271
  %v10273 = vpop.f32.mrf.mxu0
  %v10274 = vpop.f32.mrf.mxu0
  %v10275 = vadd.f32 0.0, %v10274
  %v10276 = vpop.f32.mrf.mxu0
  %10277 = vmatprep.mubr.bf16.mxu0 0
  %10278 = vmatmul.mubr.bf16.gmra.mxu0 %v9943
  %v10279 = vpop.f32.mrf.mxu0
  %v10280 = vadd.f32 0.0, %v10279
  %v10281 = vpop.f32.mrf.mxu0
  %v10282 = vpop.f32.mrf.mxu0
  %v10283 = vadd.f32 0.0, %v10282
  %v10284 = vpop.f32.mrf.mxu0
  %10285 = vmatprep.mubr.bf16.mxu0 0
  %10286 = vmatmul.mubr.bf16.gmra.mxu0 %v9946
  %v10287 = vpop.f32.mrf.mxu0
  %v10288 = vadd.f32 0.0, %v10287
  %v10289 = vpop.f32.mrf.mxu0
  %v10290 = vpop.f32.mrf.mxu0
  %v10291 = vadd.f32 0.0, %v10290
  %v10292 = vpop.f32.mrf.mxu0
  %10293 = vmatprep.mubr.bf16.mxu0 0
  %10294 = vmatmul.mubr.bf16.gmra.mxu0 %v9949
  %v10295 = vpop.f32.mrf.mxu0
  %v10296 = vadd.f32 0.0, %v10295
  %v10297 = vpop.f32.mrf.mxu0
  %v10298 = vpop.f32.mrf.mxu0
  %v10299 = vadd.f32 0.0, %v10298
  %v10300 = vpop.f32.mrf.mxu0
  %10301 = vmatprep.mubr.bf16.mxu0 0
  %10302 = vmatmul.mubr.bf16.gmra.mxu0 %v9952
  %v10303 = vpop.f32.mrf.mxu0
  %v10304 = vadd.f32 0.0, %v10303
  %v10305 = vpop.f32.mrf.mxu0
  %v10306 = vpop.f32.mrf.mxu0
  %v10307 = vadd.f32 0.0, %v10306
  %v10308 = vpop.f32.mrf.mxu0
  %10309 = vmatprep.mubr.bf16.mxu0 0
  %10310 = vmatmul.mubr.bf16.gmra.mxu0 %v9955
  %v10311 = vpop.f32.mrf.mxu0
  %v10312 = vadd.f32 0.0, %v10311
  %v10313 = vpop.f32.mrf.mxu0
  %v10314 = vpop.f32.mrf.mxu0
  %v10315 = vadd.f32 0.0, %v10314
  %v10316 = vpop.f32.mrf.mxu0
  %10317 = vmatprep.mubr.bf16.mxu0 0
  %10318 = vmatmul.mubr.bf16.gmra.mxu0 %v9958
  %v10319 = vpop.f32.mrf.mxu0
  %v10320 = vadd.f32 0.0, %v10319
  %v10321 = vpop.f32.mrf.mxu0
  %v10322 = vpop.f32.mrf.mxu0
  %v10323 = vadd.f32 0.0, %v10322
  %v10324 = vpop.f32.mrf.mxu0
  %10325 = vmatprep.mubr.bf16.mxu0 0
  %10326 = vmatmul.mubr.bf16.gmra.mxu0 %v9961
  %v10327 = vpop.f32.mrf.mxu0
  %v10328 = vadd.f32 0.0, %v10327
  %v10329 = vpop.f32.mrf.mxu0
  %v10330 = vpop.f32.mrf.mxu0
  %v10331 = vadd.f32 0.0, %v10330
  %v10332 = vpop.f32.mrf.mxu0
  %10333 = vmatprep.mubr.bf16.mxu0 0
  %10334 = vmatmul.mubr.bf16.gmra.mxu0 %v9964
  %v10335 = vpop.f32.mrf.mxu0
  %v10336 = vadd.f32 0.0, %v10335
  %v10337 = vpop.f32.mrf.mxu0
  %v10338 = vpop.f32.mrf.mxu0
  %v10339 = vadd.f32 0.0, %v10338
  %v10340 = vpop.f32.mrf.mxu0
  %10341 = vmatprep.mubr.bf16.mxu0 0
  %10342 = vmatmul.mubr.bf16.gmra.mxu0 %v9967
  %v10343 = vpop.f32.mrf.mxu0
  %v10344 = vadd.f32 0.0, %v10343
  %v10345 = vpop.f32.mrf.mxu0
  %v10346 = vpop.f32.mrf.mxu0
  %v10347 = vadd.f32 0.0, %v10346
  %v10348 = vpop.f32.mrf.mxu0
  %10349 = vmatprep.mubr.bf16.mxu0 0
  %10350 = vmatmul.mubr.bf16.gmra.mxu0 %v9970
  %v10351 = vpop.f32.mrf.mxu0
  %v10352 = vadd.f32 0.0, %v10351
  %v10353 = vpop.f32.mrf.mxu0
  %v10354 = vpop.f32.mrf.mxu0
  %v10355 = vadd.f32 0.0, %v10354
  %v10356 = vpop.f32.mrf.mxu0
  %10357 = vmatprep.mubr.bf16.mxu0 0
  %10358 = vmatmul.mubr.bf16.gmra.mxu0 %v9973
  %v10359 = vpop.f32.mrf.mxu0
  %v10360 = vadd.f32 0.0, %v10359
  %v10361 = vpop.f32.mrf.mxu0
  %v10362 = vpop.f32.mrf.mxu0
  %v10363 = vadd.f32 0.0, %v10362
  %v10364 = vpop.f32.mrf.mxu0
  %10365 = vmatprep.mubr.bf16.mxu0 0
  %10366 = vmatmul.mubr.bf16.gmra.mxu0 %v9976
  %v10367 = vpop.f32.mrf.mxu0
  %v10368 = vadd.f32 0.0, %v10367
  %v10369 = vpop.f32.mrf.mxu0
  %v10370 = vpop.f32.mrf.mxu0
  %v10371 = vadd.f32 0.0, %v10370
  %v10372 = vpop.f32.mrf.mxu0
  %10373 = vmatprep.mubr.bf16.mxu0 0
  %10374 = vmatmul.mubr.bf16.gmra.mxu0 %v9979
  %v10375 = vpop.f32.mrf.mxu0
  %v10376 = vadd.f32 0.0, %v10375
  %v10377 = vpop.f32.mrf.mxu0
  %v10378 = vpop.f32.mrf.mxu0
  %v10379 = vadd.f32 0.0, %v10378
  %v10380 = vpop.f32.mrf.mxu0
  %10381 = vmatprep.mubr.bf16.mxu0 0
  %10382 = vmatmul.mubr.bf16.gmra.mxu0 %v9982
  %v10383 = vpop.f32.mrf.mxu0
  %v10384 = vadd.f32 0.0, %v10383
  %v10385 = vpop.f32.mrf.mxu0
  %v10386 = vpop.f32.mrf.mxu0
  %v10387 = vadd.f32 0.0, %v10386
  %v10388 = vpop.f32.mrf.mxu0
  %10389 = vmatprep.mubr.bf16.mxu0 0
  %10390 = vmatmul.mubr.bf16.gmra.mxu0 %v9985
  %v10391 = vpop.f32.mrf.mxu0
  %v10392 = vadd.f32 0.0, %v10391
  %v10393 = vpop.f32.mrf.mxu0
  %v10394 = vpop.f32.mrf.mxu0
  %v10395 = vadd.f32 0.0, %v10394
  %v10396 = vpop.f32.mrf.mxu0
  %10397 = vmatprep.mubr.bf16.mxu0 0
  %10398 = vmatmul.mubr.bf16.gmra.mxu0 %v9988
  %v10399 = vpop.f32.mrf.mxu0
  %v10400 = vadd.f32 0.0, %v10399
  %v10401 = vpop.f32.mrf.mxu0
  %v10402 = vpop.f32.mrf.mxu0
  %v10403 = vadd.f32 0.0, %v10402
  %v10404 = vpop.f32.mrf.mxu0
  %10405 = vmatprep.mubr.bf16.mxu0 0
  %10406 = vmatmul.mubr.bf16.gmra.mxu0 %v9991
  %v10407 = vpop.f32.mrf.mxu0
  %v10408 = vadd.f32 0.0, %v10407
  %v10409 = vpop.f32.mrf.mxu0
  %v10410 = vpop.f32.mrf.mxu0
  %v10411 = vadd.f32 0.0, %v10410
  %v10412 = vpop.f32.mrf.mxu0
  %10413 = vmatprep.mubr.bf16.mxu0 0
  %10414 = vmatmul.mubr.bf16.gmra.mxu0 %v9994
  %v10415 = vpop.f32.mrf.mxu0
  %v10416 = vadd.f32 0.0, %v10415
  %v10417 = vpop.f32.mrf.mxu0
  %v10418 = vpop.f32.mrf.mxu0
  %v10419 = vadd.f32 0.0, %v10418
  %v10420 = vpop.f32.mrf.mxu0
  %10421 = vdwg.mxu0
  %10422 = vst [vmem:[#allocation3] sm:$0xff] %v10031
  %10423 = vst [vmem:[#allocation3 + $0x8] sm:$0xff] %v10033
  %10424 = vst.msk [vmem:[#allocation3 + $0x10] sm:$0xff] %vm547, %v10264
  %10425 = vst [vmem:[#allocation3 + $0x18] sm:$0xff] %v10035
  %10426 = vst [vmem:[#allocation3 + $0x20] sm:$0xff] %v10037
  %10427 = vst.msk [vmem:[#allocation3 + $0x28] sm:$0xff] %vm547, %v10267
  %10428 = vst [vmem:[#allocation3 + $0x30] sm:$0xff] %v10041
  %10429 = vst [vmem:[#allocation3 + $0x38] sm:$0xff] %v10043
  %10430 = vst.msk [vmem:[#allocation3 + $0x40] sm:$0xff] %vm547, %v10272
  %10431 = vst [vmem:[#allocation3 + $0x48] sm:$0xff] %v10045
  %10432 = vst [vmem:[#allocation3 + $0x50] sm:$0xff] %v10047
  %10433 = vst.msk [vmem:[#allocation3 + $0x58] sm:$0xff] %vm547, %v10275
  %10434 = vst [vmem:[#allocation3 + $0x60] sm:$0xff] %v10051
  %10435 = vst [vmem:[#allocation3 + $0x68] sm:$0xff] %v10053
  %10436 = vst.msk [vmem:[#allocation3 + $0x70] sm:$0xff] %vm547, %v10280
  %10437 = vst [vmem:[#allocation3 + $0x78] sm:$0xff] %v10055
  %10438 = vst [vmem:[#allocation3 + $0x80] sm:$0xff] %v10057
  %10439 = vst.msk [vmem:[#allocation3 + $0x88] sm:$0xff] %vm547, %v10283
  %10440 = vst [vmem:[#allocation3 + $0x90] sm:$0xff] %v10061
  %10441 = vst [vmem:[#allocation3 + $0x98] sm:$0xff] %v10063
  %10442 = vst.msk [vmem:[#allocation3 + $0xa0] sm:$0xff] %vm547, %v10288
  %10443 = vst [vmem:[#allocation3 + $0xa8] sm:$0xff] %v10065
  %10444 = vst [vmem:[#allocation3 + $0xb0] sm:$0xff] %v10067
  %10445 = vst.msk [vmem:[#allocation3 + $0xb8] sm:$0xff] %vm547, %v10291
  %10446 = vst [vmem:[#allocation3 + $0xc0] sm:$0xff] %v10071
  %10447 = vst [vmem:[#allocation3 + $0xc8] sm:$0xff] %v10073
  %10448 = vst.msk [vmem:[#allocation3 + $0xd0] sm:$0xff] %vm547, %v10296
  %10449 = vst [vmem:[#allocation3 + $0xd8] sm:$0xff] %v10075
  %10450 = vst [vmem:[#allocation3 + $0xe0] sm:$0xff] %v10077
  %10451 = vst.msk [vmem:[#allocation3 + $0xe8] sm:$0xff] %vm547, %v10299
  %10452 = vst [vmem:[#allocation3 + $0xf0] sm:$0xff] %v10081
  %10453 = vst [vmem:[#allocation3 + $0xf8] sm:$0xff] %v10083
  %10454 = vst.msk [vmem:[#allocation3 + $0x100] sm:$0xff] %vm547, %v10304
  %10455 = vst [vmem:[#allocation3 + $0x108] sm:$0xff] %v10085
  %10456 = vst [vmem:[#allocation3 + $0x110] sm:$0xff] %v10087
  %10457 = vst.msk [vmem:[#allocation3 + $0x118] sm:$0xff] %vm547, %v10307
  %10458 = vst [vmem:[#allocation3 + $0x120] sm:$0xff] %v10091
  %10459 = vst [vmem:[#allocation3 + $0x128] sm:$0xff] %v10093
  %10460 = vst.msk [vmem:[#allocation3 + $0x130] sm:$0xff] %vm547, %v10312
  %10461 = vst [vmem:[#allocation3 + $0x138] sm:$0xff] %v10095
  %10462 = vst [vmem:[#allocation3 + $0x140] sm:$0xff] %v10097
  %10463 = vst.msk [vmem:[#allocation3 + $0x148] sm:$0xff] %vm547, %v10315
  %10464 = vst [vmem:[#allocation3 + $0x150] sm:$0xff] %v10101
  %10465 = vst [vmem:[#allocation3 + $0x158] sm:$0xff] %v10103
  %10466 = vst.msk [vmem:[#allocation3 + $0x160] sm:$0xff] %vm547, %v10320
  %10467 = vst [vmem:[#allocation3 + $0x168] sm:$0xff] %v10105
  %10468 = vst [vmem:[#allocation3 + $0x170] sm:$0xff] %v10107
  %10469 = vst.msk [vmem:[#allocation3 + $0x178] sm:$0xff] %vm547, %v10323
  %10470 = vst [vmem:[#allocation3 + $0x180] sm:$0xff] %v10111
  %10471 = vst [vmem:[#allocation3 + $0x188] sm:$0xff] %v10113
  %10472 = vst.msk [vmem:[#allocation3 + $0x190] sm:$0xff] %vm547, %v10328
  %10473 = vst [vmem:[#allocation3 + $0x198] sm:$0xff] %v10115
  %10474 = vst [vmem:[#allocation3 + $0x1a0] sm:$0xff] %v10117
  %10475 = vst.msk [vmem:[#allocation3 + $0x1a8] sm:$0xff] %vm547, %v10331
  %10476 = vst [vmem:[#allocation3 + $0x1b0] sm:$0xff] %v10121
  %10477 = vst [vmem:[#allocation3 + $0x1b8] sm:$0xff] %v10123
  %10478 = vst.msk [vmem:[#allocation3 + $0x1c0] sm:$0xff] %vm547, %v10336
  %10479 = vst [vmem:[#allocation3 + $0x1c8] sm:$0xff] %v10125
  %10480 = vst [vmem:[#allocation3 + $0x1d0] sm:$0xff] %v10127
  %10481 = vst.msk [vmem:[#allocation3 + $0x1d8] sm:$0xff] %vm547, %v10339
  %10482 = vst [vmem:[#allocation3 + $0x1e0] sm:$0xff] %v10131
  %10483 = vst [vmem:[#allocation3 + $0x1e8] sm:$0xff] %v10133
  %10484 = vst.msk [vmem:[#allocation3 + $0x1f0] sm:$0xff] %vm547, %v10344
  %10485 = vst [vmem:[#allocation3 + $0x1f8] sm:$0xff] %v10135
  %10486 = vst [vmem:[#allocation3 + $0x200] sm:$0xff] %v10137
  %10487 = vst.msk [vmem:[#allocation3 + $0x208] sm:$0xff] %vm547, %v10347
  %10488 = vst [vmem:[#allocation3 + $0x210] sm:$0xff] %v10141
  %10489 = vst [vmem:[#allocation3 + $0x218] sm:$0xff] %v10143
  %10490 = vst.msk [vmem:[#allocation3 + $0x220] sm:$0xff] %vm547, %v10352
  %10491 = vst [vmem:[#allocation3 + $0x228] sm:$0xff] %v10145
  %10492 = vst [vmem:[#allocation3 + $0x230] sm:$0xff] %v10147
  %10493 = vst.msk [vmem:[#allocation3 + $0x238] sm:$0xff] %vm547, %v10355
  %10494 = vst [vmem:[#allocation3 + $0x240] sm:$0xff] %v10151
  %10495 = vst [vmem:[#allocation3 + $0x248] sm:$0xff] %v10153
  %10496 = vst.msk [vmem:[#allocation3 + $0x250] sm:$0xff] %vm547, %v10360
  %10497 = vst [vmem:[#allocation3 + $0x258] sm:$0xff] %v10155
  %10498 = vst [vmem:[#allocation3 + $0x260] sm:$0xff] %v10157
  %10499 = vst.msk [vmem:[#allocation3 + $0x268] sm:$0xff] %vm547, %v10363
  %10500 = vst [vmem:[#allocation3 + $0x270] sm:$0xff] %v10161
  %10501 = vst [vmem:[#allocation3 + $0x278] sm:$0xff] %v10163
  %10502 = vst.msk [vmem:[#allocation3 + $0x280] sm:$0xff] %vm547, %v10368
  %10503 = vst [vmem:[#allocation3 + $0x288] sm:$0xff] %v10165
  %10504 = vst [vmem:[#allocation3 + $0x290] sm:$0xff] %v10167
  %10505 = vst.msk [vmem:[#allocation3 + $0x298] sm:$0xff] %vm547, %v10371
  %10506 = vst [vmem:[#allocation3 + $0x2a0] sm:$0xff] %v10171
  %10507 = vst [vmem:[#allocation3 + $0x2a8] sm:$0xff] %v10173
  %10508 = vst.msk [vmem:[#allocation3 + $0x2b0] sm:$0xff] %vm547, %v10376
  %10509 = vst [vmem:[#allocation3 + $0x2b8] sm:$0xff] %v10175
  %10510 = vst [vmem:[#allocation3 + $0x2c0] sm:$0xff] %v10177
  %10511 = vst.msk [vmem:[#allocation3 + $0x2c8] sm:$0xff] %vm547, %v10379
  %10512 = vst [vmem:[#allocation3 + $0x2d0] sm:$0xff] %v10181
  %10513 = vst [vmem:[#allocation3 + $0x2d8] sm:$0xff] %v10183
  %10514 = vst.msk [vmem:[#allocation3 + $0x2e0] sm:$0xff] %vm547, %v10384
  %10515 = vst [vmem:[#allocation3 + $0x2e8] sm:$0xff] %v10185
  %10516 = vst [vmem:[#allocation3 + $0x2f0] sm:$0xff] %v10187
  %10517 = vst.msk [vmem:[#allocation3 + $0x2f8] sm:$0xff] %vm547, %v10387
  %10518 = vst [vmem:[#allocation3 + $0x300] sm:$0xff] %v10191
  %10519 = vst [vmem:[#allocation3 + $0x308] sm:$0xff] %v10193
  %10520 = vst.msk [vmem:[#allocation3 + $0x310] sm:$0xff] %vm547, %v10392
  %10521 = vst [vmem:[#allocation3 + $0x318] sm:$0xff] %v10195
  %10522 = vst [vmem:[#allocation3 + $0x320] sm:$0xff] %v10197
  %10523 = vst.msk [vmem:[#allocation3 + $0x328] sm:$0xff] %vm547, %v10395
  %10524 = vst [vmem:[#allocation3 + $0x330] sm:$0xff] %v10201
  %10525 = vst [vmem:[#allocation3 + $0x338] sm:$0xff] %v10203
  %10526 = vst.msk [vmem:[#allocation3 + $0x340] sm:$0xff] %vm547, %v10400
  %10527 = vst [vmem:[#allocation3 + $0x348] sm:$0xff] %v10205
  %10528 = vst [vmem:[#allocation3 + $0x350] sm:$0xff] %v10207
  %10529 = vst.msk [vmem:[#allocation3 + $0x358] sm:$0xff] %vm547, %v10403
  %10530 = vst [vmem:[#allocation3 + $0x360] sm:$0xff] %v10211
  %10531 = vst [vmem:[#allocation3 + $0x368] sm:$0xff] %v10213
  %10532 = vst.msk [vmem:[#allocation3 + $0x370] sm:$0xff] %vm547, %v10408
  %10533 = vst [vmem:[#allocation3 + $0x378] sm:$0xff] %v10215
  %10534 = vst [vmem:[#allocation3 + $0x380] sm:$0xff] %v10217
  %10535 = vst.msk [vmem:[#allocation3 + $0x388] sm:$0xff] %vm547, %v10411
  %10536 = vst [vmem:[#allocation3 + $0x390] sm:$0xff] %v10221
  %10537 = vst [vmem:[#allocation3 + $0x398] sm:$0xff] %v10223
  %10538 = vst.msk [vmem:[#allocation3 + $0x3a0] sm:$0xff] %vm547, %v10416
  %10539 = vst [vmem:[#allocation3 + $0x3a8] sm:$0xff] %v10225
  %10540 = vst [vmem:[#allocation3 + $0x3b0] sm:$0xff] %v10227
  %10541 = vst.msk [vmem:[#allocation3 + $0x3b8] sm:$0xff] %vm547, %v10419
  %v10542 = vld [vmem:[#allocation3] sm:$0xff]
  %v10543 = vld [vmem:[#allocation3 + $0x18] sm:$0xff]
  %v10544 = vld [vmem:[#allocation3 + $0x30] sm:$0xff]
  %v10545 = vld [vmem:[#allocation3 + $0x48] sm:$0xff]
  %v10546 = vld [vmem:[#allocation3 + $0x60] sm:$0xff]
  %v10547 = vld [vmem:[#allocation3 + $0x78] sm:$0xff]
  %v10548 = vld [vmem:[#allocation3 + $0x90] sm:$0xff]
  %v10549 = vld [vmem:[#allocation3 + $0xa8] sm:$0xff]
  %v10550 = vld [vmem:[#allocation3 + $0xc0] sm:$0xff]
  %v10551 = vld [vmem:[#allocation3 + $0xd8] sm:$0xff]
  %v10552 = vld [vmem:[#allocation3 + $0xf0] sm:$0xff]
  %v10553 = vld [vmem:[#allocation3 + $0x108] sm:$0xff]
  %v10554 = vld [vmem:[#allocation3 + $0x120] sm:$0xff]
  %v10555 = vld [vmem:[#allocation3 + $0x138] sm:$0xff]
  %v10556 = vld [vmem:[#allocation3 + $0x150] sm:$0xff]
  %v10557 = vld [vmem:[#allocation3 + $0x168] sm:$0xff]
  %v10558 = vld [vmem:[#allocation3 + $0x180] sm:$0xff]
  %v10559 = vld [vmem:[#allocation3 + $0x198] sm:$0xff]
  %v10560 = vld [vmem:[#allocation3 + $0x1b0] sm:$0xff]
  %v10561 = vld [vmem:[#allocation3 + $0x1c8] sm:$0xff]
  %v10562 = vld [vmem:[#allocation3 + $0x1e0] sm:$0xff]
  %v10563 = vld [vmem:[#allocation3 + $0x1f8] sm:$0xff]
  %v10564 = vld [vmem:[#allocation3 + $0x210] sm:$0xff]
  %v10565 = vld [vmem:[#allocation3 + $0x228] sm:$0xff]
  %v10566 = vld [vmem:[#allocation3 + $0x240] sm:$0xff]
  %v10567 = vld [vmem:[#allocation3 + $0x258] sm:$0xff]
  %v10568 = vld [vmem:[#allocation3 + $0x270] sm:$0xff]
  %v10569 = vld [vmem:[#allocation3 + $0x288] sm:$0xff]
  %v10570 = vld [vmem:[#allocation3 + $0x2a0] sm:$0xff]
  %v10571 = vld [vmem:[#allocation3 + $0x2b8] sm:$0xff]
  %v10572 = vld [vmem:[#allocation3 + $0x2d0] sm:$0xff]
  %v10573 = vld [vmem:[#allocation3 + $0x2e8] sm:$0xff]
  %v10574 = vld [vmem:[#allocation3 + $0x300] sm:$0xff]
  %v10575 = vld [vmem:[#allocation3 + $0x318] sm:$0xff]
  %v10576 = vld [vmem:[#allocation3 + $0x330] sm:$0xff]
  %v10577 = vld [vmem:[#allocation3 + $0x348] sm:$0xff]
  %v10578 = vadd.f32 %v9720, %v10542
  %v10579 = vadd.f32 %v9721, %v10543
  %v10580 = vadd.f32 %v9722, %v10544
  %v10581 = vadd.f32 %v9723, %v10545
  %v10582 = vadd.f32 %v9724, %v10546
  %v10583 = vadd.f32 %v9725, %v10547
  %v10584 = vadd.f32 %v9726, %v10548
  %v10585 = vadd.f32 %v9727, %v10549
  %v10586 = vadd.f32 %v9728, %v10550
  %v10587 = vadd.f32 %v9729, %v10551
  %v10588 = vadd.f32 %v9730, %v10552
  %v10589 = vadd.f32 %v9731, %v10553
  %v10590 = vadd.f32 %v9732, %v10554
  %v10591 = vadd.f32 %v9733, %v10555
  %v10592 = vadd.f32 %v9734, %v10556
  %v10593 = vadd.f32 %v9735, %v10557
  %v10594 = vadd.f32 %v9736, %v10558
  %v10595 = vadd.f32 %v9737, %v10559
  %v10596 = vadd.f32 %v9738, %v10560
  %v10597 = vadd.f32 %v9739, %v10561
  %v10598 = vadd.f32 %v9740, %v10562
  %v10599 = vadd.f32 %v9741, %v10563
  %v10600 = vadd.f32 %v9742, %v10564
  %v10601 = vadd.f32 %v9743, %v10565
  %v10602 = vadd.f32 %v9744, %v10566
  %v10603 = vadd.f32 %v9745, %v10567
  %v10604 = vadd.f32 %v9746, %v10568
  %v10605 = vadd.f32 %v9747, %v10569
  %v10606 = vadd.f32 %v9748, %v10570
  %v10607 = vadd.f32 %v9749, %v10571
  %v10608 = vadd.f32 %v9750, %v10572
  %v10609 = vadd.f32 %v9751, %v10573
  %v10610 = vadd.f32 %v9752, %v10574
  %v10611 = vadd.f32 %v9753, %v10575
  %v10612 = vadd.f32 %v9754, %v10576
  %v10613 = vadd.f32 %v9755, %v10577
  %v10614 = vld [vmem:[#allocation3] sm:$0xfe]
  %v10615 = vld [vmem:[#allocation3 + $0x360] sm:$0x1]
  %v10653 = vrot.slane %v10614, 1
  %v10654 = vrot.slane %v10543, 1
  %v10655 = vsel %vm4178, %v10653, %v10654
  %v10656 = vrot.slane %v10544, 1
  %v10657 = vsel %vm4178, %v10654, %v10656
  %v10658 = vrot.slane %v10545, 1
  %v10659 = vsel %vm4178, %v10656, %v10658
  %v10660 = vrot.slane %v10546, 1
  %v10661 = vsel %vm4178, %v10658, %v10660
  %v10662 = vrot.slane %v10547, 1
  %v10663 = vsel %vm4178, %v10660, %v10662
  %v10664 = vrot.slane %v10548, 1
  %v10665 = vsel %vm4178, %v10662, %v10664
  %v10666 = vrot.slane %v10549, 1
  %v10667 = vsel %vm4178, %v10664, %v10666
  %v10668 = vrot.slane %v10550, 1
  %v10669 = vsel %vm4178, %v10666, %v10668
  %v10670 = vrot.slane %v10551, 1
  %v10671 = vsel %vm4178, %v10668, %v10670
  %v10672 = vrot.slane %v10552, 1
  %v10673 = vsel %vm4178, %v10670, %v10672
  %v10674 = vrot.slane %v10553, 1
  %v10675 = vsel %vm4178, %v10672, %v10674
  %v10676 = vrot.slane %v10554, 1
  %v10677 = vsel %vm4178, %v10674, %v10676
  %v10678 = vrot.slane %v10555, 1
  %v10679 = vsel %vm4178, %v10676, %v10678
  %v10680 = vrot.slane %v10556, 1
  %v10681 = vsel %vm4178, %v10678, %v10680
  %v10682 = vrot.slane %v10557, 1
  %v10683 = vsel %vm4178, %v10680, %v10682
  %v10684 = vrot.slane %v10558, 1
  %v10685 = vsel %vm4178, %v10682, %v10684
  %v10686 = vrot.slane %v10559, 1
  %v10687 = vsel %vm4178, %v10684, %v10686
  %v10688 = vrot.slane %v10560, 1
  %v10689 = vsel %vm4178, %v10686, %v10688
  %v10690 = vrot.slane %v10561, 1
  %v10691 = vsel %vm4178, %v10688, %v10690
  %v10692 = vrot.slane %v10562, 1
  %v10693 = vsel %vm4178, %v10690, %v10692
  %v10694 = vrot.slane %v10563, 1
  %v10695 = vsel %vm4178, %v10692, %v10694
  %v10696 = vrot.slane %v10564, 1
  %v10697 = vsel %vm4178, %v10694, %v10696
  %v10698 = vrot.slane %v10565, 1
  %v10699 = vsel %vm4178, %v10696, %v10698
  %v10700 = vrot.slane %v10566, 1
  %v10701 = vsel %vm4178, %v10698, %v10700
  %v10702 = vrot.slane %v10567, 1
  %v10703 = vsel %vm4178, %v10700, %v10702
  %v10704 = vrot.slane %v10568, 1
  %v10705 = vsel %vm4178, %v10702, %v10704
  %v10706 = vrot.slane %v10569, 1
  %v10707 = vsel %vm4178, %v10704, %v10706
  %v10708 = vrot.slane %v10570, 1
  %v10709 = vsel %vm4178, %v10706, %v10708
  %v10710 = vrot.slane %v10571, 1
  %v10711 = vsel %vm4178, %v10708, %v10710
  %v10712 = vrot.slane %v10572, 1
  %v10713 = vsel %vm4178, %v10710, %v10712
  %v10714 = vrot.slane %v10573, 1
  %v10715 = vsel %vm4178, %v10712, %v10714
  %v10716 = vrot.slane %v10574, 1
  %v10717 = vsel %vm4178, %v10714, %v10716
  %v10718 = vrot.slane %v10575, 1
  %v10719 = vsel %vm4178, %v10716, %v10718
  %v10720 = vrot.slane %v10576, 1
  %v10721 = vsel %vm4178, %v10718, %v10720
  %v10722 = vrot.slane %v10577, 1
  %v10723 = vsel %vm4178, %v10720, %v10722
  %v10724 = vrot.slane %v10615, 1
  %v10725 = vsel %vm4178, %v10722, %v10724
  %10726 = vrot.lane.b32.xlu0 %v10655, 96
  %v10727 = vpop.permute.xlu0 %10726
  %10728 = vrot.lane.b32.xlu0 %v10657, 96
  %v10729 = vpop.permute.xlu0 %10728
  %10730 = vrot.lane.b32.xlu0 %v10659, 96
  %v10731 = vpop.permute.xlu0 %10730
  %10732 = vrot.lane.b32.xlu0 %v10661, 96
  %v10733 = vpop.permute.xlu0 %10732
  %10734 = vrot.lane.b32.xlu0 %v10663, 96
  %v10735 = vpop.permute.xlu0 %10734
  %10736 = vrot.lane.b32.xlu0 %v10665, 96
  %v10737 = vpop.permute.xlu0 %10736
  %10738 = vrot.lane.b32.xlu0 %v10667, 96
  %v10739 = vpop.permute.xlu0 %10738
  %10740 = vrot.lane.b32.xlu0 %v10669, 96
  %v10741 = vpop.permute.xlu0 %10740
  %10742 = vrot.lane.b32.xlu0 %v10671, 96
  %v10743 = vpop.permute.xlu0 %10742
  %10744 = vrot.lane.b32.xlu0 %v10673, 96
  %v10745 = vpop.permute.xlu0 %10744
  %10746 = vrot.lane.b32.xlu0 %v10675, 96
  %v10747 = vpop.permute.xlu0 %10746
  %10748 = vrot.lane.b32.xlu0 %v10677, 96
  %v10749 = vpop.permute.xlu0 %10748
  %10750 = vrot.lane.b32.xlu0 %v10679, 96
  %v10751 = vpop.permute.xlu0 %10750
  %10752 = vrot.lane.b32.xlu0 %v10681, 96
  %v10753 = vpop.permute.xlu0 %10752
  %10754 = vrot.lane.b32.xlu0 %v10683, 96
  %v10755 = vpop.permute.xlu0 %10754
  %10756 = vrot.lane.b32.xlu0 %v10685, 96
  %v10757 = vpop.permute.xlu0 %10756
  %10758 = vrot.lane.b32.xlu0 %v10687, 96
  %v10759 = vpop.permute.xlu0 %10758
  %10760 = vrot.lane.b32.xlu0 %v10689, 96
  %v10761 = vpop.permute.xlu0 %10760
  %10762 = vrot.lane.b32.xlu0 %v10691, 96
  %v10763 = vpop.permute.xlu0 %10762
  %10764 = vrot.lane.b32.xlu0 %v10693, 96
  %v10765 = vpop.permute.xlu0 %10764
  %10766 = vrot.lane.b32.xlu0 %v10695, 96
  %v10767 = vpop.permute.xlu0 %10766
  %10768 = vrot.lane.b32.xlu0 %v10697, 96
  %v10769 = vpop.permute.xlu0 %10768
  %10770 = vrot.lane.b32.xlu0 %v10699, 96
  %v10771 = vpop.permute.xlu0 %10770
  %10772 = vrot.lane.b32.xlu0 %v10701, 96
  %v10773 = vpop.permute.xlu0 %10772
  %10774 = vrot.lane.b32.xlu0 %v10703, 96
  %v10775 = vpop.permute.xlu0 %10774
  %10776 = vrot.lane.b32.xlu0 %v10705, 96
  %v10777 = vpop.permute.xlu0 %10776
  %10778 = vrot.lane.b32.xlu0 %v10707, 96
  %v10779 = vpop.permute.xlu0 %10778
  %10780 = vrot.lane.b32.xlu0 %v10709, 96
  %v10781 = vpop.permute.xlu0 %10780
  %10782 = vrot.lane.b32.xlu0 %v10711, 96
  %v10783 = vpop.permute.xlu0 %10782
  %10784 = vrot.lane.b32.xlu0 %v10713, 96
  %v10785 = vpop.permute.xlu0 %10784
  %10786 = vrot.lane.b32.xlu0 %v10715, 96
  %v10787 = vpop.permute.xlu0 %10786
  %10788 = vrot.lane.b32.xlu0 %v10717, 96
  %v10789 = vpop.permute.xlu0 %10788
  %10790 = vrot.lane.b32.xlu0 %v10719, 96
  %v10791 = vpop.permute.xlu0 %10790
  %10792 = vrot.lane.b32.xlu0 %v10721, 96
  %v10793 = vpop.permute.xlu0 %10792
  %10794 = vrot.lane.b32.xlu0 %v10723, 96
  %v10795 = vpop.permute.xlu0 %10794
  %10796 = vrot.lane.b32.xlu0 %v10725, 96
  %v10797 = vpop.permute.xlu0 %10796
  %v10834 = vadd.f32 %v10578, %v10727
  %v10835 = vadd.f32 %v10579, %v10729
  %v10836 = vadd.f32 %v10580, %v10731
  %v10837 = vadd.f32 %v10581, %v10733
  %v10838 = vadd.f32 %v10582, %v10735
  %v10839 = vadd.f32 %v10583, %v10737
  %v10840 = vadd.f32 %v10584, %v10739
  %v10841 = vadd.f32 %v10585, %v10741
  %v10842 = vadd.f32 %v10586, %v10743
  %v10843 = vadd.f32 %v10587, %v10745
  %v10844 = vadd.f32 %v10588, %v10747
  %v10845 = vadd.f32 %v10589, %v10749
  %v10846 = vadd.f32 %v10590, %v10751
  %v10847 = vadd.f32 %v10591, %v10753
  %v10848 = vadd.f32 %v10592, %v10755
  %v10849 = vadd.f32 %v10593, %v10757
  %v10850 = vadd.f32 %v10594, %v10759
  %v10851 = vadd.f32 %v10595, %v10761
  %v10852 = vadd.f32 %v10596, %v10763
  %v10853 = vadd.f32 %v10597, %v10765
  %v10854 = vadd.f32 %v10598, %v10767
  %v10855 = vadd.f32 %v10599, %v10769
  %v10856 = vadd.f32 %v10600, %v10771
  %v10857 = vadd.f32 %v10601, %v10773
  %v10858 = vadd.f32 %v10602, %v10775
  %v10859 = vadd.f32 %v10603, %v10777
  %v10860 = vadd.f32 %v10604, %v10779
  %v10861 = vadd.f32 %v10605, %v10781
  %v10862 = vadd.f32 %v10606, %v10783
  %v10863 = vadd.f32 %v10607, %v10785
  %v10864 = vadd.f32 %v10608, %v10787
  %v10865 = vadd.f32 %v10609, %v10789
  %v10866 = vadd.f32 %v10610, %v10791
  %v10867 = vadd.f32 %v10611, %v10793
  %v10868 = vadd.f32 %v10612, %v10795
  %v10869 = vadd.f32 %v10613, %v10797
  %v10870 = vld [vmem:[#allocation3 + $0x18] sm:$0xf0]
  %v10871 = vld [vmem:[#allocation3 + $0x360] sm:$0xff]
  %v10872 = vld [vmem:[#allocation3 + $0x378] sm:$0xf]
  %v10876 = vrot.slane %v10870, 4
  %v10877 = vrot.slane %v10544, 4
  %v10878 = vsel %vm4624, %v10876, %v10877
  %v10879 = vrot.slane %v10545, 4
  %v10880 = vsel %vm4624, %v10877, %v10879
  %v10881 = vrot.slane %v10546, 4
  %v10882 = vsel %vm4624, %v10879, %v10881
  %v10883 = vrot.slane %v10547, 4
  %v10884 = vsel %vm4624, %v10881, %v10883
  %v10885 = vrot.slane %v10548, 4
  %v10886 = vsel %vm4624, %v10883, %v10885
  %v10887 = vrot.slane %v10549, 4
  %v10888 = vsel %vm4624, %v10885, %v10887
  %v10889 = vrot.slane %v10550, 4
  %v10890 = vsel %vm4624, %v10887, %v10889
  %v10891 = vrot.slane %v10551, 4
  %v10892 = vsel %vm4624, %v10889, %v10891
  %v10893 = vrot.slane %v10552, 4
  %v10894 = vsel %vm4624, %v10891, %v10893
  %v10895 = vrot.slane %v10553, 4
  %v10896 = vsel %vm4624, %v10893, %v10895
  %v10897 = vrot.slane %v10554, 4
  %v10898 = vsel %vm4624, %v10895, %v10897
  %v10899 = vrot.slane %v10555, 4
  %v10900 = vsel %vm4624, %v10897, %v10899
  %v10901 = vrot.slane %v10556, 4
  %v10902 = vsel %vm4624, %v10899, %v10901
  %v10903 = vrot.slane %v10557, 4
  %v10904 = vsel %vm4624, %v10901, %v10903
  %v10905 = vrot.slane %v10558, 4
  %v10906 = vsel %vm4624, %v10903, %v10905
  %v10907 = vrot.slane %v10559, 4
  %v10908 = vsel %vm4624, %v10905, %v10907
  %v10909 = vrot.slane %v10560, 4
  %v10910 = vsel %vm4624, %v10907, %v10909
  %v10911 = vrot.slane %v10561, 4
  %v10912 = vsel %vm4624, %v10909, %v10911
  %v10913 = vrot.slane %v10562, 4
  %v10914 = vsel %vm4624, %v10911, %v10913
  %v10915 = vrot.slane %v10563, 4
  %v10916 = vsel %vm4624, %v10913, %v10915
  %v10917 = vrot.slane %v10564, 4
  %v10918 = vsel %vm4624, %v10915, %v10917
  %v10919 = vrot.slane %v10565, 4
  %v10920 = vsel %vm4624, %v10917, %v10919
  %v10921 = vrot.slane %v10566, 4
  %v10922 = vsel %vm4624, %v10919, %v10921
  %v10923 = vrot.slane %v10567, 4
  %v10924 = vsel %vm4624, %v10921, %v10923
  %v10925 = vrot.slane %v10568, 4
  %v10926 = vsel %vm4624, %v10923, %v10925
  %v10927 = vrot.slane %v10569, 4
  %v10928 = vsel %vm4624, %v10925, %v10927
  %v10929 = vrot.slane %v10570, 4
  %v10930 = vsel %vm4624, %v10927, %v10929
  %v10931 = vrot.slane %v10571, 4
  %v10932 = vsel %vm4624, %v10929, %v10931
  %v10933 = vrot.slane %v10572, 4
  %v10934 = vsel %vm4624, %v10931, %v10933
  %v10935 = vrot.slane %v10573, 4
  %v10936 = vsel %vm4624, %v10933, %v10935
  %v10937 = vrot.slane %v10574, 4
  %v10938 = vsel %vm4624, %v10935, %v10937
  %v10939 = vrot.slane %v10575, 4
  %v10940 = vsel %vm4624, %v10937, %v10939
  %v10941 = vrot.slane %v10576, 4
  %v10942 = vsel %vm4624, %v10939, %v10941
  %v10943 = vrot.slane %v10577, 4
  %v10944 = vsel %vm4624, %v10941, %v10943
  %v10945 = vrot.slane %v10871, 4
  %v10946 = vsel %vm4624, %v10943, %v10945
  %v10947 = vrot.slane %v10872, 4
  %v10948 = vsel %vm4624, %v10945, %v10947
  %10949 = vrot.lane.b32.xlu0 %v10878, 64
  %v10950 = vpop.permute.xlu0 %10949
  %10951 = vrot.lane.b32.xlu0 %v10880, 64
  %v10952 = vpop.permute.xlu0 %10951
  %10953 = vrot.lane.b32.xlu0 %v10882, 64
  %v10954 = vpop.permute.xlu0 %10953
  %10955 = vrot.lane.b32.xlu0 %v10884, 64
  %v10956 = vpop.permute.xlu0 %10955
  %10957 = vrot.lane.b32.xlu0 %v10886, 64
  %v10958 = vpop.permute.xlu0 %10957
  %10959 = vrot.lane.b32.xlu0 %v10888, 64
  %v10960 = vpop.permute.xlu0 %10959
  %10961 = vrot.lane.b32.xlu0 %v10890, 64
  %v10962 = vpop.permute.xlu0 %10961
  %10963 = vrot.lane.b32.xlu0 %v10892, 64
  %v10964 = vpop.permute.xlu0 %10963
  %10965 = vrot.lane.b32.xlu0 %v10894, 64
  %v10966 = vpop.permute.xlu0 %10965
  %10967 = vrot.lane.b32.xlu0 %v10896, 64
  %v10968 = vpop.permute.xlu0 %10967
  %10969 = vrot.lane.b32.xlu0 %v10898, 64
  %v10970 = vpop.permute.xlu0 %10969
  %10971 = vrot.lane.b32.xlu0 %v10900, 64
  %v10972 = vpop.permute.xlu0 %10971
  %10973 = vrot.lane.b32.xlu0 %v10902, 64
  %v10974 = vpop.permute.xlu0 %10973
  %10975 = vrot.lane.b32.xlu0 %v10904, 64
  %v10976 = vpop.permute.xlu0 %10975
  %10977 = vrot.lane.b32.xlu0 %v10906, 64
  %v10978 = vpop.permute.xlu0 %10977
  %10979 = vrot.lane.b32.xlu0 %v10908, 64
  %v10980 = vpop.permute.xlu0 %10979
  %10981 = vrot.lane.b32.xlu0 %v10910, 64
  %v10982 = vpop.permute.xlu0 %10981
  %10983 = vrot.lane.b32.xlu0 %v10912, 64
  %v10984 = vpop.permute.xlu0 %10983
  %10985 = vrot.lane.b32.xlu0 %v10914, 64
  %v10986 = vpop.permute.xlu0 %10985
  %10987 = vrot.lane.b32.xlu0 %v10916, 64
  %v10988 = vpop.permute.xlu0 %10987
  %10989 = vrot.lane.b32.xlu0 %v10918, 64
  %v10990 = vpop.permute.xlu0 %10989
  %10991 = vrot.lane.b32.xlu0 %v10920, 64
  %v10992 = vpop.permute.xlu0 %10991
  %10993 = vrot.lane.b32.xlu0 %v10922, 64
  %v10994 = vpop.permute.xlu0 %10993
  %10995 = vrot.lane.b32.xlu0 %v10924, 64
  %v10996 = vpop.permute.xlu0 %10995
  %10997 = vrot.lane.b32.xlu0 %v10926, 64
  %v10998 = vpop.permute.xlu0 %10997
  %10999 = vrot.lane.b32.xlu0 %v10928, 64
  %v11000 = vpop.permute.xlu0 %10999
  %11001 = vrot.lane.b32.xlu0 %v10930, 64
  %v11002 = vpop.permute.xlu0 %11001
  %11003 = vrot.lane.b32.xlu0 %v10932, 64
  %v11004 = vpop.permute.xlu0 %11003
  %11005 = vrot.lane.b32.xlu0 %v10934, 64
  %v11006 = vpop.permute.xlu0 %11005
  %11007 = vrot.lane.b32.xlu0 %v10936, 64
  %v11008 = vpop.permute.xlu0 %11007
  %11009 = vrot.lane.b32.xlu0 %v10938, 64
  %v11010 = vpop.permute.xlu0 %11009
  %11011 = vrot.lane.b32.xlu0 %v10940, 64
  %v11012 = vpop.permute.xlu0 %11011
  %11013 = vrot.lane.b32.xlu0 %v10942, 64
  %v11014 = vpop.permute.xlu0 %11013
  %11015 = vrot.lane.b32.xlu0 %v10944, 64
  %v11016 = vpop.permute.xlu0 %11015
  %11017 = vrot.lane.b32.xlu0 %v10946, 64
  %v11018 = vpop.permute.xlu0 %11017
  %11019 = vrot.lane.b32.xlu0 %v10948, 64
  %v11020 = vpop.permute.xlu0 %11019
  %v11057 = vadd.f32 %v10834, %v10950
  %v11058 = vadd.f32 %v10835, %v10952
  %v11059 = vadd.f32 %v10836, %v10954
  %v11060 = vadd.f32 %v10837, %v10956
  %v11061 = vadd.f32 %v10838, %v10958
  %v11062 = vadd.f32 %v10839, %v10960
  %v11063 = vadd.f32 %v10840, %v10962
  %v11064 = vadd.f32 %v10841, %v10964
  %v11065 = vadd.f32 %v10842, %v10966
  %v11066 = vadd.f32 %v10843, %v10968
  %v11067 = vadd.f32 %v10844, %v10970
  %v11068 = vadd.f32 %v10845, %v10972
  %v11069 = vadd.f32 %v10846, %v10974
  %v11070 = vadd.f32 %v10847, %v10976
  %v11071 = vadd.f32 %v10848, %v10978
  %v11072 = vadd.f32 %v10849, %v10980
  %v11073 = vadd.f32 %v10850, %v10982
  %v11074 = vadd.f32 %v10851, %v10984
  %v11075 = vadd.f32 %v10852, %v10986
  %v11076 = vadd.f32 %v10853, %v10988
  %v11077 = vadd.f32 %v10854, %v10990
  %v11078 = vadd.f32 %v10855, %v10992
  %v11079 = vadd.f32 %v10856, %v10994
  %v11080 = vadd.f32 %v10857, %v10996
  %v11081 = vadd.f32 %v10858, %v10998
  %v11082 = vadd.f32 %v10859, %v11000
  %v11083 = vadd.f32 %v10860, %v11002
  %v11084 = vadd.f32 %v10861, %v11004
  %v11085 = vadd.f32 %v10862, %v11006
  %v11086 = vadd.f32 %v10863, %v11008
  %v11087 = vadd.f32 %v10864, %v11010
  %v11088 = vadd.f32 %v10865, %v11012
  %v11089 = vadd.f32 %v10866, %v11014
  %v11090 = vadd.f32 %v10867, %v11016
  %v11091 = vadd.f32 %v10868, %v11018
  %v11092 = vadd.f32 %v10869, %v11020
  %v11093 = vld [vmem:[#allocation3 + $0x18] sm:$0xe0]
  %v11094 = vld [vmem:[#allocation3 + $0x378] sm:$0x1f]
  %v11097 = vrot.slane %v11093, 5
  %v11098 = vrot.slane %v10544, 5
  %v11099 = vsel %vm4916, %v11097, %v11098
  %v11100 = vrot.slane %v10545, 5
  %v11101 = vsel %vm4916, %v11098, %v11100
  %v11102 = vrot.slane %v10546, 5
  %v11103 = vsel %vm4916, %v11100, %v11102
  %v11104 = vrot.slane %v10547, 5
  %v11105 = vsel %vm4916, %v11102, %v11104
  %v11106 = vrot.slane %v10548, 5
  %v11107 = vsel %vm4916, %v11104, %v11106
  %v11108 = vrot.slane %v10549, 5
  %v11109 = vsel %vm4916, %v11106, %v11108
  %v11110 = vrot.slane %v10550, 5
  %v11111 = vsel %vm4916, %v11108, %v11110
  %v11112 = vrot.slane %v10551, 5
  %v11113 = vsel %vm4916, %v11110, %v11112
  %v11114 = vrot.slane %v10552, 5
  %v11115 = vsel %vm4916, %v11112, %v11114
  %v11116 = vrot.slane %v10553, 5
  %v11117 = vsel %vm4916, %v11114, %v11116
  %v11118 = vrot.slane %v10554, 5
  %v11119 = vsel %vm4916, %v11116, %v11118
  %v11120 = vrot.slane %v10555, 5
  %v11121 = vsel %vm4916, %v11118, %v11120
  %v11122 = vrot.slane %v10556, 5
  %v11123 = vsel %vm4916, %v11120, %v11122
  %v11124 = vrot.slane %v10557, 5
  %v11125 = vsel %vm4916, %v11122, %v11124
  %v11126 = vrot.slane %v10558, 5
  %v11127 = vsel %vm4916, %v11124, %v11126
  %v11128 = vrot.slane %v10559, 5
  %v11129 = vsel %vm4916, %v11126, %v11128
  %v11130 = vrot.slane %v10560, 5
  %v11131 = vsel %vm4916, %v11128, %v11130
  %v11132 = vrot.slane %v10561, 5
  %v11133 = vsel %vm4916, %v11130, %v11132
  %v11134 = vrot.slane %v10562, 5
  %v11135 = vsel %vm4916, %v11132, %v11134
  %v11136 = vrot.slane %v10563, 5
  %v11137 = vsel %vm4916, %v11134, %v11136
  %v11138 = vrot.slane %v10564, 5
  %v11139 = vsel %vm4916, %v11136, %v11138
  %v11140 = vrot.slane %v10565, 5
  %v11141 = vsel %vm4916, %v11138, %v11140
  %v11142 = vrot.slane %v10566, 5
  %v11143 = vsel %vm4916, %v11140, %v11142
  %v11144 = vrot.slane %v10567, 5
  %v11145 = vsel %vm4916, %v11142, %v11144
  %v11146 = vrot.slane %v10568, 5
  %v11147 = vsel %vm4916, %v11144, %v11146
  %v11148 = vrot.slane %v10569, 5
  %v11149 = vsel %vm4916, %v11146, %v11148
  %v11150 = vrot.slane %v10570, 5
  %v11151 = vsel %vm4916, %v11148, %v11150
  %v11152 = vrot.slane %v10571, 5
  %v11153 = vsel %vm4916, %v11150, %v11152
  %v11154 = vrot.slane %v10572, 5
  %v11155 = vsel %vm4916, %v11152, %v11154
  %v11156 = vrot.slane %v10573, 5
  %v11157 = vsel %vm4916, %v11154, %v11156
  %v11158 = vrot.slane %v10574, 5
  %v11159 = vsel %vm4916, %v11156, %v11158
  %v11160 = vrot.slane %v10575, 5
  %v11161 = vsel %vm4916, %v11158, %v11160
  %v11162 = vrot.slane %v10576, 5
  %v11163 = vsel %vm4916, %v11160, %v11162
  %v11164 = vrot.slane %v10577, 5
  %v11165 = vsel %vm4916, %v11162, %v11164
  %v11166 = vrot.slane %v10871, 5
  %v11167 = vsel %vm4916, %v11164, %v11166
  %v11168 = vrot.slane %v11094, 5
  %v11169 = vsel %vm4916, %v11166, %v11168
  %11170 = vrot.lane.b32.xlu0 %v11099, 32
  %v11171 = vpop.permute.xlu0 %11170
  %11172 = vrot.lane.b32.xlu0 %v11101, 32
  %v11173 = vpop.permute.xlu0 %11172
  %11174 = vrot.lane.b32.xlu0 %v11103, 32
  %v11175 = vpop.permute.xlu0 %11174
  %11176 = vrot.lane.b32.xlu0 %v11105, 32
  %v11177 = vpop.permute.xlu0 %11176
  %11178 = vrot.lane.b32.xlu0 %v11107, 32
  %v11179 = vpop.permute.xlu0 %11178
  %11180 = vrot.lane.b32.xlu0 %v11109, 32
  %v11181 = vpop.permute.xlu0 %11180
  %11182 = vrot.lane.b32.xlu0 %v11111, 32
  %v11183 = vpop.permute.xlu0 %11182
  %11184 = vrot.lane.b32.xlu0 %v11113, 32
  %v11185 = vpop.permute.xlu0 %11184
  %11186 = vrot.lane.b32.xlu0 %v11115, 32
  %v11187 = vpop.permute.xlu0 %11186
  %11188 = vrot.lane.b32.xlu0 %v11117, 32
  %v11189 = vpop.permute.xlu0 %11188
  %11190 = vrot.lane.b32.xlu0 %v11119, 32
  %v11191 = vpop.permute.xlu0 %11190
  %11192 = vrot.lane.b32.xlu0 %v11121, 32
  %v11193 = vpop.permute.xlu0 %11192
  %11194 = vrot.lane.b32.xlu0 %v11123, 32
  %v11195 = vpop.permute.xlu0 %11194
  %11196 = vrot.lane.b32.xlu0 %v11125, 32
  %v11197 = vpop.permute.xlu0 %11196
  %11198 = vrot.lane.b32.xlu0 %v11127, 32
  %v11199 = vpop.permute.xlu0 %11198
  %11200 = vrot.lane.b32.xlu0 %v11129, 32
  %v11201 = vpop.permute.xlu0 %11200
  %11202 = vrot.lane.b32.xlu0 %v11131, 32
  %v11203 = vpop.permute.xlu0 %11202
  %11204 = vrot.lane.b32.xlu0 %v11133, 32
  %v11205 = vpop.permute.xlu0 %11204
  %11206 = vrot.lane.b32.xlu0 %v11135, 32
  %v11207 = vpop.permute.xlu0 %11206
  %11208 = vrot.lane.b32.xlu0 %v11137, 32
  %v11209 = vpop.permute.xlu0 %11208
  %11210 = vrot.lane.b32.xlu0 %v11139, 32
  %v11211 = vpop.permute.xlu0 %11210
  %11212 = vrot.lane.b32.xlu0 %v11141, 32
  %v11213 = vpop.permute.xlu0 %11212
  %11214 = vrot.lane.b32.xlu0 %v11143, 32
  %v11215 = vpop.permute.xlu0 %11214
  %11216 = vrot.lane.b32.xlu0 %v11145, 32
  %v11217 = vpop.permute.xlu0 %11216
  %11218 = vrot.lane.b32.xlu0 %v11147, 32
  %v11219 = vpop.permute.xlu0 %11218
  %11220 = vrot.lane.b32.xlu0 %v11149, 32
  %v11221 = vpop.permute.xlu0 %11220
  %11222 = vrot.lane.b32.xlu0 %v11151, 32
  %v11223 = vpop.permute.xlu0 %11222
  %11224 = vrot.lane.b32.xlu0 %v11153, 32
  %v11225 = vpop.permute.xlu0 %11224
  %11226 = vrot.lane.b32.xlu0 %v11155, 32
  %v11227 = vpop.permute.xlu0 %11226
  %11228 = vrot.lane.b32.xlu0 %v11157, 32
  %v11229 = vpop.permute.xlu0 %11228
  %11230 = vrot.lane.b32.xlu0 %v11159, 32
  %v11231 = vpop.permute.xlu0 %11230
  %11232 = vrot.lane.b32.xlu0 %v11161, 32
  %v11233 = vpop.permute.xlu0 %11232
  %11234 = vrot.lane.b32.xlu0 %v11163, 32
  %v11235 = vpop.permute.xlu0 %11234
  %11236 = vrot.lane.b32.xlu0 %v11165, 32
  %v11237 = vpop.permute.xlu0 %11236
  %11238 = vrot.lane.b32.xlu0 %v11167, 32
  %v11239 = vpop.permute.xlu0 %11238
  %11240 = vrot.lane.b32.xlu0 %v11169, 32
  %v11241 = vpop.permute.xlu0 %11240
  %v11278 = vadd.f32 %v11057, %v11171
  %v11279 = vadd.f32 %v11058, %v11173
  %v11280 = vadd.f32 %v11059, %v11175
  %v11281 = vadd.f32 %v11060, %v11177
  %v11282 = vadd.f32 %v11061, %v11179
  %v11283 = vadd.f32 %v11062, %v11181
  %v11284 = vadd.f32 %v11063, %v11183
  %v11285 = vadd.f32 %v11064, %v11185
  %v11286 = vadd.f32 %v11065, %v11187
  %v11287 = vadd.f32 %v11066, %v11189
  %v11288 = vadd.f32 %v11067, %v11191
  %v11289 = vadd.f32 %v11068, %v11193
  %v11290 = vadd.f32 %v11069, %v11195
  %v11291 = vadd.f32 %v11070, %v11197
  %v11292 = vadd.f32 %v11071, %v11199
  %v11293 = vadd.f32 %v11072, %v11201
  %v11294 = vadd.f32 %v11073, %v11203
  %v11295 = vadd.f32 %v11074, %v11205
  %v11296 = vadd.f32 %v11075, %v11207
  %v11297 = vadd.f32 %v11076, %v11209
  %v11298 = vadd.f32 %v11077, %v11211
  %v11299 = vadd.f32 %v11078, %v11213
  %v11300 = vadd.f32 %v11079, %v11215
  %v11301 = vadd.f32 %v11080, %v11217
  %v11302 = vadd.f32 %v11081, %v11219
  %v11303 = vadd.f32 %v11082, %v11221
  %v11304 = vadd.f32 %v11083, %v11223
  %v11305 = vadd.f32 %v11084, %v11225
  %v11306 = vadd.f32 %v11085, %v11227
  %v11307 = vadd.f32 %v11086, %v11229
  %v11308 = vadd.f32 %v11087, %v11231
  %v11309 = vadd.f32 %v11088, %v11233
  %v11310 = vadd.f32 %v11089, %v11235
  %v11311 = vadd.f32 %v11090, %v11237
  %v11312 = vadd.f32 %v11091, %v11239
  %v11313 = vadd.f32 %v11092, %v11241
  %v11314 = vlaneseq
  %v11315 = vshrl.u32 %v11314, 7
  %v11316 = vadd.s32 %v11315, 8
  %v11317 = vadd.s32 %v11315, 16
  %v11318 = vadd.s32 %v11315, 24
  %v11319 = vadd.s32 %v11315, 32
  %v11320 = vadd.s32 %v11315, 40
  %v11321 = vadd.s32 %v11315, 48
  %v11322 = vadd.s32 %v11315, 56
  %v11323 = vadd.s32 %v11315, 64
  %v11324 = vadd.s32 %v11315, 72
  %v11325 = vadd.s32 %v11315, 80
  %v11326 = vadd.s32 %v11315, 88
  %v11327 = vadd.s32 %v11315, 96
  %v11328 = vadd.s32 %v11315, 104
  %v11329 = vadd.s32 %v11315, 112
  %v11330 = vadd.s32 %v11315, 120
  %v11331 = vadd.s32 %v11315, 128
  %v11332 = vadd.s32 %v11315, 136
  %v11333 = vadd.s32 %v11315, 144
  %v11334 = vadd.s32 %v11315, 152
  %v11335 = vadd.s32 %v11315, 160
  %v11336 = vadd.s32 %v11315, 168
  %v11337 = vadd.s32 %v11315, 176
  %v11338 = vadd.s32 %v11315, 184
  %v11339 = vadd.s32 %v11315, 192
  %v11340 = vadd.s32 %v11315, 200
  %v11341 = vadd.s32 %v11315, 208
  %v11342 = vadd.s32 %v11315, 216
  %v11343 = vadd.s32 %v11315, 224
  %v11344 = vadd.s32 %v11315, 232
  %v11345 = vadd.s32 %v11315, 240
  %v11346 = vadd.s32 %v11315, 248
  %v11347 = vadd.s32 %v11315, 256
  %v11348 = vadd.s32 %v11315, 264
  %v11349 = vadd.s32 %v11315, 272
  %v11350 = vadd.s32 %v11315, 280
  %v11351 = vcvt.s32.f32 %v11315
  %v11352 = vcvt.s32.f32 %v11316
  %v11353 = vcvt.s32.f32 %v11317
  %v11354 = vcvt.s32.f32 %v11318
  %v11355 = vcvt.s32.f32 %v11319
  %v11356 = vcvt.s32.f32 %v11320
  %v11357 = vcvt.s32.f32 %v11321
  %v11358 = vcvt.s32.f32 %v11322
  %v11359 = vcvt.s32.f32 %v11323
  %v11360 = vcvt.s32.f32 %v11324
  %v11361 = vcvt.s32.f32 %v11325
  %v11362 = vcvt.s32.f32 %v11326
  %v11363 = vcvt.s32.f32 %v11327
  %v11364 = vcvt.s32.f32 %v11328
  %v11365 = vcvt.s32.f32 %v11329
  %v11366 = vcvt.s32.f32 %v11330
  %v11367 = vcvt.s32.f32 %v11331
  %v11368 = vcvt.s32.f32 %v11332
  %v11369 = vcvt.s32.f32 %v11333
  %v11370 = vcvt.s32.f32 %v11334
  %v11371 = vcvt.s32.f32 %v11335
  %v11372 = vcvt.s32.f32 %v11336
  %v11373 = vcvt.s32.f32 %v11337
  %v11374 = vcvt.s32.f32 %v11338
  %v11375 = vcvt.s32.f32 %v11339
  %v11376 = vcvt.s32.f32 %v11340
  %v11377 = vcvt.s32.f32 %v11341
  %v11378 = vcvt.s32.f32 %v11342
  %v11379 = vcvt.s32.f32 %v11343
  %v11380 = vcvt.s32.f32 %v11344
  %v11381 = vcvt.s32.f32 %v11345
  %v11382 = vcvt.s32.f32 %v11346
  %v11383 = vcvt.s32.f32 %v11347
  %v11384 = vcvt.s32.f32 %v11348
  %v11385 = vcvt.s32.f32 %v11349
  %v11386 = vcvt.s32.f32 %v11350
  %v11387 = vadd.f32 %v11351, 0.5
  %v11388 = vadd.f32 %v11352, 0.5
  %v11389 = vadd.f32 %v11353, 0.5
  %v11390 = vadd.f32 %v11354, 0.5
  %v11391 = vadd.f32 %v11355, 0.5
  %v11392 = vadd.f32 %v11356, 0.5
  %v11393 = vadd.f32 %v11357, 0.5
  %v11394 = vadd.f32 %v11358, 0.5
  %v11395 = vadd.f32 %v11359, 0.5
  %v11396 = vadd.f32 %v11360, 0.5
  %v11397 = vadd.f32 %v11361, 0.5
  %v11398 = vadd.f32 %v11362, 0.5
  %v11399 = vadd.f32 %v11363, 0.5
  %v11400 = vadd.f32 %v11364, 0.5
  %v11401 = vadd.f32 %v11365, 0.5
  %v11402 = vadd.f32 %v11366, 0.5
  %v11403 = vadd.f32 %v11367, 0.5
  %v11404 = vadd.f32 %v11368, 0.5
  %v11405 = vadd.f32 %v11369, 0.5
  %v11406 = vadd.f32 %v11370, 0.5
  %v11407 = vadd.f32 %v11371, 0.5
  %v11408 = vadd.f32 %v11372, 0.5
  %v11409 = vadd.f32 %v11373, 0.5
  %v11410 = vadd.f32 %v11374, 0.5
  %v11411 = vadd.f32 %v11375, 0.5
  %v11412 = vadd.f32 %v11376, 0.5
  %v11413 = vadd.f32 %v11377, 0.5
  %v11414 = vadd.f32 %v11378, 0.5
  %v11415 = vadd.f32 %v11379, 0.5
  %v11416 = vadd.f32 %v11380, 0.5
  %v11417 = vadd.f32 %v11381, 0.5
  %v11418 = vadd.f32 %v11382, 0.5
  %v11419 = vadd.f32 %v11383, 0.5
  %v11420 = vadd.f32 %v11384, 0.5
  %v11421 = vadd.f32 %v11385, 0.5
  %v11422 = vadd.f32 %v11386, 0.5
  %v11423 = vmul.f32 %v11387, 0.083333336
  %v11424 = vmul.f32 %v11388, 0.083333336
  %v11425 = vmul.f32 %v11389, 0.083333336
  %v11426 = vmul.f32 %v11390, 0.083333336
  %v11427 = vmul.f32 %v11391, 0.083333336
  %v11428 = vmul.f32 %v11392, 0.083333336
  %v11429 = vmul.f32 %v11393, 0.083333336
  %v11430 = vmul.f32 %v11394, 0.083333336
  %v11431 = vmul.f32 %v11395, 0.083333336
  %v11432 = vmul.f32 %v11396, 0.083333336
  %v11433 = vmul.f32 %v11397, 0.083333336
  %v11434 = vmul.f32 %v11398, 0.083333336
  %v11435 = vmul.f32 %v11399, 0.083333336
  %v11436 = vmul.f32 %v11400, 0.083333336
  %v11437 = vmul.f32 %v11401, 0.083333336
  %v11438 = vmul.f32 %v11402, 0.083333336
  %v11439 = vmul.f32 %v11403, 0.083333336
  %v11440 = vmul.f32 %v11404, 0.083333336
  %v11441 = vmul.f32 %v11405, 0.083333336
  %v11442 = vmul.f32 %v11406, 0.083333336
  %v11443 = vmul.f32 %v11407, 0.083333336
  %v11444 = vmul.f32 %v11408, 0.083333336
  %v11445 = vmul.f32 %v11409, 0.083333336
  %v11446 = vmul.f32 %v11410, 0.083333336
  %v11447 = vmul.f32 %v11411, 0.083333336
  %v11448 = vmul.f32 %v11412, 0.083333336
  %v11449 = vmul.f32 %v11413, 0.083333336
  %v11450 = vmul.f32 %v11414, 0.083333336
  %v11451 = vmul.f32 %v11415, 0.083333336
  %v11452 = vmul.f32 %v11416, 0.083333336
  %v11453 = vmul.f32 %v11417, 0.083333336
  %v11454 = vmul.f32 %v11418, 0.083333336
  %v11455 = vmul.f32 %v11419, 0.083333336
  %v11456 = vmul.f32 %v11420, 0.083333336
  %v11457 = vmul.f32 %v11421, 0.083333336
  %v11458 = vmul.f32 %v11422, 0.083333336
  %v11459 = vcvt.f32.s32.to.zero.pseudo %v11423
  %v11460 = vcvt.f32.s32.to.zero.pseudo %v11424
  %v11461 = vcvt.f32.s32.to.zero.pseudo %v11425
  %v11462 = vcvt.f32.s32.to.zero.pseudo %v11426
  %v11463 = vcvt.f32.s32.to.zero.pseudo %v11427
  %v11464 = vcvt.f32.s32.to.zero.pseudo %v11428
  %v11465 = vcvt.f32.s32.to.zero.pseudo %v11429
  %v11466 = vcvt.f32.s32.to.zero.pseudo %v11430
  %v11467 = vcvt.f32.s32.to.zero.pseudo %v11431
  %v11468 = vcvt.f32.s32.to.zero.pseudo %v11432
  %v11469 = vcvt.f32.s32.to.zero.pseudo %v11433
  %v11470 = vcvt.f32.s32.to.zero.pseudo %v11434
  %v11471 = vcvt.f32.s32.to.zero.pseudo %v11435
  %v11472 = vcvt.f32.s32.to.zero.pseudo %v11436
  %v11473 = vcvt.f32.s32.to.zero.pseudo %v11437
  %v11474 = vcvt.f32.s32.to.zero.pseudo %v11438
  %v11475 = vcvt.f32.s32.to.zero.pseudo %v11439
  %v11476 = vcvt.f32.s32.to.zero.pseudo %v11440
  %v11477 = vcvt.f32.s32.to.zero.pseudo %v11441
  %v11478 = vcvt.f32.s32.to.zero.pseudo %v11442
  %v11479 = vcvt.f32.s32.to.zero.pseudo %v11443
  %v11480 = vcvt.f32.s32.to.zero.pseudo %v11444
  %v11481 = vcvt.f32.s32.to.zero.pseudo %v11445
  %v11482 = vcvt.f32.s32.to.zero.pseudo %v11446
  %v11483 = vcvt.f32.s32.to.zero.pseudo %v11447
  %v11484 = vcvt.f32.s32.to.zero.pseudo %v11448
  %v11485 = vcvt.f32.s32.to.zero.pseudo %v11449
  %v11486 = vcvt.f32.s32.to.zero.pseudo %v11450
  %v11487 = vcvt.f32.s32.to.zero.pseudo %v11451
  %v11488 = vcvt.f32.s32.to.zero.pseudo %v11452
  %v11489 = vcvt.f32.s32.to.zero.pseudo %v11453
  %v11490 = vcvt.f32.s32.to.zero.pseudo %v11454
  %v11491 = vcvt.f32.s32.to.zero.pseudo %v11455
  %v11492 = vcvt.f32.s32.to.zero.pseudo %v11456
  %v11493 = vcvt.f32.s32.to.zero.pseudo %v11457
  %v11494 = vcvt.f32.s32.to.zero.pseudo %v11458
  %v11495 = vmul.u32 %v11459, 12
  %v11496 = vmul.u32 %v11460, 12
  %v11497 = vmul.u32 %v11461, 12
  %v11498 = vmul.u32 %v11462, 12
  %v11499 = vmul.u32 %v11463, 12
  %v11500 = vmul.u32 %v11464, 12
  %v11501 = vmul.u32 %v11465, 12
  %v11502 = vmul.u32 %v11466, 12
  %v11503 = vmul.u32 %v11467, 12
  %v11504 = vmul.u32 %v11468, 12
  %v11505 = vmul.u32 %v11469, 12
  %v11506 = vmul.u32 %v11470, 12
  %v11507 = vmul.u32 %v11471, 12
  %v11508 = vmul.u32 %v11472, 12
  %v11509 = vmul.u32 %v11473, 12
  %v11510 = vmul.u32 %v11474, 12
  %v11511 = vmul.u32 %v11475, 12
  %v11512 = vmul.u32 %v11476, 12
  %v11513 = vmul.u32 %v11477, 12
  %v11514 = vmul.u32 %v11478, 12
  %v11515 = vmul.u32 %v11479, 12
  %v11516 = vmul.u32 %v11480, 12
  %v11517 = vmul.u32 %v11481, 12
  %v11518 = vmul.u32 %v11482, 12
  %v11519 = vmul.u32 %v11483, 12
  %v11520 = vmul.u32 %v11484, 12
  %v11521 = vmul.u32 %v11485, 12
  %v11522 = vmul.u32 %v11486, 12
  %v11523 = vmul.u32 %v11487, 12
  %v11524 = vmul.u32 %v11488, 12
  %v11525 = vmul.u32 %v11489, 12
  %v11526 = vmul.u32 %v11490, 12
  %v11527 = vmul.u32 %v11491, 12
  %v11528 = vmul.u32 %v11492, 12
  %v11529 = vmul.u32 %v11493, 12
  %v11530 = vmul.u32 %v11494, 12
  %v11531 = vsub.s32 %v11315, %v11495
  %v11532 = vsub.s32 %v11316, %v11496
  %v11533 = vsub.s32 %v11317, %v11497
  %v11534 = vsub.s32 %v11318, %v11498
  %v11535 = vsub.s32 %v11319, %v11499
  %v11536 = vsub.s32 %v11320, %v11500
  %v11537 = vsub.s32 %v11321, %v11501
  %v11538 = vsub.s32 %v11322, %v11502
  %v11539 = vsub.s32 %v11323, %v11503
  %v11540 = vsub.s32 %v11324, %v11504
  %v11541 = vsub.s32 %v11325, %v11505
  %v11542 = vsub.s32 %v11326, %v11506
  %v11543 = vsub.s32 %v11327, %v11507
  %v11544 = vsub.s32 %v11328, %v11508
  %v11545 = vsub.s32 %v11329, %v11509
  %v11546 = vsub.s32 %v11330, %v11510
  %v11547 = vsub.s32 %v11331, %v11511
  %v11548 = vsub.s32 %v11332, %v11512
  %v11549 = vsub.s32 %v11333, %v11513
  %v11550 = vsub.s32 %v11334, %v11514
  %v11551 = vsub.s32 %v11335, %v11515
  %v11552 = vsub.s32 %v11336, %v11516
  %v11553 = vsub.s32 %v11337, %v11517
  %v11554 = vsub.s32 %v11338, %v11518
  %v11555 = vsub.s32 %v11339, %v11519
  %v11556 = vsub.s32 %v11340, %v11520
  %v11557 = vsub.s32 %v11341, %v11521
  %v11558 = vsub.s32 %v11342, %v11522
  %v11559 = vsub.s32 %v11343, %v11523
  %v11560 = vsub.s32 %v11344, %v11524
  %v11561 = vsub.s32 %v11345, %v11525
  %v11562 = vsub.s32 %v11346, %v11526
  %v11563 = vsub.s32 %v11347, %v11527
  %v11564 = vsub.s32 %v11348, %v11528
  %v11565 = vsub.s32 %v11349, %v11529
  %v11566 = vsub.s32 %v11350, %v11530
  %v11567 = vcvt.s32.f32 %v11459
  %v11568 = vcvt.s32.f32 %v11460
  %v11569 = vcvt.s32.f32 %v11461
  %v11570 = vcvt.s32.f32 %v11462
  %v11571 = vcvt.s32.f32 %v11463
  %v11572 = vcvt.s32.f32 %v11464
  %v11573 = vcvt.s32.f32 %v11465
  %v11574 = vcvt.s32.f32 %v11466
  %v11575 = vcvt.s32.f32 %v11467
  %v11576 = vcvt.s32.f32 %v11468
  %v11577 = vcvt.s32.f32 %v11469
  %v11578 = vcvt.s32.f32 %v11470
  %v11579 = vcvt.s32.f32 %v11471
  %v11580 = vcvt.s32.f32 %v11472
  %v11581 = vcvt.s32.f32 %v11473
  %v11582 = vcvt.s32.f32 %v11474
  %v11583 = vcvt.s32.f32 %v11475
  %v11584 = vcvt.s32.f32 %v11476
  %v11585 = vcvt.s32.f32 %v11477
  %v11586 = vcvt.s32.f32 %v11478
  %v11587 = vcvt.s32.f32 %v11479
  %v11588 = vcvt.s32.f32 %v11480
  %v11589 = vcvt.s32.f32 %v11481
  %v11590 = vcvt.s32.f32 %v11482
  %v11591 = vcvt.s32.f32 %v11483
  %v11592 = vcvt.s32.f32 %v11484
  %v11593 = vcvt.s32.f32 %v11485
  %v11594 = vcvt.s32.f32 %v11486
  %v11595 = vcvt.s32.f32 %v11487
  %v11596 = vcvt.s32.f32 %v11488
  %v11597 = vcvt.s32.f32 %v11489
  %v11598 = vcvt.s32.f32 %v11490
  %v11599 = vcvt.s32.f32 %v11491
  %v11600 = vcvt.s32.f32 %v11492
  %v11601 = vcvt.s32.f32 %v11493
  %v11602 = vcvt.s32.f32 %v11494
  %v11603 = vadd.f32 %v11567, 0.5
  %v11604 = vadd.f32 %v11568, 0.5
  %v11605 = vadd.f32 %v11569, 0.5
  %v11606 = vadd.f32 %v11570, 0.5
  %v11607 = vadd.f32 %v11571, 0.5
  %v11608 = vadd.f32 %v11572, 0.5
  %v11609 = vadd.f32 %v11573, 0.5
  %v11610 = vadd.f32 %v11574, 0.5
  %v11611 = vadd.f32 %v11575, 0.5
  %v11612 = vadd.f32 %v11576, 0.5
  %v11613 = vadd.f32 %v11577, 0.5
  %v11614 = vadd.f32 %v11578, 0.5
  %v11615 = vadd.f32 %v11579, 0.5
  %v11616 = vadd.f32 %v11580, 0.5
  %v11617 = vadd.f32 %v11581, 0.5
  %v11618 = vadd.f32 %v11582, 0.5
  %v11619 = vadd.f32 %v11583, 0.5
  %v11620 = vadd.f32 %v11584, 0.5
  %v11621 = vadd.f32 %v11585, 0.5
  %v11622 = vadd.f32 %v11586, 0.5
  %v11623 = vadd.f32 %v11587, 0.5
  %v11624 = vadd.f32 %v11588, 0.5
  %v11625 = vadd.f32 %v11589, 0.5
  %v11626 = vadd.f32 %v11590, 0.5
  %v11627 = vadd.f32 %v11591, 0.5
  %v11628 = vadd.f32 %v11592, 0.5
  %v11629 = vadd.f32 %v11593, 0.5
  %v11630 = vadd.f32 %v11594, 0.5
  %v11631 = vadd.f32 %v11595, 0.5
  %v11632 = vadd.f32 %v11596, 0.5
  %v11633 = vadd.f32 %v11597, 0.5
  %v11634 = vadd.f32 %v11598, 0.5
  %v11635 = vadd.f32 %v11599, 0.5
  %v11636 = vadd.f32 %v11600, 0.5
  %v11637 = vadd.f32 %v11601, 0.5
  %v11638 = vadd.f32 %v11602, 0.5
  %v11639 = vmul.f32 %v11603, 0.083333336
  %v11640 = vmul.f32 %v11604, 0.083333336
  %v11641 = vmul.f32 %v11605, 0.083333336
  %v11642 = vmul.f32 %v11606, 0.083333336
  %v11643 = vmul.f32 %v11607, 0.083333336
  %v11644 = vmul.f32 %v11608, 0.083333336
  %v11645 = vmul.f32 %v11609, 0.083333336
  %v11646 = vmul.f32 %v11610, 0.083333336
  %v11647 = vmul.f32 %v11611, 0.083333336
  %v11648 = vmul.f32 %v11612, 0.083333336
  %v11649 = vmul.f32 %v11613, 0.083333336
  %v11650 = vmul.f32 %v11614, 0.083333336
  %v11651 = vmul.f32 %v11615, 0.083333336
  %v11652 = vmul.f32 %v11616, 0.083333336
  %v11653 = vmul.f32 %v11617, 0.083333336
  %v11654 = vmul.f32 %v11618, 0.083333336
  %v11655 = vmul.f32 %v11619, 0.083333336
  %v11656 = vmul.f32 %v11620, 0.083333336
  %v11657 = vmul.f32 %v11621, 0.083333336
  %v11658 = vmul.f32 %v11622, 0.083333336
  %v11659 = vmul.f32 %v11623, 0.083333336
  %v11660 = vmul.f32 %v11624, 0.083333336
  %v11661 = vmul.f32 %v11625, 0.083333336
  %v11662 = vmul.f32 %v11626, 0.083333336
  %v11663 = vmul.f32 %v11627, 0.083333336
  %v11664 = vmul.f32 %v11628, 0.083333336
  %v11665 = vmul.f32 %v11629, 0.083333336
  %v11666 = vmul.f32 %v11630, 0.083333336
  %v11667 = vmul.f32 %v11631, 0.083333336
  %v11668 = vmul.f32 %v11632, 0.083333336
  %v11669 = vmul.f32 %v11633, 0.083333336
  %v11670 = vmul.f32 %v11634, 0.083333336
  %v11671 = vmul.f32 %v11635, 0.083333336
  %v11672 = vmul.f32 %v11636, 0.083333336
  %v11673 = vmul.f32 %v11637, 0.083333336
  %v11674 = vmul.f32 %v11638, 0.083333336
  %v11675 = vcvt.f32.s32.to.zero.pseudo %v11639
  %v11676 = vcvt.f32.s32.to.zero.pseudo %v11640
  %v11677 = vcvt.f32.s32.to.zero.pseudo %v11641
  %v11678 = vcvt.f32.s32.to.zero.pseudo %v11642
  %v11679 = vcvt.f32.s32.to.zero.pseudo %v11643
  %v11680 = vcvt.f32.s32.to.zero.pseudo %v11644
  %v11681 = vcvt.f32.s32.to.zero.pseudo %v11645
  %v11682 = vcvt.f32.s32.to.zero.pseudo %v11646
  %v11683 = vcvt.f32.s32.to.zero.pseudo %v11647
  %v11684 = vcvt.f32.s32.to.zero.pseudo %v11648
  %v11685 = vcvt.f32.s32.to.zero.pseudo %v11649
  %v11686 = vcvt.f32.s32.to.zero.pseudo %v11650
  %v11687 = vcvt.f32.s32.to.zero.pseudo %v11651
  %v11688 = vcvt.f32.s32.to.zero.pseudo %v11652
  %v11689 = vcvt.f32.s32.to.zero.pseudo %v11653
  %v11690 = vcvt.f32.s32.to.zero.pseudo %v11654
  %v11691 = vcvt.f32.s32.to.zero.pseudo %v11655
  %v11692 = vcvt.f32.s32.to.zero.pseudo %v11656
  %v11693 = vcvt.f32.s32.to.zero.pseudo %v11657
  %v11694 = vcvt.f32.s32.to.zero.pseudo %v11658
  %v11695 = vcvt.f32.s32.to.zero.pseudo %v11659
  %v11696 = vcvt.f32.s32.to.zero.pseudo %v11660
  %v11697 = vcvt.f32.s32.to.zero.pseudo %v11661
  %v11698 = vcvt.f32.s32.to.zero.pseudo %v11662
  %v11699 = vcvt.f32.s32.to.zero.pseudo %v11663
  %v11700 = vcvt.f32.s32.to.zero.pseudo %v11664
  %v11701 = vcvt.f32.s32.to.zero.pseudo %v11665
  %v11702 = vcvt.f32.s32.to.zero.pseudo %v11666
  %v11703 = vcvt.f32.s32.to.zero.pseudo %v11667
  %v11704 = vcvt.f32.s32.to.zero.pseudo %v11668
  %v11705 = vcvt.f32.s32.to.zero.pseudo %v11669
  %v11706 = vcvt.f32.s32.to.zero.pseudo %v11670
  %v11707 = vcvt.f32.s32.to.zero.pseudo %v11671
  %v11708 = vcvt.f32.s32.to.zero.pseudo %v11672
  %v11709 = vcvt.f32.s32.to.zero.pseudo %v11673
  %v11710 = vcvt.f32.s32.to.zero.pseudo %v11674
  %v11711 = vmul.u32 %v11675, 12
  %v11712 = vmul.u32 %v11676, 12
  %v11713 = vmul.u32 %v11677, 12
  %v11714 = vmul.u32 %v11678, 12
  %v11715 = vmul.u32 %v11679, 12
  %v11716 = vmul.u32 %v11680, 12
  %v11717 = vmul.u32 %v11681, 12
  %v11718 = vmul.u32 %v11682, 12
  %v11719 = vmul.u32 %v11683, 12
  %v11720 = vmul.u32 %v11684, 12
  %v11721 = vmul.u32 %v11685, 12
  %v11722 = vmul.u32 %v11686, 12
  %v11723 = vmul.u32 %v11687, 12
  %v11724 = vmul.u32 %v11688, 12
  %v11725 = vmul.u32 %v11689, 12
  %v11726 = vmul.u32 %v11690, 12
  %v11727 = vmul.u32 %v11691, 12
  %v11728 = vmul.u32 %v11692, 12
  %v11729 = vmul.u32 %v11693, 12
  %v11730 = vmul.u32 %v11694, 12
  %v11731 = vmul.u32 %v11695, 12
  %v11732 = vmul.u32 %v11696, 12
  %v11733 = vmul.u32 %v11697, 12
  %v11734 = vmul.u32 %v11698, 12
  %v11735 = vmul.u32 %v11699, 12
  %v11736 = vmul.u32 %v11700, 12
  %v11737 = vmul.u32 %v11701, 12
  %v11738 = vmul.u32 %v11702, 12
  %v11739 = vmul.u32 %v11703, 12
  %v11740 = vmul.u32 %v11704, 12
  %v11741 = vmul.u32 %v11705, 12
  %v11742 = vmul.u32 %v11706, 12
  %v11743 = vmul.u32 %v11707, 12
  %v11744 = vmul.u32 %v11708, 12
  %v11745 = vmul.u32 %v11709, 12
  %v11746 = vmul.u32 %v11710, 12
  %v11747 = vsub.s32 %v11459, %v11711
  %v11748 = vsub.s32 %v11460, %v11712
  %v11749 = vsub.s32 %v11461, %v11713
  %v11750 = vsub.s32 %v11462, %v11714
  %v11751 = vsub.s32 %v11463, %v11715
  %v11752 = vsub.s32 %v11464, %v11716
  %v11753 = vsub.s32 %v11465, %v11717
  %v11754 = vsub.s32 %v11466, %v11718
  %v11755 = vsub.s32 %v11467, %v11719
  %v11756 = vsub.s32 %v11468, %v11720
  %v11757 = vsub.s32 %v11469, %v11721
  %v11758 = vsub.s32 %v11470, %v11722
  %v11759 = vsub.s32 %v11471, %v11723
  %v11760 = vsub.s32 %v11472, %v11724
  %v11761 = vsub.s32 %v11473, %v11725
  %v11762 = vsub.s32 %v11474, %v11726
  %v11763 = vsub.s32 %v11475, %v11727
  %v11764 = vsub.s32 %v11476, %v11728
  %v11765 = vsub.s32 %v11477, %v11729
  %v11766 = vsub.s32 %v11478, %v11730
  %v11767 = vsub.s32 %v11479, %v11731
  %v11768 = vsub.s32 %v11480, %v11732
  %v11769 = vsub.s32 %v11481, %v11733
  %v11770 = vsub.s32 %v11482, %v11734
  %v11771 = vsub.s32 %v11483, %v11735
  %v11772 = vsub.s32 %v11484, %v11736
  %v11773 = vsub.s32 %v11485, %v11737
  %v11774 = vsub.s32 %v11486, %v11738
  %v11775 = vsub.s32 %v11487, %v11739
  %v11776 = vsub.s32 %v11488, %v11740
  %v11777 = vsub.s32 %v11489, %v11741
  %v11778 = vsub.s32 %v11490, %v11742
  %v11779 = vsub.s32 %v11491, %v11743
  %v11780 = vsub.s32 %v11492, %v11744
  %v11781 = vsub.s32 %v11493, %v11745
  %v11782 = vsub.s32 %v11494, %v11746
  %vm11783 = vcmp.lt.s32.totalorder %v11747, 10
  %vm11784 = vcmp.lt.s32.totalorder %v11748, 10
  %vm11785 = vcmp.lt.s32.totalorder %v11749, 10
  %vm11786 = vcmp.lt.s32.totalorder %v11750, 10
  %vm11787 = vcmp.lt.s32.totalorder %v11751, 10
  %vm11788 = vcmp.lt.s32.totalorder %v11752, 10
  %vm11789 = vcmp.lt.s32.totalorder %v11753, 10
  %vm11790 = vcmp.lt.s32.totalorder %v11754, 10
  %vm11791 = vcmp.lt.s32.totalorder %v11755, 10
  %vm11792 = vcmp.lt.s32.totalorder %v11756, 10
  %vm11793 = vcmp.lt.s32.totalorder %v11757, 10
  %vm11794 = vcmp.lt.s32.totalorder %v11758, 10
  %vm11795 = vcmp.lt.s32.totalorder %v11759, 10
  %vm11796 = vcmp.lt.s32.totalorder %v11760, 10
  %vm11797 = vcmp.lt.s32.totalorder %v11761, 10
  %vm11798 = vcmp.lt.s32.totalorder %v11762, 10
  %vm11799 = vcmp.lt.s32.totalorder %v11763, 10
  %vm11800 = vcmp.lt.s32.totalorder %v11764, 10
  %vm11801 = vcmp.lt.s32.totalorder %v11765, 10
  %vm11802 = vcmp.lt.s32.totalorder %v11766, 10
  %vm11803 = vcmp.lt.s32.totalorder %v11767, 10
  %vm11804 = vcmp.lt.s32.totalorder %v11768, 10
  %vm11805 = vcmp.lt.s32.totalorder %v11769, 10
  %vm11806 = vcmp.lt.s32.totalorder %v11770, 10
  %vm11807 = vcmp.lt.s32.totalorder %v11771, 10
  %vm11808 = vcmp.lt.s32.totalorder %v11772, 10
  %vm11809 = vcmp.lt.s32.totalorder %v11773, 10
  %vm11810 = vcmp.lt.s32.totalorder %v11774, 10
  %vm11811 = vcmp.lt.s32.totalorder %v11775, 10
  %vm11812 = vcmp.lt.s32.totalorder %v11776, 10
  %vm11813 = vcmp.lt.s32.totalorder %v11777, 10
  %vm11814 = vcmp.lt.s32.totalorder %v11778, 10
  %vm11815 = vcmp.lt.s32.totalorder %v11779, 10
  %vm11816 = vcmp.lt.s32.totalorder %v11780, 10
  %vm11817 = vcmp.lt.s32.totalorder %v11781, 10
  %vm11818 = vcmp.lt.s32.totalorder %v11782, 10
  %vm11819 = vcmp.lt.s32.totalorder %v11531, 10
  %vm11820 = vcmp.lt.s32.totalorder %v11532, 10
  %vm11821 = vcmp.lt.s32.totalorder %v11533, 10
  %vm11822 = vcmp.lt.s32.totalorder %v11534, 10
  %vm11823 = vcmp.lt.s32.totalorder %v11535, 10
  %vm11824 = vcmp.lt.s32.totalorder %v11536, 10
  %vm11825 = vcmp.lt.s32.totalorder %v11537, 10
  %vm11826 = vcmp.lt.s32.totalorder %v11538, 10
  %vm11827 = vcmp.lt.s32.totalorder %v11539, 10
  %vm11828 = vcmp.lt.s32.totalorder %v11540, 10
  %vm11829 = vcmp.lt.s32.totalorder %v11541, 10
  %vm11830 = vcmp.lt.s32.totalorder %v11542, 10
  %vm11831 = vcmp.lt.s32.totalorder %v11543, 10
  %vm11832 = vcmp.lt.s32.totalorder %v11544, 10
  %vm11833 = vcmp.lt.s32.totalorder %v11545, 10
  %vm11834 = vcmp.lt.s32.totalorder %v11546, 10
  %vm11835 = vcmp.lt.s32.totalorder %v11547, 10
  %vm11836 = vcmp.lt.s32.totalorder %v11548, 10
  %vm11837 = vcmp.lt.s32.totalorder %v11549, 10
  %vm11838 = vcmp.lt.s32.totalorder %v11550, 10
  %vm11839 = vcmp.lt.s32.totalorder %v11551, 10
  %vm11840 = vcmp.lt.s32.totalorder %v11552, 10
  %vm11841 = vcmp.lt.s32.totalorder %v11553, 10
  %vm11842 = vcmp.lt.s32.totalorder %v11554, 10
  %vm11843 = vcmp.lt.s32.totalorder %v11555, 10
  %vm11844 = vcmp.lt.s32.totalorder %v11556, 10
  %vm11845 = vcmp.lt.s32.totalorder %v11557, 10
  %vm11846 = vcmp.lt.s32.totalorder %v11558, 10
  %vm11847 = vcmp.lt.s32.totalorder %v11559, 10
  %vm11848 = vcmp.lt.s32.totalorder %v11560, 10
  %vm11849 = vcmp.lt.s32.totalorder %v11561, 10
  %vm11850 = vcmp.lt.s32.totalorder %v11562, 10
  %vm11851 = vcmp.lt.s32.totalorder %v11563, 10
  %vm11852 = vcmp.lt.s32.totalorder %v11564, 10
  %vm11853 = vcmp.lt.s32.totalorder %v11565, 10
  %vm11854 = vcmp.lt.s32.totalorder %v11566, 10
  %vm11855 = vmand %vm11783, %vm11819
  %vm11856 = vmand %vm11784, %vm11820
  %vm11857 = vmand %vm11785, %vm11821
  %vm11858 = vmand %vm11786, %vm11822
  %vm11859 = vmand %vm11787, %vm11823
  %vm11860 = vmand %vm11788, %vm11824
  %vm11861 = vmand %vm11789, %vm11825
  %vm11862 = vmand %vm11790, %vm11826
  %vm11863 = vmand %vm11791, %vm11827
  %vm11864 = vmand %vm11792, %vm11828
  %vm11865 = vmand %vm11793, %vm11829
  %vm11866 = vmand %vm11794, %vm11830
  %vm11867 = vmand %vm11795, %vm11831
  %vm11868 = vmand %vm11796, %vm11832
  %vm11869 = vmand %vm11797, %vm11833
  %vm11870 = vmand %vm11798, %vm11834
  %vm11871 = vmand %vm11799, %vm11835
  %vm11872 = vmand %vm11800, %vm11836
  %vm11873 = vmand %vm11801, %vm11837
  %vm11874 = vmand %vm11802, %vm11838
  %vm11875 = vmand %vm11803, %vm11839
  %vm11876 = vmand %vm11804, %vm11840
  %vm11877 = vmand %vm11805, %vm11841
  %vm11878 = vmand %vm11806, %vm11842
  %vm11879 = vmand %vm11807, %vm11843
  %vm11880 = vmand %vm11808, %vm11844
  %vm11881 = vmand %vm11809, %vm11845
  %vm11882 = vmand %vm11810, %vm11846
  %vm11883 = vmand %vm11811, %vm11847
  %vm11884 = vmand %vm11812, %vm11848
  %vm11885 = vmand %vm11813, %vm11849
  %vm11886 = vmand %vm11814, %vm11850
  %vm11887 = vmand %vm11815, %vm11851
  %vm11888 = vmand %vm11816, %vm11852
  %vm11889 = vmand %vm11817, %vm11853
  %vm11890 = vmand %vm11818, %vm11854
  %v11891 = vsel %vm11855, 1, 0
  %v11892 = vsel %vm11856, 1, 0
  %v11893 = vsel %vm11857, 1, 0
  %v11894 = vsel %vm11858, 1, 0
  %v11895 = vsel %vm11859, 1, 0
  %v11896 = vsel %vm11860, 1, 0
  %v11897 = vsel %vm11861, 1, 0
  %v11898 = vsel %vm11862, 1, 0
  %v11899 = vsel %vm11863, 1, 0
  %v11900 = vsel %vm11864, 1, 0
  %v11901 = vsel %vm11865, 1, 0
  %v11902 = vsel %vm11866, 1, 0
  %v11903 = vsel %vm11867, 1, 0
  %v11904 = vsel %vm11868, 1, 0
  %v11905 = vsel %vm11869, 1, 0
  %v11906 = vsel %vm11870, 1, 0
  %v11907 = vsel %vm11871, 1, 0
  %v11908 = vsel %vm11872, 1, 0
  %v11909 = vsel %vm11873, 1, 0
  %v11910 = vsel %vm11874, 1, 0
  %v11911 = vsel %vm11875, 1, 0
  %v11912 = vsel %vm11876, 1, 0
  %v11913 = vsel %vm11877, 1, 0
  %v11914 = vsel %vm11878, 1, 0
  %v11915 = vsel %vm11879, 1, 0
  %v11916 = vsel %vm11880, 1, 0
  %v11917 = vsel %vm11881, 1, 0
  %v11918 = vsel %vm11882, 1, 0
  %v11919 = vsel %vm11883, 1, 0
  %v11920 = vsel %vm11884, 1, 0
  %v11921 = vsel %vm11885, 1, 0
  %v11922 = vsel %vm11886, 1, 0
  %v11923 = vsel %vm11887, 1, 0
  %v11924 = vsel %vm11888, 1, 0
  %v11925 = vsel %vm11889, 1, 0
  %v11926 = vsel %vm11890, 1, 0
  %v11927 = vcvt.s32.f32 %v11891
  %v11928 = vcvt.s32.f32 %v11892
  %v11929 = vcvt.s32.f32 %v11893
  %v11930 = vcvt.s32.f32 %v11894
  %v11931 = vcvt.s32.f32 %v11895
  %v11932 = vcvt.s32.f32 %v11896
  %v11933 = vcvt.s32.f32 %v11897
  %v11934 = vcvt.s32.f32 %v11898
  %v11935 = vcvt.s32.f32 %v11899
  %v11936 = vcvt.s32.f32 %v11900
  %v11937 = vcvt.s32.f32 %v11901
  %v11938 = vcvt.s32.f32 %v11902
  %v11939 = vcvt.s32.f32 %v11903
  %v11940 = vcvt.s32.f32 %v11904
  %v11941 = vcvt.s32.f32 %v11905
  %v11942 = vcvt.s32.f32 %v11906
  %v11943 = vcvt.s32.f32 %v11907
  %v11944 = vcvt.s32.f32 %v11908
  %v11945 = vcvt.s32.f32 %v11909
  %v11946 = vcvt.s32.f32 %v11910
  %v11947 = vcvt.s32.f32 %v11911
  %v11948 = vcvt.s32.f32 %v11912
  %v11949 = vcvt.s32.f32 %v11913
  %v11950 = vcvt.s32.f32 %v11914
  %v11951 = vcvt.s32.f32 %v11915
  %v11952 = vcvt.s32.f32 %v11916
  %v11953 = vcvt.s32.f32 %v11917
  %v11954 = vcvt.s32.f32 %v11918
  %v11955 = vcvt.s32.f32 %v11919
  %v11956 = vcvt.s32.f32 %v11920
  %v11957 = vcvt.s32.f32 %v11921
  %v11958 = vcvt.s32.f32 %v11922
  %v11959 = vcvt.s32.f32 %v11923
  %v11960 = vcvt.s32.f32 %v11924
  %v11961 = vcvt.s32.f32 %v11925
  %v11962 = vcvt.s32.f32 %v11926
  %v11963 = vmul.f32 %v11278, %v11927
  %v11964 = vmul.f32 %v11279, %v11928
  %v11965 = vmul.f32 %v11280, %v11929
  %v11966 = vmul.f32 %v11281, %v11930
  %v11967 = vmul.f32 %v11282, %v11931
  %v11968 = vmul.f32 %v11283, %v11932
  %v11969 = vmul.f32 %v11284, %v11933
  %v11970 = vmul.f32 %v11285, %v11934
  %v11971 = vmul.f32 %v11286, %v11935
  %v11972 = vmul.f32 %v11287, %v11936
  %v11973 = vmul.f32 %v11288, %v11937
  %v11974 = vmul.f32 %v11289, %v11938
  %v11975 = vmul.f32 %v11290, %v11939
  %v11976 = vmul.f32 %v11291, %v11940
  %v11977 = vmul.f32 %v11292, %v11941
  %v11978 = vmul.f32 %v11293, %v11942
  %v11979 = vmul.f32 %v11294, %v11943
  %v11980 = vmul.f32 %v11295, %v11944
  %v11981 = vmul.f32 %v11296, %v11945
  %v11982 = vmul.f32 %v11297, %v11946
  %v11983 = vmul.f32 %v11298, %v11947
  %v11984 = vmul.f32 %v11299, %v11948
  %v11985 = vmul.f32 %v11300, %v11949
  %v11986 = vmul.f32 %v11301, %v11950
  %v11987 = vmul.f32 %v11302, %v11951
  %v11988 = vmul.f32 %v11303, %v11952
  %v11989 = vmul.f32 %v11304, %v11953
  %v11990 = vmul.f32 %v11305, %v11954
  %v11991 = vmul.f32 %v11306, %v11955
  %v11992 = vmul.f32 %v11307, %v11956
  %v11993 = vmul.f32 %v11308, %v11957
  %v11994 = vmul.f32 %v11309, %v11958
  %v11995 = vmul.f32 %v11310, %v11959
  %v11996 = vmul.f32 %v11311, %v11960
  %v11997 = vmul.f32 %v11312, %v11961
  %v11998 = vmul.f32 %v11313, %v11962
  %v11999 = vsel %vm547, %v11963, 0.0
  %v12000 = vsel %vm547, %v11964, 0.0
  %v12001 = vadd.f32 %v11999, %v12000
  %v12002 = vsel %vm547, %v11965, 0.0
  %v12003 = vadd.f32 %v12001, %v12002
  %v12004 = vsel %vm547, %v11966, 0.0
  %v12005 = vadd.f32 %v12003, %v12004
  %v12006 = vsel %vm547, %v11967, 0.0
  %v12007 = vadd.f32 %v12005, %v12006
  %v12008 = vsel %vm547, %v11968, 0.0
  %v12009 = vadd.f32 %v12007, %v12008
  %v12010 = vsel %vm547, %v11969, 0.0
  %v12011 = vadd.f32 %v12009, %v12010
  %v12012 = vsel %vm547, %v11970, 0.0
  %v12013 = vadd.f32 %v12011, %v12012
  %v12014 = vsel %vm547, %v11971, 0.0
  %v12015 = vadd.f32 %v12013, %v12014
  %v12016 = vsel %vm547, %v11972, 0.0
  %v12017 = vadd.f32 %v12015, %v12016
  %v12018 = vsel %vm547, %v11973, 0.0
  %v12019 = vadd.f32 %v12017, %v12018
  %v12020 = vsel %vm547, %v11974, 0.0
  %v12021 = vadd.f32 %v12019, %v12020
  %v12022 = vsel %vm547, %v11975, 0.0
  %v12023 = vadd.f32 %v12021, %v12022
  %v12024 = vsel %vm547, %v11976, 0.0
  %v12025 = vadd.f32 %v12023, %v12024
  %v12026 = vsel %vm547, %v11977, 0.0
  %v12027 = vadd.f32 %v12025, %v12026
  %v12028 = vsel %vm547, %v11978, 0.0
  %v12029 = vadd.f32 %v12027, %v12028
  %v12030 = vsel %vm547, %v11979, 0.0
  %v12031 = vadd.f32 %v12029, %v12030
  %v12032 = vsel %vm547, %v11980, 0.0
  %v12033 = vadd.f32 %v12031, %v12032
  %v12034 = vsel %vm547, %v11981, 0.0
  %v12035 = vadd.f32 %v12033, %v12034
  %v12036 = vsel %vm547, %v11982, 0.0
  %v12037 = vadd.f32 %v12035, %v12036
  %v12038 = vsel %vm547, %v11983, 0.0
  %v12039 = vadd.f32 %v12037, %v12038
  %v12040 = vsel %vm547, %v11984, 0.0
  %v12041 = vadd.f32 %v12039, %v12040
  %v12042 = vsel %vm547, %v11985, 0.0
  %v12043 = vadd.f32 %v12041, %v12042
  %v12044 = vsel %vm547, %v11986, 0.0
  %v12045 = vadd.f32 %v12043, %v12044
  %v12046 = vsel %vm547, %v11987, 0.0
  %v12047 = vadd.f32 %v12045, %v12046
  %v12048 = vsel %vm547, %v11988, 0.0
  %v12049 = vadd.f32 %v12047, %v12048
  %v12050 = vsel %vm547, %v11989, 0.0
  %v12051 = vadd.f32 %v12049, %v12050
  %v12052 = vsel %vm547, %v11990, 0.0
  %v12053 = vadd.f32 %v12051, %v12052
  %v12054 = vsel %vm547, %v11991, 0.0
  %v12055 = vadd.f32 %v12053, %v12054
  %v12056 = vsel %vm547, %v11992, 0.0
  %v12057 = vadd.f32 %v12055, %v12056
  %v12058 = vsel %vm547, %v11993, 0.0
  %v12059 = vadd.f32 %v12057, %v12058
  %v12060 = vsel %vm547, %v11994, 0.0
  %v12061 = vadd.f32 %v12059, %v12060
  %v12062 = vsel %vm547, %v11995, 0.0
  %v12063 = vadd.f32 %v12061, %v12062
  %v12064 = vsel %vm547, %v11996, 0.0
  %v12065 = vadd.f32 %v12063, %v12064
  %v12066 = vsel %vm547, %v11997, 0.0
  %v12067 = vadd.f32 %v12065, %v12066
  %v12068 = vsel %vm547, %v11998, 0.0
  %v12069 = vadd.f32 %v12067, %v12068
  %v12070 = vrot.slane %v12069, 4
  %v12071 = vadd.f32 %v12069, %v12070
  %v12072 = vrot.slane %v12071, 2
  %v12073 = vadd.f32 %v12071, %v12072
  %v12074 = vrot.slane %v12073, 1
  %v12075 = vadd.f32 %v12073, %v12074
  %v12076 = vmul.f32 %v12075, 0.005
  %v12077 = vmul.f32 %v11963, %v11963
  %v12078 = vmul.f32 %v11964, %v11964
  %v12079 = vmul.f32 %v11965, %v11965
  %v12080 = vmul.f32 %v11966, %v11966
  %v12081 = vmul.f32 %v11967, %v11967
  %v12082 = vmul.f32 %v11968, %v11968
  %v12083 = vmul.f32 %v11969, %v11969
  %v12084 = vmul.f32 %v11970, %v11970
  %v12085 = vmul.f32 %v11971, %v11971
  %v12086 = vmul.f32 %v11972, %v11972
  %v12087 = vmul.f32 %v11973, %v11973
  %v12088 = vmul.f32 %v11974, %v11974
  %v12089 = vmul.f32 %v11975, %v11975
  %v12090 = vmul.f32 %v11976, %v11976
  %v12091 = vmul.f32 %v11977, %v11977
  %v12092 = vmul.f32 %v11978, %v11978
  %v12093 = vmul.f32 %v11979, %v11979
  %v12094 = vmul.f32 %v11980, %v11980
  %v12095 = vmul.f32 %v11981, %v11981
  %v12096 = vmul.f32 %v11982, %v11982
  %v12097 = vmul.f32 %v11983, %v11983
  %v12098 = vmul.f32 %v11984, %v11984
  %v12099 = vmul.f32 %v11985, %v11985
  %v12100 = vmul.f32 %v11986, %v11986
  %v12101 = vmul.f32 %v11987, %v11987
  %v12102 = vmul.f32 %v11988, %v11988
  %v12103 = vmul.f32 %v11989, %v11989
  %v12104 = vmul.f32 %v11990, %v11990
  %v12105 = vmul.f32 %v11991, %v11991
  %v12106 = vmul.f32 %v11992, %v11992
  %v12107 = vmul.f32 %v11993, %v11993
  %v12108 = vmul.f32 %v11994, %v11994
  %v12109 = vmul.f32 %v11995, %v11995
  %v12110 = vmul.f32 %v11996, %v11996
  %v12111 = vmul.f32 %v11997, %v11997
  %v12112 = vmul.f32 %v11998, %v11998
  %v12113 = vsel %vm547, %v12077, 0.0
  %v12114 = vsel %vm547, %v12078, 0.0
  %v12115 = vadd.f32 %v12113, %v12114
  %v12116 = vsel %vm547, %v12079, 0.0
  %v12117 = vadd.f32 %v12115, %v12116
  %v12118 = vsel %vm547, %v12080, 0.0
  %v12119 = vadd.f32 %v12117, %v12118
  %v12120 = vsel %vm547, %v12081, 0.0
  %v12121 = vadd.f32 %v12119, %v12120
  %v12122 = vsel %vm547, %v12082, 0.0
  %v12123 = vadd.f32 %v12121, %v12122
  %v12124 = vsel %vm547, %v12083, 0.0
  %v12125 = vadd.f32 %v12123, %v12124
  %v12126 = vsel %vm547, %v12084, 0.0
  %v12127 = vadd.f32 %v12125, %v12126
  %v12128 = vsel %vm547, %v12085, 0.0
  %v12129 = vadd.f32 %v12127, %v12128
  %v12130 = vsel %vm547, %v12086, 0.0
  %v12131 = vadd.f32 %v12129, %v12130
  %v12132 = vsel %vm547, %v12087, 0.0
  %v12133 = vadd.f32 %v12131, %v12132
  %v12134 = vsel %vm547, %v12088, 0.0
  %v12135 = vadd.f32 %v12133, %v12134
  %v12136 = vsel %vm547, %v12089, 0.0
  %v12137 = vadd.f32 %v12135, %v12136
  %v12138 = vsel %vm547, %v12090, 0.0
  %v12139 = vadd.f32 %v12137, %v12138
  %v12140 = vsel %vm547, %v12091, 0.0
  %v12141 = vadd.f32 %v12139, %v12140
  %v12142 = vsel %vm547, %v12092, 0.0
  %v12143 = vadd.f32 %v12141, %v12142
  %v12144 = vsel %vm547, %v12093, 0.0
  %v12145 = vadd.f32 %v12143, %v12144
  %v12146 = vsel %vm547, %v12094, 0.0
  %v12147 = vadd.f32 %v12145, %v12146
  %v12148 = vsel %vm547, %v12095, 0.0
  %v12149 = vadd.f32 %v12147, %v12148
  %v12150 = vsel %vm547, %v12096, 0.0
  %v12151 = vadd.f32 %v12149, %v12150
  %v12152 = vsel %vm547, %v12097, 0.0
  %v12153 = vadd.f32 %v12151, %v12152
  %v12154 = vsel %vm547, %v12098, 0.0
  %v12155 = vadd.f32 %v12153, %v12154
  %v12156 = vsel %vm547, %v12099, 0.0
  %v12157 = vadd.f32 %v12155, %v12156
  %v12158 = vsel %vm547, %v12100, 0.0
  %v12159 = vadd.f32 %v12157, %v12158
  %v12160 = vsel %vm547, %v12101, 0.0
  %v12161 = vadd.f32 %v12159, %v12160
  %v12162 = vsel %vm547, %v12102, 0.0
  %v12163 = vadd.f32 %v12161, %v12162
  %v12164 = vsel %vm547, %v12103, 0.0
  %v12165 = vadd.f32 %v12163, %v12164
  %v12166 = vsel %vm547, %v12104, 0.0
  %v12167 = vadd.f32 %v12165, %v12166
  %v12168 = vsel %vm547, %v12105, 0.0
  %v12169 = vadd.f32 %v12167, %v12168
  %v12170 = vsel %vm547, %v12106, 0.0
  %v12171 = vadd.f32 %v12169, %v12170
  %v12172 = vsel %vm547, %v12107, 0.0
  %v12173 = vadd.f32 %v12171, %v12172
  %v12174 = vsel %vm547, %v12108, 0.0
  %v12175 = vadd.f32 %v12173, %v12174
  %v12176 = vsel %vm547, %v12109, 0.0
  %v12177 = vadd.f32 %v12175, %v12176
  %v12178 = vsel %vm547, %v12110, 0.0
  %v12179 = vadd.f32 %v12177, %v12178
  %v12180 = vsel %vm547, %v12111, 0.0
  %v12181 = vadd.f32 %v12179, %v12180
  %v12182 = vsel %vm547, %v12112, 0.0
  %v12183 = vadd.f32 %v12181, %v12182
  %v12184 = vrot.slane %v12183, 4
  %v12185 = vadd.f32 %v12183, %v12184
  %v12186 = vrot.slane %v12185, 2
  %v12187 = vadd.f32 %v12185, %v12186
  %v12188 = vrot.slane %v12187, 1
  %v12189 = vadd.f32 %v12187, %v12188
  %v12190 = vmul.f32 %v12189, 0.005
  %v12191 = vmul.f32 %v12076, %v12076
  %v12192 = vsub.f32 %v12190, %v12191
  %v12193 = vadd.f32 %v12192, 1e-05
  %v12194 = vrsqrt.pop %v12193
  %v12195 = vld [vmem:[%s5] sm:$0x1]
  %v12196 = vmul.f32 %v12194, %v12195
  %v12197 = vld [vmem:[%s6] sm:$0x1]
  %v12198 = vmul.f32 %v12076, %v12196
  %v12199 = vsub.f32 %v12197, %v12198
  %v12200 = vlaneseq
  %v12201 = vshrl.u32 %v12200, 7
  %v12202 = vsub.s32 0, %v12201
  %v12203 = vrot.slane %v12196, %v12202
  %v12204 = vmul.f32 %v11278, %v12203
  %v12205 = vmul.f32 %v11279, %v12203
  %v12206 = vmul.f32 %v11280, %v12203
  %v12207 = vmul.f32 %v11281, %v12203
  %v12208 = vmul.f32 %v11282, %v12203
  %v12209 = vmul.f32 %v11283, %v12203
  %v12210 = vmul.f32 %v11284, %v12203
  %v12211 = vmul.f32 %v11285, %v12203
  %v12212 = vmul.f32 %v11286, %v12203
  %v12213 = vmul.f32 %v11287, %v12203
  %v12214 = vmul.f32 %v11288, %v12203
  %v12215 = vmul.f32 %v11289, %v12203
  %v12216 = vmul.f32 %v11290, %v12203
  %v12217 = vmul.f32 %v11291, %v12203
  %v12218 = vmul.f32 %v11292, %v12203
  %v12219 = vmul.f32 %v11293, %v12203
  %v12220 = vmul.f32 %v11294, %v12203
  %v12221 = vmul.f32 %v11295, %v12203
  %v12222 = vmul.f32 %v11296, %v12203
  %v12223 = vmul.f32 %v11297, %v12203
  %v12224 = vmul.f32 %v11298, %v12203
  %v12225 = vmul.f32 %v11299, %v12203
  %v12226 = vmul.f32 %v11300, %v12203
  %v12227 = vmul.f32 %v11301, %v12203
  %v12228 = vmul.f32 %v11302, %v12203
  %v12229 = vmul.f32 %v11303, %v12203
  %v12230 = vmul.f32 %v11304, %v12203
  %v12231 = vmul.f32 %v11305, %v12203
  %v12232 = vmul.f32 %v11306, %v12203
  %v12233 = vmul.f32 %v11307, %v12203
  %v12234 = vmul.f32 %v11308, %v12203
  %v12235 = vmul.f32 %v11309, %v12203
  %v12236 = vmul.f32 %v11310, %v12203
  %v12237 = vmul.f32 %v11311, %v12203
  %v12238 = vmul.f32 %v11312, %v12203
  %v12239 = vmul.f32 %v11313, %v12203
  %v12241 = vlaneseq
  %v12242 = vshrl.u32 %v12241, 7
  %v12243 = vsub.s32 0, %v12242
  %v12244 = vrot.slane %v12199, %v12243
  %v12246 = vadd.f32 %v12204, %v12244
  %v12247 = vadd.f32 %v12205, %v12244
  %v12248 = vadd.f32 %v12206, %v12244
  %v12249 = vadd.f32 %v12207, %v12244
  %v12250 = vadd.f32 %v12208, %v12244
  %v12251 = vadd.f32 %v12209, %v12244
  %v12252 = vadd.f32 %v12210, %v12244
  %v12253 = vadd.f32 %v12211, %v12244
  %v12254 = vadd.f32 %v12212, %v12244
  %v12255 = vadd.f32 %v12213, %v12244
  %v12256 = vadd.f32 %v12214, %v12244
  %v12257 = vadd.f32 %v12215, %v12244
  %v12258 = vadd.f32 %v12216, %v12244
  %v12259 = vadd.f32 %v12217, %v12244
  %v12260 = vadd.f32 %v12218, %v12244
  %v12261 = vadd.f32 %v12219, %v12244
  %v12262 = vadd.f32 %v12220, %v12244
  %v12263 = vadd.f32 %v12221, %v12244
  %v12264 = vadd.f32 %v12222, %v12244
  %v12265 = vadd.f32 %v12223, %v12244
  %v12266 = vadd.f32 %v12224, %v12244
  %v12267 = vadd.f32 %v12225, %v12244
  %v12268 = vadd.f32 %v12226, %v12244
  %v12269 = vadd.f32 %v12227, %v12244
  %v12270 = vadd.f32 %v12228, %v12244
  %v12271 = vadd.f32 %v12229, %v12244
  %v12272 = vadd.f32 %v12230, %v12244
  %v12273 = vadd.f32 %v12231, %v12244
  %v12274 = vadd.f32 %v12232, %v12244
  %v12275 = vadd.f32 %v12233, %v12244
  %v12276 = vadd.f32 %v12234, %v12244
  %v12277 = vadd.f32 %v12235, %v12244
  %v12278 = vadd.f32 %v12236, %v12244
  %v12279 = vadd.f32 %v12237, %v12244
  %v12280 = vadd.f32 %v12238, %v12244
  %v12281 = vadd.f32 %v12239, %v12244
  %v12282 = vmax.f32 %v12246, 0.0
  %v12283 = vmax.f32 %v12247, 0.0
  %v12284 = vmax.f32 %v12248, 0.0
  %v12285 = vmax.f32 %v12249, 0.0
  %v12286 = vmax.f32 %v12250, 0.0
  %v12287 = vmax.f32 %v12251, 0.0
  %v12288 = vmax.f32 %v12252, 0.0
  %v12289 = vmax.f32 %v12253, 0.0
  %v12290 = vmax.f32 %v12254, 0.0
  %v12291 = vmax.f32 %v12255, 0.0
  %v12292 = vmax.f32 %v12256, 0.0
  %v12293 = vmax.f32 %v12257, 0.0
  %v12294 = vmax.f32 %v12258, 0.0
  %v12295 = vmax.f32 %v12259, 0.0
  %v12296 = vmax.f32 %v12260, 0.0
  %v12297 = vmax.f32 %v12261, 0.0
  %v12298 = vmax.f32 %v12262, 0.0
  %v12299 = vmax.f32 %v12263, 0.0
  %v12300 = vmax.f32 %v12264, 0.0
  %v12301 = vmax.f32 %v12265, 0.0
  %v12302 = vmax.f32 %v12266, 0.0
  %v12303 = vmax.f32 %v12267, 0.0
  %v12304 = vmax.f32 %v12268, 0.0
  %v12305 = vmax.f32 %v12269, 0.0
  %v12306 = vmax.f32 %v12270, 0.0
  %v12307 = vmax.f32 %v12271, 0.0
  %v12308 = vmax.f32 %v12272, 0.0
  %v12309 = vmax.f32 %v12273, 0.0
  %v12310 = vmax.f32 %v12274, 0.0
  %v12311 = vmax.f32 %v12275, 0.0
  %v12312 = vmax.f32 %v12276, 0.0
  %v12313 = vmax.f32 %v12277, 0.0
  %v12314 = vmax.f32 %v12278, 0.0
  %v12315 = vmax.f32 %v12279, 0.0
  %v12316 = vmax.f32 %v12280, 0.0
  %v12317 = vmax.f32 %v12281, 0.0
  %12318 = vst.msk [vmem:[%s7] sm:$0xff] %vm547, %v12282
  %12319 = vst.msk [vmem:[%s7 + $0x8] sm:$0xff] %vm547, %v12283
  %12320 = vst.msk [vmem:[%s7 + $0x10] sm:$0xff] %vm547, %v12284
  %12321 = vst.msk [vmem:[%s7 + $0x18] sm:$0xff] %vm547, %v12285
  %12322 = vst.msk [vmem:[%s7 + $0x20] sm:$0xff] %vm547, %v12286
  %12323 = vst.msk [vmem:[%s7 + $0x28] sm:$0xff] %vm547, %v12287
  %12324 = vst.msk [vmem:[%s7 + $0x30] sm:$0xff] %vm547, %v12288
  %12325 = vst.msk [vmem:[%s7 + $0x38] sm:$0xff] %vm547, %v12289
  %12326 = vst.msk [vmem:[%s7 + $0x40] sm:$0xff] %vm547, %v12290
  %12327 = vst.msk [vmem:[%s7 + $0x48] sm:$0xff] %vm547, %v12291
  %12328 = vst.msk [vmem:[%s7 + $0x50] sm:$0xff] %vm547, %v12292
  %12329 = vst.msk [vmem:[%s7 + $0x58] sm:$0xff] %vm547, %v12293
  %12330 = vst.msk [vmem:[%s7 + $0x60] sm:$0xff] %vm547, %v12294
  %12331 = vst.msk [vmem:[%s7 + $0x68] sm:$0xff] %vm547, %v12295
  %12332 = vst.msk [vmem:[%s7 + $0x70] sm:$0xff] %vm547, %v12296
  %12333 = vst.msk [vmem:[%s7 + $0x78] sm:$0xff] %vm547, %v12297
  %12334 = vst.msk [vmem:[%s7 + $0x80] sm:$0xff] %vm547, %v12298
  %12335 = vst.msk [vmem:[%s7 + $0x88] sm:$0xff] %vm547, %v12299
  %12336 = vst.msk [vmem:[%s7 + $0x90] sm:$0xff] %vm547, %v12300
  %12337 = vst.msk [vmem:[%s7 + $0x98] sm:$0xff] %vm547, %v12301
  %12338 = vst.msk [vmem:[%s7 + $0xa0] sm:$0xff] %vm547, %v12302
  %12339 = vst.msk [vmem:[%s7 + $0xa8] sm:$0xff] %vm547, %v12303
  %12340 = vst.msk [vmem:[%s7 + $0xb0] sm:$0xff] %vm547, %v12304
  %12341 = vst.msk [vmem:[%s7 + $0xb8] sm:$0xff] %vm547, %v12305
  %12342 = vst.msk [vmem:[%s7 + $0xc0] sm:$0xff] %vm547, %v12306
  %12343 = vst.msk [vmem:[%s7 + $0xc8] sm:$0xff] %vm547, %v12307
  %12344 = vst.msk [vmem:[%s7 + $0xd0] sm:$0xff] %vm547, %v12308
  %12345 = vst.msk [vmem:[%s7 + $0xd8] sm:$0xff] %vm547, %v12309
  %12346 = vst.msk [vmem:[%s7 + $0xe0] sm:$0xff] %vm547, %v12310
  %12347 = vst.msk [vmem:[%s7 + $0xe8] sm:$0xff] %vm547, %v12311
  %12348 = vst.msk [vmem:[%s7 + $0xf0] sm:$0xff] %vm547, %v12312
  %12349 = vst.msk [vmem:[%s7 + $0xf8] sm:$0xff] %vm547, %v12313
  %12350 = vst.msk [vmem:[%s7 + $0x100] sm:$0xff] %vm547, %v12314
  %12351 = vst.msk [vmem:[%s7 + $0x108] sm:$0xff] %vm547, %v12315
  %12352 = vst.msk [vmem:[%s7 + $0x110] sm:$0xff] %vm547, %v12316
  %12353 = vst.msk [vmem:[%s7 + $0x118] sm:$0xff] %vm547, %v12317
  // Predicated region
  $region30: #{mnist_features.1} parent=0 // pred_check
    _
  $region31: #{mnist_features.1} parent=0 // pred_check_branch
    %12355 = sbr.rel (0) target = $region33
  $region32: #{mnist_features.1} parent=0 // pred_region
    _
  $region33: #{mnist_features.1} parent=0 // pred_fallthru
    _
  // Predicated region
  $region34: #{mnist_features.1} parent=0 // pred_check
    _
  $region35: #{mnist_features.1} parent=0 // pred_check_branch
    %12357 = sbr.rel (0) target = $region37
  $region36: #{mnist_features.1} parent=0 // pred_region
    _
  $region37: #{mnist_features.1} parent=0 // pred_fallthru
    _

</llo_original>
